<compile_context>
chip_gen: v7x
topology: tpu7x:2x2x1
jax: 0.10.0
libtpu: 0.0.40
codegen_flags: <defaults>
</compile_context>

<pallas_src>
import jax
import jax.numpy as jnp
from jax import lax
from jax.experimental import pallas as pl
from jax.experimental.pallas import tpu as pltpu


def _vmem():
    return pl.BlockSpec(memory_space=pltpu.MemorySpace.VMEM)


# -----------------------------------------------------------------------------
# Pallas kernel 1: single-block matmul (unpadded, full-array VMEM blocks)
# -----------------------------------------------------------------------------
def _matmul_kernel(a_ref, b_ref, o_ref):
    o_ref[...] = jnp.dot(a_ref[...], b_ref[...], preferred_element_type=jnp.float32)


def pallas_matmul(a, b):
    """(M,K) @ (K,N) -> (M,N) f32; operands passed as-is (block == full array)."""
    M, _ = a.shape
    _, N = b.shape
    return pl.pallas_call(
        _matmul_kernel,
        out_shape=jax.ShapeDtypeStruct((M, N), jnp.float32),
        in_specs=[_vmem(), _vmem()],
        out_specs=_vmem(),
    )(a, b)


# -----------------------------------------------------------------------------
# Pallas kernel 2: masked bidirectional GRU (emulates pack_padded_sequence + GRU)
#   - fused gate weights, hoisted input projections, interleaved fwd/bwd steps
# -----------------------------------------------------------------------------
def _bigru_kernel(x_ref, mask_ref, wx_ref, bx_ref, whf_ref, bhf_ref, whb_ref, bhb_ref,
                  out_f_ref, out_b_ref, hf_ref, hb_ref, xg_ref):
    T, B, H = out_f_ref.shape
    H3 = 3 * H
    f32 = jnp.float32
    bf16 = jnp.bfloat16

    # Hoisted input projections for BOTH directions in a single MXU matmul:
    # (T*B, D) @ (D, 6H) -> VMEM scratch (T*B, 6H); only h @ Wh stays in the recurrence.
    xg_ref[...] = (jnp.dot(x_ref[...], wx_ref[...], preferred_element_type=f32)
                   + bx_ref[...])

    def gate(xg, h, wh_ref, bh_ref):
        # single fused (B,H) @ (H,3H) matmul for r/z/n, split in registers
        hg = jnp.dot(h.astype(bf16), wh_ref[...], preferred_element_type=f32) + bh_ref[...]
        r = jax.nn.sigmoid(xg[:, :H] + hg[:, :H])
        z = jax.nn.sigmoid(xg[:, H:2 * H] + hg[:, H:2 * H])
        n = jnp.tanh(xg[:, 2 * H:] + r * hg[:, 2 * H:])
        return (1.0 - z) * n + z * h

    def body(i, carry):
        h_f, h_b = carry
        tb = T - 1 - i
        row_f = xg_ref[pl.ds(i * B, B), :]      # (B, 6H) precomputed gates, fwd step
        row_b = xg_ref[pl.ds(tb * B, B), :]     # (B, 6H) precomputed gates, bwd step
        m_f = mask_ref[i]                       # (B, 1): 1 for valid steps, 0 for pad
        m_b = mask_ref[tb]

        hf_new = gate(row_f[:, :H3], h_f, whf_ref, bhf_ref)
        hb_new = gate(row_b[:, H3:], h_b, whb_ref, bhb_ref)

        out_f_ref[i] = m_f * hf_new             # padded outputs are zero
        out_b_ref[tb] = m_b * hb_new
        h_f = m_f * hf_new + (1.0 - m_f) * h_f  # freeze state on padded steps
        h_b = m_b * hb_new + (1.0 - m_b) * h_b
        return (h_f, h_b)

    h_f, h_b = lax.fori_loop(
        0, T, body,
        (jnp.zeros((B, H), f32), jnp.zeros((B, H), f32)),
        unroll=True)
    hf_ref[...] = h_f
    hb_ref[...] = h_b


def pallas_bigru(x_btd, lengths, p):
    """x: (B, T, D), lengths: (B,) int32.
    Returns all_hidden (B, T, 2H) and final hidden stacked as (2, B, H) (PyTorch h_n)."""
    B, T, D = x_btd.shape
    H = p["wh_f"].shape[0]
    # time-major, flattened so the hoisted input projection is one well-shaped matmul
    x_flat = jnp.transpose(x_btd, (1, 0, 2)).reshape(T * B, D).astype(jnp.bfloat16)
    t_idx = jnp.arange(T, dtype=jnp.int32)[:, None]
    mask = (t_idx < lengths[None, :].astype(jnp.int32)).astype(jnp.float32)[:, :, None]

    out_shapes = (
        jax.ShapeDtypeStruct((T, B, H), jnp.float32),
        jax.ShapeDtypeStruct((T, B, H), jnp.float32),
        jax.ShapeDtypeStruct((B, H), jnp.float32),
        jax.ShapeDtypeStruct((B, H), jnp.float32),
    )
    out_f, out_b, h_f, h_b = pl.pallas_call(
        _bigru_kernel,
        out_shape=out_shapes,
        in_specs=[_vmem() for _ in range(8)],
        out_specs=tuple(_vmem() for _ in range(4)),
        scratch_shapes=[pltpu.VMEM((T * B, 6 * H), jnp.float32)],
    )(x_flat, mask, p["wx_cat"], p["bx_cat"], p["wh_f"], p["bh_f"], p["wh_b"], p["bh_b"])

    all_hidden = jnp.concatenate(
        [jnp.transpose(out_f, (1, 0, 2)), jnp.transpose(out_b, (1, 0, 2))], axis=-1)
    h_n = jnp.stack([h_f, h_b], axis=0)          # (2, B, H), PyTorch h_n layout
    return all_hidden, h_n


# -----------------------------------------------------------------------------
# Pallas kernel 3: fused dense tail
#   bilinear attention -> context MLP (BN folded) -> context embedding ->
#   bilinear mapping -> item logits -> inference recommendation loop
# -----------------------------------------------------------------------------
# TODO(synk): the exact BilinearAttention module definition was not provided with the
# reference; a standard bilinear attention (score = q W k^T, masked softmax) is used.
def _make_tail_kernel(cfg):
    lam = float(cfg["lambda_score"])
    rec_len = int(cfg["recommendation_len"])
    Iu = int(cfg["num_item_units"])
    Cu = int(cfg["num_context_units"])

    def kernel(q_ref, attn_w_ref, item_h_ref, ctxt_h_ref, mask_ref,
               w1a_ref, w1b_ref, b1_ref, w2_ref, b2_ref,
               ctx_emb_ref, bil_w_ref, bil_b_ref, item_emb_t_ref,
               attrs_ref, attrs_t_ref,
               attn_ref, ctx_logits_ref, ctx_preds_ref, item_logits_ref, preds_ref):
        f32, bf16 = jnp.float32, jnp.bfloat16
        B, T = mask_ref.shape
        V = item_logits_ref.shape[1]
        C = ctx_logits_ref.shape[1]

        # -------- bilinear attention (masked softmax + two weighted sums) --------
        qw = jnp.dot(q_ref[...].astype(bf16), attn_w_ref[...],
                     preferred_element_type=f32)                          # (B, AE)
        keys = item_h_ref[...]                                            # (B, T, AE)
        # broadcast+reduce kept (tiny T/AE); becomes a dot_general if scaled up
        scores = jnp.sum(qw[:, None, :] * keys, axis=-1)                  # (B, T)
        mask = mask_ref[...]
        scores = jnp.where(mask > 0.5, scores, -1e30)
        mx = jnp.max(scores, axis=-1, keepdims=True)
        ex = jnp.exp(scores - mx) * mask
        attn = ex / jnp.maximum(jnp.sum(ex, axis=-1, keepdims=True), 1e-30)
        attn_ref[...] = attn
        item_enc = jnp.sum(attn[:, :, None] * keys, axis=1)               # (B, AE)
        ctxt_enc = jnp.sum(attn[:, :, None] * ctxt_h_ref[...], axis=1)    # (B, AE)

        # -------- context MLP (eval-mode BatchNorm folded into w1/b1) --------
        h1 = (jnp.dot(item_enc.astype(bf16), w1a_ref[...], preferred_element_type=f32)
              + jnp.dot(ctxt_enc.astype(bf16), w1b_ref[...], preferred_element_type=f32)
              + b1_ref[...])
        h1 = jnp.maximum(h1, 0.0)
        ctx_logits = (jnp.dot(h1.astype(bf16), w2_ref[...], preferred_element_type=f32)
                      + b2_ref[...])                                      # (B, C)
        ctx_logits_ref[...] = ctx_logits

        cmax = jnp.max(ctx_logits, axis=-1, keepdims=True)
        ce = jnp.exp(ctx_logits - cmax)
        ctx_probs = ce / jnp.sum(ce, axis=-1, keepdims=True)
        col_c = lax.broadcasted_iota(jnp.int32, (B, C), 1)
        ctx_preds_ref[...] = jnp.min(jnp.where(ctx_logits == cmax, col_c, C),
                                     axis=-1, keepdims=True)

        # -------- context embedding of predicted distribution --------
        ctx_y = jnp.dot(ctx_probs.astype(bf16), ctx_emb_ref[...],
                        preferred_element_type=f32)                       # (B, Cu)

        # -------- bilinear mapping: gp[b,i] = sum_{d,c} e[b,d] W[i,d,c] y[b,c] + b[i] --------
        # bil_w is pre-flattened to (AE, Cu*Iu) with column index k = c*Iu + i,
        # so the (d) contraction is one MXU matmul and the (c) contraction is a short
        # statically-unrolled scaled sum of lane slices (no in-kernel reshape needed).
        A = jnp.dot(item_enc.astype(bf16), bil_w_ref[...],
                    preferred_element_type=f32)                           # (B, Cu*Iu)
        gp = bil_b_ref[...] + ctx_y[:, 0:1] * A[:, 0:Iu]
        for c in range(1, Cu):
            gp = gp + ctx_y[:, c:c + 1] * A[:, c * Iu:(c + 1) * Iu]       # (B, Iu)

        item_logits = jnp.dot(gp.astype(bf16), item_emb_t_ref[...],
                              preferred_element_type=f32)                 # (B, V)
        item_logits_ref[...] = item_logits

        # -------- inference recommendation loop (accumulated penalty mask) --------
        imax = jnp.max(item_logits, axis=-1, keepdims=True)
        ie = jnp.exp(item_logits - imax)
        item_probs = ie / jnp.sum(ie, axis=-1, keepdims=True)

        col_v = lax.broadcasted_iota(jnp.int32, (B, V), 1)

        def argmax_v(x):                      # first index of the max, (B, 1) int32
            m = jnp.max(x, axis=-1, keepdims=True)
            return jnp.min(jnp.where(x == m, col_v, V), axis=-1, keepdims=True)

        sel = argmax_v(item_probs)
        preds_ref[:, 0:1] = sel
        # TODO(synk): get_indices_to_reduce is assumed to knock out already-recommended
        # items; implemented as an accumulated 1e9 penalty mask.
        rec_mask = (col_v == sel).astype(f32)
        sat = ctx_probs
        for k in range(1, rec_len):
            mu = jnp.dot(sat.astype(bf16), attrs_t_ref[...],
                         preferred_element_type=f32)                      # (B, V)
            mu = mu / jnp.maximum(jnp.sum(mu, axis=-1, keepdims=True), 1e-30)
            mmr = lam * item_probs + (1.0 - lam) * mu - rec_mask * 1e9
            sel = argmax_v(mmr)
            preds_ref[:, k:k + 1] = sel
            one_hot = (col_v == sel).astype(f32)
            rec_mask = rec_mask + one_hot
            attr_sel = jnp.dot(one_hot.astype(bf16), attrs_ref[...],
                               preferred_element_type=f32)                # (B, C) gather-by-matmul
            sat = sat * (1.0 - attr_sel + 1e-5)
            sat = sat / jnp.maximum(jnp.sum(sat, axis=-1, keepdims=True), 1e-30)

    return kernel


# -----------------------------------------------------------------------------
# parameter init (deterministic, synthetic — no checkpoint load) + inference prep
# -----------------------------------------------------------------------------
def init_params(key, cfg):
    V, C, U = cfg["item_num"], cfg["context_num"], cfg["user_num"]
    Iu, Cu, Uu = cfg["num_item_units"], cfg["num_context_units"], cfg["num_user_units"]
    H = cfg["num_gru_units"]
    AE = 2 * H
    ks = jax.random.split(key, 16)

    def nrm(k, shape, s=0.1):
        return (jax.random.normal(k, shape) * s).astype(jnp.float32)

    def gru_raw(k, d_in):
        k1, k2, k3, k4, k5, k6, k7, k8 = jax.random.split(k, 8)
        return dict(w_ih_f=nrm(k1, (3 * H, d_in)), w_hh_f=nrm(k2, (3 * H, H)),
                    b_ih_f=nrm(k3, (3 * H,)), b_hh_f=nrm(k4, (3 * H,)),
                    w_ih_b=nrm(k5, (3 * H, d_in)), w_hh_b=nrm(k6, (3 * H, H)),
                    b_ih_b=nrm(k7, (3 * H,)), b_hh_b=nrm(k8, (3 * H,)))

    p = {}
    p["item_emb"] = nrm(ks[0], (V, Iu)).at[0].set(0.0)     # padding_idx = 0
    p["user_emb"] = nrm(ks[1], (U, Uu)).at[0].set(0.0)     # padding_idx = 0
    p["ctx_emb"] = nrm(ks[2], (C, Cu))
    # TODO(synk): attributes come from the properties_path CSV in the original module;
    # synthesized deterministically here with shape (item_num, context_num).
    p["attributes"] = jax.random.uniform(ks[3], (V, C), dtype=jnp.float32)
    p["ctx_gru"] = gru_raw(ks[4], Iu + Cu + Uu)
    p["item_gru"] = gru_raw(ks[5], Iu + AE)
    p["mlp_w1"] = nrm(ks[6], (AE, 2 * AE))                 # Linear(2*AE -> 2H == AE)
    p["mlp_b1"] = nrm(ks[7], (AE,))
    p["mlp_w2"] = nrm(ks[8], (C, AE))
    p["mlp_b2"] = nrm(ks[9], (C,))
    p["bn_gamma"] = jnp.ones((AE,), jnp.float32)           # fresh BatchNorm1d (eval mode)
    p["bn_beta"] = jnp.zeros((AE,), jnp.float32)
    p["bn_mean"] = jnp.zeros((AE,), jnp.float32)
    p["bn_var"] = jnp.ones((AE,), jnp.float32)
    p["bilinear_w"] = nrm(ks[10], (Iu, AE, Cu))            # nn.Bilinear weight (out,in1,in2)
    p["bilinear_b"] = nrm(ks[11], (Iu,))
    p["attn_w"] = nrm(ks[12], (AE, AE))
    return p


def prepare_params(raw, cfg):
    """Stack/transpose GRU weights, fold eval-mode BN, pre-flatten bilinear weights,
    and cast matmul operands to bf16 (f32 accumulation happens in the kernels)."""
    H = cfg["num_gru_units"]
    AE = 2 * H
    Iu, Cu = cfg["num_item_units"], cfg["num_context_units"]
    bf16, f32 = jnp.bfloat16, jnp.float32

    def gru_pack(g):
        return dict(
            wx_cat=jnp.concatenate([g["w_ih_f"].T, g["w_ih_b"].T], axis=1).astype(bf16),
            bx_cat=jnp.concatenate([g["b_ih_f"], g["b_ih_b"]])[None, :].astype(f32),
            wh_f=g["w_hh_f"].T.astype(bf16), bh_f=g["b_hh_f"][None, :].astype(f32),
            wh_b=g["w_hh_b"].T.astype(bf16), bh_b=g["b_hh_b"][None, :].astype(f32),
        )

    p = {}
    p["item_emb"] = raw["item_emb"]
    p["user_emb"] = raw["user_emb"]
    p["ctx_emb_bf16"] = raw["ctx_emb"].astype(bf16)
    p["ctx_gru"] = gru_pack(raw["ctx_gru"])
    p["item_gru"] = gru_pack(raw["item_gru"])

    # fold eval-mode BatchNorm into the first MLP layer
    scale = raw["bn_gamma"] / jnp.sqrt(raw["bn_var"] + 1e-5)
    w1t = raw["mlp_w1"].T * scale[None, :]                 # (2*AE, AE)
    p["w1a"] = w1t[:AE].astype(bf16)                       # item_enc half
    p["w1b"] = w1t[AE:].astype(bf16)                       # ctxt_enc half
    p["b1"] = ((raw["mlp_b1"] - raw["bn_mean"]) * scale + raw["bn_beta"])[None, :].astype(f32)
    p["w2"] = raw["mlp_w2"].T.astype(bf16)                 # (AE, C)
    p["b2"] = raw["mlp_b2"][None, :].astype(f32)
    p["attn_w"] = raw["attn_w"].astype(bf16)
    # bilinear weight flattened so that column k = c*Iu + i holds W[i, d, c]
    p["bil_w"] = jnp.transpose(raw["bilinear_w"], (1, 2, 0)).reshape(AE, Cu * Iu).astype(bf16)
    p["bil_b"] = raw["bilinear_b"][None, :].astype(f32)
    p["item_emb_t"] = raw["item_emb"].T.astype(bf16)       # (Iu, V)
    p["attrs_bf16"] = raw["attributes"].astype(bf16)       # (V, C)
    p["attrs_t"] = raw["attributes"].T.astype(bf16)        # (C, V)
    return p


# -----------------------------------------------------------------------------
# forward pass (eval mode: dropout = identity, recommendation loop active)
# -----------------------------------------------------------------------------
def adsr_user_forward(params, item_x, context_x, user_id, cfg):
    B, T = item_x.shape
    H = cfg["num_gru_units"]
    AE = 2 * H
    C = cfg["context_num"]
    Cu = cfg["num_context_units"]
    V = cfg["item_num"]
    R = cfg["recommendation_len"]

    # ---------- encode ----------
    lengths = jnp.sum((item_x != 0).astype(jnp.int32), axis=-1)
    seq_mask = (item_x != 0).astype(jnp.float32)                           # (B, T)

    item_x_emb = jnp.take(params["item_emb"], item_x, axis=0)              # (B, T, Iu)
    ctx_x_emb = pallas_matmul(
        context_x.reshape(B * T, C).astype(jnp.bfloat16),
        params["ctx_emb_bf16"]).reshape(B, T, Cu)                          # einsum('blc,cd->bld')
    user_emb = jnp.take(params["user_emb"], user_id, axis=0)               # (B, Uu)
    user_rep = jnp.broadcast_to(user_emb[:, None, :], (B, T, user_emb.shape[-1]))

    ctx_input = jnp.concatenate([item_x_emb, ctx_x_emb, user_rep], axis=-1)
    ctxt_all_hidden, _ = pallas_bigru(ctx_input, lengths, params["ctx_gru"])     # (B, T, 2H)

    item_input = jnp.concatenate([item_x_emb, ctxt_all_hidden], axis=-1)
    item_all_hidden, item_h_n = pallas_bigru(item_input, lengths, params["item_gru"])

    # Literal reproduction of PyTorch's `h_n.view((batch_size, 1, -1))` applied to the
    # (2, B, H) h_n tensor (flattens across the direction axis first, exactly as the
    # reference module does).
    item_enc_q = jnp.reshape(item_h_n, (B, AE))

    # ---------- fused dense tail (attention + MLP + bilinear + logits + rec loop) ----------
    tail_kernel = _make_tail_kernel(cfg)
    out_shapes = (
        jax.ShapeDtypeStruct((B, T), jnp.float32),      # attention
        jax.ShapeDtypeStruct((B, C), jnp.float32),      # context logits
        jax.ShapeDtypeStruct((B, 1), jnp.int32),        # context preds
        jax.ShapeDtypeStruct((B, V), jnp.float32),      # item logits
        jax.ShapeDtypeStruct((B, R), jnp.int32),        # recommended list
    )
    attn, ctx_logits, ctx_preds, item_logits, preds = pl.pallas_call(
        tail_kernel,
        out_shape=out_shapes,
        in_specs=[_vmem() for _ in range(16)],
        out_specs=tuple(_vmem() for _ in range(5)),
    )(item_enc_q, params["attn_w"], item_all_hidden, ctxt_all_hidden, seq_mask,
      params["w1a"], params["w1b"], params["b1"], params["w2"], params["b2"],
      params["ctx_emb_bf16"], params["bil_w"], params["bil_b"], params["item_emb_t"],
      params["attrs_bf16"], params["attrs_t"])

    return dict(preds=preds,
                logits=item_logits,
                attention=attn,
                context_logits=ctx_logits.reshape(B, -1),
                context_preds=ctx_preds[:, 0])


# -----------------------------------------------------------------------------
# main
# -----------------------------------------------------------------------------
if __name__ == "__main__":
    cfg = dict(item_num=64, context_num=8, user_num=6,
               num_item_units=32, num_context_units=32, num_user_units=32,
               num_gru_units=16, recommendation_len=5, lambda_score=0.5)

    root = jax.random.PRNGKey(0)
    k_params, k_item, k_ctx, k_user = jax.random.split(root, 4)

    raw_params = init_params(k_params, cfg)
    params = prepare_params(raw_params, cfg)

    B, T = 2, 8
    lengths = jnp.array([8, 5], dtype=jnp.int32)
    pos = jnp.arange(T, dtype=jnp.int32)[None, :]
    item_x = jax.random.randint(k_item, (B, T), 1, cfg["item_num"], dtype=jnp.int32)
    item_x = jnp.where(pos < lengths[:, None], item_x, 0).astype(jnp.int32)    # 0 = padding
    context_x = jax.random.uniform(k_ctx, (B, T, cfg["context_num"]), dtype=jnp.float32)
    user_id = jax.random.randint(k_user, (B,), 1, cfg["user_num"], dtype=jnp.int32)

    forward = jax.jit(lambda p, a, b, c: adsr_user_forward(p, a, b, c, cfg))
    out = forward(params, item_x, context_x, user_id)
    jax.block_until_ready(out)

    assert out["preds"].shape == (B, cfg["recommendation_len"])
    assert out["logits"].shape == (B, cfg["item_num"])
    assert out["attention"].shape == (B, T)
    assert out["context_logits"].shape == (B, cfg["context_num"])
    assert out["context_preds"].shape == (B,)
    print("KERNEL_OK")
</pallas_src>

<mosaic_0001>
module attributes {stable_mosaic.version = 11 : i64} {
  func.func @_matmul_kernel(%arg0: memref<16x8xbf16, #tpu.memory_space<vmem>>, %arg1: memref<8x32xbf16, #tpu.memory_space<vmem>>, %arg2: memref<16x32xf32, #tpu.memory_space<vmem>>) attributes {dimension_semantics = [], scalar_prefetch = 0 : i64, scratch_operands = 0 : i64, tpu.core_type = #tpu.core_type<tc>} {
    %c0 = arith.constant 0 : index
    %c0_0 = arith.constant 0 : index
    %0 = vector.load %arg0[%c0, %c0_0] : memref<16x8xbf16, #tpu.memory_space<vmem>>, vector<16x8xbf16>
    %c0_1 = arith.constant 0 : index
    %c0_2 = arith.constant 0 : index
    %1 = vector.load %arg1[%c0_1, %c0_2] : memref<8x32xbf16, #tpu.memory_space<vmem>>, vector<8x32xbf16>
    %cst = arith.constant dense<0.000000e+00> : vector<16x32xf32>
    %2 = tpu.matmul %0, %1, %cst {dimension_numbers = #tpu.dot_dimension_numbers<[1], [0], [0], [1], [0, 0, 1, 1], [], []>} : vector<16x8xbf16>, vector<8x32xbf16>, vector<16x32xf32> -> vector<16x32xf32>
    %c0_3 = arith.constant 0 : index
    %c0_4 = arith.constant 0 : index
    %3 = vector.load %arg2[%c0_3, %c0_4] : memref<16x32xf32, #tpu.memory_space<vmem>>, vector<16x32xf32>
    tpu.vector_store %arg2[%c0_3, %c0_4], %2 {strides = array<i32>} : memref<16x32xf32, #tpu.memory_space<vmem>>, vector<16x32xf32>,
    return
  }
}

module attributes {stable_mosaic.version = 11 : i64} {
  func.func @_bigru_kernel(%arg0: memref<16x96xbf16, #tpu.memory_space<vmem>>, %arg1: memref<8x2x1xf32, #tpu.memory_space<vmem>>, %arg2: memref<96x96xbf16, #tpu.memory_space<vmem>>, %arg3: memref<1x96xf32, #tpu.memory_space<vmem>>, %arg4: memref<16x48xbf16, #tpu.memory_space<vmem>>, %arg5: memref<1x48xf32, #tpu.memory_space<vmem>>, %arg6: memref<16x48xbf16, #tpu.memory_space<vmem>>, %arg7: memref<1x48xf32, #tpu.memory_space<vmem>>, %arg8: memref<8x2x16xf32, #tpu.memory_space<vmem>>, %arg9: memref<8x2x16xf32, #tpu.memory_space<vmem>>, %arg10: memref<2x16xf32, #tpu.memory_space<vmem>>, %arg11: memref<2x16xf32, #tpu.memory_space<vmem>>, %arg12: memref<16x96xf32, #tpu.memory_space<vmem>>) attributes {dimension_semantics = [], scalar_prefetch = 0 : i64, scratch_operands = 1 : i64, tpu.core_type = #tpu.core_type<tc>} {
    %c0 = arith.constant 0 : index
    %c0_0 = arith.constant 0 : index
    %0 = vector.load %arg0[%c0, %c0_0] : memref<16x96xbf16, #tpu.memory_space<vmem>>, vector<16x96xbf16>
    %c0_1 = arith.constant 0 : index
    %c0_2 = arith.constant 0 : index
    %1 = vector.load %arg2[%c0_1, %c0_2] : memref<96x96xbf16, #tpu.memory_space<vmem>>, vector<96x96xbf16>
    %cst = arith.constant dense<0.000000e+00> : vector<16x96xf32>
    %2 = tpu.matmul %0, %1, %cst {dimension_numbers = #tpu.dot_dimension_numbers<[1], [0], [0], [1], [0, 0, 1, 1], [], []>} : vector<16x96xbf16>, vector<96x96xbf16>, vector<16x96xf32> -> vector<16x96xf32>
    %c0_3 = arith.constant 0 : index
    %c0_4 = arith.constant 0 : index
    %3 = vector.load %arg3[%c0_3, %c0_4] : memref<1x96xf32, #tpu.memory_space<vmem>>, vector<1x96xf32>
    %4 = vector.broadcast %3 : vector<1x96xf32> to vector<16x96xf32>
    %5 = arith.addf %2, %4 : vector<16x96xf32>
    %c0_5 = arith.constant 0 : index
    %c0_6 = arith.constant 0 : index
    %6 = vector.load %arg12[%c0_5, %c0_6] : memref<16x96xf32, #tpu.memory_space<vmem>>, vector<16x96xf32>
    tpu.vector_store %arg12[%c0_5, %c0_6], %5 {strides = array<i32>} : memref<16x96xf32, #tpu.memory_space<vmem>>, vector<16x96xf32>,
    %cst_7 = arith.constant 0.000000e+00 : f32
    %7 = vector.broadcast %cst_7 : f32 to vector<2x16xf32>
    %cst_8 = arith.constant 0.000000e+00 : f32
    %8 = vector.broadcast %cst_8 : f32 to vector<2x16xf32>
    %c0_i32 = arith.constant 0 : i32
    %c7_i32 = arith.constant 7 : i32
    %9 = arith.subi %c7_i32, %c0_i32 : i32
    %c2_i32 = arith.constant 2 : i32
    %10 = arith.muli %c0_i32, %c2_i32 : i32
    %11 = arith.index_cast %10 : i32 to index
    %c0_9 = arith.constant 0 : index
    %12 = vector.load %arg12[%11, %c0_9] : memref<16x96xf32, #tpu.memory_space<vmem>>, vector<2x96xf32>
    %c2_i32_10 = arith.constant 2 : i32
    %13 = arith.muli %9, %c2_i32_10 : i32
    %14 = arith.index_cast %13 : i32 to index
    %c0_11 = arith.constant 0 : index
    %15 = vector.load %arg12[%14, %c0_11] : memref<16x96xf32, #tpu.memory_space<vmem>>, vector<2x96xf32>
    %16 = arith.index_cast %c0_i32 : i32 to index
    %c0_12 = arith.constant 0 : index
    %c0_13 = arith.constant 0 : index
    %17 = vector.load %arg1[%16, %c0_12, %c0_13] : memref<8x2x1xf32, #tpu.memory_space<vmem>>, vector<1x2x1xf32>
    %18 = vector.shape_cast %17 : vector<1x2x1xf32> to vector<2x1xf32>
    %19 = arith.index_cast %9 : i32 to index
    %c0_14 = arith.constant 0 : index
    %c0_15 = arith.constant 0 : index
    %20 = vector.load %arg1[%19, %c0_14, %c0_15] : memref<8x2x1xf32, #tpu.memory_space<vmem>>, vector<1x2x1xf32>
    %21 = vector.shape_cast %20 : vector<1x2x1xf32> to vector<2x1xf32>
    %22 = vector.extract_strided_slice %12 {offsets = [0, 0], sizes = [2, 48], strides = [1, 1]} : vector<2x96xf32> to vector<2x48xf32>
    %23 = arith.truncf %7 : vector<2x16xf32> to vector<2x16xbf16>
    %c0_16 = arith.constant 0 : index
    %c0_17 = arith.constant 0 : index
    %24 = vector.load %arg4[%c0_16, %c0_17] : memref<16x48xbf16, #tpu.memory_space<vmem>>, vector<16x48xbf16>
    %cst_18 = arith.constant dense<0.000000e+00> : vector<2x48xf32>
    %25 = tpu.matmul %23, %24, %cst_18 {dimension_numbers = #tpu.dot_dimension_numbers<[1], [0], [0], [1], [0, 0, 1, 1], [], []>} : vector<2x16xbf16>, vector<16x48xbf16>, vector<2x48xf32> -> vector<2x48xf32>
    %c0_19 = arith.constant 0 : index
    %c0_20 = arith.constant 0 : index
    %26 = vector.load %arg5[%c0_19, %c0_20] : memref<1x48xf32, #tpu.memory_space<vmem>>, vector<1x48xf32>
    %27 = vector.broadcast %26 : vector<1x48xf32> to vector<2x48xf32>
    %28 = arith.addf %25, %27 : vector<2x48xf32>
    %29 = vector.extract_strided_slice %22 {offsets = [0, 0], sizes = [2, 16], strides = [1, 1]} : vector<2x48xf32> to vector<2x16xf32>
    %30 = vector.extract_strided_slice %28 {offsets = [0, 0], sizes = [2, 16], strides = [1, 1]} : vector<2x48xf32> to vector<2x16xf32>
    %31 = arith.addf %29, %30 : vector<2x16xf32>
    %32 = arith.negf %31 : vector<2x16xf32>
    %33 = math.exp %32 : vector<2x16xf32>
    %cst_21 = arith.constant 1.000000e+00 : f32
    %34 = vector.broadcast %cst_21 : f32 to vector<2x16xf32>
    %35 = arith.addf %34, %33 : vector<2x16xf32>
    %36 = arith.divf %34, %35 : vector<2x16xf32>
    %37 = vector.extract_strided_slice %22 {offsets = [0, 16], sizes = [2, 16], strides = [1, 1]} : vector<2x48xf32> to vector<2x16xf32>
    %38 = vector.extract_strided_slice %28 {offsets = [0, 16], sizes = [2, 16], strides = [1, 1]} : vector<2x48xf32> to vector<2x16xf32>
    %39 = arith.addf %37, %38 : vector<2x16xf32>
    %40 = arith.negf %39 : vector<2x16xf32>
    %41 = math.exp %40 : vector<2x16xf32>
    %cst_22 = arith.constant 1.000000e+00 : f32
    %42 = vector.broadcast %cst_22 : f32 to vector<2x16xf32>
    %43 = arith.addf %42, %41 : vector<2x16xf32>
    %44 = arith.divf %42, %43 : vector<2x16xf32>
    %45 = vector.extract_strided_slice %22 {offsets = [0, 32], sizes = [2, 16], strides = [1, 1]} : vector<2x48xf32> to vector<2x16xf32>
    %46 = vector.extract_strided_slice %28 {offsets = [0, 32], sizes = [2, 16], strides = [1, 1]} : vector<2x48xf32> to vector<2x16xf32>
    %47 = arith.mulf %36, %46 : vector<2x16xf32>
    %48 = arith.addf %45, %47 : vector<2x16xf32>
    %49 = math.tanh %48 : vector<2x16xf32>
    %cst_23 = arith.constant 1.000000e+00 : f32
    %50 = vector.broadcast %cst_23 : f32 to vector<2x16xf32>
    %51 = arith.subf %50, %44 : vector<2x16xf32>
    %52 = arith.mulf %51, %49 : vector<2x16xf32>
    %53 = arith.mulf %44, %7 : vector<2x16xf32>
    %54 = arith.addf %52, %53 : vector<2x16xf32>
    %55 = vector.extract_strided_slice %15 {offsets = [0, 48], sizes = [2, 48], strides = [1, 1]} : vector<2x96xf32> to vector<2x48xf32>
    %56 = arith.truncf %8 : vector<2x16xf32> to vector<2x16xbf16>
    %c0_24 = arith.constant 0 : index
    %c0_25 = arith.constant 0 : index
    %57 = vector.load %arg6[%c0_24, %c0_25] : memref<16x48xbf16, #tpu.memory_space<vmem>>, vector<16x48xbf16>
    %cst_26 = arith.constant dense<0.000000e+00> : vector<2x48xf32>
    %58 = tpu.matmul %56, %57, %cst_26 {dimension_numbers = #tpu.dot_dimension_numbers<[1], [0], [0], [1], [0, 0, 1, 1], [], []>} : vector<2x16xbf16>, vector<16x48xbf16>, vector<2x48xf32> -> vector<2x48xf32>
    %c0_27 = arith.constant 0 : index
    %c0_28 = arith.constant 0 : index
    %59 = vector.load %arg7[%c0_27, %c0_28] : memref<1x48xf32, #tpu.memory_space<vmem>>, vector<1x48xf32>
    %60 = vector.broadcast %59 : vector<1x48xf32> to vector<2x48xf32>
    %61 = arith.addf %58, %60 : vector<2x48xf32>
    %62 = vector.extract_strided_slice %55 {offsets = [0, 0], sizes = [2, 16], strides = [1, 1]} : vector<2x48xf32> to vector<2x16xf32>
    %63 = vector.extract_strided_slice %61 {offsets = [0, 0], sizes = [2, 16], strides = [1, 1]} : vector<2x48xf32> to vector<2x16xf32>
    %64 = arith.addf %62, %63 : vector<2x16xf32>
    %65 = arith.negf %64 : vector<2x16xf32>
    %66 = math.exp %65 : vector<2x16xf32>
    %cst_29 = arith.constant 1.000000e+00 : f32
    %67 = vector.broadcast %cst_29 : f32 to vector<2x16xf32>
    %68 = arith.addf %67, %66 : vector<2x16xf32>
    %69 = arith.divf %67, %68 : vector<2x16xf32>
    %70 = vector.extract_strided_slice %55 {offsets = [0, 16], sizes = [2, 16], strides = [1, 1]} : vector<2x48xf32> to vector<2x16xf32>
    %71 = vector.extract_strided_slice %61 {offsets = [0, 16], sizes = [2, 16], strides = [1, 1]} : vector<2x48xf32> to vector<2x16xf32>
    %72 = arith.addf %70, %71 : vector<2x16xf32>
    %73 = arith.negf %72 : vector<2x16xf32>
    %74 = math.exp %73 : vector<2x16xf32>
    %cst_30 = arith.constant 1.000000e+00 : f32
    %75 = vector.broadcast %cst_30 : f32 to vector<2x16xf32>
    %76 = arith.addf %75, %74 : vector<2x16xf32>
    %77 = arith.divf %75, %76 : vector<2x16xf32>
    %78 = vector.extract_strided_slice %55 {offsets = [0, 32], sizes = [2, 16], strides = [1, 1]} : vector<2x48xf32> to vector<2x16xf32>
    %79 = vector.extract_strided_slice %61 {offsets = [0, 32], sizes = [2, 16], strides = [1, 1]} : vector<2x48xf32> to vector<2x16xf32>
    %80 = arith.mulf %69, %79 : vector<2x16xf32>
    %81 = arith.addf %78, %80 : vector<2x16xf32>
    %82 = math.tanh %81 : vector<2x16xf32>
    %cst_31 = arith.constant 1.000000e+00 : f32
    %83 = vector.broadcast %cst_31 : f32 to vector<2x16xf32>
    %84 = arith.subf %83, %77 : vector<2x16xf32>
    %85 = arith.mulf %84, %82 : vector<2x16xf32>
    %86 = arith.mulf %77, %8 : vector<2x16xf32>
    %87 = arith.addf %85, %86 : vector<2x16xf32>
    %88 = vector.broadcast %18 : vector<2x1xf32> to vector<2x16xf32>
    %89 = arith.mulf %88, %54 : vector<2x16xf32>
    %90 = arith.index_cast %c0_i32 : i32 to index
    %c0_32 = arith.constant 0 : index
    %c0_33 = arith.constant 0 : index
    %91 = vector.load %arg8[%90, %c0_32, %c0_33] : memref<8x2x16xf32, #tpu.memory_space<vmem>>, vector<1x2x16xf32>
    %92 = vector.shape_cast %91 : vector<1x2x16xf32> to vector<2x16xf32>
    %93 = vector.shape_cast %89 : vector<2x16xf32> to vector<1x2x16xf32>
    tpu.vector_store %arg8[%90, %c0_32, %c0_33], %93 {strides = array<i32>} : memref<8x2x16xf32, #tpu.memory_space<vmem>>, vector<1x2x16xf32>,
    %94 = vector.broadcast %21 : vector<2x1xf32> to vector<2x16xf32>
    %95 = arith.mulf %94, %87 : vector<2x16xf32>
    %96 = arith.index_cast %9 : i32 to index
    %c0_34 = arith.constant 0 : index
    %c0_35 = arith.constant 0 : index
    %97 = vector.load %arg9[%96, %c0_34, %c0_35] : memref<8x2x16xf32, #tpu.memory_space<vmem>>, vector<1x2x16xf32>
    %98 = vector.shape_cast %97 : vector<1x2x16xf32> to vector<2x16xf32>
    %99 = vector.shape_cast %95 : vector<2x16xf32> to vector<1x2x16xf32>
    tpu.vector_store %arg9[%96, %c0_34, %c0_35], %99 {strides = array<i32>} : memref<8x2x16xf32, #tpu.memory_space<vmem>>, vector<1x2x16xf32>,
    %100 = vector.broadcast %18 : vector<2x1xf32> to vector<2x16xf32>
    %101 = arith.mulf %100, %54 : vector<2x16xf32>
    %cst_36 = arith.constant 1.000000e+00 : f32
    %102 = vector.broadcast %cst_36 : f32 to vector<2x1xf32>
    %103 = arith.subf %102, %18 : vector<2x1xf32>
    %104 = vector.broadcast %103 : vector<2x1xf32> to vector<2x16xf32>
    %105 = arith.mulf %104, %7 : vector<2x16xf32>
    %106 = arith.addf %101, %105 : vector<2x16xf32>
    %107 = vector.broadcast %21 : vector<2x1xf32> to vector<2x16xf32>
    %108 = arith.mulf %107, %87 : vector<2x16xf32>
    %cst_37 = arith.constant 1.000000e+00 : f32
    %109 = vector.broadcast %cst_37 : f32 to vector<2x1xf32>
    %110 = arith.subf %109, %21 : vector<2x1xf32>
    %111 = vector.broadcast %110 : vector<2x1xf32> to vector<2x16xf32>
    %112 = arith.mulf %111, %8 : vector<2x16xf32>
    %113 = arith.addf %108, %112 : vector<2x16xf32>
    %c1_i32 = arith.constant 1 : i32
    %c7_i32_38 = arith.constant 7 : i32
    %114 = arith.subi %c7_i32_38, %c1_i32 : i32
    %c2_i32_39 = arith.constant 2 : i32
    %115 = arith.muli %c1_i32, %c2_i32_39 : i32
    %116 = arith.index_cast %115 : i32 to index
    %c0_40 = arith.constant 0 : index
    %117 = vector.load %arg12[%116, %c0_40] : memref<16x96xf32, #tpu.memory_space<vmem>>, vector<2x96xf32>
    %c2_i32_41 = arith.constant 2 : i32
    %118 = arith.muli %114, %c2_i32_41 : i32
    %119 = arith.index_cast %118 : i32 to index
    %c0_42 = arith.constant 0 : index
    %120 = vector.load %arg12[%119, %c0_42] : memref<16x96xf32, #tpu.memory_space<vmem>>, vector<2x96xf32>
    %121 = arith.index_cast %c1_i32 : i32 to index
    %c0_43 = arith.constant 0 : index
    %c0_44 = arith.constant 0 : index
    %122 = vector.load %arg1[%121, %c0_43, %c0_44] : memref<8x2x1xf32, #tpu.memory_space<vmem>>, vector<1x2x1xf32>
    %123 = vector.shape_cast %122 : vector<1x2x1xf32> to vector<2x1xf32>
    %124 = arith.index_cast %114 : i32 to index
    %c0_45 = arith.constant 0 : index
    %c0_46 = arith.constant 0 : index
    %125 = vector.load %arg1[%124, %c0_45, %c0_46] : memref<8x2x1xf32, #tpu.memory_space<vmem>>, vector<1x2x1xf32>
    %126 = vector.shape_cast %125 : vector<1x2x1xf32> to vector<2x1xf32>
    %127 = vector.extract_strided_slice %117 {offsets = [0, 0], sizes = [2, 48], strides = [1, 1]} : vector<2x96xf32> to vector<2x48xf32>
    %128 = arith.truncf %106 : vector<2x16xf32> to vector<2x16xbf16>
    %c0_47 = arith.constant 0 : index
    %c0_48 = arith.constant 0 : index
    %129 = vector.load %arg4[%c0_47, %c0_48] : memref<16x48xbf16, #tpu.memory_space<vmem>>, vector<16x48xbf16>
    %cst_49 = arith.constant dense<0.000000e+00> : vector<2x48xf32>
    %130 = tpu.matmul %128, %129, %cst_49 {dimension_numbers = #tpu.dot_dimension_numbers<[1], [0], [0], [1], [0, 0, 1, 1], [], []>} : vector<2x16xbf16>, vector<16x48xbf16>, vector<2x48xf32> -> vector<2x48xf32>
    %c0_50 = arith.constant 0 : index
    %c0_51 = arith.constant 0 : index
    %131 = vector.load %arg5[%c0_50, %c0_51] : memref<1x48xf32, #tpu.memory_space<vmem>>, vector<1x48xf32>
    %132 = vector.broadcast %131 : vector<1x48xf32> to vector<2x48xf32>
    %133 = arith.addf %130, %132 : vector<2x48xf32>
    %134 = vector.extract_strided_slice %127 {offsets = [0, 0], sizes = [2, 16], strides = [1, 1]} : vector<2x48xf32> to vector<2x16xf32>
    %135 = vector.extract_strided_slice %133 {offsets = [0, 0], sizes = [2, 16], strides = [1, 1]} : vector<2x48xf32> to vector<2x16xf32>
    %136 = arith.addf %134, %135 : vector<2x16xf32>
    %137 = arith.negf %136 : vector<2x16xf32>
    %138 = math.exp %137 : vector<2x16xf32>
    %cst_52 = arith.constant 1.000000e+00 : f32
    %139 = vector.broadcast %cst_52 : f32 to vector<2x16xf32>
    %140 = arith.addf %139, %138 : vector<2x16xf32>
    %141 = arith.divf %139, %140 : vector<2x16xf32>
    %142 = vector.extract_strided_slice %127 {offsets = [0, 16], sizes = [2, 16], strides = [1, 1]} : vector<2x48xf32> to vector<2x16xf32>
    %143 = vector.extract_strided_slice %133 {offsets = [0, 16], sizes = [2, 16], strides = [1, 1]} : vector<2x48xf32> to vector<2x16xf32>
    %144 = arith.addf %142, %143 : vector<2x16xf32>
    %145 = arith.negf %144 : vector<2x16xf32>
    %146 = math.exp %145 : vector<2x16xf32>
    %cst_53 = arith.constant 1.000000e+00 : f32
    %147 = vector.broadcast %cst_53 : f32 to vector<2x16xf32>
    %148 = arith.addf %147, %146 : vector<2x16xf32>
    %149 = arith.divf %147, %148 : vector<2x16xf32>
    %150 = vector.extract_strided_slice %127 {offsets = [0, 32], sizes = [2, 16], strides = [1, 1]} : vector<2x48xf32> to vector<2x16xf32>
    %151 = vector.extract_strided_slice %133 {offsets = [0, 32], sizes = [2, 16], strides = [1, 1]} : vector<2x48xf32> to vector<2x16xf32>
    %152 = arith.mulf %141, %151 : vector<2x16xf32>
    %153 = arith.addf %150, %152 : vector<2x16xf32>
    %154 = math.tanh %153 : vector<2x16xf32>
    %cst_54 = arith.constant 1.000000e+00 : f32
    %155 = vector.broadcast %cst_54 : f32 to vector<2x16xf32>
    %156 = arith.subf %155, %149 : vector<2x16xf32>
    %157 = arith.mulf %156, %154 : vector<2x16xf32>
    %158 = arith.mulf %149, %106 : vector<2x16xf32>
    %159 = arith.addf %157, %158 : vector<2x16xf32>
    %160 = vector.extract_strided_slice %120 {offsets = [0, 48], sizes = [2, 48], strides = [1, 1]} : vector<2x96xf32> to vector<2x48xf32>
    %161 = arith.truncf %113 : vector<2x16xf32> to vector<2x16xbf16>
    %c0_55 = arith.constant 0 : index
    %c0_56 = arith.constant 0 : index
    %162 = vector.load %arg6[%c0_55, %c0_56] : memref<16x48xbf16, #tpu.memory_space<vmem>>, vector<16x48xbf16>
    %cst_57 = arith.constant dense<0.000000e+00> : vector<2x48xf32>
    %163 = tpu.matmul %161, %162, %cst_57 {dimension_numbers = #tpu.dot_dimension_numbers<[1], [0], [0], [1], [0, 0, 1, 1], [], []>} : vector<2x16xbf16>, vector<16x48xbf16>, vector<2x48xf32> -> vector<2x48xf32>
    %c0_58 = arith.constant 0 : index
    %c0_59 = arith.constant 0 : index
    %164 = vector.load %arg7[%c0_58, %c0_59] : memref<1x48xf32, #tpu.memory_space<vmem>>, vector<1x48xf32>
    %165 = vector.broadcast %164 : vector<1x48xf32> to vector<2x48xf32>
    %166 = arith.addf %163, %165 : vector<2x48xf32>
    %167 = vector.extract_strided_slice %160 {offsets = [0, 0], sizes = [2, 16], strides = [1, 1]} : vector<2x48xf32> to vector<2x16xf32>
    %168 = vector.extract_strided_slice %166 {offsets = [0, 0], sizes = [2, 16], strides = [1, 1]} : vector<2x48xf32> to vector<2x16xf32>
    %169 = arith.addf %167, %168 : vector<2x16xf32>
    %170 = arith.negf %169 : vector<2x16xf32>
    %171 = math.exp %170 : vector<2x16xf32>
    %cst_60 = arith.constant 1.000000e+00 : f32
    %172 = vector.broadcast %cst_60 : f32 to vector<2x16xf32>
    %173 = arith.addf %172, %171 : vector<2x16xf32>
    %174 = arith.divf %172, %173 : vector<2x16xf32>
    %175 = vector.extract_strided_slice %160 {offsets = [0, 16], sizes = [2, 16], strides = [1, 1]} : vector<2x48xf32> to vector<2x16xf32>
    %176 = vector.extract_strided_slice %166 {offsets = [0, 16], sizes = [2, 16], strides = [1, 1]} : vector<2x48xf32> to vector<2x16xf32>
    %177 = arith.addf %175, %176 : vector<2x16xf32>
    %178 = arith.negf %177 : vector<2x16xf32>
    %179 = math.exp %178 : vector<2x16xf32>
    %cst_61 = arith.constant 1.000000e+00 : f32
    %180 = vector.broadcast %cst_61 : f32 to vector<2x16xf32>
    %181 = arith.addf %180, %179 : vector<2x16xf32>
    %182 = arith.divf %180, %181 : vector<2x16xf32>
    %183 = vector.extract_strided_slice %160 {offsets = [0, 32], sizes = [2, 16], strides = [1, 1]} : vector<2x48xf32> to vector<2x16xf32>
    %184 = vector.extract_strided_slice %166 {offsets = [0, 32], sizes = [2, 16], strides = [1, 1]} : vector<2x48xf32> to vector<2x16xf32>
    %185 = arith.mulf %174, %184 : vector<2x16xf32>
    %186 = arith.addf %183, %185 : vector<2x16xf32>
    %187 = math.tanh %186 : vector<2x16xf32>
    %cst_62 = arith.constant 1.000000e+00 : f32
    %188 = vector.broadcast %cst_62 : f32 to vector<2x16xf32>
    %189 = arith.subf %188, %182 : vector<2x16xf32>
    %190 = arith.mulf %189, %187 : vector<2x16xf32>
    %191 = arith.mulf %182, %113 : vector<2x16xf32>
    %192 = arith.addf %190, %191 : vector<2x16xf32>
    %193 = vector.broadcast %123 : vector<2x1xf32> to vector<2x16xf32>
    %194 = arith.mulf %193, %159 : vector<2x16xf32>
    %195 = arith.index_cast %c1_i32 : i32 to index
    %c0_63 = arith.constant 0 : index
    %c0_64 = arith.constant 0 : index
    %196 = vector.load %arg8[%195, %c0_63, %c0_64] : memref<8x2x16xf32, #tpu.memory_space<vmem>>, vector<1x2x16xf32>
    %197 = vector.shape_cast %196 : vector<1x2x16xf32> to vector<2x16xf32>
    %198 = vector.shape_cast %194 : vector<2x16xf32> to vector<1x2x16xf32>
    tpu.vector_store %arg8[%195, %c0_63, %c0_64], %198 {strides = array<i32>} : memref<8x2x16xf32, #tpu.memory_space<vmem>>, vector<1x2x16xf32>,
    %199 = vector.broadcast %126 : vector<2x1xf32> to vector<2x16xf32>
    %200 = arith.mulf %199, %192 : vector<2x16xf32>
    %201 = arith.index_cast %114 : i32 to index
    %c0_65 = arith.constant 0 : index
    %c0_66 = arith.constant 0 : index
    %202 = vector.load %arg9[%201, %c0_65, %c0_66] : memref<8x2x16xf32, #tpu.memory_space<vmem>>, vector<1x2x16xf32>
    %203 = vector.shape_cast %202 : vector<1x2x16xf32> to vector<2x16xf32>
    %204 = vector.shape_cast %200 : vector<2x16xf32> to vector<1x2x16xf32>
    tpu.vector_store %arg9[%201, %c0_65, %c0_66], %204 {strides = array<i32>} : memref<8x2x16xf32, #tpu.memory_space<vmem>>, vector<1x2x16xf32>,
    %205 = vector.broadcast %123 : vector<2x1xf32> to vector<2x16xf32>
    %206 = arith.mulf %205, %159 : vector<2x16xf32>
    %cst_67 = arith.constant 1.000000e+00 : f32
    %207 = vector.broadcast %cst_67 : f32 to vector<2x1xf32>
    %208 = arith.subf %207, %123 : vector<2x1xf32>
    %209 = vector.broadcast %208 : vector<2x1xf32> to vector<2x16xf32>
    %210 = arith.mulf %209, %106 : vector<2x16xf32>
    %211 = arith.addf %206, %210 : vector<2x16xf32>
    %212 = vector.broadcast %126 : vector<2x1xf32> to vector<2x16xf32>
    %213 = arith.mulf %212, %192 : vector<2x16xf32>
    %cst_68 = arith.constant 1.000000e+00 : f32
    %214 = vector.broadcast %cst_68 : f32 to vector<2x1xf32>
    %215 = arith.subf %214, %126 : vector<2x1xf32>
    %216 = vector.broadcast %215 : vector<2x1xf32> to vector<2x16xf32>
    %217 = arith.mulf %216, %113 : vector<2x16xf32>
    %218 = arith.addf %213, %217 : vector<2x16xf32>
    %c2_i32_69 = arith.constant 2 : i32
    %c7_i32_70 = arith.constant 7 : i32
    %219 = arith.subi %c7_i32_70, %c2_i32_69 : i32
    %c2_i32_71 = arith.constant 2 : i32
    %220 = arith.muli %c2_i32_69, %c2_i32_71 : i32
    %221 = arith.index_cast %220 : i32 to index
    %c0_72 = arith.constant 0 : index
    %222 = vector.load %arg12[%221, %c0_72] : memref<16x96xf32, #tpu.memory_space<vmem>>, vector<2x96xf32>
    %c2_i32_73 = arith.constant 2 : i32
    %223 = arith.muli %219, %c2_i32_73 : i32
    %224 = arith.index_cast %223 : i32 to index
    %c0_74 = arith.constant 0 : index
    %225 = vector.load %arg12[%224, %c0_74] : memref<16x96xf32, #tpu.memory_space<vmem>>, vector<2x96xf32>
    %226 = arith.index_cast %c2_i32_69 : i32 to index
    %c0_75 = arith.constant 0 : index
    %c0_76 = arith.constant 0 : index
    %227 = vector.load %arg1[%226, %c0_75, %c0_76] : memref<8x2x1xf32, #tpu.memory_space<vmem>>, vector<1x2x1xf32>
    %228 = vector.shape_cast %227 : vector<1x2x1xf32> to vector<2x1xf32>
    %229 = arith.index_cast %219 : i32 to index
    %c0_77 = arith.constant 0 : index
    %c0_78 = arith.constant 0 : index
    %230 = vector.load %arg1[%229, %c0_77, %c0_78] : memref<8x2x1xf32, #tpu.memory_space<vmem>>, vector<1x2x1xf32>
    %231 = vector.shape_cast %230 : vector<1x2x1xf32> to vector<2x1xf32>
    %232 = vector.extract_strided_slice %222 {offsets = [0, 0], sizes = [2, 48], strides = [1, 1]} : vector<2x96xf32> to vector<2x48xf32>
    %233 = arith.truncf %211 : vector<2x16xf32> to vector<2x16xbf16>
    %c0_79 = arith.constant 0 : index
    %c0_80 = arith.constant 0 : index
    %234 = vector.load %arg4[%c0_79, %c0_80] : memref<16x48xbf16, #tpu.memory_space<vmem>>, vector<16x48xbf16>
    %cst_81 = arith.constant dense<0.000000e+00> : vector<2x48xf32>
    %235 = tpu.matmul %233, %234, %cst_81 {dimension_numbers = #tpu.dot_dimension_numbers<[1], [0], [0], [1], [0, 0, 1, 1], [], []>} : vector<2x16xbf16>, vector<16x48xbf16>, vector<2x48xf32> -> vector<2x48xf32>
    %c0_82 = arith.constant 0 : index
    %c0_83 = arith.constant 0 : index
    %236 = vector.load %arg5[%c0_82, %c0_83] : memref<1x48xf32, #tpu.memory_space<vmem>>, vector<1x48xf32>
    %237 = vector.broadcast %236 : vector<1x48xf32> to vector<2x48xf32>
    %238 = arith.addf %235, %237 : vector<2x48xf32>
    %239 = vector.extract_strided_slice %232 {offsets = [0, 0], sizes = [2, 16], strides = [1, 1]} : vector<2x48xf32> to vector<2x16xf32>
    %240 = vector.extract_strided_slice %238 {offsets = [0, 0], sizes = [2, 16], strides = [1, 1]} : vector<2x48xf32> to vector<2x16xf32>
    %241 = arith.addf %239, %240 : vector<2x16xf32>
    %242 = arith.negf %241 : vector<2x16xf32>
    %243 = math.exp %242 : vector<2x16xf32>
    %cst_84 = arith.constant 1.000000e+00 : f32
    %244 = vector.broadcast %cst_84 : f32 to vector<2x16xf32>
    %245 = arith.addf %244, %243 : vector<2x16xf32>
    %246 = arith.divf %244, %245 : vector<2x16xf32>
    %247 = vector.extract_strided_slice %232 {offsets = [0, 16], sizes = [2, 16], strides = [1, 1]} : vector<2x48xf32> to vector<2x16xf32>
    %248 = vector.extract_strided_slice %238 {offsets = [0, 16], sizes = [2, 16], strides = [1, 1]} : vector<2x48xf32> to vector<2x16xf32>
    %249 = arith.addf %247, %248 : vector<2x16xf32>
    %250 = arith.negf %249 : vector<2x16xf32>
    %251 = math.exp %250 : vector<2x16xf32>
    %cst_85 = arith.constant 1.000000e+00 : f32
    %252 = vector.broadcast %cst_85 : f32 to vector<2x16xf32>
    %253 = arith.addf %252, %251 : vector<2x16xf32>
    %254 = arith.divf %252, %253 : vector<2x16xf32>
    %255 = vector.extract_strided_slice %232 {offsets = [0, 32], sizes = [2, 16], strides = [1, 1]} : vector<2x48xf32> to vector<2x16xf32>
    %256 = vector.extract_strided_slice %238 {offsets = [0, 32], sizes = [2, 16], strides = [1, 1]} : vector<2x48xf32> to vector<2x16xf32>
    %257 = arith.mulf %246, %256 : vector<2x16xf32>
    %258 = arith.addf %255, %257 : vector<2x16xf32>
    %259 = math.tanh %258 : vector<2x16xf32>
    %cst_86 = arith.constant 1.000000e+00 : f32
    %260 = vector.broadcast %cst_86 : f32 to vector<2x16xf32>
    %261 = arith.subf %260, %254 : vector<2x16xf32>
    %262 = arith.mulf %261, %259 : vector<2x16xf32>
    %263 = arith.mulf %254, %211 : vector<2x16xf32>
    %264 = arith.addf %262, %263 : vector<2x16xf32>
    %265 = vector.extract_strided_slice %225 {offsets = [0, 48], sizes = [2, 48], strides = [1, 1]} : vector<2x96xf32> to vector<2x48xf32>
    %266 = arith.truncf %218 : vector<2x16xf32> to vector<2x16xbf16>
    %c0_87 = arith.constant 0 : index
    %c0_88 = arith.constant 0 : index
    %267 = vector.load %arg6[%c0_87, %c0_88] : memref<16x48xbf16, #tpu.memory_space<vmem>>, vector<16x48xbf16>
    %cst_89 = arith.constant dense<0.000000e+00> : vector<2x48xf32>
    %268 = tpu.matmul %266, %267, %cst_89 {dimension_numbers = #tpu.dot_dimension_numbers<[1], [0], [0], [1], [0, 0, 1, 1], [], []>} : vector<2x16xbf16>, vector<16x48xbf16>, vector<2x48xf32> -> vector<2x48xf32>
    %c0_90 = arith.constant 0 : index
    %c0_91 = arith.constant 0 : index
    %269 = vector.load %arg7[%c0_90, %c0_91] : memref<1x48xf32, #tpu.memory_space<vmem>>, vector<1x48xf32>
    %270 = vector.broadcast %269 : vector<1x48xf32> to vector<2x48xf32>
    %271 = arith.addf %268, %270 : vector<2x48xf32>
    %272 = vector.extract_strided_slice %265 {offsets = [0, 0], sizes = [2, 16], strides = [1, 1]} : vector<2x48xf32> to vector<2x16xf32>
    %273 = vector.extract_strided_slice %271 {offsets = [0, 0], sizes = [2, 16], strides = [1, 1]} : vector<2x48xf32> to vector<2x16xf32>
    %274 = arith.addf %272, %273 : vector<2x16xf32>
    %275 = arith.negf %274 : vector<2x16xf32>
    %276 = math.exp %275 : vector<2x16xf32>
    %cst_92 = arith.constant 1.000000e+00 : f32
    %277 = vector.broadcast %cst_92 : f32 to vector<2x16xf32>
    %278 = arith.addf %277, %276 : vector<2x16xf32>
    %279 = arith.divf %277, %278 : vector<2x16xf32>
    %280 = vector.extract_strided_slice %265 {offsets = [0, 16], sizes = [2, 16], strides = [1, 1]} : vector<2x48xf32> to vector<2x16xf32>
    %281 = vector.extract_strided_slice %271 {offsets = [0, 16], sizes = [2, 16], strides = [1, 1]} : vector<2x48xf32> to vector<2x16xf32>
    %282 = arith.addf %280, %281 : vector<2x16xf32>
    %283 = arith.negf %282 : vector<2x16xf32>
    %284 = math.exp %283 : vector<2x16xf32>
    %cst_93 = arith.constant 1.000000e+00 : f32
    %285 = vector.broadcast %cst_93 : f32 to vector<2x16xf32>
    %286 = arith.addf %285, %284 : vector<2x16xf32>
    %287 = arith.divf %285, %286 : vector<2x16xf32>
    %288 = vector.extract_strided_slice %265 {offsets = [0, 32], sizes = [2, 16], strides = [1, 1]} : vector<2x48xf32> to vector<2x16xf32>
    %289 = vector.extract_strided_slice %271 {offsets = [0, 32], sizes = [2, 16], strides = [1, 1]} : vector<2x48xf32> to vector<2x16xf32>
    %290 = arith.mulf %279, %289 : vector<2x16xf32>
    %291 = arith.addf %288, %290 : vector<2x16xf32>
    %292 = math.tanh %291 : vector<2x16xf32>
    %cst_94 = arith.constant 1.000000e+00 : f32
    %293 = vector.broadcast %cst_94 : f32 to vector<2x16xf32>
    %294 = arith.subf %293, %287 : vector<2x16xf32>
    %295 = arith.mulf %294, %292 : vector<2x16xf32>
    %296 = arith.mulf %287, %218 : vector<2x16xf32>
    %297 = arith.addf %295, %296 : vector<2x16xf32>
    %298 = vector.broadcast %228 : vector<2x1xf32> to vector<2x16xf32>
    %299 = arith.mulf %298, %264 : vector<2x16xf32>
    %300 = arith.index_cast %c2_i32_69 : i32 to index
    %c0_95 = arith.constant 0 : index
    %c0_96 = arith.constant 0 : index
    %301 = vector.load %arg8[%300, %c0_95, %c0_96] : memref<8x2x16xf32, #tpu.memory_space<vmem>>, vector<1x2x16xf32>
    %302 = vector.shape_cast %301 : vector<1x2x16xf32> to vector<2x16xf32>
    %303 = vector.shape_cast %299 : vector<2x16xf32> to vector<1x2x16xf32>
    tpu.vector_store %arg8[%300, %c0_95, %c0_96], %303 {strides = array<i32>} : memref<8x2x16xf32, #tpu.memory_space<vmem>>, vector<1x2x16xf32>,
    %304 = vector.broadcast %231 : vector<2x1xf32> to vector<2x16xf32>
    %305 = arith.mulf %304, %297 : vector<2x16xf32>
    %306 = arith.index_cast %219 : i32 to index
    %c0_97 = arith.constant 0 : index
    %c0_98 = arith.constant 0 : index
    %307 = vector.load %arg9[%306, %c0_97, %c0_98] : memref<8x2x16xf32, #tpu.memory_space<vmem>>, vector<1x2x16xf32>
    %308 = vector.shape_cast %307 : vector<1x2x16xf32> to vector<2x16xf32>
    %309 = vector.shape_cast %305 : vector<2x16xf32> to vector<1x2x16xf32>
    tpu.vector_store %arg9[%306, %c0_97, %c0_98], %309 {strides = array<i32>} : memref<8x2x16xf32, #tpu.memory_space<vmem>>, vector<1x2x16xf32>,
    %310 = vector.broadcast %228 : vector<2x1xf32> to vector<2x16xf32>
    %311 = arith.mulf %310, %264 : vector<2x16xf32>
    %cst_99 = arith.constant 1.000000e+00 : f32
    %312 = vector.broadcast %cst_99 : f32 to vector<2x1xf32>
    %313 = arith.subf %312, %228 : vector<2x1xf32>
    %314 = vector.broadcast %313 : vector<2x1xf32> to vector<2x16xf32>
    %315 = arith.mulf %314, %211 : vector<2x16xf32>
    %316 = arith.addf %311, %315 : vector<2x16xf32>
    %317 = vector.broadcast %231 : vector<2x1xf32> to vector<2x16xf32>
    %318 = arith.mulf %317, %297 : vector<2x16xf32>
    %cst_100 = arith.constant 1.000000e+00 : f32
    %319 = vector.broadcast %cst_100 : f32 to vector<2x1xf32>
    %320 = arith.subf %319, %231 : vector<2x1xf32>
    %321 = vector.broadcast %320 : vector<2x1xf32> to vector<2x16xf32>
    %322 = arith.mulf %321, %218 : vector<2x16xf32>
    %323 = arith.addf %318, %322 : vector<2x16xf32>
    %c3_i32 = arith.constant 3 : i32
    %c7_i32_101 = arith.constant 7 : i32
    %324 = arith.subi %c7_i32_101, %c3_i32 : i32
    %c2_i32_102 = arith.constant 2 : i32
    %325 = arith.muli %c3_i32, %c2_i32_102 : i32
    %326 = arith.index_cast %325 : i32 to index
    %c0_103 = arith.constant 0 : index
    %327 = vector.load %arg12[%326, %c0_103] : memref<16x96xf32, #tpu.memory_space<vmem>>, vector<2x96xf32>
    %c2_i32_104 = arith.constant 2 : i32
    %328 = arith.muli %324, %c2_i32_104 : i32
    %329 = arith.index_cast %328 : i32 to index
    %c0_105 = arith.constant 0 : index
    %330 = vector.load %arg12[%329, %c0_105] : memref<16x96xf32, #tpu.memory_space<vmem>>, vector<2x96xf32>
    %331 = arith.index_cast %c3_i32 : i32 to index
    %c0_106 = arith.constant 0 : index
    %c0_107 = arith.constant 0 : index
    %332 = vector.load %arg1[%331, %c0_106, %c0_107] : memref<8x2x1xf32, #tpu.memory_space<vmem>>, vector<1x2x1xf32>
    %333 = vector.shape_cast %332 : vector<1x2x1xf32> to vector<2x1xf32>
    %334 = arith.index_cast %324 : i32 to index
    %c0_108 = arith.constant 0 : index
    %c0_109 = arith.constant 0 : index
    %335 = vector.load %arg1[%334, %c0_108, %c0_109] : memref<8x2x1xf32, #tpu.memory_space<vmem>>, vector<1x2x1xf32>
    %336 = vector.shape_cast %335 : vector<1x2x1xf32> to vector<2x1xf32>
    %337 = vector.extract_strided_slice %327 {offsets = [0, 0], sizes = [2, 48], strides = [1, 1]} : vector<2x96xf32> to vector<2x48xf32>
    %338 = arith.truncf %316 : vector<2x16xf32> to vector<2x16xbf16>
    %c0_110 = arith.constant 0 : index
    %c0_111 = arith.constant 0 : index
    %339 = vector.load %arg4[%c0_110, %c0_111] : memref<16x48xbf16, #tpu.memory_space<vmem>>, vector<16x48xbf16>
    %cst_112 = arith.constant dense<0.000000e+00> : vector<2x48xf32>
    %340 = tpu.matmul %338, %339, %cst_112 {dimension_numbers = #tpu.dot_dimension_numbers<[1], [0], [0], [1], [0, 0, 1, 1], [], []>} : vector<2x16xbf16>, vector<16x48xbf16>, vector<2x48xf32> -> vector<2x48xf32>
    %c0_113 = arith.constant 0 : index
    %c0_114 = arith.constant 0 : index
    %341 = vector.load %arg5[%c0_113, %c0_114] : memref<1x48xf32, #tpu.memory_space<vmem>>, vector<1x48xf32>
    %342 = vector.broadcast %341 : vector<1x48xf32> to vector<2x48xf32>
    %343 = arith.addf %340, %342 : vector<2x48xf32>
    %344 = vector.extract_strided_slice %337 {offsets = [0, 0], sizes = [2, 16], strides = [1, 1]} : vector<2x48xf32> to vector<2x16xf32>
    %345 = vector.extract_strided_slice %343 {offsets = [0, 0], sizes = [2, 16], strides = [1, 1]} : vector<2x48xf32> to vector<2x16xf32>
    %346 = arith.addf %344, %345 : vector<2x16xf32>
    %347 = arith.negf %346 : vector<2x16xf32>
    %348 = math.exp %347 : vector<2x16xf32>
    %cst_115 = arith.constant 1.000000e+00 : f32
    %349 = vector.broadcast %cst_115 : f32 to vector<2x16xf32>
    %350 = arith.addf %349, %348 : vector<2x16xf32>
    %351 = arith.divf %349, %350 : vector<2x16xf32>
    %352 = vector.extract_strided_slice %337 {offsets = [0, 16], sizes = [2, 16], strides = [1, 1]} : vector<2x48xf32> to vector<2x16xf32>
    %353 = vector.extract_strided_slice %343 {offsets = [0, 16], sizes = [2, 16], strides = [1, 1]} : vector<2x48xf32> to vector<2x16xf32>
    %354 = arith.addf %352, %353 : vector<2x16xf32>
    %355 = arith.negf %354 : vector<2x16xf32>
    %356 = math.exp %355 : vector<2x16xf32>
    %cst_116 = arith.constant 1.000000e+00 : f32
    %357 = vector.broadcast %cst_116 : f32 to vector<2x16xf32>
    %358 = arith.addf %357, %356 : vector<2x16xf32>
    %359 = arith.divf %357, %358 : vector<2x16xf32>
    %360 = vector.extract_strided_slice %337 {offsets = [0, 32], sizes = [2, 16], strides = [1, 1]} : vector<2x48xf32> to vector<2x16xf32>
    %361 = vector.extract_strided_slice %343 {offsets = [0, 32], sizes = [2, 16], strides = [1, 1]} : vector<2x48xf32> to vector<2x16xf32>
    %362 = arith.mulf %351, %361 : vector<2x16xf32>
    %363 = arith.addf %360, %362 : vector<2x16xf32>
    %364 = math.tanh %363 : vector<2x16xf32>
    %cst_117 = arith.constant 1.000000e+00 : f32
    %365 = vector.broadcast %cst_117 : f32 to vector<2x16xf32>
    %366 = arith.subf %365, %359 : vector<2x16xf32>
    %367 = arith.mulf %366, %364 : vector<2x16xf32>
    %368 = arith.mulf %359, %316 : vector<2x16xf32>
    %369 = arith.addf %367, %368 : vector<2x16xf32>
    %370 = vector.extract_strided_slice %330 {offsets = [0, 48], sizes = [2, 48], strides = [1, 1]} : vector<2x96xf32> to vector<2x48xf32>
    %371 = arith.truncf %323 : vector<2x16xf32> to vector<2x16xbf16>
    %c0_118 = arith.constant 0 : index
    %c0_119 = arith.constant 0 : index
    %372 = vector.load %arg6[%c0_118, %c0_119] : memref<16x48xbf16, #tpu.memory_space<vmem>>, vector<16x48xbf16>
    %cst_120 = arith.constant dense<0.000000e+00> : vector<2x48xf32>
    %373 = tpu.matmul %371, %372, %cst_120 {dimension_numbers = #tpu.dot_dimension_numbers<[1], [0], [0], [1], [0, 0, 1, 1], [], []>} : vector<2x16xbf16>, vector<16x48xbf16>, vector<2x48xf32> -> vector<2x48xf32>
    %c0_121 = arith.constant 0 : index
    %c0_122 = arith.constant 0 : index
    %374 = vector.load %arg7[%c0_121, %c0_122] : memref<1x48xf32, #tpu.memory_space<vmem>>, vector<1x48xf32>
    %375 = vector.broadcast %374 : vector<1x48xf32> to vector<2x48xf32>
    %376 = arith.addf %373, %375 : vector<2x48xf32>
    %377 = vector.extract_strided_slice %370 {offsets = [0, 0], sizes = [2, 16], strides = [1, 1]} : vector<2x48xf32> to vector<2x16xf32>
    %378 = vector.extract_strided_slice %376 {offsets = [0, 0], sizes = [2, 16], strides = [1, 1]} : vector<2x48xf32> to vector<2x16xf32>
    %379 = arith.addf %377, %378 : vector<2x16xf32>
    %380 = arith.negf %379 : vector<2x16xf32>
    %381 = math.exp %380 : vector<2x16xf32>
    %cst_123 = arith.constant 1.000000e+00 : f32
    %382 = vector.broadcast %cst_123 : f32 to vector<2x16xf32>
    %383 = arith.addf %382, %381 : vector<2x16xf32>
    %384 = arith.divf %382, %383 : vector<2x16xf32>
    %385 = vector.extract_strided_slice %370 {offsets = [0, 16], sizes = [2, 16], strides = [1, 1]} : vector<2x48xf32> to vector<2x16xf32>
    %386 = vector.extract_strided_slice %376 {offsets = [0, 16], sizes = [2, 16], strides = [1, 1]} : vector<2x48xf32> to vector<2x16xf32>
    %387 = arith.addf %385, %386 : vector<2x16xf32>
    %388 = arith.negf %387 : vector<2x16xf32>
    %389 = math.exp %388 : vector<2x16xf32>
    %cst_124 = arith.constant 1.000000e+00 : f32
    %390 = vector.broadcast %cst_124 : f32 to vector<2x16xf32>
    %391 = arith.addf %390, %389 : vector<2x16xf32>
    %392 = arith.divf %390, %391 : vector<2x16xf32>
    %393 = vector.extract_strided_slice %370 {offsets = [0, 32], sizes = [2, 16], strides = [1, 1]} : vector<2x48xf32> to vector<2x16xf32>
    %394 = vector.extract_strided_slice %376 {offsets = [0, 32], sizes = [2, 16], strides = [1, 1]} : vector<2x48xf32> to vector<2x16xf32>
    %395 = arith.mulf %384, %394 : vector<2x16xf32>
    %396 = arith.addf %393, %395 : vector<2x16xf32>
    %397 = math.tanh %396 : vector<2x16xf32>
    %cst_125 = arith.constant 1.000000e+00 : f32
    %398 = vector.broadcast %cst_125 : f32 to vector<2x16xf32>
    %399 = arith.subf %398, %392 : vector<2x16xf32>
    %400 = arith.mulf %399, %397 : vector<2x16xf32>
    %401 = arith.mulf %392, %323 : vector<2x16xf32>
    %402 = arith.addf %400, %401 : vector<2x16xf32>
    %403 = vector.broadcast %333 : vector<2x1xf32> to vector<2x16xf32>
    %404 = arith.mulf %403, %369 : vector<2x16xf32>
    %405 = arith.index_cast %c3_i32 : i32 to index
    %c0_126 = arith.constant 0 : index
    %c0_127 = arith.constant 0 : index
    %406 = vector.load %arg8[%405, %c0_126, %c0_127] : memref<8x2x16xf32, #tpu.memory_space<vmem>>, vector<1x2x16xf32>
    %407 = vector.shape_cast %406 : vector<1x2x16xf32> to vector<2x16xf32>
    %408 = vector.shape_cast %404 : vector<2x16xf32> to vector<1x2x16xf32>
    tpu.vector_store %arg8[%405, %c0_126, %c0_127], %408 {strides = array<i32>} : memref<8x2x16xf32, #tpu.memory_space<vmem>>, vector<1x2x16xf32>,
    %409 = vector.broadcast %336 : vector<2x1xf32> to vector<2x16xf32>
    %410 = arith.mulf %409, %402 : vector<2x16xf32>
    %411 = arith.index_cast %324 : i32 to index
    %c0_128 = arith.constant 0 : index
    %c0_129 = arith.constant 0 : index
    %412 = vector.load %arg9[%411, %c0_128, %c0_129] : memref<8x2x16xf32, #tpu.memory_space<vmem>>, vector<1x2x16xf32>
    %413 = vector.shape_cast %412 : vector<1x2x16xf32> to vector<2x16xf32>
    %414 = vector.shape_cast %410 : vector<2x16xf32> to vector<1x2x16xf32>
    tpu.vector_store %arg9[%411, %c0_128, %c0_129], %414 {strides = array<i32>} : memref<8x2x16xf32, #tpu.memory_space<vmem>>, vector<1x2x16xf32>,
    %415 = vector.broadcast %333 : vector<2x1xf32> to vector<2x16xf32>
    %416 = arith.mulf %415, %369 : vector<2x16xf32>
    %cst_130 = arith.constant 1.000000e+00 : f32
    %417 = vector.broadcast %cst_130 : f32 to vector<2x1xf32>
    %418 = arith.subf %417, %333 : vector<2x1xf32>
    %419 = vector.broadcast %418 : vector<2x1xf32> to vector<2x16xf32>
    %420 = arith.mulf %419, %316 : vector<2x16xf32>
    %421 = arith.addf %416, %420 : vector<2x16xf32>
    %422 = vector.broadcast %336 : vector<2x1xf32> to vector<2x16xf32>
    %423 = arith.mulf %422, %402 : vector<2x16xf32>
    %cst_131 = arith.constant 1.000000e+00 : f32
    %424 = vector.broadcast %cst_131 : f32 to vector<2x1xf32>
    %425 = arith.subf %424, %336 : vector<2x1xf32>
    %426 = vector.broadcast %425 : vector<2x1xf32> to vector<2x16xf32>
    %427 = arith.mulf %426, %323 : vector<2x16xf32>
    %428 = arith.addf %423, %427 : vector<2x16xf32>
    %c4_i32 = arith.constant 4 : i32
    %c7_i32_132 = arith.constant 7 : i32
    %429 = arith.subi %c7_i32_132, %c4_i32 : i32
    %c2_i32_133 = arith.constant 2 : i32
    %430 = arith.muli %c4_i32, %c2_i32_133 : i32
    %431 = arith.index_cast %430 : i32 to index
    %c0_134 = arith.constant 0 : index
    %432 = vector.load %arg12[%431, %c0_134] : memref<16x96xf32, #tpu.memory_space<vmem>>, vector<2x96xf32>
    %c2_i32_135 = arith.constant 2 : i32
    %433 = arith.muli %429, %c2_i32_135 : i32
    %434 = arith.index_cast %433 : i32 to index
    %c0_136 = arith.constant 0 : index
    %435 = vector.load %arg12[%434, %c0_136] : memref<16x96xf32, #tpu.memory_space<vmem>>, vector<2x96xf32>
    %436 = arith.index_cast %c4_i32 : i32 to index
    %c0_137 = arith.constant 0 : index
    %c0_138 = arith.constant 0 : index
    %437 = vector.load %arg1[%436, %c0_137, %c0_138] : memref<8x2x1xf32, #tpu.memory_space<vmem>>, vector<1x2x1xf32>
    %438 = vector.shape_cast %437 : vector<1x2x1xf32> to vector<2x1xf32>
    %439 = arith.index_cast %429 : i32 to index
    %c0_139 = arith.constant 0 : index
    %c0_140 = arith.constant 0 : index
    %440 = vector.load %arg1[%439, %c0_139, %c0_140] : memref<8x2x1xf32, #tpu.memory_space<vmem>>, vector<1x2x1xf32>
    %441 = vector.shape_cast %440 : vector<1x2x1xf32> to vector<2x1xf32>
    %442 = vector.extract_strided_slice %432 {offsets = [0, 0], sizes = [2, 48], strides = [1, 1]} : vector<2x96xf32> to vector<2x48xf32>
    %443 = arith.truncf %421 : vector<2x16xf32> to vector<2x16xbf16>
    %c0_141 = arith.constant 0 : index
    %c0_142 = arith.constant 0 : index
    %444 = vector.load %arg4[%c0_141, %c0_142] : memref<16x48xbf16, #tpu.memory_space<vmem>>, vector<16x48xbf16>
    %cst_143 = arith.constant dense<0.000000e+00> : vector<2x48xf32>
    %445 = tpu.matmul %443, %444, %cst_143 {dimension_numbers = #tpu.dot_dimension_numbers<[1], [0], [0], [1], [0, 0, 1, 1], [], []>} : vector<2x16xbf16>, vector<16x48xbf16>, vector<2x48xf32> -> vector<2x48xf32>
    %c0_144 = arith.constant 0 : index
    %c0_145 = arith.constant 0 : index
    %446 = vector.load %arg5[%c0_144, %c0_145] : memref<1x48xf32, #tpu.memory_space<vmem>>, vector<1x48xf32>
    %447 = vector.broadcast %446 : vector<1x48xf32> to vector<2x48xf32>
    %448 = arith.addf %445, %447 : vector<2x48xf32>
    %449 = vector.extract_strided_slice %442 {offsets = [0, 0], sizes = [2, 16], strides = [1, 1]} : vector<2x48xf32> to vector<2x16xf32>
    %450 = vector.extract_strided_slice %448 {offsets = [0, 0], sizes = [2, 16], strides = [1, 1]} : vector<2x48xf32> to vector<2x16xf32>
    %451 = arith.addf %449, %450 : vector<2x16xf32>
    %452 = arith.negf %451 : vector<2x16xf32>
    %453 = math.exp %452 : vector<2x16xf32>
    %cst_146 = arith.constant 1.000000e+00 : f32
    %454 = vector.broadcast %cst_146 : f32 to vector<2x16xf32>
    %455 = arith.addf %454, %453 : vector<2x16xf32>
    %456 = arith.divf %454, %455 : vector<2x16xf32>
    %457 = vector.extract_strided_slice %442 {offsets = [0, 16], sizes = [2, 16], strides = [1, 1]} : vector<2x48xf32> to vector<2x16xf32>
    %458 = vector.extract_strided_slice %448 {offsets = [0, 16], sizes = [2, 16], strides = [1, 1]} : vector<2x48xf32> to vector<2x16xf32>
    %459 = arith.addf %457, %458 : vector<2x16xf32>
    %460 = arith.negf %459 : vector<2x16xf32>
    %461 = math.exp %460 : vector<2x16xf32>
    %cst_147 = arith.constant 1.000000e+00 : f32
    %462 = vector.broadcast %cst_147 : f32 to vector<2x16xf32>
    %463 = arith.addf %462, %461 : vector<2x16xf32>
    %464 = arith.divf %462, %463 : vector<2x16xf32>
    %465 = vector.extract_strided_slice %442 {offsets = [0, 32], sizes = [2, 16], strides = [1, 1]} : vector<2x48xf32> to vector<2x16xf32>
    %466 = vector.extract_strided_slice %448 {offsets = [0, 32], sizes = [2, 16], strides = [1, 1]} : vector<2x48xf32> to vector<2x16xf32>
    %467 = arith.mulf %456, %466 : vector<2x16xf32>
    %468 = arith.addf %465, %467 : vector<2x16xf32>
    %469 = math.tanh %468 : vector<2x16xf32>
    %cst_148 = arith.constant 1.000000e+00 : f32
    %470 = vector.broadcast %cst_148 : f32 to vector<2x16xf32>
    %471 = arith.subf %470, %464 : vector<2x16xf32>
    %472 = arith.mulf %471, %469 : vector<2x16xf32>
    %473 = arith.mulf %464, %421 : vector<2x16xf32>
    %474 = arith.addf %472, %473 : vector<2x16xf32>
    %475 = vector.extract_strided_slice %435 {offsets = [0, 48], sizes = [2, 48], strides = [1, 1]} : vector<2x96xf32> to vector<2x48xf32>
    %476 = arith.truncf %428 : vector<2x16xf32> to vector<2x16xbf16>
    %c0_149 = arith.constant 0 : index
    %c0_150 = arith.constant 0 : index
    %477 = vector.load %arg6[%c0_149, %c0_150] : memref<16x48xbf16, #tpu.memory_space<vmem>>, vector<16x48xbf16>
    %cst_151 = arith.constant dense<0.000000e+00> : vector<2x48xf32>
    %478 = tpu.matmul %476, %477, %cst_151 {dimension_numbers = #tpu.dot_dimension_numbers<[1], [0], [0], [1], [0, 0, 1, 1], [], []>} : vector<2x16xbf16>, vector<16x48xbf16>, vector<2x48xf32> -> vector<2x48xf32>
    %c0_152 = arith.constant 0 : index
    %c0_153 = arith.constant 0 : index
    %479 = vector.load %arg7[%c0_152, %c0_153] : memref<1x48xf32, #tpu.memory_space<vmem>>, vector<1x48xf32>
    %480 = vector.broadcast %479 : vector<1x48xf32> to vector<2x48xf32>
    %481 = arith.addf %478, %480 : vector<2x48xf32>
    %482 = vector.extract_strided_slice %475 {offsets = [0, 0], sizes = [2, 16], strides = [1, 1]} : vector<2x48xf32> to vector<2x16xf32>
    %483 = vector.extract_strided_slice %481 {offsets = [0, 0], sizes = [2, 16], strides = [1, 1]} : vector<2x48xf32> to vector<2x16xf32>
    %484 = arith.addf %482, %483 : vector<2x16xf32>
    %485 = arith.negf %484 : vector<2x16xf32>
    %486 = math.exp %485 : vector<2x16xf32>
    %cst_154 = arith.constant 1.000000e+00 : f32
    %487 = vector.broadcast %cst_154 : f32 to vector<2x16xf32>
    %488 = arith.addf %487, %486 : vector<2x16xf32>
    %489 = arith.divf %487, %488 : vector<2x16xf32>
    %490 = vector.extract_strided_slice %475 {offsets = [0, 16], sizes = [2, 16], strides = [1, 1]} : vector<2x48xf32> to vector<2x16xf32>
    %491 = vector.extract_strided_slice %481 {offsets = [0, 16], sizes = [2, 16], strides = [1, 1]} : vector<2x48xf32> to vector<2x16xf32>
    %492 = arith.addf %490, %491 : vector<2x16xf32>
    %493 = arith.negf %492 : vector<2x16xf32>
    %494 = math.exp %493 : vector<2x16xf32>
    %cst_155 = arith.constant 1.000000e+00 : f32
    %495 = vector.broadcast %cst_155 : f32 to vector<2x16xf32>
    %496 = arith.addf %495, %494 : vector<2x16xf32>
    %497 = arith.divf %495, %496 : vector<2x16xf32>
    %498 = vector.extract_strided_slice %475 {offsets = [0, 32], sizes = [2, 16], strides = [1, 1]} : vector<2x48xf32> to vector<2x16xf32>
    %499 = vector.extract_strided_slice %481 {offsets = [0, 32], sizes = [2, 16], strides = [1, 1]} : vector<2x48xf32> to vector<2x16xf32>
    %500 = arith.mulf %489, %499 : vector<2x16xf32>
    %501 = arith.addf %498, %500 : vector<2x16xf32>
    %502 = math.tanh %501 : vector<2x16xf32>
    %cst_156 = arith.constant 1.000000e+00 : f32
    %503 = vector.broadcast %cst_156 : f32 to vector<2x16xf32>
    %504 = arith.subf %503, %497 : vector<2x16xf32>
    %505 = arith.mulf %504, %502 : vector<2x16xf32>
    %506 = arith.mulf %497, %428 : vector<2x16xf32>
    %507 = arith.addf %505, %506 : vector<2x16xf32>
    %508 = vector.broadcast %438 : vector<2x1xf32> to vector<2x16xf32>
    %509 = arith.mulf %508, %474 : vector<2x16xf32>
    %510 = arith.index_cast %c4_i32 : i32 to index
    %c0_157 = arith.constant 0 : index
    %c0_158 = arith.constant 0 : index
    %511 = vector.load %arg8[%510, %c0_157, %c0_158] : memref<8x2x16xf32, #tpu.memory_space<vmem>>, vector<1x2x16xf32>
    %512 = vector.shape_cast %511 : vector<1x2x16xf32> to vector<2x16xf32>
    %513 = vector.shape_cast %509 : vector<2x16xf32> to vector<1x2x16xf32>
    tpu.vector_store %arg8[%510, %c0_157, %c0_158], %513 {strides = array<i32>} : memref<8x2x16xf32, #tpu.memory_space<vmem>>, vector<1x2x16xf32>,
    %514 = vector.broadcast %441 : vector<2x1xf32> to vector<2x16xf32>
    %515 = arith.mulf %514, %507 : vector<2x16xf32>
    %516 = arith.index_cast %429 : i32 to index
    %c0_159 = arith.constant 0 : index
    %c0_160 = arith.constant 0 : index
    %517 = vector.load %arg9[%516, %c0_159, %c0_160] : memref<8x2x16xf32, #tpu.memory_space<vmem>>, vector<1x2x16xf32>
    %518 = vector.shape_cast %517 : vector<1x2x16xf32> to vector<2x16xf32>
    %519 = vector.shape_cast %515 : vector<2x16xf32> to vector<1x2x16xf32>
    tpu.vector_store %arg9[%516, %c0_159, %c0_160], %519 {strides = array<i32>} : memref<8x2x16xf32, #tpu.memory_space<vmem>>, vector<1x2x16xf32>,
    %520 = vector.broadcast %438 : vector<2x1xf32> to vector<2x16xf32>
    %521 = arith.mulf %520, %474 : vector<2x16xf32>
    %cst_161 = arith.constant 1.000000e+00 : f32
    %522 = vector.broadcast %cst_161 : f32 to vector<2x1xf32>
    %523 = arith.subf %522, %438 : vector<2x1xf32>
    %524 = vector.broadcast %523 : vector<2x1xf32> to vector<2x16xf32>
    %525 = arith.mulf %524, %421 : vector<2x16xf32>
    %526 = arith.addf %521, %525 : vector<2x16xf32>
    %527 = vector.broadcast %441 : vector<2x1xf32> to vector<2x16xf32>
    %528 = arith.mulf %527, %507 : vector<2x16xf32>
    %cst_162 = arith.constant 1.000000e+00 : f32
    %529 = vector.broadcast %cst_162 : f32 to vector<2x1xf32>
    %530 = arith.subf %529, %441 : vector<2x1xf32>
    %531 = vector.broadcast %530 : vector<2x1xf32> to vector<2x16xf32>
    %532 = arith.mulf %531, %428 : vector<2x16xf32>
    %533 = arith.addf %528, %532 : vector<2x16xf32>
    %c5_i32 = arith.constant 5 : i32
    %c7_i32_163 = arith.constant 7 : i32
    %534 = arith.subi %c7_i32_163, %c5_i32 : i32
    %c2_i32_164 = arith.constant 2 : i32
    %535 = arith.muli %c5_i32, %c2_i32_164 : i32
    %536 = arith.index_cast %535 : i32 to index
    %c0_165 = arith.constant 0 : index
    %537 = vector.load %arg12[%536, %c0_165] : memref<16x96xf32, #tpu.memory_space<vmem>>, vector<2x96xf32>
    %c2_i32_166 = arith.constant 2 : i32
    %538 = arith.muli %534, %c2_i32_166 : i32
    %539 = arith.index_cast %538 : i32 to index
    %c0_167 = arith.constant 0 : index
    %540 = vector.load %arg12[%539, %c0_167] : memref<16x96xf32, #tpu.memory_space<vmem>>, vector<2x96xf32>
    %541 = arith.index_cast %c5_i32 : i32 to index
    %c0_168 = arith.constant 0 : index
    %c0_169 = arith.constant 0 : index
    %542 = vector.load %arg1[%541, %c0_168, %c0_169] : memref<8x2x1xf32, #tpu.memory_space<vmem>>, vector<1x2x1xf32>
    %543 = vector.shape_cast %542 : vector<1x2x1xf32> to vector<2x1xf32>
    %544 = arith.index_cast %534 : i32 to index
    %c0_170 = arith.constant 0 : index
    %c0_171 = arith.constant 0 : index
    %545 = vector.load %arg1[%544, %c0_170, %c0_171] : memref<8x2x1xf32, #tpu.memory_space<vmem>>, vector<1x2x1xf32>
    %546 = vector.shape_cast %545 : vector<1x2x1xf32> to vector<2x1xf32>
    %547 = vector.extract_strided_slice %537 {offsets = [0, 0], sizes = [2, 48], strides = [1, 1]} : vector<2x96xf32> to vector<2x48xf32>
    %548 = arith.truncf %526 : vector<2x16xf32> to vector<2x16xbf16>
    %c0_172 = arith.constant 0 : index
    %c0_173 = arith.constant 0 : index
    %549 = vector.load %arg4[%c0_172, %c0_173] : memref<16x48xbf16, #tpu.memory_space<vmem>>, vector<16x48xbf16>
    %cst_174 = arith.constant dense<0.000000e+00> : vector<2x48xf32>
    %550 = tpu.matmul %548, %549, %cst_174 {dimension_numbers = #tpu.dot_dimension_numbers<[1], [0], [0], [1], [0, 0, 1, 1], [], []>} : vector<2x16xbf16>, vector<16x48xbf16>, vector<2x48xf32> -> vector<2x48xf32>
    %c0_175 = arith.constant 0 : index
    %c0_176 = arith.constant 0 : index
    %551 = vector.load %arg5[%c0_175, %c0_176] : memref<1x48xf32, #tpu.memory_space<vmem>>, vector<1x48xf32>
    %552 = vector.broadcast %551 : vector<1x48xf32> to vector<2x48xf32>
    %553 = arith.addf %550, %552 : vector<2x48xf32>
    %554 = vector.extract_strided_slice %547 {offsets = [0, 0], sizes = [2, 16], strides = [1, 1]} : vector<2x48xf32> to vector<2x16xf32>
    %555 = vector.extract_strided_slice %553 {offsets = [0, 0], sizes = [2, 16], strides = [1, 1]} : vector<2x48xf32> to vector<2x16xf32>
    %556 = arith.addf %554, %555 : vector<2x16xf32>
    %557 = arith.negf %556 : vector<2x16xf32>
    %558 = math.exp %557 : vector<2x16xf32>
    %cst_177 = arith.constant 1.000000e+00 : f32
    %559 = vector.broadcast %cst_177 : f32 to vector<2x16xf32>
    %560 = arith.addf %559, %558 : vector<2x16xf32>
    %561 = arith.divf %559, %560 : vector<2x16xf32>
    %562 = vector.extract_strided_slice %547 {offsets = [0, 16], sizes = [2, 16], strides = [1, 1]} : vector<2x48xf32> to vector<2x16xf32>
    %563 = vector.extract_strided_slice %553 {offsets = [0, 16], sizes = [2, 16], strides = [1, 1]} : vector<2x48xf32> to vector<2x16xf32>
    %564 = arith.addf %562, %563 : vector<2x16xf32>
    %565 = arith.negf %564 : vector<2x16xf32>
    %566 = math.exp %565 : vector<2x16xf32>
    %cst_178 = arith.constant 1.000000e+00 : f32
    %567 = vector.broadcast %cst_178 : f32 to vector<2x16xf32>
    %568 = arith.addf %567, %566 : vector<2x16xf32>
    %569 = arith.divf %567, %568 : vector<2x16xf32>
    %570 = vector.extract_strided_slice %547 {offsets = [0, 32], sizes = [2, 16], strides = [1, 1]} : vector<2x48xf32> to vector<2x16xf32>
    %571 = vector.extract_strided_slice %553 {offsets = [0, 32], sizes = [2, 16], strides = [1, 1]} : vector<2x48xf32> to vector<2x16xf32>
    %572 = arith.mulf %561, %571 : vector<2x16xf32>
    %573 = arith.addf %570, %572 : vector<2x16xf32>
    %574 = math.tanh %573 : vector<2x16xf32>
    %cst_179 = arith.constant 1.000000e+00 : f32
    %575 = vector.broadcast %cst_179 : f32 to vector<2x16xf32>
    %576 = arith.subf %575, %569 : vector<2x16xf32>
    %577 = arith.mulf %576, %574 : vector<2x16xf32>
    %578 = arith.mulf %569, %526 : vector<2x16xf32>
    %579 = arith.addf %577, %578 : vector<2x16xf32>
    %580 = vector.extract_strided_slice %540 {offsets = [0, 48], sizes = [2, 48], strides = [1, 1]} : vector<2x96xf32> to vector<2x48xf32>
    %581 = arith.truncf %533 : vector<2x16xf32> to vector<2x16xbf16>
    %c0_180 = arith.constant 0 : index
    %c0_181 = arith.constant 0 : index
    %582 = vector.load %arg6[%c0_180, %c0_181] : memref<16x48xbf16, #tpu.memory_space<vmem>>, vector<16x48xbf16>
    %cst_182 = arith.constant dense<0.000000e+00> : vector<2x48xf32>
    %583 = tpu.matmul %581, %582, %cst_182 {dimension_numbers = #tpu.dot_dimension_numbers<[1], [0], [0], [1], [0, 0, 1, 1], [], []>} : vector<2x16xbf16>, vector<16x48xbf16>, vector<2x48xf32> -> vector<2x48xf32>
    %c0_183 = arith.constant 0 : index
    %c0_184 = arith.constant 0 : index
    %584 = vector.load %arg7[%c0_183, %c0_184] : memref<1x48xf32, #tpu.memory_space<vmem>>, vector<1x48xf32>
    %585 = vector.broadcast %584 : vector<1x48xf32> to vector<2x48xf32>
    %586 = arith.addf %583, %585 : vector<2x48xf32>
    %587 = vector.extract_strided_slice %580 {offsets = [0, 0], sizes = [2, 16], strides = [1, 1]} : vector<2x48xf32> to vector<2x16xf32>
    %588 = vector.extract_strided_slice %586 {offsets = [0, 0], sizes = [2, 16], strides = [1, 1]} : vector<2x48xf32> to vector<2x16xf32>
    %589 = arith.addf %587, %588 : vector<2x16xf32>
    %590 = arith.negf %589 : vector<2x16xf32>
    %591 = math.exp %590 : vector<2x16xf32>
    %cst_185 = arith.constant 1.000000e+00 : f32
    %592 = vector.broadcast %cst_185 : f32 to vector<2x16xf32>
    %593 = arith.addf %592, %591 : vector<2x16xf32>
    %594 = arith.divf %592, %593 : vector<2x16xf32>
    %595 = vector.extract_strided_slice %580 {offsets = [0, 16], sizes = [2, 16], strides = [1, 1]} : vector<2x48xf32> to vector<2x16xf32>
    %596 = vector.extract_strided_slice %586 {offsets = [0, 16], sizes = [2, 16], strides = [1, 1]} : vector<2x48xf32> to vector<2x16xf32>
    %597 = arith.addf %595, %596 : vector<2x16xf32>
    %598 = arith.negf %597 : vector<2x16xf32>
    %599 = math.exp %598 : vector<2x16xf32>
    %cst_186 = arith.constant 1.000000e+00 : f32
    %600 = vector.broadcast %cst_186 : f32 to vector<2x16xf32>
    %601 = arith.addf %600, %599 : vector<2x16xf32>
    %602 = arith.divf %600, %601 : vector<2x16xf32>
    %603 = vector.extract_strided_slice %580 {offsets = [0, 32], sizes = [2, 16], strides = [1, 1]} : vector<2x48xf32> to vector<2x16xf32>
    %604 = vector.extract_strided_slice %586 {offsets = [0, 32], sizes = [2, 16], strides = [1, 1]} : vector<2x48xf32> to vector<2x16xf32>
    %605 = arith.mulf %594, %604 : vector<2x16xf32>
    %606 = arith.addf %603, %605 : vector<2x16xf32>
    %607 = math.tanh %606 : vector<2x16xf32>
    %cst_187 = arith.constant 1.000000e+00 : f32
    %608 = vector.broadcast %cst_187 : f32 to vector<2x16xf32>
    %609 = arith.subf %608, %602 : vector<2x16xf32>
    %610 = arith.mulf %609, %607 : vector<2x16xf32>
    %611 = arith.mulf %602, %533 : vector<2x16xf32>
    %612 = arith.addf %610, %611 : vector<2x16xf32>
    %613 = vector.broadcast %543 : vector<2x1xf32> to vector<2x16xf32>
    %614 = arith.mulf %613, %579 : vector<2x16xf32>
    %615 = arith.index_cast %c5_i32 : i32 to index
    %c0_188 = arith.constant 0 : index
    %c0_189 = arith.constant 0 : index
    %616 = vector.load %arg8[%615, %c0_188, %c0_189] : memref<8x2x16xf32, #tpu.memory_space<vmem>>, vector<1x2x16xf32>
    %617 = vector.shape_cast %616 : vector<1x2x16xf32> to vector<2x16xf32>
    %618 = vector.shape_cast %614 : vector<2x16xf32> to vector<1x2x16xf32>
    tpu.vector_store %arg8[%615, %c0_188, %c0_189], %618 {strides = array<i32>} : memref<8x2x16xf32, #tpu.memory_space<vmem>>, vector<1x2x16xf32>,
    %619 = vector.broadcast %546 : vector<2x1xf32> to vector<2x16xf32>
    %620 = arith.mulf %619, %612 : vector<2x16xf32>
    %621 = arith.index_cast %534 : i32 to index
    %c0_190 = arith.constant 0 : index
    %c0_191 = arith.constant 0 : index
    %622 = vector.load %arg9[%621, %c0_190, %c0_191] : memref<8x2x16xf32, #tpu.memory_space<vmem>>, vector<1x2x16xf32>
    %623 = vector.shape_cast %622 : vector<1x2x16xf32> to vector<2x16xf32>
    %624 = vector.shape_cast %620 : vector<2x16xf32> to vector<1x2x16xf32>
    tpu.vector_store %arg9[%621, %c0_190, %c0_191], %624 {strides = array<i32>} : memref<8x2x16xf32, #tpu.memory_space<vmem>>, vector<1x2x16xf32>,
    %625 = vector.broadcast %543 : vector<2x1xf32> to vector<2x16xf32>
    %626 = arith.mulf %625, %579 : vector<2x16xf32>
    %cst_192 = arith.constant 1.000000e+00 : f32
    %627 = vector.broadcast %cst_192 : f32 to vector<2x1xf32>
    %628 = arith.subf %627, %543 : vector<2x1xf32>
    %629 = vector.broadcast %628 : vector<2x1xf32> to vector<2x16xf32>
    %630 = arith.mulf %629, %526 : vector<2x16xf32>
    %631 = arith.addf %626, %630 : vector<2x16xf32>
    %632 = vector.broadcast %546 : vector<2x1xf32> to vector<2x16xf32>
    %633 = arith.mulf %632, %612 : vector<2x16xf32>
    %cst_193 = arith.constant 1.000000e+00 : f32
    %634 = vector.broadcast %cst_193 : f32 to vector<2x1xf32>
    %635 = arith.subf %634, %546 : vector<2x1xf32>
    %636 = vector.broadcast %635 : vector<2x1xf32> to vector<2x16xf32>
    %637 = arith.mulf %636, %533 : vector<2x16xf32>
    %638 = arith.addf %633, %637 : vector<2x16xf32>
    %c6_i32 = arith.constant 6 : i32
    %c7_i32_194 = arith.constant 7 : i32
    %639 = arith.subi %c7_i32_194, %c6_i32 : i32
    %c2_i32_195 = arith.constant 2 : i32
    %640 = arith.muli %c6_i32, %c2_i32_195 : i32
    %641 = arith.index_cast %640 : i32 to index
    %c0_196 = arith.constant 0 : index
    %642 = vector.load %arg12[%641, %c0_196] : memref<16x96xf32, #tpu.memory_space<vmem>>, vector<2x96xf32>
    %c2_i32_197 = arith.constant 2 : i32
    %643 = arith.muli %639, %c2_i32_197 : i32
    %644 = arith.index_cast %643 : i32 to index
    %c0_198 = arith.constant 0 : index
    %645 = vector.load %arg12[%644, %c0_198] : memref<16x96xf32, #tpu.memory_space<vmem>>, vector<2x96xf32>
    %646 = arith.index_cast %c6_i32 : i32 to index
    %c0_199 = arith.constant 0 : index
    %c0_200 = arith.constant 0 : index
    %647 = vector.load %arg1[%646, %c0_199, %c0_200] : memref<8x2x1xf32, #tpu.memory_space<vmem>>, vector<1x2x1xf32>
    %648 = vector.shape_cast %647 : vector<1x2x1xf32> to vector<2x1xf32>
    %649 = arith.index_cast %639 : i32 to index
    %c0_201 = arith.constant 0 : index
    %c0_202 = arith.constant 0 : index
    %650 = vector.load %arg1[%649, %c0_201, %c0_202] : memref<8x2x1xf32, #tpu.memory_space<vmem>>, vector<1x2x1xf32>
    %651 = vector.shape_cast %650 : vector<1x2x1xf32> to vector<2x1xf32>
    %652 = vector.extract_strided_slice %642 {offsets = [0, 0], sizes = [2, 48], strides = [1, 1]} : vector<2x96xf32> to vector<2x48xf32>
    %653 = arith.truncf %631 : vector<2x16xf32> to vector<2x16xbf16>
    %c0_203 = arith.constant 0 : index
    %c0_204 = arith.constant 0 : index
    %654 = vector.load %arg4[%c0_203, %c0_204] : memref<16x48xbf16, #tpu.memory_space<vmem>>, vector<16x48xbf16>
    %cst_205 = arith.constant dense<0.000000e+00> : vector<2x48xf32>
    %655 = tpu.matmul %653, %654, %cst_205 {dimension_numbers = #tpu.dot_dimension_numbers<[1], [0], [0], [1], [0, 0, 1, 1], [], []>} : vector<2x16xbf16>, vector<16x48xbf16>, vector<2x48xf32> -> vector<2x48xf32>
    %c0_206 = arith.constant 0 : index
    %c0_207 = arith.constant 0 : index
    %656 = vector.load %arg5[%c0_206, %c0_207] : memref<1x48xf32, #tpu.memory_space<vmem>>, vector<1x48xf32>
    %657 = vector.broadcast %656 : vector<1x48xf32> to vector<2x48xf32>
    %658 = arith.addf %655, %657 : vector<2x48xf32>
    %659 = vector.extract_strided_slice %652 {offsets = [0, 0], sizes = [2, 16], strides = [1, 1]} : vector<2x48xf32> to vector<2x16xf32>
    %660 = vector.extract_strided_slice %658 {offsets = [0, 0], sizes = [2, 16], strides = [1, 1]} : vector<2x48xf32> to vector<2x16xf32>
    %661 = arith.addf %659, %660 : vector<2x16xf32>
    %662 = arith.negf %661 : vector<2x16xf32>
    %663 = math.exp %662 : vector<2x16xf32>
    %cst_208 = arith.constant 1.000000e+00 : f32
    %664 = vector.broadcast %cst_208 : f32 to vector<2x16xf32>
    %665 = arith.addf %664, %663 : vector<2x16xf32>
    %666 = arith.divf %664, %665 : vector<2x16xf32>
    %667 = vector.extract_strided_slice %652 {offsets = [0, 16], sizes = [2, 16], strides = [1, 1]} : vector<2x48xf32> to vector<2x16xf32>
    %668 = vector.extract_strided_slice %658 {offsets = [0, 16], sizes = [2, 16], strides = [1, 1]} : vector<2x48xf32> to vector<2x16xf32>
    %669 = arith.addf %667, %668 : vector<2x16xf32>
    %670 = arith.negf %669 : vector<2x16xf32>
    %671 = math.exp %670 : vector<2x16xf32>
    %cst_209 = arith.constant 1.000000e+00 : f32
    %672 = vector.broadcast %cst_209 : f32 to vector<2x16xf32>
    %673 = arith.addf %672, %671 : vector<2x16xf32>
    %674 = arith.divf %672, %673 : vector<2x16xf32>
    %675 = vector.extract_strided_slice %652 {offsets = [0, 32], sizes = [2, 16], strides = [1, 1]} : vector<2x48xf32> to vector<2x16xf32>
    %676 = vector.extract_strided_slice %658 {offsets = [0, 32], sizes = [2, 16], strides = [1, 1]} : vector<2x48xf32> to vector<2x16xf32>
    %677 = arith.mulf %666, %676 : vector<2x16xf32>
    %678 = arith.addf %675, %677 : vector<2x16xf32>
    %679 = math.tanh %678 : vector<2x16xf32>
    %cst_210 = arith.constant 1.000000e+00 : f32
    %680 = vector.broadcast %cst_210 : f32 to vector<2x16xf32>
    %681 = arith.subf %680, %674 : vector<2x16xf32>
    %682 = arith.mulf %681, %679 : vector<2x16xf32>
    %683 = arith.mulf %674, %631 : vector<2x16xf32>
    %684 = arith.addf %682, %683 : vector<2x16xf32>
    %685 = vector.extract_strided_slice %645 {offsets = [0, 48], sizes = [2, 48], strides = [1, 1]} : vector<2x96xf32> to vector<2x48xf32>
    %686 = arith.truncf %638 : vector<2x16xf32> to vector<2x16xbf16>
    %c0_211 = arith.constant 0 : index
    %c0_212 = arith.constant 0 : index
    %687 = vector.load %arg6[%c0_211, %c0_212] : memref<16x48xbf16, #tpu.memory_space<vmem>>, vector<16x48xbf16>
    %cst_213 = arith.constant dense<0.000000e+00> : vector<2x48xf32>
    %688 = tpu.matmul %686, %687, %cst_213 {dimension_numbers = #tpu.dot_dimension_numbers<[1], [0], [0], [1], [0, 0, 1, 1], [], []>} : vector<2x16xbf16>, vector<16x48xbf16>, vector<2x48xf32> -> vector<2x48xf32>
    %c0_214 = arith.constant 0 : index
    %c0_215 = arith.constant 0 : index
    %689 = vector.load %arg7[%c0_214, %c0_215] : memref<1x48xf32, #tpu.memory_space<vmem>>, vector<1x48xf32>
    %690 = vector.broadcast %689 : vector<1x48xf32> to vector<2x48xf32>
    %691 = arith.addf %688, %690 : vector<2x48xf32>
    %692 = vector.extract_strided_slice %685 {offsets = [0, 0], sizes = [2, 16], strides = [1, 1]} : vector<2x48xf32> to vector<2x16xf32>
    %693 = vector.extract_strided_slice %691 {offsets = [0, 0], sizes = [2, 16], strides = [1, 1]} : vector<2x48xf32> to vector<2x16xf32>
    %694 = arith.addf %692, %693 : vector<2x16xf32>
    %695 = arith.negf %694 : vector<2x16xf32>
    %696 = math.exp %695 : vector<2x16xf32>
    %cst_216 = arith.constant 1.000000e+00 : f32
    %697 = vector.broadcast %cst_216 : f32 to vector<2x16xf32>
    %698 = arith.addf %697, %696 : vector<2x16xf32>
    %699 = arith.divf %697, %698 : vector<2x16xf32>
    %700 = vector.extract_strided_slice %685 {offsets = [0, 16], sizes = [2, 16], strides = [1, 1]} : vector<2x48xf32> to vector<2x16xf32>
    %701 = vector.extract_strided_slice %691 {offsets = [0, 16], sizes = [2, 16], strides = [1, 1]} : vector<2x48xf32> to vector<2x16xf32>
    %702 = arith.addf %700, %701 : vector<2x16xf32>
    %703 = arith.negf %702 : vector<2x16xf32>
    %704 = math.exp %703 : vector<2x16xf32>
    %cst_217 = arith.constant 1.000000e+00 : f32
    %705 = vector.broadcast %cst_217 : f32 to vector<2x16xf32>
    %706 = arith.addf %705, %704 : vector<2x16xf32>
    %707 = arith.divf %705, %706 : vector<2x16xf32>
    %708 = vector.extract_strided_slice %685 {offsets = [0, 32], sizes = [2, 16], strides = [1, 1]} : vector<2x48xf32> to vector<2x16xf32>
    %709 = vector.extract_strided_slice %691 {offsets = [0, 32], sizes = [2, 16], strides = [1, 1]} : vector<2x48xf32> to vector<2x16xf32>
    %710 = arith.mulf %699, %709 : vector<2x16xf32>
    %711 = arith.addf %708, %710 : vector<2x16xf32>
    %712 = math.tanh %711 : vector<2x16xf32>
    %cst_218 = arith.constant 1.000000e+00 : f32
    %713 = vector.broadcast %cst_218 : f32 to vector<2x16xf32>
    %714 = arith.subf %713, %707 : vector<2x16xf32>
    %715 = arith.mulf %714, %712 : vector<2x16xf32>
    %716 = arith.mulf %707, %638 : vector<2x16xf32>
    %717 = arith.addf %715, %716 : vector<2x16xf32>
    %718 = vector.broadcast %648 : vector<2x1xf32> to vector<2x16xf32>
    %719 = arith.mulf %718, %684 : vector<2x16xf32>
    %720 = arith.index_cast %c6_i32 : i32 to index
    %c0_219 = arith.constant 0 : index
    %c0_220 = arith.constant 0 : index
    %721 = vector.load %arg8[%720, %c0_219, %c0_220] : memref<8x2x16xf32, #tpu.memory_space<vmem>>, vector<1x2x16xf32>
    %722 = vector.shape_cast %721 : vector<1x2x16xf32> to vector<2x16xf32>
    %723 = vector.shape_cast %719 : vector<2x16xf32> to vector<1x2x16xf32>
    tpu.vector_store %arg8[%720, %c0_219, %c0_220], %723 {strides = array<i32>} : memref<8x2x16xf32, #tpu.memory_space<vmem>>, vector<1x2x16xf32>,
    %724 = vector.broadcast %651 : vector<2x1xf32> to vector<2x16xf32>
    %725 = arith.mulf %724, %717 : vector<2x16xf32>
    %726 = arith.index_cast %639 : i32 to index
    %c0_221 = arith.constant 0 : index
    %c0_222 = arith.constant 0 : index
    %727 = vector.load %arg9[%726, %c0_221, %c0_222] : memref<8x2x16xf32, #tpu.memory_space<vmem>>, vector<1x2x16xf32>
    %728 = vector.shape_cast %727 : vector<1x2x16xf32> to vector<2x16xf32>
    %729 = vector.shape_cast %725 : vector<2x16xf32> to vector<1x2x16xf32>
    tpu.vector_store %arg9[%726, %c0_221, %c0_222], %729 {strides = array<i32>} : memref<8x2x16xf32, #tpu.memory_space<vmem>>, vector<1x2x16xf32>,
    %730 = vector.broadcast %648 : vector<2x1xf32> to vector<2x16xf32>
    %731 = arith.mulf %730, %684 : vector<2x16xf32>
    %cst_223 = arith.constant 1.000000e+00 : f32
    %732 = vector.broadcast %cst_223 : f32 to vector<2x1xf32>
    %733 = arith.subf %732, %648 : vector<2x1xf32>
    %734 = vector.broadcast %733 : vector<2x1xf32> to vector<2x16xf32>
    %735 = arith.mulf %734, %631 : vector<2x16xf32>
    %736 = arith.addf %731, %735 : vector<2x16xf32>
    %737 = vector.broadcast %651 : vector<2x1xf32> to vector<2x16xf32>
    %738 = arith.mulf %737, %717 : vector<2x16xf32>
    %cst_224 = arith.constant 1.000000e+00 : f32
    %739 = vector.broadcast %cst_224 : f32 to vector<2x1xf32>
    %740 = arith.subf %739, %651 : vector<2x1xf32>
    %741 = vector.broadcast %740 : vector<2x1xf32> to vector<2x16xf32>
    %742 = arith.mulf %741, %638 : vector<2x16xf32>
    %743 = arith.addf %738, %742 : vector<2x16xf32>
    %c7_i32_225 = arith.constant 7 : i32
    %c7_i32_226 = arith.constant 7 : i32
    %744 = arith.subi %c7_i32_226, %c7_i32_225 : i32
    %c2_i32_227 = arith.constant 2 : i32
    %745 = arith.muli %c7_i32_225, %c2_i32_227 : i32
    %746 = arith.index_cast %745 : i32 to index
    %c0_228 = arith.constant 0 : index
    %747 = vector.load %arg12[%746, %c0_228] : memref<16x96xf32, #tpu.memory_space<vmem>>, vector<2x96xf32>
    %c2_i32_229 = arith.constant 2 : i32
    %748 = arith.muli %744, %c2_i32_229 : i32
    %749 = arith.index_cast %748 : i32 to index
    %c0_230 = arith.constant 0 : index
    %750 = vector.load %arg12[%749, %c0_230] : memref<16x96xf32, #tpu.memory_space<vmem>>, vector<2x96xf32>
    %751 = arith.index_cast %c7_i32_225 : i32 to index
    %c0_231 = arith.constant 0 : index
    %c0_232 = arith.constant 0 : index
    %752 = vector.load %arg1[%751, %c0_231, %c0_232] : memref<8x2x1xf32, #tpu.memory_space<vmem>>, vector<1x2x1xf32>
    %753 = vector.shape_cast %752 : vector<1x2x1xf32> to vector<2x1xf32>
    %754 = arith.index_cast %744 : i32 to index
    %c0_233 = arith.constant 0 : index
    %c0_234 = arith.constant 0 : index
    %755 = vector.load %arg1[%754, %c0_233, %c0_234] : memref<8x2x1xf32, #tpu.memory_space<vmem>>, vector<1x2x1xf32>
    %756 = vector.shape_cast %755 : vector<1x2x1xf32> to vector<2x1xf32>
    %757 = vector.extract_strided_slice %747 {offsets = [0, 0], sizes = [2, 48], strides = [1, 1]} : vector<2x96xf32> to vector<2x48xf32>
    %758 = arith.truncf %736 : vector<2x16xf32> to vector<2x16xbf16>
    %c0_235 = arith.constant 0 : index
    %c0_236 = arith.constant 0 : index
    %759 = vector.load %arg4[%c0_235, %c0_236] : memref<16x48xbf16, #tpu.memory_space<vmem>>, vector<16x48xbf16>
    %cst_237 = arith.constant dense<0.000000e+00> : vector<2x48xf32>
    %760 = tpu.matmul %758, %759, %cst_237 {dimension_numbers = #tpu.dot_dimension_numbers<[1], [0], [0], [1], [0, 0, 1, 1], [], []>} : vector<2x16xbf16>, vector<16x48xbf16>, vector<2x48xf32> -> vector<2x48xf32>
    %c0_238 = arith.constant 0 : index
    %c0_239 = arith.constant 0 : index
    %761 = vector.load %arg5[%c0_238, %c0_239] : memref<1x48xf32, #tpu.memory_space<vmem>>, vector<1x48xf32>
    %762 = vector.broadcast %761 : vector<1x48xf32> to vector<2x48xf32>
    %763 = arith.addf %760, %762 : vector<2x48xf32>
    %764 = vector.extract_strided_slice %757 {offsets = [0, 0], sizes = [2, 16], strides = [1, 1]} : vector<2x48xf32> to vector<2x16xf32>
    %765 = vector.extract_strided_slice %763 {offsets = [0, 0], sizes = [2, 16], strides = [1, 1]} : vector<2x48xf32> to vector<2x16xf32>
    %766 = arith.addf %764, %765 : vector<2x16xf32>
    %767 = arith.negf %766 : vector<2x16xf32>
    %768 = math.exp %767 : vector<2x16xf32>
    %cst_240 = arith.constant 1.000000e+00 : f32
    %769 = vector.broadcast %cst_240 : f32 to vector<2x16xf32>
    %770 = arith.addf %769, %768 : vector<2x16xf32>
    %771 = arith.divf %769, %770 : vector<2x16xf32>
    %772 = vector.extract_strided_slice %757 {offsets = [0, 16], sizes = [2, 16], strides = [1, 1]} : vector<2x48xf32> to vector<2x16xf32>
    %773 = vector.extract_strided_slice %763 {offsets = [0, 16], sizes = [2, 16], strides = [1, 1]} : vector<2x48xf32> to vector<2x16xf32>
    %774 = arith.addf %772, %773 : vector<2x16xf32>
    %775 = arith.negf %774 : vector<2x16xf32>
    %776 = math.exp %775 : vector<2x16xf32>
    %cst_241 = arith.constant 1.000000e+00 : f32
    %777 = vector.broadcast %cst_241 : f32 to vector<2x16xf32>
    %778 = arith.addf %777, %776 : vector<2x16xf32>
    %779 = arith.divf %777, %778 : vector<2x16xf32>
    %780 = vector.extract_strided_slice %757 {offsets = [0, 32], sizes = [2, 16], strides = [1, 1]} : vector<2x48xf32> to vector<2x16xf32>
    %781 = vector.extract_strided_slice %763 {offsets = [0, 32], sizes = [2, 16], strides = [1, 1]} : vector<2x48xf32> to vector<2x16xf32>
    %782 = arith.mulf %771, %781 : vector<2x16xf32>
    %783 = arith.addf %780, %782 : vector<2x16xf32>
    %784 = math.tanh %783 : vector<2x16xf32>
    %cst_242 = arith.constant 1.000000e+00 : f32
    %785 = vector.broadcast %cst_242 : f32 to vector<2x16xf32>
    %786 = arith.subf %785, %779 : vector<2x16xf32>
    %787 = arith.mulf %786, %784 : vector<2x16xf32>
    %788 = arith.mulf %779, %736 : vector<2x16xf32>
    %789 = arith.addf %787, %788 : vector<2x16xf32>
    %790 = vector.extract_strided_slice %750 {offsets = [0, 48], sizes = [2, 48], strides = [1, 1]} : vector<2x96xf32> to vector<2x48xf32>
    %791 = arith.truncf %743 : vector<2x16xf32> to vector<2x16xbf16>
    %c0_243 = arith.constant 0 : index
    %c0_244 = arith.constant 0 : index
    %792 = vector.load %arg6[%c0_243, %c0_244] : memref<16x48xbf16, #tpu.memory_space<vmem>>, vector<16x48xbf16>
    %cst_245 = arith.constant dense<0.000000e+00> : vector<2x48xf32>
    %793 = tpu.matmul %791, %792, %cst_245 {dimension_numbers = #tpu.dot_dimension_numbers<[1], [0], [0], [1], [0, 0, 1, 1], [], []>} : vector<2x16xbf16>, vector<16x48xbf16>, vector<2x48xf32> -> vector<2x48xf32>
    %c0_246 = arith.constant 0 : index
    %c0_247 = arith.constant 0 : index
    %794 = vector.load %arg7[%c0_246, %c0_247] : memref<1x48xf32, #tpu.memory_space<vmem>>, vector<1x48xf32>
    %795 = vector.broadcast %794 : vector<1x48xf32> to vector<2x48xf32>
    %796 = arith.addf %793, %795 : vector<2x48xf32>
    %797 = vector.extract_strided_slice %790 {offsets = [0, 0], sizes = [2, 16], strides = [1, 1]} : vector<2x48xf32> to vector<2x16xf32>
    %798 = vector.extract_strided_slice %796 {offsets = [0, 0], sizes = [2, 16], strides = [1, 1]} : vector<2x48xf32> to vector<2x16xf32>
    %799 = arith.addf %797, %798 : vector<2x16xf32>
    %800 = arith.negf %799 : vector<2x16xf32>
    %801 = math.exp %800 : vector<2x16xf32>
    %cst_248 = arith.constant 1.000000e+00 : f32
    %802 = vector.broadcast %cst_248 : f32 to vector<2x16xf32>
    %803 = arith.addf %802, %801 : vector<2x16xf32>
    %804 = arith.divf %802, %803 : vector<2x16xf32>
    %805 = vector.extract_strided_slice %790 {offsets = [0, 16], sizes = [2, 16], strides = [1, 1]} : vector<2x48xf32> to vector<2x16xf32>
    %806 = vector.extract_strided_slice %796 {offsets = [0, 16], sizes = [2, 16], strides = [1, 1]} : vector<2x48xf32> to vector<2x16xf32>
    %807 = arith.addf %805, %806 : vector<2x16xf32>
    %808 = arith.negf %807 : vector<2x16xf32>
    %809 = math.exp %808 : vector<2x16xf32>
    %cst_249 = arith.constant 1.000000e+00 : f32
    %810 = vector.broadcast %cst_249 : f32 to vector<2x16xf32>
    %811 = arith.addf %810, %809 : vector<2x16xf32>
    %812 = arith.divf %810, %811 : vector<2x16xf32>
    %813 = vector.extract_strided_slice %790 {offsets = [0, 32], sizes = [2, 16], strides = [1, 1]} : vector<2x48xf32> to vector<2x16xf32>
    %814 = vector.extract_strided_slice %796 {offsets = [0, 32], sizes = [2, 16], strides = [1, 1]} : vector<2x48xf32> to vector<2x16xf32>
    %815 = arith.mulf %804, %814 : vector<2x16xf32>
    %816 = arith.addf %813, %815 : vector<2x16xf32>
    %817 = math.tanh %816 : vector<2x16xf32>
    %cst_250 = arith.constant 1.000000e+00 : f32
    %818 = vector.broadcast %cst_250 : f32 to vector<2x16xf32>
    %819 = arith.subf %818, %812 : vector<2x16xf32>
    %820 = arith.mulf %819, %817 : vector<2x16xf32>
    %821 = arith.mulf %812, %743 : vector<2x16xf32>
    %822 = arith.addf %820, %821 : vector<2x16xf32>
    %823 = vector.broadcast %753 : vector<2x1xf32> to vector<2x16xf32>
    %824 = arith.mulf %823, %789 : vector<2x16xf32>
    %825 = arith.index_cast %c7_i32_225 : i32 to index
    %c0_251 = arith.constant 0 : index
    %c0_252 = arith.constant 0 : index
    %826 = vector.load %arg8[%825, %c0_251, %c0_252] : memref<8x2x16xf32, #tpu.memory_space<vmem>>, vector<1x2x16xf32>
    %827 = vector.shape_cast %826 : vector<1x2x16xf32> to vector<2x16xf32>
    %828 = vector.shape_cast %824 : vector<2x16xf32> to vector<1x2x16xf32>
    tpu.vector_store %arg8[%825, %c0_251, %c0_252], %828 {strides = array<i32>} : memref<8x2x16xf32, #tpu.memory_space<vmem>>, vector<1x2x16xf32>,
    %829 = vector.broadcast %756 : vector<2x1xf32> to vector<2x16xf32>
    %830 = arith.mulf %829, %822 : vector<2x16xf32>
    %831 = arith.index_cast %744 : i32 to index
    %c0_253 = arith.constant 0 : index
    %c0_254 = arith.constant 0 : index
    %832 = vector.load %arg9[%831, %c0_253, %c0_254] : memref<8x2x16xf32, #tpu.memory_space<vmem>>, vector<1x2x16xf32>
    %833 = vector.shape_cast %832 : vector<1x2x16xf32> to vector<2x16xf32>
    %834 = vector.shape_cast %830 : vector<2x16xf32> to vector<1x2x16xf32>
    tpu.vector_store %arg9[%831, %c0_253, %c0_254], %834 {strides = array<i32>} : memref<8x2x16xf32, #tpu.memory_space<vmem>>, vector<1x2x16xf32>,
    %835 = vector.broadcast %753 : vector<2x1xf32> to vector<2x16xf32>
    %836 = arith.mulf %835, %789 : vector<2x16xf32>
    %cst_255 = arith.constant 1.000000e+00 : f32
    %837 = vector.broadcast %cst_255 : f32 to vector<2x1xf32>
    %838 = arith.subf %837, %753 : vector<2x1xf32>
    %839 = vector.broadcast %838 : vector<2x1xf32> to vector<2x16xf32>
    %840 = arith.mulf %839, %736 : vector<2x16xf32>
    %841 = arith.addf %836, %840 : vector<2x16xf32>
    %842 = vector.broadcast %756 : vector<2x1xf32> to vector<2x16xf32>
    %843 = arith.mulf %842, %822 : vector<2x16xf32>
    %cst_256 = arith.constant 1.000000e+00 : f32
    %844 = vector.broadcast %cst_256 : f32 to vector<2x1xf32>
    %845 = arith.subf %844, %756 : vector<2x1xf32>
    %846 = vector.broadcast %845 : vector<2x1xf32> to vector<2x16xf32>
    %847 = arith.mulf %846, %743 : vector<2x16xf32>
    %848 = arith.addf %843, %847 : vector<2x16xf32>
    %c8_i32 = arith.constant 8 : i32
    %c0_257 = arith.constant 0 : index
    %c0_258 = arith.constant 0 : index
    %849 = vector.load %arg10[%c0_257, %c0_258] : memref<2x16xf32, #tpu.memory_space<vmem>>, vector<2x16xf32>
    tpu.vector_store %arg10[%c0_257, %c0_258], %841 {strides = array<i32>} : memref<2x16xf32, #tpu.memory_space<vmem>>, vector<2x16xf32>,
    %c0_259 = arith.constant 0 : index
    %c0_260 = arith.constant 0 : index
    %850 = vector.load %arg11[%c0_259, %c0_260] : memref<2x16xf32, #tpu.memory_space<vmem>>, vector<2x16xf32>
    tpu.vector_store %arg11[%c0_259, %c0_260], %848 {strides = array<i32>} : memref<2x16xf32, #tpu.memory_space<vmem>>, vector<2x16xf32>,
    return
  }
}

module attributes {stable_mosaic.version = 11 : i64} {
  func.func @_bigru_kernel(%arg0: memref<16x64xbf16, #tpu.memory_space<vmem>>, %arg1: memref<8x2x1xf32, #tpu.memory_space<vmem>>, %arg2: memref<64x96xbf16, #tpu.memory_space<vmem>>, %arg3: memref<1x96xf32, #tpu.memory_space<vmem>>, %arg4: memref<16x48xbf16, #tpu.memory_space<vmem>>, %arg5: memref<1x48xf32, #tpu.memory_space<vmem>>, %arg6: memref<16x48xbf16, #tpu.memory_space<vmem>>, %arg7: memref<1x48xf32, #tpu.memory_space<vmem>>, %arg8: memref<8x2x16xf32, #tpu.memory_space<vmem>>, %arg9: memref<8x2x16xf32, #tpu.memory_space<vmem>>, %arg10: memref<2x16xf32, #tpu.memory_space<vmem>>, %arg11: memref<2x16xf32, #tpu.memory_space<vmem>>, %arg12: memref<16x96xf32, #tpu.memory_space<vmem>>) attributes {dimension_semantics = [], scalar_prefetch = 0 : i64, scratch_operands = 1 : i64, tpu.core_type = #tpu.core_type<tc>} {
    %c0 = arith.constant 0 : index
    %c0_0 = arith.constant 0 : index
    %0 = vector.load %arg0[%c0, %c0_0] : memref<16x64xbf16, #tpu.memory_space<vmem>>, vector<16x64xbf16>
    %c0_1 = arith.constant 0 : index
    %c0_2 = arith.constant 0 : index
    %1 = vector.load %arg2[%c0_1, %c0_2] : memref<64x96xbf16, #tpu.memory_space<vmem>>, vector<64x96xbf16>
    %cst = arith.constant dense<0.000000e+00> : vector<16x96xf32>
    %2 = tpu.matmul %0, %1, %cst {dimension_numbers = #tpu.dot_dimension_numbers<[1], [0], [0], [1], [0, 0, 1, 1], [], []>} : vector<16x64xbf16>, vector<64x96xbf16>, vector<16x96xf32> -> vector<16x96xf32>
    %c0_3 = arith.constant 0 : index
    %c0_4 = arith.constant 0 : index
    %3 = vector.load %arg3[%c0_3, %c0_4] : memref<1x96xf32, #tpu.memory_space<vmem>>, vector<1x96xf32>
    %4 = vector.broadcast %3 : vector<1x96xf32> to vector<16x96xf32>
    %5 = arith.addf %2, %4 : vector<16x96xf32>
    %c0_5 = arith.constant 0 : index
    %c0_6 = arith.constant 0 : index
    %6 = vector.load %arg12[%c0_5, %c0_6] : memref<16x96xf32, #tpu.memory_space<vmem>>, vector<16x96xf32>
    tpu.vector_store %arg12[%c0_5, %c0_6], %5 {strides = array<i32>} : memref<16x96xf32, #tpu.memory_space<vmem>>, vector<16x96xf32>,
    %cst_7 = arith.constant 0.000000e+00 : f32
    %7 = vector.broadcast %cst_7 : f32 to vector<2x16xf32>
    %cst_8 = arith.constant 0.000000e+00 : f32
    %8 = vector.broadcast %cst_8 : f32 to vector<2x16xf32>
    %c0_i32 = arith.constant 0 : i32
    %c7_i32 = arith.constant 7 : i32
    %9 = arith.subi %c7_i32, %c0_i32 : i32
    %c2_i32 = arith.constant 2 : i32
    %10 = arith.muli %c0_i32, %c2_i32 : i32
    %11 = arith.index_cast %10 : i32 to index
    %c0_9 = arith.constant 0 : index
    %12 = vector.load %arg12[%11, %c0_9] : memref<16x96xf32, #tpu.memory_space<vmem>>, vector<2x96xf32>
    %c2_i32_10 = arith.constant 2 : i32
    %13 = arith.muli %9, %c2_i32_10 : i32
    %14 = arith.index_cast %13 : i32 to index
    %c0_11 = arith.constant 0 : index
    %15 = vector.load %arg12[%14, %c0_11] : memref<16x96xf32, #tpu.memory_space<vmem>>, vector<2x96xf32>
    %16 = arith.index_cast %c0_i32 : i32 to index
    %c0_12 = arith.constant 0 : index
    %c0_13 = arith.constant 0 : index
    %17 = vector.load %arg1[%16, %c0_12, %c0_13] : memref<8x2x1xf32, #tpu.memory_space<vmem>>, vector<1x2x1xf32>
    %18 = vector.shape_cast %17 : vector<1x2x1xf32> to vector<2x1xf32>
    %19 = arith.index_cast %9 : i32 to index
    %c0_14 = arith.constant 0 : index
    %c0_15 = arith.constant 0 : index
    %20 = vector.load %arg1[%19, %c0_14, %c0_15] : memref<8x2x1xf32, #tpu.memory_space<vmem>>, vector<1x2x1xf32>
    %21 = vector.shape_cast %20 : vector<1x2x1xf32> to vector<2x1xf32>
    %22 = vector.extract_strided_slice %12 {offsets = [0, 0], sizes = [2, 48], strides = [1, 1]} : vector<2x96xf32> to vector<2x48xf32>
    %23 = arith.truncf %7 : vector<2x16xf32> to vector<2x16xbf16>
    %c0_16 = arith.constant 0 : index
    %c0_17 = arith.constant 0 : index
    %24 = vector.load %arg4[%c0_16, %c0_17] : memref<16x48xbf16, #tpu.memory_space<vmem>>, vector<16x48xbf16>
    %cst_18 = arith.constant dense<0.000000e+00> : vector<2x48xf32>
    %25 = tpu.matmul %23, %24, %cst_18 {dimension_numbers = #tpu.dot_dimension_numbers<[1], [0], [0], [1], [0, 0, 1, 1], [], []>} : vector<2x16xbf16>, vector<16x48xbf16>, vector<2x48xf32> -> vector<2x48xf32>
    %c0_19 = arith.constant 0 : index
    %c0_20 = arith.constant 0 : index
    %26 = vector.load %arg5[%c0_19, %c0_20] : memref<1x48xf32, #tpu.memory_space<vmem>>, vector<1x48xf32>
    %27 = vector.broadcast %26 : vector<1x48xf32> to vector<2x48xf32>
    %28 = arith.addf %25, %27 : vector<2x48xf32>
    %29 = vector.extract_strided_slice %22 {offsets = [0, 0], sizes = [2, 16], strides = [1, 1]} : vector<2x48xf32> to vector<2x16xf32>
    %30 = vector.extract_strided_slice %28 {offsets = [0, 0], sizes = [2, 16], strides = [1, 1]} : vector<2x48xf32> to vector<2x16xf32>
    %31 = arith.addf %29, %30 : vector<2x16xf32>
    %32 = arith.negf %31 : vector<2x16xf32>
    %33 = math.exp %32 : vector<2x16xf32>
    %cst_21 = arith.constant 1.000000e+00 : f32
    %34 = vector.broadcast %cst_21 : f32 to vector<2x16xf32>
    %35 = arith.addf %34, %33 : vector<2x16xf32>
    %36 = arith.divf %34, %35 : vector<2x16xf32>
    %37 = vector.extract_strided_slice %22 {offsets = [0, 16], sizes = [2, 16], strides = [1, 1]} : vector<2x48xf32> to vector<2x16xf32>
    %38 = vector.extract_strided_slice %28 {offsets = [0, 16], sizes = [2, 16], strides = [1, 1]} : vector<2x48xf32> to vector<2x16xf32>
    %39 = arith.addf %37, %38 : vector<2x16xf32>
    %40 = arith.negf %39 : vector<2x16xf32>
    %41 = math.exp %40 : vector<2x16xf32>
    %cst_22 = arith.constant 1.000000e+00 : f32
    %42 = vector.broadcast %cst_22 : f32 to vector<2x16xf32>
    %43 = arith.addf %42, %41 : vector<2x16xf32>
    %44 = arith.divf %42, %43 : vector<2x16xf32>
    %45 = vector.extract_strided_slice %22 {offsets = [0, 32], sizes = [2, 16], strides = [1, 1]} : vector<2x48xf32> to vector<2x16xf32>
    %46 = vector.extract_strided_slice %28 {offsets = [0, 32], sizes = [2, 16], strides = [1, 1]} : vector<2x48xf32> to vector<2x16xf32>
    %47 = arith.mulf %36, %46 : vector<2x16xf32>
    %48 = arith.addf %45, %47 : vector<2x16xf32>
    %49 = math.tanh %48 : vector<2x16xf32>
    %cst_23 = arith.constant 1.000000e+00 : f32
    %50 = vector.broadcast %cst_23 : f32 to vector<2x16xf32>
    %51 = arith.subf %50, %44 : vector<2x16xf32>
    %52 = arith.mulf %51, %49 : vector<2x16xf32>
    %53 = arith.mulf %44, %7 : vector<2x16xf32>
    %54 = arith.addf %52, %53 : vector<2x16xf32>
    %55 = vector.extract_strided_slice %15 {offsets = [0, 48], sizes = [2, 48], strides = [1, 1]} : vector<2x96xf32> to vector<2x48xf32>
    %56 = arith.truncf %8 : vector<2x16xf32> to vector<2x16xbf16>
    %c0_24 = arith.constant 0 : index
    %c0_25 = arith.constant 0 : index
    %57 = vector.load %arg6[%c0_24, %c0_25] : memref<16x48xbf16, #tpu.memory_space<vmem>>, vector<16x48xbf16>
    %cst_26 = arith.constant dense<0.000000e+00> : vector<2x48xf32>
    %58 = tpu.matmul %56, %57, %cst_26 {dimension_numbers = #tpu.dot_dimension_numbers<[1], [0], [0], [1], [0, 0, 1, 1], [], []>} : vector<2x16xbf16>, vector<16x48xbf16>, vector<2x48xf32> -> vector<2x48xf32>
    %c0_27 = arith.constant 0 : index
    %c0_28 = arith.constant 0 : index
    %59 = vector.load %arg7[%c0_27, %c0_28] : memref<1x48xf32, #tpu.memory_space<vmem>>, vector<1x48xf32>
    %60 = vector.broadcast %59 : vector<1x48xf32> to vector<2x48xf32>
    %61 = arith.addf %58, %60 : vector<2x48xf32>
    %62 = vector.extract_strided_slice %55 {offsets = [0, 0], sizes = [2, 16], strides = [1, 1]} : vector<2x48xf32> to vector<2x16xf32>
    %63 = vector.extract_strided_slice %61 {offsets = [0, 0], sizes = [2, 16], strides = [1, 1]} : vector<2x48xf32> to vector<2x16xf32>
    %64 = arith.addf %62, %63 : vector<2x16xf32>
    %65 = arith.negf %64 : vector<2x16xf32>
    %66 = math.exp %65 : vector<2x16xf32>
    %cst_29 = arith.constant 1.000000e+00 : f32
    %67 = vector.broadcast %cst_29 : f32 to vector<2x16xf32>
    %68 = arith.addf %67, %66 : vector<2x16xf32>
    %69 = arith.divf %67, %68 : vector<2x16xf32>
    %70 = vector.extract_strided_slice %55 {offsets = [0, 16], sizes = [2, 16], strides = [1, 1]} : vector<2x48xf32> to vector<2x16xf32>
    %71 = vector.extract_strided_slice %61 {offsets = [0, 16], sizes = [2, 16], strides = [1, 1]} : vector<2x48xf32> to vector<2x16xf32>
    %72 = arith.addf %70, %71 : vector<2x16xf32>
    %73 = arith.negf %72 : vector<2x16xf32>
    %74 = math.exp %73 : vector<2x16xf32>
    %cst_30 = arith.constant 1.000000e+00 : f32
    %75 = vector.broadcast %cst_30 : f32 to vector<2x16xf32>
    %76 = arith.addf %75, %74 : vector<2x16xf32>
    %77 = arith.divf %75, %76 : vector<2x16xf32>
    %78 = vector.extract_strided_slice %55 {offsets = [0, 32], sizes = [2, 16], strides = [1, 1]} : vector<2x48xf32> to vector<2x16xf32>
    %79 = vector.extract_strided_slice %61 {offsets = [0, 32], sizes = [2, 16], strides = [1, 1]} : vector<2x48xf32> to vector<2x16xf32>
    %80 = arith.mulf %69, %79 : vector<2x16xf32>
    %81 = arith.addf %78, %80 : vector<2x16xf32>
    %82 = math.tanh %81 : vector<2x16xf32>
    %cst_31 = arith.constant 1.000000e+00 : f32
    %83 = vector.broadcast %cst_31 : f32 to vector<2x16xf32>
    %84 = arith.subf %83, %77 : vector<2x16xf32>
    %85 = arith.mulf %84, %82 : vector<2x16xf32>
    %86 = arith.mulf %77, %8 : vector<2x16xf32>
    %87 = arith.addf %85, %86 : vector<2x16xf32>
    %88 = vector.broadcast %18 : vector<2x1xf32> to vector<2x16xf32>
    %89 = arith.mulf %88, %54 : vector<2x16xf32>
    %90 = arith.index_cast %c0_i32 : i32 to index
    %c0_32 = arith.constant 0 : index
    %c0_33 = arith.constant 0 : index
    %91 = vector.load %arg8[%90, %c0_32, %c0_33] : memref<8x2x16xf32, #tpu.memory_space<vmem>>, vector<1x2x16xf32>
    %92 = vector.shape_cast %91 : vector<1x2x16xf32> to vector<2x16xf32>
    %93 = vector.shape_cast %89 : vector<2x16xf32> to vector<1x2x16xf32>
    tpu.vector_store %arg8[%90, %c0_32, %c0_33], %93 {strides = array<i32>} : memref<8x2x16xf32, #tpu.memory_space<vmem>>, vector<1x2x16xf32>,
    %94 = vector.broadcast %21 : vector<2x1xf32> to vector<2x16xf32>
    %95 = arith.mulf %94, %87 : vector<2x16xf32>
    %96 = arith.index_cast %9 : i32 to index
    %c0_34 = arith.constant 0 : index
    %c0_35 = arith.constant 0 : index
    %97 = vector.load %arg9[%96, %c0_34, %c0_35] : memref<8x2x16xf32, #tpu.memory_space<vmem>>, vector<1x2x16xf32>
    %98 = vector.shape_cast %97 : vector<1x2x16xf32> to vector<2x16xf32>
    %99 = vector.shape_cast %95 : vector<2x16xf32> to vector<1x2x16xf32>
    tpu.vector_store %arg9[%96, %c0_34, %c0_35], %99 {strides = array<i32>} : memref<8x2x16xf32, #tpu.memory_space<vmem>>, vector<1x2x16xf32>,
    %100 = vector.broadcast %18 : vector<2x1xf32> to vector<2x16xf32>
    %101 = arith.mulf %100, %54 : vector<2x16xf32>
    %cst_36 = arith.constant 1.000000e+00 : f32
    %102 = vector.broadcast %cst_36 : f32 to vector<2x1xf32>
    %103 = arith.subf %102, %18 : vector<2x1xf32>
    %104 = vector.broadcast %103 : vector<2x1xf32> to vector<2x16xf32>
    %105 = arith.mulf %104, %7 : vector<2x16xf32>
    %106 = arith.addf %101, %105 : vector<2x16xf32>
    %107 = vector.broadcast %21 : vector<2x1xf32> to vector<2x16xf32>
    %108 = arith.mulf %107, %87 : vector<2x16xf32>
    %cst_37 = arith.constant 1.000000e+00 : f32
    %109 = vector.broadcast %cst_37 : f32 to vector<2x1xf32>
    %110 = arith.subf %109, %21 : vector<2x1xf32>
    %111 = vector.broadcast %110 : vector<2x1xf32> to vector<2x16xf32>
    %112 = arith.mulf %111, %8 : vector<2x16xf32>
    %113 = arith.addf %108, %112 : vector<2x16xf32>
    %c1_i32 = arith.constant 1 : i32
    %c7_i32_38 = arith.constant 7 : i32
    %114 = arith.subi %c7_i32_38, %c1_i32 : i32
    %c2_i32_39 = arith.constant 2 : i32
    %115 = arith.muli %c1_i32, %c2_i32_39 : i32
    %116 = arith.index_cast %115 : i32 to index
    %c0_40 = arith.constant 0 : index
    %117 = vector.load %arg12[%116, %c0_40] : memref<16x96xf32, #tpu.memory_space<vmem>>, vector<2x96xf32>
    %c2_i32_41 = arith.constant 2 : i32
    %118 = arith.muli %114, %c2_i32_41 : i32
    %119 = arith.index_cast %118 : i32 to index
    %c0_42 = arith.constant 0 : index
    %120 = vector.load %arg12[%119, %c0_42] : memref<16x96xf32, #tpu.memory_space<vmem>>, vector<2x96xf32>
    %121 = arith.index_cast %c1_i32 : i32 to index
    %c0_43 = arith.constant 0 : index
    %c0_44 = arith.constant 0 : index
    %122 = vector.load %arg1[%121, %c0_43, %c0_44] : memref<8x2x1xf32, #tpu.memory_space<vmem>>, vector<1x2x1xf32>
    %123 = vector.shape_cast %122 : vector<1x2x1xf32> to vector<2x1xf32>
    %124 = arith.index_cast %114 : i32 to index
    %c0_45 = arith.constant 0 : index
    %c0_46 = arith.constant 0 : index
    %125 = vector.load %arg1[%124, %c0_45, %c0_46] : memref<8x2x1xf32, #tpu.memory_space<vmem>>, vector<1x2x1xf32>
    %126 = vector.shape_cast %125 : vector<1x2x1xf32> to vector<2x1xf32>
    %127 = vector.extract_strided_slice %117 {offsets = [0, 0], sizes = [2, 48], strides = [1, 1]} : vector<2x96xf32> to vector<2x48xf32>
    %128 = arith.truncf %106 : vector<2x16xf32> to vector<2x16xbf16>
    %c0_47 = arith.constant 0 : index
    %c0_48 = arith.constant 0 : index
    %129 = vector.load %arg4[%c0_47, %c0_48] : memref<16x48xbf16, #tpu.memory_space<vmem>>, vector<16x48xbf16>
    %cst_49 = arith.constant dense<0.000000e+00> : vector<2x48xf32>
    %130 = tpu.matmul %128, %129, %cst_49 {dimension_numbers = #tpu.dot_dimension_numbers<[1], [0], [0], [1], [0, 0, 1, 1], [], []>} : vector<2x16xbf16>, vector<16x48xbf16>, vector<2x48xf32> -> vector<2x48xf32>
    %c0_50 = arith.constant 0 : index
    %c0_51 = arith.constant 0 : index
    %131 = vector.load %arg5[%c0_50, %c0_51] : memref<1x48xf32, #tpu.memory_space<vmem>>, vector<1x48xf32>
    %132 = vector.broadcast %131 : vector<1x48xf32> to vector<2x48xf32>
    %133 = arith.addf %130, %132 : vector<2x48xf32>
    %134 = vector.extract_strided_slice %127 {offsets = [0, 0], sizes = [2, 16], strides = [1, 1]} : vector<2x48xf32> to vector<2x16xf32>
    %135 = vector.extract_strided_slice %133 {offsets = [0, 0], sizes = [2, 16], strides = [1, 1]} : vector<2x48xf32> to vector<2x16xf32>
    %136 = arith.addf %134, %135 : vector<2x16xf32>
    %137 = arith.negf %136 : vector<2x16xf32>
    %138 = math.exp %137 : vector<2x16xf32>
    %cst_52 = arith.constant 1.000000e+00 : f32
    %139 = vector.broadcast %cst_52 : f32 to vector<2x16xf32>
    %140 = arith.addf %139, %138 : vector<2x16xf32>
    %141 = arith.divf %139, %140 : vector<2x16xf32>
    %142 = vector.extract_strided_slice %127 {offsets = [0, 16], sizes = [2, 16], strides = [1, 1]} : vector<2x48xf32> to vector<2x16xf32>
    %143 = vector.extract_strided_slice %133 {offsets = [0, 16], sizes = [2, 16], strides = [1, 1]} : vector<2x48xf32> to vector<2x16xf32>
    %144 = arith.addf %142, %143 : vector<2x16xf32>
    %145 = arith.negf %144 : vector<2x16xf32>
    %146 = math.exp %145 : vector<2x16xf32>
    %cst_53 = arith.constant 1.000000e+00 : f32
    %147 = vector.broadcast %cst_53 : f32 to vector<2x16xf32>
    %148 = arith.addf %147, %146 : vector<2x16xf32>
    %149 = arith.divf %147, %148 : vector<2x16xf32>
    %150 = vector.extract_strided_slice %127 {offsets = [0, 32], sizes = [2, 16], strides = [1, 1]} : vector<2x48xf32> to vector<2x16xf32>
    %151 = vector.extract_strided_slice %133 {offsets = [0, 32], sizes = [2, 16], strides = [1, 1]} : vector<2x48xf32> to vector<2x16xf32>
    %152 = arith.mulf %141, %151 : vector<2x16xf32>
    %153 = arith.addf %150, %152 : vector<2x16xf32>
    %154 = math.tanh %153 : vector<2x16xf32>
    %cst_54 = arith.constant 1.000000e+00 : f32
    %155 = vector.broadcast %cst_54 : f32 to vector<2x16xf32>
    %156 = arith.subf %155, %149 : vector<2x16xf32>
    %157 = arith.mulf %156, %154 : vector<2x16xf32>
    %158 = arith.mulf %149, %106 : vector<2x16xf32>
    %159 = arith.addf %157, %158 : vector<2x16xf32>
    %160 = vector.extract_strided_slice %120 {offsets = [0, 48], sizes = [2, 48], strides = [1, 1]} : vector<2x96xf32> to vector<2x48xf32>
    %161 = arith.truncf %113 : vector<2x16xf32> to vector<2x16xbf16>
    %c0_55 = arith.constant 0 : index
    %c0_56 = arith.constant 0 : index
    %162 = vector.load %arg6[%c0_55, %c0_56] : memref<16x48xbf16, #tpu.memory_space<vmem>>, vector<16x48xbf16>
    %cst_57 = arith.constant dense<0.000000e+00> : vector<2x48xf32>
    %163 = tpu.matmul %161, %162, %cst_57 {dimension_numbers = #tpu.dot_dimension_numbers<[1], [0], [0], [1], [0, 0, 1, 1], [], []>} : vector<2x16xbf16>, vector<16x48xbf16>, vector<2x48xf32> -> vector<2x48xf32>
    %c0_58 = arith.constant 0 : index
    %c0_59 = arith.constant 0 : index
    %164 = vector.load %arg7[%c0_58, %c0_59] : memref<1x48xf32, #tpu.memory_space<vmem>>, vector<1x48xf32>
    %165 = vector.broadcast %164 : vector<1x48xf32> to vector<2x48xf32>
    %166 = arith.addf %163, %165 : vector<2x48xf32>
    %167 = vector.extract_strided_slice %160 {offsets = [0, 0], sizes = [2, 16], strides = [1, 1]} : vector<2x48xf32> to vector<2x16xf32>
    %168 = vector.extract_strided_slice %166 {offsets = [0, 0], sizes = [2, 16], strides = [1, 1]} : vector<2x48xf32> to vector<2x16xf32>
    %169 = arith.addf %167, %168 : vector<2x16xf32>
    %170 = arith.negf %169 : vector<2x16xf32>
    %171 = math.exp %170 : vector<2x16xf32>
    %cst_60 = arith.constant 1.000000e+00 : f32
    %172 = vector.broadcast %cst_60 : f32 to vector<2x16xf32>
    %173 = arith.addf %172, %171 : vector<2x16xf32>
    %174 = arith.divf %172, %173 : vector<2x16xf32>
    %175 = vector.extract_strided_slice %160 {offsets = [0, 16], sizes = [2, 16], strides = [1, 1]} : vector<2x48xf32> to vector<2x16xf32>
    %176 = vector.extract_strided_slice %166 {offsets = [0, 16], sizes = [2, 16], strides = [1, 1]} : vector<2x48xf32> to vector<2x16xf32>
    %177 = arith.addf %175, %176 : vector<2x16xf32>
    %178 = arith.negf %177 : vector<2x16xf32>
    %179 = math.exp %178 : vector<2x16xf32>
    %cst_61 = arith.constant 1.000000e+00 : f32
    %180 = vector.broadcast %cst_61 : f32 to vector<2x16xf32>
    %181 = arith.addf %180, %179 : vector<2x16xf32>
    %182 = arith.divf %180, %181 : vector<2x16xf32>
    %183 = vector.extract_strided_slice %160 {offsets = [0, 32], sizes = [2, 16], strides = [1, 1]} : vector<2x48xf32> to vector<2x16xf32>
    %184 = vector.extract_strided_slice %166 {offsets = [0, 32], sizes = [2, 16], strides = [1, 1]} : vector<2x48xf32> to vector<2x16xf32>
    %185 = arith.mulf %174, %184 : vector<2x16xf32>
    %186 = arith.addf %183, %185 : vector<2x16xf32>
    %187 = math.tanh %186 : vector<2x16xf32>
    %cst_62 = arith.constant 1.000000e+00 : f32
    %188 = vector.broadcast %cst_62 : f32 to vector<2x16xf32>
    %189 = arith.subf %188, %182 : vector<2x16xf32>
    %190 = arith.mulf %189, %187 : vector<2x16xf32>
    %191 = arith.mulf %182, %113 : vector<2x16xf32>
    %192 = arith.addf %190, %191 : vector<2x16xf32>
    %193 = vector.broadcast %123 : vector<2x1xf32> to vector<2x16xf32>
    %194 = arith.mulf %193, %159 : vector<2x16xf32>
    %195 = arith.index_cast %c1_i32 : i32 to index
    %c0_63 = arith.constant 0 : index
    %c0_64 = arith.constant 0 : index
    %196 = vector.load %arg8[%195, %c0_63, %c0_64] : memref<8x2x16xf32, #tpu.memory_space<vmem>>, vector<1x2x16xf32>
    %197 = vector.shape_cast %196 : vector<1x2x16xf32> to vector<2x16xf32>
    %198 = vector.shape_cast %194 : vector<2x16xf32> to vector<1x2x16xf32>
    tpu.vector_store %arg8[%195, %c0_63, %c0_64], %198 {strides = array<i32>} : memref<8x2x16xf32, #tpu.memory_space<vmem>>, vector<1x2x16xf32>,
    %199 = vector.broadcast %126 : vector<2x1xf32> to vector<2x16xf32>
    %200 = arith.mulf %199, %192 : vector<2x16xf32>
    %201 = arith.index_cast %114 : i32 to index
    %c0_65 = arith.constant 0 : index
    %c0_66 = arith.constant 0 : index
    %202 = vector.load %arg9[%201, %c0_65, %c0_66] : memref<8x2x16xf32, #tpu.memory_space<vmem>>, vector<1x2x16xf32>
    %203 = vector.shape_cast %202 : vector<1x2x16xf32> to vector<2x16xf32>
    %204 = vector.shape_cast %200 : vector<2x16xf32> to vector<1x2x16xf32>
    tpu.vector_store %arg9[%201, %c0_65, %c0_66], %204 {strides = array<i32>} : memref<8x2x16xf32, #tpu.memory_space<vmem>>, vector<1x2x16xf32>,
    %205 = vector.broadcast %123 : vector<2x1xf32> to vector<2x16xf32>
    %206 = arith.mulf %205, %159 : vector<2x16xf32>
    %cst_67 = arith.constant 1.000000e+00 : f32
    %207 = vector.broadcast %cst_67 : f32 to vector<2x1xf32>
    %208 = arith.subf %207, %123 : vector<2x1xf32>
    %209 = vector.broadcast %208 : vector<2x1xf32> to vector<2x16xf32>
    %210 = arith.mulf %209, %106 : vector<2x16xf32>
    %211 = arith.addf %206, %210 : vector<2x16xf32>
    %212 = vector.broadcast %126 : vector<2x1xf32> to vector<2x16xf32>
    %213 = arith.mulf %212, %192 : vector<2x16xf32>
    %cst_68 = arith.constant 1.000000e+00 : f32
    %214 = vector.broadcast %cst_68 : f32 to vector<2x1xf32>
    %215 = arith.subf %214, %126 : vector<2x1xf32>
    %216 = vector.broadcast %215 : vector<2x1xf32> to vector<2x16xf32>
    %217 = arith.mulf %216, %113 : vector<2x16xf32>
    %218 = arith.addf %213, %217 : vector<2x16xf32>
    %c2_i32_69 = arith.constant 2 : i32
    %c7_i32_70 = arith.constant 7 : i32
    %219 = arith.subi %c7_i32_70, %c2_i32_69 : i32
    %c2_i32_71 = arith.constant 2 : i32
    %220 = arith.muli %c2_i32_69, %c2_i32_71 : i32
    %221 = arith.index_cast %220 : i32 to index
    %c0_72 = arith.constant 0 : index
    %222 = vector.load %arg12[%221, %c0_72] : memref<16x96xf32, #tpu.memory_space<vmem>>, vector<2x96xf32>
    %c2_i32_73 = arith.constant 2 : i32
    %223 = arith.muli %219, %c2_i32_73 : i32
    %224 = arith.index_cast %223 : i32 to index
    %c0_74 = arith.constant 0 : index
    %225 = vector.load %arg12[%224, %c0_74] : memref<16x96xf32, #tpu.memory_space<vmem>>, vector<2x96xf32>
    %226 = arith.index_cast %c2_i32_69 : i32 to index
    %c0_75 = arith.constant 0 : index
    %c0_76 = arith.constant 0 : index
    %227 = vector.load %arg1[%226, %c0_75, %c0_76] : memref<8x2x1xf32, #tpu.memory_space<vmem>>, vector<1x2x1xf32>
    %228 = vector.shape_cast %227 : vector<1x2x1xf32> to vector<2x1xf32>
    %229 = arith.index_cast %219 : i32 to index
    %c0_77 = arith.constant 0 : index
    %c0_78 = arith.constant 0 : index
    %230 = vector.load %arg1[%229, %c0_77, %c0_78] : memref<8x2x1xf32, #tpu.memory_space<vmem>>, vector<1x2x1xf32>
    %231 = vector.shape_cast %230 : vector<1x2x1xf32> to vector<2x1xf32>
    %232 = vector.extract_strided_slice %222 {offsets = [0, 0], sizes = [2, 48], strides = [1, 1]} : vector<2x96xf32> to vector<2x48xf32>
    %233 = arith.truncf %211 : vector<2x16xf32> to vector<2x16xbf16>
    %c0_79 = arith.constant 0 : index
    %c0_80 = arith.constant 0 : index
    %234 = vector.load %arg4[%c0_79, %c0_80] : memref<16x48xbf16, #tpu.memory_space<vmem>>, vector<16x48xbf16>
    %cst_81 = arith.constant dense<0.000000e+00> : vector<2x48xf32>
    %235 = tpu.matmul %233, %234, %cst_81 {dimension_numbers = #tpu.dot_dimension_numbers<[1], [0], [0], [1], [0, 0, 1, 1], [], []>} : vector<2x16xbf16>, vector<16x48xbf16>, vector<2x48xf32> -> vector<2x48xf32>
    %c0_82 = arith.constant 0 : index
    %c0_83 = arith.constant 0 : index
    %236 = vector.load %arg5[%c0_82, %c0_83] : memref<1x48xf32, #tpu.memory_space<vmem>>, vector<1x48xf32>
    %237 = vector.broadcast %236 : vector<1x48xf32> to vector<2x48xf32>
    %238 = arith.addf %235, %237 : vector<2x48xf32>
    %239 = vector.extract_strided_slice %232 {offsets = [0, 0], sizes = [2, 16], strides = [1, 1]} : vector<2x48xf32> to vector<2x16xf32>
    %240 = vector.extract_strided_slice %238 {offsets = [0, 0], sizes = [2, 16], strides = [1, 1]} : vector<2x48xf32> to vector<2x16xf32>
    %241 = arith.addf %239, %240 : vector<2x16xf32>
    %242 = arith.negf %241 : vector<2x16xf32>
    %243 = math.exp %242 : vector<2x16xf32>
    %cst_84 = arith.constant 1.000000e+00 : f32
    %244 = vector.broadcast %cst_84 : f32 to vector<2x16xf32>
    %245 = arith.addf %244, %243 : vector<2x16xf32>
    %246 = arith.divf %244, %245 : vector<2x16xf32>
    %247 = vector.extract_strided_slice %232 {offsets = [0, 16], sizes = [2, 16], strides = [1, 1]} : vector<2x48xf32> to vector<2x16xf32>
    %248 = vector.extract_strided_slice %238 {offsets = [0, 16], sizes = [2, 16], strides = [1, 1]} : vector<2x48xf32> to vector<2x16xf32>
    %249 = arith.addf %247, %248 : vector<2x16xf32>
    %250 = arith.negf %249 : vector<2x16xf32>
    %251 = math.exp %250 : vector<2x16xf32>
    %cst_85 = arith.constant 1.000000e+00 : f32
    %252 = vector.broadcast %cst_85 : f32 to vector<2x16xf32>
    %253 = arith.addf %252, %251 : vector<2x16xf32>
    %254 = arith.divf %252, %253 : vector<2x16xf32>
    %255 = vector.extract_strided_slice %232 {offsets = [0, 32], sizes = [2, 16], strides = [1, 1]} : vector<2x48xf32> to vector<2x16xf32>
    %256 = vector.extract_strided_slice %238 {offsets = [0, 32], sizes = [2, 16], strides = [1, 1]} : vector<2x48xf32> to vector<2x16xf32>
    %257 = arith.mulf %246, %256 : vector<2x16xf32>
    %258 = arith.addf %255, %257 : vector<2x16xf32>
    %259 = math.tanh %258 : vector<2x16xf32>
    %cst_86 = arith.constant 1.000000e+00 : f32
    %260 = vector.broadcast %cst_86 : f32 to vector<2x16xf32>
    %261 = arith.subf %260, %254 : vector<2x16xf32>
    %262 = arith.mulf %261, %259 : vector<2x16xf32>
    %263 = arith.mulf %254, %211 : vector<2x16xf32>
    %264 = arith.addf %262, %263 : vector<2x16xf32>
    %265 = vector.extract_strided_slice %225 {offsets = [0, 48], sizes = [2, 48], strides = [1, 1]} : vector<2x96xf32> to vector<2x48xf32>
    %266 = arith.truncf %218 : vector<2x16xf32> to vector<2x16xbf16>
    %c0_87 = arith.constant 0 : index
    %c0_88 = arith.constant 0 : index
    %267 = vector.load %arg6[%c0_87, %c0_88] : memref<16x48xbf16, #tpu.memory_space<vmem>>, vector<16x48xbf16>
    %cst_89 = arith.constant dense<0.000000e+00> : vector<2x48xf32>
    %268 = tpu.matmul %266, %267, %cst_89 {dimension_numbers = #tpu.dot_dimension_numbers<[1], [0], [0], [1], [0, 0, 1, 1], [], []>} : vector<2x16xbf16>, vector<16x48xbf16>, vector<2x48xf32> -> vector<2x48xf32>
    %c0_90 = arith.constant 0 : index
    %c0_91 = arith.constant 0 : index
    %269 = vector.load %arg7[%c0_90, %c0_91] : memref<1x48xf32, #tpu.memory_space<vmem>>, vector<1x48xf32>
    %270 = vector.broadcast %269 : vector<1x48xf32> to vector<2x48xf32>
    %271 = arith.addf %268, %270 : vector<2x48xf32>
    %272 = vector.extract_strided_slice %265 {offsets = [0, 0], sizes = [2, 16], strides = [1, 1]} : vector<2x48xf32> to vector<2x16xf32>
    %273 = vector.extract_strided_slice %271 {offsets = [0, 0], sizes = [2, 16], strides = [1, 1]} : vector<2x48xf32> to vector<2x16xf32>
    %274 = arith.addf %272, %273 : vector<2x16xf32>
    %275 = arith.negf %274 : vector<2x16xf32>
    %276 = math.exp %275 : vector<2x16xf32>
    %cst_92 = arith.constant 1.000000e+00 : f32
    %277 = vector.broadcast %cst_92 : f32 to vector<2x16xf32>
    %278 = arith.addf %277, %276 : vector<2x16xf32>
    %279 = arith.divf %277, %278 : vector<2x16xf32>
    %280 = vector.extract_strided_slice %265 {offsets = [0, 16], sizes = [2, 16], strides = [1, 1]} : vector<2x48xf32> to vector<2x16xf32>
    %281 = vector.extract_strided_slice %271 {offsets = [0, 16], sizes = [2, 16], strides = [1, 1]} : vector<2x48xf32> to vector<2x16xf32>
    %282 = arith.addf %280, %281 : vector<2x16xf32>
    %283 = arith.negf %282 : vector<2x16xf32>
    %284 = math.exp %283 : vector<2x16xf32>
    %cst_93 = arith.constant 1.000000e+00 : f32
    %285 = vector.broadcast %cst_93 : f32 to vector<2x16xf32>
    %286 = arith.addf %285, %284 : vector<2x16xf32>
    %287 = arith.divf %285, %286 : vector<2x16xf32>
    %288 = vector.extract_strided_slice %265 {offsets = [0, 32], sizes = [2, 16], strides = [1, 1]} : vector<2x48xf32> to vector<2x16xf32>
    %289 = vector.extract_strided_slice %271 {offsets = [0, 32], sizes = [2, 16], strides = [1, 1]} : vector<2x48xf32> to vector<2x16xf32>
    %290 = arith.mulf %279, %289 : vector<2x16xf32>
    %291 = arith.addf %288, %290 : vector<2x16xf32>
    %292 = math.tanh %291 : vector<2x16xf32>
    %cst_94 = arith.constant 1.000000e+00 : f32
    %293 = vector.broadcast %cst_94 : f32 to vector<2x16xf32>
    %294 = arith.subf %293, %287 : vector<2x16xf32>
    %295 = arith.mulf %294, %292 : vector<2x16xf32>
    %296 = arith.mulf %287, %218 : vector<2x16xf32>
    %297 = arith.addf %295, %296 : vector<2x16xf32>
    %298 = vector.broadcast %228 : vector<2x1xf32> to vector<2x16xf32>
    %299 = arith.mulf %298, %264 : vector<2x16xf32>
    %300 = arith.index_cast %c2_i32_69 : i32 to index
    %c0_95 = arith.constant 0 : index
    %c0_96 = arith.constant 0 : index
    %301 = vector.load %arg8[%300, %c0_95, %c0_96] : memref<8x2x16xf32, #tpu.memory_space<vmem>>, vector<1x2x16xf32>
    %302 = vector.shape_cast %301 : vector<1x2x16xf32> to vector<2x16xf32>
    %303 = vector.shape_cast %299 : vector<2x16xf32> to vector<1x2x16xf32>
    tpu.vector_store %arg8[%300, %c0_95, %c0_96], %303 {strides = array<i32>} : memref<8x2x16xf32, #tpu.memory_space<vmem>>, vector<1x2x16xf32>,
    %304 = vector.broadcast %231 : vector<2x1xf32> to vector<2x16xf32>
    %305 = arith.mulf %304, %297 : vector<2x16xf32>
    %306 = arith.index_cast %219 : i32 to index
    %c0_97 = arith.constant 0 : index
    %c0_98 = arith.constant 0 : index
    %307 = vector.load %arg9[%306, %c0_97, %c0_98] : memref<8x2x16xf32, #tpu.memory_space<vmem>>, vector<1x2x16xf32>
    %308 = vector.shape_cast %307 : vector<1x2x16xf32> to vector<2x16xf32>
    %309 = vector.shape_cast %305 : vector<2x16xf32> to vector<1x2x16xf32>
    tpu.vector_store %arg9[%306, %c0_97, %c0_98], %309 {strides = array<i32>} : memref<8x2x16xf32, #tpu.memory_space<vmem>>, vector<1x2x16xf32>,
    %310 = vector.broadcast %228 : vector<2x1xf32> to vector<2x16xf32>
    %311 = arith.mulf %310, %264 : vector<2x16xf32>
    %cst_99 = arith.constant 1.000000e+00 : f32
    %312 = vector.broadcast %cst_99 : f32 to vector<2x1xf32>
    %313 = arith.subf %312, %228 : vector<2x1xf32>
    %314 = vector.broadcast %313 : vector<2x1xf32> to vector<2x16xf32>
    %315 = arith.mulf %314, %211 : vector<2x16xf32>
    %316 = arith.addf %311, %315 : vector<2x16xf32>
    %317 = vector.broadcast %231 : vector<2x1xf32> to vector<2x16xf32>
    %318 = arith.mulf %317, %297 : vector<2x16xf32>
    %cst_100 = arith.constant 1.000000e+00 : f32
    %319 = vector.broadcast %cst_100 : f32 to vector<2x1xf32>
    %320 = arith.subf %319, %231 : vector<2x1xf32>
    %321 = vector.broadcast %320 : vector<2x1xf32> to vector<2x16xf32>
    %322 = arith.mulf %321, %218 : vector<2x16xf32>
    %323 = arith.addf %318, %322 : vector<2x16xf32>
    %c3_i32 = arith.constant 3 : i32
    %c7_i32_101 = arith.constant 7 : i32
    %324 = arith.subi %c7_i32_101, %c3_i32 : i32
    %c2_i32_102 = arith.constant 2 : i32
    %325 = arith.muli %c3_i32, %c2_i32_102 : i32
    %326 = arith.index_cast %325 : i32 to index
    %c0_103 = arith.constant 0 : index
    %327 = vector.load %arg12[%326, %c0_103] : memref<16x96xf32, #tpu.memory_space<vmem>>, vector<2x96xf32>
    %c2_i32_104 = arith.constant 2 : i32
    %328 = arith.muli %324, %c2_i32_104 : i32
    %329 = arith.index_cast %328 : i32 to index
    %c0_105 = arith.constant 0 : index
    %330 = vector.load %arg12[%329, %c0_105] : memref<16x96xf32, #tpu.memory_space<vmem>>, vector<2x96xf32>
    %331 = arith.index_cast %c3_i32 : i32 to index
    %c0_106 = arith.constant 0 : index
    %c0_107 = arith.constant 0 : index
    %332 = vector.load %arg1[%331, %c0_106, %c0_107] : memref<8x2x1xf32, #tpu.memory_space<vmem>>, vector<1x2x1xf32>
    %333 = vector.shape_cast %332 : vector<1x2x1xf32> to vector<2x1xf32>
    %334 = arith.index_cast %324 : i32 to index
    %c0_108 = arith.constant 0 : index
    %c0_109 = arith.constant 0 : index
    %335 = vector.load %arg1[%334, %c0_108, %c0_109] : memref<8x2x1xf32, #tpu.memory_space<vmem>>, vector<1x2x1xf32>
    %336 = vector.shape_cast %335 : vector<1x2x1xf32> to vector<2x1xf32>
    %337 = vector.extract_strided_slice %327 {offsets = [0, 0], sizes = [2, 48], strides = [1, 1]} : vector<2x96xf32> to vector<2x48xf32>
    %338 = arith.truncf %316 : vector<2x16xf32> to vector<2x16xbf16>
    %c0_110 = arith.constant 0 : index
    %c0_111 = arith.constant 0 : index
    %339 = vector.load %arg4[%c0_110, %c0_111] : memref<16x48xbf16, #tpu.memory_space<vmem>>, vector<16x48xbf16>
    %cst_112 = arith.constant dense<0.000000e+00> : vector<2x48xf32>
    %340 = tpu.matmul %338, %339, %cst_112 {dimension_numbers = #tpu.dot_dimension_numbers<[1], [0], [0], [1], [0, 0, 1, 1], [], []>} : vector<2x16xbf16>, vector<16x48xbf16>, vector<2x48xf32> -> vector<2x48xf32>
    %c0_113 = arith.constant 0 : index
    %c0_114 = arith.constant 0 : index
    %341 = vector.load %arg5[%c0_113, %c0_114] : memref<1x48xf32, #tpu.memory_space<vmem>>, vector<1x48xf32>
    %342 = vector.broadcast %341 : vector<1x48xf32> to vector<2x48xf32>
    %343 = arith.addf %340, %342 : vector<2x48xf32>
    %344 = vector.extract_strided_slice %337 {offsets = [0, 0], sizes = [2, 16], strides = [1, 1]} : vector<2x48xf32> to vector<2x16xf32>
    %345 = vector.extract_strided_slice %343 {offsets = [0, 0], sizes = [2, 16], strides = [1, 1]} : vector<2x48xf32> to vector<2x16xf32>
    %346 = arith.addf %344, %345 : vector<2x16xf32>
    %347 = arith.negf %346 : vector<2x16xf32>
    %348 = math.exp %347 : vector<2x16xf32>
    %cst_115 = arith.constant 1.000000e+00 : f32
    %349 = vector.broadcast %cst_115 : f32 to vector<2x16xf32>
    %350 = arith.addf %349, %348 : vector<2x16xf32>
    %351 = arith.divf %349, %350 : vector<2x16xf32>
    %352 = vector.extract_strided_slice %337 {offsets = [0, 16], sizes = [2, 16], strides = [1, 1]} : vector<2x48xf32> to vector<2x16xf32>
    %353 = vector.extract_strided_slice %343 {offsets = [0, 16], sizes = [2, 16], strides = [1, 1]} : vector<2x48xf32> to vector<2x16xf32>
    %354 = arith.addf %352, %353 : vector<2x16xf32>
    %355 = arith.negf %354 : vector<2x16xf32>
    %356 = math.exp %355 : vector<2x16xf32>
    %cst_116 = arith.constant 1.000000e+00 : f32
    %357 = vector.broadcast %cst_116 : f32 to vector<2x16xf32>
    %358 = arith.addf %357, %356 : vector<2x16xf32>
    %359 = arith.divf %357, %358 : vector<2x16xf32>
    %360 = vector.extract_strided_slice %337 {offsets = [0, 32], sizes = [2, 16], strides = [1, 1]} : vector<2x48xf32> to vector<2x16xf32>
    %361 = vector.extract_strided_slice %343 {offsets = [0, 32], sizes = [2, 16], strides = [1, 1]} : vector<2x48xf32> to vector<2x16xf32>
    %362 = arith.mulf %351, %361 : vector<2x16xf32>
    %363 = arith.addf %360, %362 : vector<2x16xf32>
    %364 = math.tanh %363 : vector<2x16xf32>
    %cst_117 = arith.constant 1.000000e+00 : f32
    %365 = vector.broadcast %cst_117 : f32 to vector<2x16xf32>
    %366 = arith.subf %365, %359 : vector<2x16xf32>
    %367 = arith.mulf %366, %364 : vector<2x16xf32>
    %368 = arith.mulf %359, %316 : vector<2x16xf32>
    %369 = arith.addf %367, %368 : vector<2x16xf32>
    %370 = vector.extract_strided_slice %330 {offsets = [0, 48], sizes = [2, 48], strides = [1, 1]} : vector<2x96xf32> to vector<2x48xf32>
    %371 = arith.truncf %323 : vector<2x16xf32> to vector<2x16xbf16>
    %c0_118 = arith.constant 0 : index
    %c0_119 = arith.constant 0 : index
    %372 = vector.load %arg6[%c0_118, %c0_119] : memref<16x48xbf16, #tpu.memory_space<vmem>>, vector<16x48xbf16>
    %cst_120 = arith.constant dense<0.000000e+00> : vector<2x48xf32>
    %373 = tpu.matmul %371, %372, %cst_120 {dimension_numbers = #tpu.dot_dimension_numbers<[1], [0], [0], [1], [0, 0, 1, 1], [], []>} : vector<2x16xbf16>, vector<16x48xbf16>, vector<2x48xf32> -> vector<2x48xf32>
    %c0_121 = arith.constant 0 : index
    %c0_122 = arith.constant 0 : index
    %374 = vector.load %arg7[%c0_121, %c0_122] : memref<1x48xf32, #tpu.memory_space<vmem>>, vector<1x48xf32>
    %375 = vector.broadcast %374 : vector<1x48xf32> to vector<2x48xf32>
    %376 = arith.addf %373, %375 : vector<2x48xf32>
    %377 = vector.extract_strided_slice %370 {offsets = [0, 0], sizes = [2, 16], strides = [1, 1]} : vector<2x48xf32> to vector<2x16xf32>
    %378 = vector.extract_strided_slice %376 {offsets = [0, 0], sizes = [2, 16], strides = [1, 1]} : vector<2x48xf32> to vector<2x16xf32>
    %379 = arith.addf %377, %378 : vector<2x16xf32>
    %380 = arith.negf %379 : vector<2x16xf32>
    %381 = math.exp %380 : vector<2x16xf32>
    %cst_123 = arith.constant 1.000000e+00 : f32
    %382 = vector.broadcast %cst_123 : f32 to vector<2x16xf32>
    %383 = arith.addf %382, %381 : vector<2x16xf32>
    %384 = arith.divf %382, %383 : vector<2x16xf32>
    %385 = vector.extract_strided_slice %370 {offsets = [0, 16], sizes = [2, 16], strides = [1, 1]} : vector<2x48xf32> to vector<2x16xf32>
    %386 = vector.extract_strided_slice %376 {offsets = [0, 16], sizes = [2, 16], strides = [1, 1]} : vector<2x48xf32> to vector<2x16xf32>
    %387 = arith.addf %385, %386 : vector<2x16xf32>
    %388 = arith.negf %387 : vector<2x16xf32>
    %389 = math.exp %388 : vector<2x16xf32>
    %cst_124 = arith.constant 1.000000e+00 : f32
    %390 = vector.broadcast %cst_124 : f32 to vector<2x16xf32>
    %391 = arith.addf %390, %389 : vector<2x16xf32>
    %392 = arith.divf %390, %391 : vector<2x16xf32>
    %393 = vector.extract_strided_slice %370 {offsets = [0, 32], sizes = [2, 16], strides = [1, 1]} : vector<2x48xf32> to vector<2x16xf32>
    %394 = vector.extract_strided_slice %376 {offsets = [0, 32], sizes = [2, 16], strides = [1, 1]} : vector<2x48xf32> to vector<2x16xf32>
    %395 = arith.mulf %384, %394 : vector<2x16xf32>
    %396 = arith.addf %393, %395 : vector<2x16xf32>
    %397 = math.tanh %396 : vector<2x16xf32>
    %cst_125 = arith.constant 1.000000e+00 : f32
    %398 = vector.broadcast %cst_125 : f32 to vector<2x16xf32>
    %399 = arith.subf %398, %392 : vector<2x16xf32>
    %400 = arith.mulf %399, %397 : vector<2x16xf32>
    %401 = arith.mulf %392, %323 : vector<2x16xf32>
    %402 = arith.addf %400, %401 : vector<2x16xf32>
    %403 = vector.broadcast %333 : vector<2x1xf32> to vector<2x16xf32>
    %404 = arith.mulf %403, %369 : vector<2x16xf32>
    %405 = arith.index_cast %c3_i32 : i32 to index
    %c0_126 = arith.constant 0 : index
    %c0_127 = arith.constant 0 : index
    %406 = vector.load %arg8[%405, %c0_126, %c0_127] : memref<8x2x16xf32, #tpu.memory_space<vmem>>, vector<1x2x16xf32>
    %407 = vector.shape_cast %406 : vector<1x2x16xf32> to vector<2x16xf32>
    %408 = vector.shape_cast %404 : vector<2x16xf32> to vector<1x2x16xf32>
    tpu.vector_store %arg8[%405, %c0_126, %c0_127], %408 {strides = array<i32>} : memref<8x2x16xf32, #tpu.memory_space<vmem>>, vector<1x2x16xf32>,
    %409 = vector.broadcast %336 : vector<2x1xf32> to vector<2x16xf32>
    %410 = arith.mulf %409, %402 : vector<2x16xf32>
    %411 = arith.index_cast %324 : i32 to index
    %c0_128 = arith.constant 0 : index
    %c0_129 = arith.constant 0 : index
    %412 = vector.load %arg9[%411, %c0_128, %c0_129] : memref<8x2x16xf32, #tpu.memory_space<vmem>>, vector<1x2x16xf32>
    %413 = vector.shape_cast %412 : vector<1x2x16xf32> to vector<2x16xf32>
    %414 = vector.shape_cast %410 : vector<2x16xf32> to vector<1x2x16xf32>
    tpu.vector_store %arg9[%411, %c0_128, %c0_129], %414 {strides = array<i32>} : memref<8x2x16xf32, #tpu.memory_space<vmem>>, vector<1x2x16xf32>,
    %415 = vector.broadcast %333 : vector<2x1xf32> to vector<2x16xf32>
    %416 = arith.mulf %415, %369 : vector<2x16xf32>
    %cst_130 = arith.constant 1.000000e+00 : f32
    %417 = vector.broadcast %cst_130 : f32 to vector<2x1xf32>
    %418 = arith.subf %417, %333 : vector<2x1xf32>
    %419 = vector.broadcast %418 : vector<2x1xf32> to vector<2x16xf32>
    %420 = arith.mulf %419, %316 : vector<2x16xf32>
    %421 = arith.addf %416, %420 : vector<2x16xf32>
    %422 = vector.broadcast %336 : vector<2x1xf32> to vector<2x16xf32>
    %423 = arith.mulf %422, %402 : vector<2x16xf32>
    %cst_131 = arith.constant 1.000000e+00 : f32
    %424 = vector.broadcast %cst_131 : f32 to vector<2x1xf32>
    %425 = arith.subf %424, %336 : vector<2x1xf32>
    %426 = vector.broadcast %425 : vector<2x1xf32> to vector<2x16xf32>
    %427 = arith.mulf %426, %323 : vector<2x16xf32>
    %428 = arith.addf %423, %427 : vector<2x16xf32>
    %c4_i32 = arith.constant 4 : i32
    %c7_i32_132 = arith.constant 7 : i32
    %429 = arith.subi %c7_i32_132, %c4_i32 : i32
    %c2_i32_133 = arith.constant 2 : i32
    %430 = arith.muli %c4_i32, %c2_i32_133 : i32
    %431 = arith.index_cast %430 : i32 to index
    %c0_134 = arith.constant 0 : index
    %432 = vector.load %arg12[%431, %c0_134] : memref<16x96xf32, #tpu.memory_space<vmem>>, vector<2x96xf32>
    %c2_i32_135 = arith.constant 2 : i32
    %433 = arith.muli %429, %c2_i32_135 : i32
    %434 = arith.index_cast %433 : i32 to index
    %c0_136 = arith.constant 0 : index
    %435 = vector.load %arg12[%434, %c0_136] : memref<16x96xf32, #tpu.memory_space<vmem>>, vector<2x96xf32>
    %436 = arith.index_cast %c4_i32 : i32 to index
    %c0_137 = arith.constant 0 : index
    %c0_138 = arith.constant 0 : index
    %437 = vector.load %arg1[%436, %c0_137, %c0_138] : memref<8x2x1xf32, #tpu.memory_space<vmem>>, vector<1x2x1xf32>
    %438 = vector.shape_cast %437 : vector<1x2x1xf32> to vector<2x1xf32>
    %439 = arith.index_cast %429 : i32 to index
    %c0_139 = arith.constant 0 : index
    %c0_140 = arith.constant 0 : index
    %440 = vector.load %arg1[%439, %c0_139, %c0_140] : memref<8x2x1xf32, #tpu.memory_space<vmem>>, vector<1x2x1xf32>
    %441 = vector.shape_cast %440 : vector<1x2x1xf32> to vector<2x1xf32>
    %442 = vector.extract_strided_slice %432 {offsets = [0, 0], sizes = [2, 48], strides = [1, 1]} : vector<2x96xf32> to vector<2x48xf32>
    %443 = arith.truncf %421 : vector<2x16xf32> to vector<2x16xbf16>
    %c0_141 = arith.constant 0 : index
    %c0_142 = arith.constant 0 : index
    %444 = vector.load %arg4[%c0_141, %c0_142] : memref<16x48xbf16, #tpu.memory_space<vmem>>, vector<16x48xbf16>
    %cst_143 = arith.constant dense<0.000000e+00> : vector<2x48xf32>
    %445 = tpu.matmul %443, %444, %cst_143 {dimension_numbers = #tpu.dot_dimension_numbers<[1], [0], [0], [1], [0, 0, 1, 1], [], []>} : vector<2x16xbf16>, vector<16x48xbf16>, vector<2x48xf32> -> vector<2x48xf32>
    %c0_144 = arith.constant 0 : index
    %c0_145 = arith.constant 0 : index
    %446 = vector.load %arg5[%c0_144, %c0_145] : memref<1x48xf32, #tpu.memory_space<vmem>>, vector<1x48xf32>
    %447 = vector.broadcast %446 : vector<1x48xf32> to vector<2x48xf32>
    %448 = arith.addf %445, %447 : vector<2x48xf32>
    %449 = vector.extract_strided_slice %442 {offsets = [0, 0], sizes = [2, 16], strides = [1, 1]} : vector<2x48xf32> to vector<2x16xf32>
    %450 = vector.extract_strided_slice %448 {offsets = [0, 0], sizes = [2, 16], strides = [1, 1]} : vector<2x48xf32> to vector<2x16xf32>
    %451 = arith.addf %449, %450 : vector<2x16xf32>
    %452 = arith.negf %451 : vector<2x16xf32>
    %453 = math.exp %452 : vector<2x16xf32>
    %cst_146 = arith.constant 1.000000e+00 : f32
    %454 = vector.broadcast %cst_146 : f32 to vector<2x16xf32>
    %455 = arith.addf %454, %453 : vector<2x16xf32>
    %456 = arith.divf %454, %455 : vector<2x16xf32>
    %457 = vector.extract_strided_slice %442 {offsets = [0, 16], sizes = [2, 16], strides = [1, 1]} : vector<2x48xf32> to vector<2x16xf32>
    %458 = vector.extract_strided_slice %448 {offsets = [0, 16], sizes = [2, 16], strides = [1, 1]} : vector<2x48xf32> to vector<2x16xf32>
    %459 = arith.addf %457, %458 : vector<2x16xf32>
    %460 = arith.negf %459 : vector<2x16xf32>
    %461 = math.exp %460 : vector<2x16xf32>
    %cst_147 = arith.constant 1.000000e+00 : f32
    %462 = vector.broadcast %cst_147 : f32 to vector<2x16xf32>
    %463 = arith.addf %462, %461 : vector<2x16xf32>
    %464 = arith.divf %462, %463 : vector<2x16xf32>
    %465 = vector.extract_strided_slice %442 {offsets = [0, 32], sizes = [2, 16], strides = [1, 1]} : vector<2x48xf32> to vector<2x16xf32>
    %466 = vector.extract_strided_slice %448 {offsets = [0, 32], sizes = [2, 16], strides = [1, 1]} : vector<2x48xf32> to vector<2x16xf32>
    %467 = arith.mulf %456, %466 : vector<2x16xf32>
    %468 = arith.addf %465, %467 : vector<2x16xf32>
    %469 = math.tanh %468 : vector<2x16xf32>
    %cst_148 = arith.constant 1.000000e+00 : f32
    %470 = vector.broadcast %cst_148 : f32 to vector<2x16xf32>
    %471 = arith.subf %470, %464 : vector<2x16xf32>
    %472 = arith.mulf %471, %469 : vector<2x16xf32>
    %473 = arith.mulf %464, %421 : vector<2x16xf32>
    %474 = arith.addf %472, %473 : vector<2x16xf32>
    %475 = vector.extract_strided_slice %435 {offsets = [0, 48], sizes = [2, 48], strides = [1, 1]} : vector<2x96xf32> to vector<2x48xf32>
    %476 = arith.truncf %428 : vector<2x16xf32> to vector<2x16xbf16>
    %c0_149 = arith.constant 0 : index
    %c0_150 = arith.constant 0 : index
    %477 = vector.load %arg6[%c0_149, %c0_150] : memref<16x48xbf16, #tpu.memory_space<vmem>>, vector<16x48xbf16>
    %cst_151 = arith.constant dense<0.000000e+00> : vector<2x48xf32>
    %478 = tpu.matmul %476, %477, %cst_151 {dimension_numbers = #tpu.dot_dimension_numbers<[1], [0], [0], [1], [0, 0, 1, 1], [], []>} : vector<2x16xbf16>, vector<16x48xbf16>, vector<2x48xf32> -> vector<2x48xf32>
    %c0_152 = arith.constant 0 : index
    %c0_153 = arith.constant 0 : index
    %479 = vector.load %arg7[%c0_152, %c0_153] : memref<1x48xf32, #tpu.memory_space<vmem>>, vector<1x48xf32>
    %480 = vector.broadcast %479 : vector<1x48xf32> to vector<2x48xf32>
    %481 = arith.addf %478, %480 : vector<2x48xf32>
    %482 = vector.extract_strided_slice %475 {offsets = [0, 0], sizes = [2, 16], strides = [1, 1]} : vector<2x48xf32> to vector<2x16xf32>
    %483 = vector.extract_strided_slice %481 {offsets = [0, 0], sizes = [2, 16], strides = [1, 1]} : vector<2x48xf32> to vector<2x16xf32>
    %484 = arith.addf %482, %483 : vector<2x16xf32>
    %485 = arith.negf %484 : vector<2x16xf32>
    %486 = math.exp %485 : vector<2x16xf32>
    %cst_154 = arith.constant 1.000000e+00 : f32
    %487 = vector.broadcast %cst_154 : f32 to vector<2x16xf32>
    %488 = arith.addf %487, %486 : vector<2x16xf32>
    %489 = arith.divf %487, %488 : vector<2x16xf32>
    %490 = vector.extract_strided_slice %475 {offsets = [0, 16], sizes = [2, 16], strides = [1, 1]} : vector<2x48xf32> to vector<2x16xf32>
    %491 = vector.extract_strided_slice %481 {offsets = [0, 16], sizes = [2, 16], strides = [1, 1]} : vector<2x48xf32> to vector<2x16xf32>
    %492 = arith.addf %490, %491 : vector<2x16xf32>
    %493 = arith.negf %492 : vector<2x16xf32>
    %494 = math.exp %493 : vector<2x16xf32>
    %cst_155 = arith.constant 1.000000e+00 : f32
    %495 = vector.broadcast %cst_155 : f32 to vector<2x16xf32>
    %496 = arith.addf %495, %494 : vector<2x16xf32>
    %497 = arith.divf %495, %496 : vector<2x16xf32>
    %498 = vector.extract_strided_slice %475 {offsets = [0, 32], sizes = [2, 16], strides = [1, 1]} : vector<2x48xf32> to vector<2x16xf32>
    %499 = vector.extract_strided_slice %481 {offsets = [0, 32], sizes = [2, 16], strides = [1, 1]} : vector<2x48xf32> to vector<2x16xf32>
    %500 = arith.mulf %489, %499 : vector<2x16xf32>
    %501 = arith.addf %498, %500 : vector<2x16xf32>
    %502 = math.tanh %501 : vector<2x16xf32>
    %cst_156 = arith.constant 1.000000e+00 : f32
    %503 = vector.broadcast %cst_156 : f32 to vector<2x16xf32>
    %504 = arith.subf %503, %497 : vector<2x16xf32>
    %505 = arith.mulf %504, %502 : vector<2x16xf32>
    %506 = arith.mulf %497, %428 : vector<2x16xf32>
    %507 = arith.addf %505, %506 : vector<2x16xf32>
    %508 = vector.broadcast %438 : vector<2x1xf32> to vector<2x16xf32>
    %509 = arith.mulf %508, %474 : vector<2x16xf32>
    %510 = arith.index_cast %c4_i32 : i32 to index
    %c0_157 = arith.constant 0 : index
    %c0_158 = arith.constant 0 : index
    %511 = vector.load %arg8[%510, %c0_157, %c0_158] : memref<8x2x16xf32, #tpu.memory_space<vmem>>, vector<1x2x16xf32>
    %512 = vector.shape_cast %511 : vector<1x2x16xf32> to vector<2x16xf32>
    %513 = vector.shape_cast %509 : vector<2x16xf32> to vector<1x2x16xf32>
    tpu.vector_store %arg8[%510, %c0_157, %c0_158], %513 {strides = array<i32>} : memref<8x2x16xf32, #tpu.memory_space<vmem>>, vector<1x2x16xf32>,
    %514 = vector.broadcast %441 : vector<2x1xf32> to vector<2x16xf32>
    %515 = arith.mulf %514, %507 : vector<2x16xf32>
    %516 = arith.index_cast %429 : i32 to index
    %c0_159 = arith.constant 0 : index
    %c0_160 = arith.constant 0 : index
    %517 = vector.load %arg9[%516, %c0_159, %c0_160] : memref<8x2x16xf32, #tpu.memory_space<vmem>>, vector<1x2x16xf32>
    %518 = vector.shape_cast %517 : vector<1x2x16xf32> to vector<2x16xf32>
    %519 = vector.shape_cast %515 : vector<2x16xf32> to vector<1x2x16xf32>
    tpu.vector_store %arg9[%516, %c0_159, %c0_160], %519 {strides = array<i32>} : memref<8x2x16xf32, #tpu.memory_space<vmem>>, vector<1x2x16xf32>,
    %520 = vector.broadcast %438 : vector<2x1xf32> to vector<2x16xf32>
    %521 = arith.mulf %520, %474 : vector<2x16xf32>
    %cst_161 = arith.constant 1.000000e+00 : f32
    %522 = vector.broadcast %cst_161 : f32 to vector<2x1xf32>
    %523 = arith.subf %522, %438 : vector<2x1xf32>
    %524 = vector.broadcast %523 : vector<2x1xf32> to vector<2x16xf32>
    %525 = arith.mulf %524, %421 : vector<2x16xf32>
    %526 = arith.addf %521, %525 : vector<2x16xf32>
    %527 = vector.broadcast %441 : vector<2x1xf32> to vector<2x16xf32>
    %528 = arith.mulf %527, %507 : vector<2x16xf32>
    %cst_162 = arith.constant 1.000000e+00 : f32
    %529 = vector.broadcast %cst_162 : f32 to vector<2x1xf32>
    %530 = arith.subf %529, %441 : vector<2x1xf32>
    %531 = vector.broadcast %530 : vector<2x1xf32> to vector<2x16xf32>
    %532 = arith.mulf %531, %428 : vector<2x16xf32>
    %533 = arith.addf %528, %532 : vector<2x16xf32>
    %c5_i32 = arith.constant 5 : i32
    %c7_i32_163 = arith.constant 7 : i32
    %534 = arith.subi %c7_i32_163, %c5_i32 : i32
    %c2_i32_164 = arith.constant 2 : i32
    %535 = arith.muli %c5_i32, %c2_i32_164 : i32
    %536 = arith.index_cast %535 : i32 to index
    %c0_165 = arith.constant 0 : index
    %537 = vector.load %arg12[%536, %c0_165] : memref<16x96xf32, #tpu.memory_space<vmem>>, vector<2x96xf32>
    %c2_i32_166 = arith.constant 2 : i32
    %538 = arith.muli %534, %c2_i32_166 : i32
    %539 = arith.index_cast %538 : i32 to index
    %c0_167 = arith.constant 0 : index
    %540 = vector.load %arg12[%539, %c0_167] : memref<16x96xf32, #tpu.memory_space<vmem>>, vector<2x96xf32>
    %541 = arith.index_cast %c5_i32 : i32 to index
    %c0_168 = arith.constant 0 : index
    %c0_169 = arith.constant 0 : index
    %542 = vector.load %arg1[%541, %c0_168, %c0_169] : memref<8x2x1xf32, #tpu.memory_space<vmem>>, vector<1x2x1xf32>
    %543 = vector.shape_cast %542 : vector<1x2x1xf32> to vector<2x1xf32>
    %544 = arith.index_cast %534 : i32 to index
    %c0_170 = arith.constant 0 : index
    %c0_171 = arith.constant 0 : index
    %545 = vector.load %arg1[%544, %c0_170, %c0_171] : memref<8x2x1xf32, #tpu.memory_space<vmem>>, vector<1x2x1xf32>
    %546 = vector.shape_cast %545 : vector<1x2x1xf32> to vector<2x1xf32>
    %547 = vector.extract_strided_slice %537 {offsets = [0, 0], sizes = [2, 48], strides = [1, 1]} : vector<2x96xf32> to vector<2x48xf32>
    %548 = arith.truncf %526 : vector<2x16xf32> to vector<2x16xbf16>
    %c0_172 = arith.constant 0 : index
    %c0_173 = arith.constant 0 : index
    %549 = vector.load %arg4[%c0_172, %c0_173] : memref<16x48xbf16, #tpu.memory_space<vmem>>, vector<16x48xbf16>
    %cst_174 = arith.constant dense<0.000000e+00> : vector<2x48xf32>
    %550 = tpu.matmul %548, %549, %cst_174 {dimension_numbers = #tpu.dot_dimension_numbers<[1], [0], [0], [1], [0, 0, 1, 1], [], []>} : vector<2x16xbf16>, vector<16x48xbf16>, vector<2x48xf32> -> vector<2x48xf32>
    %c0_175 = arith.constant 0 : index
    %c0_176 = arith.constant 0 : index
    %551 = vector.load %arg5[%c0_175, %c0_176] : memref<1x48xf32, #tpu.memory_space<vmem>>, vector<1x48xf32>
    %552 = vector.broadcast %551 : vector<1x48xf32> to vector<2x48xf32>
    %553 = arith.addf %550, %552 : vector<2x48xf32>
    %554 = vector.extract_strided_slice %547 {offsets = [0, 0], sizes = [2, 16], strides = [1, 1]} : vector<2x48xf32> to vector<2x16xf32>
    %555 = vector.extract_strided_slice %553 {offsets = [0, 0], sizes = [2, 16], strides = [1, 1]} : vector<2x48xf32> to vector<2x16xf32>
    %556 = arith.addf %554, %555 : vector<2x16xf32>
    %557 = arith.negf %556 : vector<2x16xf32>
    %558 = math.exp %557 : vector<2x16xf32>
    %cst_177 = arith.constant 1.000000e+00 : f32
    %559 = vector.broadcast %cst_177 : f32 to vector<2x16xf32>
    %560 = arith.addf %559, %558 : vector<2x16xf32>
    %561 = arith.divf %559, %560 : vector<2x16xf32>
    %562 = vector.extract_strided_slice %547 {offsets = [0, 16], sizes = [2, 16], strides = [1, 1]} : vector<2x48xf32> to vector<2x16xf32>
    %563 = vector.extract_strided_slice %553 {offsets = [0, 16], sizes = [2, 16], strides = [1, 1]} : vector<2x48xf32> to vector<2x16xf32>
    %564 = arith.addf %562, %563 : vector<2x16xf32>
    %565 = arith.negf %564 : vector<2x16xf32>
    %566 = math.exp %565 : vector<2x16xf32>
    %cst_178 = arith.constant 1.000000e+00 : f32
    %567 = vector.broadcast %cst_178 : f32 to vector<2x16xf32>
    %568 = arith.addf %567, %566 : vector<2x16xf32>
    %569 = arith.divf %567, %568 : vector<2x16xf32>
    %570 = vector.extract_strided_slice %547 {offsets = [0, 32], sizes = [2, 16], strides = [1, 1]} : vector<2x48xf32> to vector<2x16xf32>
    %571 = vector.extract_strided_slice %553 {offsets = [0, 32], sizes = [2, 16], strides = [1, 1]} : vector<2x48xf32> to vector<2x16xf32>
    %572 = arith.mulf %561, %571 : vector<2x16xf32>
    %573 = arith.addf %570, %572 : vector<2x16xf32>
    %574 = math.tanh %573 : vector<2x16xf32>
    %cst_179 = arith.constant 1.000000e+00 : f32
    %575 = vector.broadcast %cst_179 : f32 to vector<2x16xf32>
    %576 = arith.subf %575, %569 : vector<2x16xf32>
    %577 = arith.mulf %576, %574 : vector<2x16xf32>
    %578 = arith.mulf %569, %526 : vector<2x16xf32>
    %579 = arith.addf %577, %578 : vector<2x16xf32>
    %580 = vector.extract_strided_slice %540 {offsets = [0, 48], sizes = [2, 48], strides = [1, 1]} : vector<2x96xf32> to vector<2x48xf32>
    %581 = arith.truncf %533 : vector<2x16xf32> to vector<2x16xbf16>
    %c0_180 = arith.constant 0 : index
    %c0_181 = arith.constant 0 : index
    %582 = vector.load %arg6[%c0_180, %c0_181] : memref<16x48xbf16, #tpu.memory_space<vmem>>, vector<16x48xbf16>
    %cst_182 = arith.constant dense<0.000000e+00> : vector<2x48xf32>
    %583 = tpu.matmul %581, %582, %cst_182 {dimension_numbers = #tpu.dot_dimension_numbers<[1], [0], [0], [1], [0, 0, 1, 1], [], []>} : vector<2x16xbf16>, vector<16x48xbf16>, vector<2x48xf32> -> vector<2x48xf32>
    %c0_183 = arith.constant 0 : index
    %c0_184 = arith.constant 0 : index
    %584 = vector.load %arg7[%c0_183, %c0_184] : memref<1x48xf32, #tpu.memory_space<vmem>>, vector<1x48xf32>
    %585 = vector.broadcast %584 : vector<1x48xf32> to vector<2x48xf32>
    %586 = arith.addf %583, %585 : vector<2x48xf32>
    %587 = vector.extract_strided_slice %580 {offsets = [0, 0], sizes = [2, 16], strides = [1, 1]} : vector<2x48xf32> to vector<2x16xf32>
    %588 = vector.extract_strided_slice %586 {offsets = [0, 0], sizes = [2, 16], strides = [1, 1]} : vector<2x48xf32> to vector<2x16xf32>
    %589 = arith.addf %587, %588 : vector<2x16xf32>
    %590 = arith.negf %589 : vector<2x16xf32>
    %591 = math.exp %590 : vector<2x16xf32>
    %cst_185 = arith.constant 1.000000e+00 : f32
    %592 = vector.broadcast %cst_185 : f32 to vector<2x16xf32>
    %593 = arith.addf %592, %591 : vector<2x16xf32>
    %594 = arith.divf %592, %593 : vector<2x16xf32>
    %595 = vector.extract_strided_slice %580 {offsets = [0, 16], sizes = [2, 16], strides = [1, 1]} : vector<2x48xf32> to vector<2x16xf32>
    %596 = vector.extract_strided_slice %586 {offsets = [0, 16], sizes = [2, 16], strides = [1, 1]} : vector<2x48xf32> to vector<2x16xf32>
    %597 = arith.addf %595, %596 : vector<2x16xf32>
    %598 = arith.negf %597 : vector<2x16xf32>
    %599 = math.exp %598 : vector<2x16xf32>
    %cst_186 = arith.constant 1.000000e+00 : f32
    %600 = vector.broadcast %cst_186 : f32 to vector<2x16xf32>
    %601 = arith.addf %600, %599 : vector<2x16xf32>
    %602 = arith.divf %600, %601 : vector<2x16xf32>
    %603 = vector.extract_strided_slice %580 {offsets = [0, 32], sizes = [2, 16], strides = [1, 1]} : vector<2x48xf32> to vector<2x16xf32>
    %604 = vector.extract_strided_slice %586 {offsets = [0, 32], sizes = [2, 16], strides = [1, 1]} : vector<2x48xf32> to vector<2x16xf32>
    %605 = arith.mulf %594, %604 : vector<2x16xf32>
    %606 = arith.addf %603, %605 : vector<2x16xf32>
    %607 = math.tanh %606 : vector<2x16xf32>
    %cst_187 = arith.constant 1.000000e+00 : f32
    %608 = vector.broadcast %cst_187 : f32 to vector<2x16xf32>
    %609 = arith.subf %608, %602 : vector<2x16xf32>
    %610 = arith.mulf %609, %607 : vector<2x16xf32>
    %611 = arith.mulf %602, %533 : vector<2x16xf32>
    %612 = arith.addf %610, %611 : vector<2x16xf32>
    %613 = vector.broadcast %543 : vector<2x1xf32> to vector<2x16xf32>
    %614 = arith.mulf %613, %579 : vector<2x16xf32>
    %615 = arith.index_cast %c5_i32 : i32 to index
    %c0_188 = arith.constant 0 : index
    %c0_189 = arith.constant 0 : index
    %616 = vector.load %arg8[%615, %c0_188, %c0_189] : memref<8x2x16xf32, #tpu.memory_space<vmem>>, vector<1x2x16xf32>
    %617 = vector.shape_cast %616 : vector<1x2x16xf32> to vector<2x16xf32>
    %618 = vector.shape_cast %614 : vector<2x16xf32> to vector<1x2x16xf32>
    tpu.vector_store %arg8[%615, %c0_188, %c0_189], %618 {strides = array<i32>} : memref<8x2x16xf32, #tpu.memory_space<vmem>>, vector<1x2x16xf32>,
    %619 = vector.broadcast %546 : vector<2x1xf32> to vector<2x16xf32>
    %620 = arith.mulf %619, %612 : vector<2x16xf32>
    %621 = arith.index_cast %534 : i32 to index
    %c0_190 = arith.constant 0 : index
    %c0_191 = arith.constant 0 : index
    %622 = vector.load %arg9[%621, %c0_190, %c0_191] : memref<8x2x16xf32, #tpu.memory_space<vmem>>, vector<1x2x16xf32>
    %623 = vector.shape_cast %622 : vector<1x2x16xf32> to vector<2x16xf32>
    %624 = vector.shape_cast %620 : vector<2x16xf32> to vector<1x2x16xf32>
    tpu.vector_store %arg9[%621, %c0_190, %c0_191], %624 {strides = array<i32>} : memref<8x2x16xf32, #tpu.memory_space<vmem>>, vector<1x2x16xf32>,
    %625 = vector.broadcast %543 : vector<2x1xf32> to vector<2x16xf32>
    %626 = arith.mulf %625, %579 : vector<2x16xf32>
    %cst_192 = arith.constant 1.000000e+00 : f32
    %627 = vector.broadcast %cst_192 : f32 to vector<2x1xf32>
    %628 = arith.subf %627, %543 : vector<2x1xf32>
    %629 = vector.broadcast %628 : vector<2x1xf32> to vector<2x16xf32>
    %630 = arith.mulf %629, %526 : vector<2x16xf32>
    %631 = arith.addf %626, %630 : vector<2x16xf32>
    %632 = vector.broadcast %546 : vector<2x1xf32> to vector<2x16xf32>
    %633 = arith.mulf %632, %612 : vector<2x16xf32>
    %cst_193 = arith.constant 1.000000e+00 : f32
    %634 = vector.broadcast %cst_193 : f32 to vector<2x1xf32>
    %635 = arith.subf %634, %546 : vector<2x1xf32>
    %636 = vector.broadcast %635 : vector<2x1xf32> to vector<2x16xf32>
    %637 = arith.mulf %636, %533 : vector<2x16xf32>
    %638 = arith.addf %633, %637 : vector<2x16xf32>
    %c6_i32 = arith.constant 6 : i32
    %c7_i32_194 = arith.constant 7 : i32
    %639 = arith.subi %c7_i32_194, %c6_i32 : i32
    %c2_i32_195 = arith.constant 2 : i32
    %640 = arith.muli %c6_i32, %c2_i32_195 : i32
    %641 = arith.index_cast %640 : i32 to index
    %c0_196 = arith.constant 0 : index
    %642 = vector.load %arg12[%641, %c0_196] : memref<16x96xf32, #tpu.memory_space<vmem>>, vector<2x96xf32>
    %c2_i32_197 = arith.constant 2 : i32
    %643 = arith.muli %639, %c2_i32_197 : i32
    %644 = arith.index_cast %643 : i32 to index
    %c0_198 = arith.constant 0 : index
    %645 = vector.load %arg12[%644, %c0_198] : memref<16x96xf32, #tpu.memory_space<vmem>>, vector<2x96xf32>
    %646 = arith.index_cast %c6_i32 : i32 to index
    %c0_199 = arith.constant 0 : index
    %c0_200 = arith.constant 0 : index
    %647 = vector.load %arg1[%646, %c0_199, %c0_200] : memref<8x2x1xf32, #tpu.memory_space<vmem>>, vector<1x2x1xf32>
    %648 = vector.shape_cast %647 : vector<1x2x1xf32> to vector<2x1xf32>
    %649 = arith.index_cast %639 : i32 to index
    %c0_201 = arith.constant 0 : index
    %c0_202 = arith.constant 0 : index
    %650 = vector.load %arg1[%649, %c0_201, %c0_202] : memref<8x2x1xf32, #tpu.memory_space<vmem>>, vector<1x2x1xf32>
    %651 = vector.shape_cast %650 : vector<1x2x1xf32> to vector<2x1xf32>
    %652 = vector.extract_strided_slice %642 {offsets = [0, 0], sizes = [2, 48], strides = [1, 1]} : vector<2x96xf32> to vector<2x48xf32>
    %653 = arith.truncf %631 : vector<2x16xf32> to vector<2x16xbf16>
    %c0_203 = arith.constant 0 : index
    %c0_204 = arith.constant 0 : index
    %654 = vector.load %arg4[%c0_203, %c0_204] : memref<16x48xbf16, #tpu.memory_space<vmem>>, vector<16x48xbf16>
    %cst_205 = arith.constant dense<0.000000e+00> : vector<2x48xf32>
    %655 = tpu.matmul %653, %654, %cst_205 {dimension_numbers = #tpu.dot_dimension_numbers<[1], [0], [0], [1], [0, 0, 1, 1], [], []>} : vector<2x16xbf16>, vector<16x48xbf16>, vector<2x48xf32> -> vector<2x48xf32>
    %c0_206 = arith.constant 0 : index
    %c0_207 = arith.constant 0 : index
    %656 = vector.load %arg5[%c0_206, %c0_207] : memref<1x48xf32, #tpu.memory_space<vmem>>, vector<1x48xf32>
    %657 = vector.broadcast %656 : vector<1x48xf32> to vector<2x48xf32>
    %658 = arith.addf %655, %657 : vector<2x48xf32>
    %659 = vector.extract_strided_slice %652 {offsets = [0, 0], sizes = [2, 16], strides = [1, 1]} : vector<2x48xf32> to vector<2x16xf32>
    %660 = vector.extract_strided_slice %658 {offsets = [0, 0], sizes = [2, 16], strides = [1, 1]} : vector<2x48xf32> to vector<2x16xf32>
    %661 = arith.addf %659, %660 : vector<2x16xf32>
    %662 = arith.negf %661 : vector<2x16xf32>
    %663 = math.exp %662 : vector<2x16xf32>
    %cst_208 = arith.constant 1.000000e+00 : f32
    %664 = vector.broadcast %cst_208 : f32 to vector<2x16xf32>
    %665 = arith.addf %664, %663 : vector<2x16xf32>
    %666 = arith.divf %664, %665 : vector<2x16xf32>
    %667 = vector.extract_strided_slice %652 {offsets = [0, 16], sizes = [2, 16], strides = [1, 1]} : vector<2x48xf32> to vector<2x16xf32>
    %668 = vector.extract_strided_slice %658 {offsets = [0, 16], sizes = [2, 16], strides = [1, 1]} : vector<2x48xf32> to vector<2x16xf32>
    %669 = arith.addf %667, %668 : vector<2x16xf32>
    %670 = arith.negf %669 : vector<2x16xf32>
    %671 = math.exp %670 : vector<2x16xf32>
    %cst_209 = arith.constant 1.000000e+00 : f32
    %672 = vector.broadcast %cst_209 : f32 to vector<2x16xf32>
    %673 = arith.addf %672, %671 : vector<2x16xf32>
    %674 = arith.divf %672, %673 : vector<2x16xf32>
    %675 = vector.extract_strided_slice %652 {offsets = [0, 32], sizes = [2, 16], strides = [1, 1]} : vector<2x48xf32> to vector<2x16xf32>
    %676 = vector.extract_strided_slice %658 {offsets = [0, 32], sizes = [2, 16], strides = [1, 1]} : vector<2x48xf32> to vector<2x16xf32>
    %677 = arith.mulf %666, %676 : vector<2x16xf32>
    %678 = arith.addf %675, %677 : vector<2x16xf32>
    %679 = math.tanh %678 : vector<2x16xf32>
    %cst_210 = arith.constant 1.000000e+00 : f32
    %680 = vector.broadcast %cst_210 : f32 to vector<2x16xf32>
    %681 = arith.subf %680, %674 : vector<2x16xf32>
    %682 = arith.mulf %681, %679 : vector<2x16xf32>
    %683 = arith.mulf %674, %631 : vector<2x16xf32>
    %684 = arith.addf %682, %683 : vector<2x16xf32>
    %685 = vector.extract_strided_slice %645 {offsets = [0, 48], sizes = [2, 48], strides = [1, 1]} : vector<2x96xf32> to vector<2x48xf32>
    %686 = arith.truncf %638 : vector<2x16xf32> to vector<2x16xbf16>
    %c0_211 = arith.constant 0 : index
    %c0_212 = arith.constant 0 : index
    %687 = vector.load %arg6[%c0_211, %c0_212] : memref<16x48xbf16, #tpu.memory_space<vmem>>, vector<16x48xbf16>
    %cst_213 = arith.constant dense<0.000000e+00> : vector<2x48xf32>
    %688 = tpu.matmul %686, %687, %cst_213 {dimension_numbers = #tpu.dot_dimension_numbers<[1], [0], [0], [1], [0, 0, 1, 1], [], []>} : vector<2x16xbf16>, vector<16x48xbf16>, vector<2x48xf32> -> vector<2x48xf32>
    %c0_214 = arith.constant 0 : index
    %c0_215 = arith.constant 0 : index
    %689 = vector.load %arg7[%c0_214, %c0_215] : memref<1x48xf32, #tpu.memory_space<vmem>>, vector<1x48xf32>
    %690 = vector.broadcast %689 : vector<1x48xf32> to vector<2x48xf32>
    %691 = arith.addf %688, %690 : vector<2x48xf32>
    %692 = vector.extract_strided_slice %685 {offsets = [0, 0], sizes = [2, 16], strides = [1, 1]} : vector<2x48xf32> to vector<2x16xf32>
    %693 = vector.extract_strided_slice %691 {offsets = [0, 0], sizes = [2, 16], strides = [1, 1]} : vector<2x48xf32> to vector<2x16xf32>
    %694 = arith.addf %692, %693 : vector<2x16xf32>
    %695 = arith.negf %694 : vector<2x16xf32>
    %696 = math.exp %695 : vector<2x16xf32>
    %cst_216 = arith.constant 1.000000e+00 : f32
    %697 = vector.broadcast %cst_216 : f32 to vector<2x16xf32>
    %698 = arith.addf %697, %696 : vector<2x16xf32>
    %699 = arith.divf %697, %698 : vector<2x16xf32>
    %700 = vector.extract_strided_slice %685 {offsets = [0, 16], sizes = [2, 16], strides = [1, 1]} : vector<2x48xf32> to vector<2x16xf32>
    %701 = vector.extract_strided_slice %691 {offsets = [0, 16], sizes = [2, 16], strides = [1, 1]} : vector<2x48xf32> to vector<2x16xf32>
    %702 = arith.addf %700, %701 : vector<2x16xf32>
    %703 = arith.negf %702 : vector<2x16xf32>
    %704 = math.exp %703 : vector<2x16xf32>
    %cst_217 = arith.constant 1.000000e+00 : f32
    %705 = vector.broadcast %cst_217 : f32 to vector<2x16xf32>
    %706 = arith.addf %705, %704 : vector<2x16xf32>
    %707 = arith.divf %705, %706 : vector<2x16xf32>
    %708 = vector.extract_strided_slice %685 {offsets = [0, 32], sizes = [2, 16], strides = [1, 1]} : vector<2x48xf32> to vector<2x16xf32>
    %709 = vector.extract_strided_slice %691 {offsets = [0, 32], sizes = [2, 16], strides = [1, 1]} : vector<2x48xf32> to vector<2x16xf32>
    %710 = arith.mulf %699, %709 : vector<2x16xf32>
    %711 = arith.addf %708, %710 : vector<2x16xf32>
    %712 = math.tanh %711 : vector<2x16xf32>
    %cst_218 = arith.constant 1.000000e+00 : f32
    %713 = vector.broadcast %cst_218 : f32 to vector<2x16xf32>
    %714 = arith.subf %713, %707 : vector<2x16xf32>
    %715 = arith.mulf %714, %712 : vector<2x16xf32>
    %716 = arith.mulf %707, %638 : vector<2x16xf32>
    %717 = arith.addf %715, %716 : vector<2x16xf32>
    %718 = vector.broadcast %648 : vector<2x1xf32> to vector<2x16xf32>
    %719 = arith.mulf %718, %684 : vector<2x16xf32>
    %720 = arith.index_cast %c6_i32 : i32 to index
    %c0_219 = arith.constant 0 : index
    %c0_220 = arith.constant 0 : index
    %721 = vector.load %arg8[%720, %c0_219, %c0_220] : memref<8x2x16xf32, #tpu.memory_space<vmem>>, vector<1x2x16xf32>
    %722 = vector.shape_cast %721 : vector<1x2x16xf32> to vector<2x16xf32>
    %723 = vector.shape_cast %719 : vector<2x16xf32> to vector<1x2x16xf32>
    tpu.vector_store %arg8[%720, %c0_219, %c0_220], %723 {strides = array<i32>} : memref<8x2x16xf32, #tpu.memory_space<vmem>>, vector<1x2x16xf32>,
    %724 = vector.broadcast %651 : vector<2x1xf32> to vector<2x16xf32>
    %725 = arith.mulf %724, %717 : vector<2x16xf32>
    %726 = arith.index_cast %639 : i32 to index
    %c0_221 = arith.constant 0 : index
    %c0_222 = arith.constant 0 : index
    %727 = vector.load %arg9[%726, %c0_221, %c0_222] : memref<8x2x16xf32, #tpu.memory_space<vmem>>, vector<1x2x16xf32>
    %728 = vector.shape_cast %727 : vector<1x2x16xf32> to vector<2x16xf32>
    %729 = vector.shape_cast %725 : vector<2x16xf32> to vector<1x2x16xf32>
    tpu.vector_store %arg9[%726, %c0_221, %c0_222], %729 {strides = array<i32>} : memref<8x2x16xf32, #tpu.memory_space<vmem>>, vector<1x2x16xf32>,
    %730 = vector.broadcast %648 : vector<2x1xf32> to vector<2x16xf32>
    %731 = arith.mulf %730, %684 : vector<2x16xf32>
    %cst_223 = arith.constant 1.000000e+00 : f32
    %732 = vector.broadcast %cst_223 : f32 to vector<2x1xf32>
    %733 = arith.subf %732, %648 : vector<2x1xf32>
    %734 = vector.broadcast %733 : vector<2x1xf32> to vector<2x16xf32>
    %735 = arith.mulf %734, %631 : vector<2x16xf32>
    %736 = arith.addf %731, %735 : vector<2x16xf32>
    %737 = vector.broadcast %651 : vector<2x1xf32> to vector<2x16xf32>
    %738 = arith.mulf %737, %717 : vector<2x16xf32>
    %cst_224 = arith.constant 1.000000e+00 : f32
    %739 = vector.broadcast %cst_224 : f32 to vector<2x1xf32>
    %740 = arith.subf %739, %651 : vector<2x1xf32>
    %741 = vector.broadcast %740 : vector<2x1xf32> to vector<2x16xf32>
    %742 = arith.mulf %741, %638 : vector<2x16xf32>
    %743 = arith.addf %738, %742 : vector<2x16xf32>
    %c7_i32_225 = arith.constant 7 : i32
    %c7_i32_226 = arith.constant 7 : i32
    %744 = arith.subi %c7_i32_226, %c7_i32_225 : i32
    %c2_i32_227 = arith.constant 2 : i32
    %745 = arith.muli %c7_i32_225, %c2_i32_227 : i32
    %746 = arith.index_cast %745 : i32 to index
    %c0_228 = arith.constant 0 : index
    %747 = vector.load %arg12[%746, %c0_228] : memref<16x96xf32, #tpu.memory_space<vmem>>, vector<2x96xf32>
    %c2_i32_229 = arith.constant 2 : i32
    %748 = arith.muli %744, %c2_i32_229 : i32
    %749 = arith.index_cast %748 : i32 to index
    %c0_230 = arith.constant 0 : index
    %750 = vector.load %arg12[%749, %c0_230] : memref<16x96xf32, #tpu.memory_space<vmem>>, vector<2x96xf32>
    %751 = arith.index_cast %c7_i32_225 : i32 to index
    %c0_231 = arith.constant 0 : index
    %c0_232 = arith.constant 0 : index
    %752 = vector.load %arg1[%751, %c0_231, %c0_232] : memref<8x2x1xf32, #tpu.memory_space<vmem>>, vector<1x2x1xf32>
    %753 = vector.shape_cast %752 : vector<1x2x1xf32> to vector<2x1xf32>
    %754 = arith.index_cast %744 : i32 to index
    %c0_233 = arith.constant 0 : index
    %c0_234 = arith.constant 0 : index
    %755 = vector.load %arg1[%754, %c0_233, %c0_234] : memref<8x2x1xf32, #tpu.memory_space<vmem>>, vector<1x2x1xf32>
    %756 = vector.shape_cast %755 : vector<1x2x1xf32> to vector<2x1xf32>
    %757 = vector.extract_strided_slice %747 {offsets = [0, 0], sizes = [2, 48], strides = [1, 1]} : vector<2x96xf32> to vector<2x48xf32>
    %758 = arith.truncf %736 : vector<2x16xf32> to vector<2x16xbf16>
    %c0_235 = arith.constant 0 : index
    %c0_236 = arith.constant 0 : index
    %759 = vector.load %arg4[%c0_235, %c0_236] : memref<16x48xbf16, #tpu.memory_space<vmem>>, vector<16x48xbf16>
    %cst_237 = arith.constant dense<0.000000e+00> : vector<2x48xf32>
    %760 = tpu.matmul %758, %759, %cst_237 {dimension_numbers = #tpu.dot_dimension_numbers<[1], [0], [0], [1], [0, 0, 1, 1], [], []>} : vector<2x16xbf16>, vector<16x48xbf16>, vector<2x48xf32> -> vector<2x48xf32>
    %c0_238 = arith.constant 0 : index
    %c0_239 = arith.constant 0 : index
    %761 = vector.load %arg5[%c0_238, %c0_239] : memref<1x48xf32, #tpu.memory_space<vmem>>, vector<1x48xf32>
    %762 = vector.broadcast %761 : vector<1x48xf32> to vector<2x48xf32>
    %763 = arith.addf %760, %762 : vector<2x48xf32>
    %764 = vector.extract_strided_slice %757 {offsets = [0, 0], sizes = [2, 16], strides = [1, 1]} : vector<2x48xf32> to vector<2x16xf32>
    %765 = vector.extract_strided_slice %763 {offsets = [0, 0], sizes = [2, 16], strides = [1, 1]} : vector<2x48xf32> to vector<2x16xf32>
    %766 = arith.addf %764, %765 : vector<2x16xf32>
    %767 = arith.negf %766 : vector<2x16xf32>
    %768 = math.exp %767 : vector<2x16xf32>
    %cst_240 = arith.constant 1.000000e+00 : f32
    %769 = vector.broadcast %cst_240 : f32 to vector<2x16xf32>
    %770 = arith.addf %769, %768 : vector<2x16xf32>
    %771 = arith.divf %769, %770 : vector<2x16xf32>
    %772 = vector.extract_strided_slice %757 {offsets = [0, 16], sizes = [2, 16], strides = [1, 1]} : vector<2x48xf32> to vector<2x16xf32>
    %773 = vector.extract_strided_slice %763 {offsets = [0, 16], sizes = [2, 16], strides = [1, 1]} : vector<2x48xf32> to vector<2x16xf32>
    %774 = arith.addf %772, %773 : vector<2x16xf32>
    %775 = arith.negf %774 : vector<2x16xf32>
    %776 = math.exp %775 : vector<2x16xf32>
    %cst_241 = arith.constant 1.000000e+00 : f32
    %777 = vector.broadcast %cst_241 : f32 to vector<2x16xf32>
    %778 = arith.addf %777, %776 : vector<2x16xf32>
    %779 = arith.divf %777, %778 : vector<2x16xf32>
    %780 = vector.extract_strided_slice %757 {offsets = [0, 32], sizes = [2, 16], strides = [1, 1]} : vector<2x48xf32> to vector<2x16xf32>
    %781 = vector.extract_strided_slice %763 {offsets = [0, 32], sizes = [2, 16], strides = [1, 1]} : vector<2x48xf32> to vector<2x16xf32>
    %782 = arith.mulf %771, %781 : vector<2x16xf32>
    %783 = arith.addf %780, %782 : vector<2x16xf32>
    %784 = math.tanh %783 : vector<2x16xf32>
    %cst_242 = arith.constant 1.000000e+00 : f32
    %785 = vector.broadcast %cst_242 : f32 to vector<2x16xf32>
    %786 = arith.subf %785, %779 : vector<2x16xf32>
    %787 = arith.mulf %786, %784 : vector<2x16xf32>
    %788 = arith.mulf %779, %736 : vector<2x16xf32>
    %789 = arith.addf %787, %788 : vector<2x16xf32>
    %790 = vector.extract_strided_slice %750 {offsets = [0, 48], sizes = [2, 48], strides = [1, 1]} : vector<2x96xf32> to vector<2x48xf32>
    %791 = arith.truncf %743 : vector<2x16xf32> to vector<2x16xbf16>
    %c0_243 = arith.constant 0 : index
    %c0_244 = arith.constant 0 : index
    %792 = vector.load %arg6[%c0_243, %c0_244] : memref<16x48xbf16, #tpu.memory_space<vmem>>, vector<16x48xbf16>
    %cst_245 = arith.constant dense<0.000000e+00> : vector<2x48xf32>
    %793 = tpu.matmul %791, %792, %cst_245 {dimension_numbers = #tpu.dot_dimension_numbers<[1], [0], [0], [1], [0, 0, 1, 1], [], []>} : vector<2x16xbf16>, vector<16x48xbf16>, vector<2x48xf32> -> vector<2x48xf32>
    %c0_246 = arith.constant 0 : index
    %c0_247 = arith.constant 0 : index
    %794 = vector.load %arg7[%c0_246, %c0_247] : memref<1x48xf32, #tpu.memory_space<vmem>>, vector<1x48xf32>
    %795 = vector.broadcast %794 : vector<1x48xf32> to vector<2x48xf32>
    %796 = arith.addf %793, %795 : vector<2x48xf32>
    %797 = vector.extract_strided_slice %790 {offsets = [0, 0], sizes = [2, 16], strides = [1, 1]} : vector<2x48xf32> to vector<2x16xf32>
    %798 = vector.extract_strided_slice %796 {offsets = [0, 0], sizes = [2, 16], strides = [1, 1]} : vector<2x48xf32> to vector<2x16xf32>
    %799 = arith.addf %797, %798 : vector<2x16xf32>
    %800 = arith.negf %799 : vector<2x16xf32>
    %801 = math.exp %800 : vector<2x16xf32>
    %cst_248 = arith.constant 1.000000e+00 : f32
    %802 = vector.broadcast %cst_248 : f32 to vector<2x16xf32>
    %803 = arith.addf %802, %801 : vector<2x16xf32>
    %804 = arith.divf %802, %803 : vector<2x16xf32>
    %805 = vector.extract_strided_slice %790 {offsets = [0, 16], sizes = [2, 16], strides = [1, 1]} : vector<2x48xf32> to vector<2x16xf32>
    %806 = vector.extract_strided_slice %796 {offsets = [0, 16], sizes = [2, 16], strides = [1, 1]} : vector<2x48xf32> to vector<2x16xf32>
    %807 = arith.addf %805, %806 : vector<2x16xf32>
    %808 = arith.negf %807 : vector<2x16xf32>
    %809 = math.exp %808 : vector<2x16xf32>
    %cst_249 = arith.constant 1.000000e+00 : f32
    %810 = vector.broadcast %cst_249 : f32 to vector<2x16xf32>
    %811 = arith.addf %810, %809 : vector<2x16xf32>
    %812 = arith.divf %810, %811 : vector<2x16xf32>
    %813 = vector.extract_strided_slice %790 {offsets = [0, 32], sizes = [2, 16], strides = [1, 1]} : vector<2x48xf32> to vector<2x16xf32>
    %814 = vector.extract_strided_slice %796 {offsets = [0, 32], sizes = [2, 16], strides = [1, 1]} : vector<2x48xf32> to vector<2x16xf32>
    %815 = arith.mulf %804, %814 : vector<2x16xf32>
    %816 = arith.addf %813, %815 : vector<2x16xf32>
    %817 = math.tanh %816 : vector<2x16xf32>
    %cst_250 = arith.constant 1.000000e+00 : f32
    %818 = vector.broadcast %cst_250 : f32 to vector<2x16xf32>
    %819 = arith.subf %818, %812 : vector<2x16xf32>
    %820 = arith.mulf %819, %817 : vector<2x16xf32>
    %821 = arith.mulf %812, %743 : vector<2x16xf32>
    %822 = arith.addf %820, %821 : vector<2x16xf32>
    %823 = vector.broadcast %753 : vector<2x1xf32> to vector<2x16xf32>
    %824 = arith.mulf %823, %789 : vector<2x16xf32>
    %825 = arith.index_cast %c7_i32_225 : i32 to index
    %c0_251 = arith.constant 0 : index
    %c0_252 = arith.constant 0 : index
    %826 = vector.load %arg8[%825, %c0_251, %c0_252] : memref<8x2x16xf32, #tpu.memory_space<vmem>>, vector<1x2x16xf32>
    %827 = vector.shape_cast %826 : vector<1x2x16xf32> to vector<2x16xf32>
    %828 = vector.shape_cast %824 : vector<2x16xf32> to vector<1x2x16xf32>
    tpu.vector_store %arg8[%825, %c0_251, %c0_252], %828 {strides = array<i32>} : memref<8x2x16xf32, #tpu.memory_space<vmem>>, vector<1x2x16xf32>,
    %829 = vector.broadcast %756 : vector<2x1xf32> to vector<2x16xf32>
    %830 = arith.mulf %829, %822 : vector<2x16xf32>
    %831 = arith.index_cast %744 : i32 to index
    %c0_253 = arith.constant 0 : index
    %c0_254 = arith.constant 0 : index
    %832 = vector.load %arg9[%831, %c0_253, %c0_254] : memref<8x2x16xf32, #tpu.memory_space<vmem>>, vector<1x2x16xf32>
    %833 = vector.shape_cast %832 : vector<1x2x16xf32> to vector<2x16xf32>
    %834 = vector.shape_cast %830 : vector<2x16xf32> to vector<1x2x16xf32>
    tpu.vector_store %arg9[%831, %c0_253, %c0_254], %834 {strides = array<i32>} : memref<8x2x16xf32, #tpu.memory_space<vmem>>, vector<1x2x16xf32>,
    %835 = vector.broadcast %753 : vector<2x1xf32> to vector<2x16xf32>
    %836 = arith.mulf %835, %789 : vector<2x16xf32>
    %cst_255 = arith.constant 1.000000e+00 : f32
    %837 = vector.broadcast %cst_255 : f32 to vector<2x1xf32>
    %838 = arith.subf %837, %753 : vector<2x1xf32>
    %839 = vector.broadcast %838 : vector<2x1xf32> to vector<2x16xf32>
    %840 = arith.mulf %839, %736 : vector<2x16xf32>
    %841 = arith.addf %836, %840 : vector<2x16xf32>
    %842 = vector.broadcast %756 : vector<2x1xf32> to vector<2x16xf32>
    %843 = arith.mulf %842, %822 : vector<2x16xf32>
    %cst_256 = arith.constant 1.000000e+00 : f32
    %844 = vector.broadcast %cst_256 : f32 to vector<2x1xf32>
    %845 = arith.subf %844, %756 : vector<2x1xf32>
    %846 = vector.broadcast %845 : vector<2x1xf32> to vector<2x16xf32>
    %847 = arith.mulf %846, %743 : vector<2x16xf32>
    %848 = arith.addf %843, %847 : vector<2x16xf32>
    %c8_i32 = arith.constant 8 : i32
    %c0_257 = arith.constant 0 : index
    %c0_258 = arith.constant 0 : index
    %849 = vector.load %arg10[%c0_257, %c0_258] : memref<2x16xf32, #tpu.memory_space<vmem>>, vector<2x16xf32>
    tpu.vector_store %arg10[%c0_257, %c0_258], %841 {strides = array<i32>} : memref<2x16xf32, #tpu.memory_space<vmem>>, vector<2x16xf32>,
    %c0_259 = arith.constant 0 : index
    %c0_260 = arith.constant 0 : index
    %850 = vector.load %arg11[%c0_259, %c0_260] : memref<2x16xf32, #tpu.memory_space<vmem>>, vector<2x16xf32>
    tpu.vector_store %arg11[%c0_259, %c0_260], %848 {strides = array<i32>} : memref<2x16xf32, #tpu.memory_space<vmem>>, vector<2x16xf32>,
    return
  }
}

module attributes {stable_mosaic.version = 11 : i64} {
  func.func @kernel(%arg0: memref<2x32xf32, #tpu.memory_space<vmem>>, %arg1: memref<32x32xbf16, #tpu.memory_space<vmem>>, %arg2: memref<2x8x32xf32, #tpu.memory_space<vmem>>, %arg3: memref<2x8x32xf32, #tpu.memory_space<vmem>>, %arg4: memref<2x8xf32, #tpu.memory_space<vmem>>, %arg5: memref<32x32xbf16, #tpu.memory_space<vmem>>, %arg6: memref<32x32xbf16, #tpu.memory_space<vmem>>, %arg7: memref<1x32xf32, #tpu.memory_space<vmem>>, %arg8: memref<32x8xbf16, #tpu.memory_space<vmem>>, %arg9: memref<1x8xf32, #tpu.memory_space<vmem>>, %arg10: memref<8x32xbf16, #tpu.memory_space<vmem>>, %arg11: memref<32x1024xbf16, #tpu.memory_space<vmem>>, %arg12: memref<1x32xf32, #tpu.memory_space<vmem>>, %arg13: memref<32x64xbf16, #tpu.memory_space<vmem>>, %arg14: memref<64x8xbf16, #tpu.memory_space<vmem>>, %arg15: memref<8x64xbf16, #tpu.memory_space<vmem>>, %arg16: memref<2x8xf32, #tpu.memory_space<vmem>>, %arg17: memref<2x8xf32, #tpu.memory_space<vmem>>, %arg18: memref<2x1xi32, #tpu.memory_space<vmem>>, %arg19: memref<2x64xf32, #tpu.memory_space<vmem>>, %arg20: memref<2x5xi32, #tpu.memory_space<vmem>>) attributes {dimension_semantics = [], scalar_prefetch = 0 : i64, scratch_operands = 0 : i64, tpu.core_type = #tpu.core_type<tc>} {
    %c0 = arith.constant 0 : index
    %c0_0 = arith.constant 0 : index
    %0 = vector.load %arg0[%c0, %c0_0] : memref<2x32xf32, #tpu.memory_space<vmem>>, vector<2x32xf32>
    %1 = arith.truncf %0 : vector<2x32xf32> to vector<2x32xbf16>
    %c0_1 = arith.constant 0 : index
    %c0_2 = arith.constant 0 : index
    %2 = vector.load %arg1[%c0_1, %c0_2] : memref<32x32xbf16, #tpu.memory_space<vmem>>, vector<32x32xbf16>
    %cst = arith.constant dense<0.000000e+00> : vector<2x32xf32>
    %3 = tpu.matmul %1, %2, %cst {dimension_numbers = #tpu.dot_dimension_numbers<[1], [0], [0], [1], [0, 0, 1, 1], [], []>} : vector<2x32xbf16>, vector<32x32xbf16>, vector<2x32xf32> -> vector<2x32xf32>
    %c0_3 = arith.constant 0 : index
    %c0_4 = arith.constant 0 : index
    %c0_5 = arith.constant 0 : index
    %4 = vector.load %arg2[%c0_3, %c0_4, %c0_5] : memref<2x8x32xf32, #tpu.memory_space<vmem>>, vector<2x8x32xf32>
    %5 = vector.shape_cast %3 : vector<2x32xf32> to vector<2x1x32xf32>
    %6 = vector.broadcast %5 : vector<2x1x32xf32> to vector<2x8x32xf32>
    %7 = arith.mulf %6, %4 : vector<2x8x32xf32>
    %cst_6 = arith.constant dense<0.000000e+00> : vector<2x8xf32>
    %8 = vector.multi_reduction <add>, %7, %cst_6 [2] : vector<2x8x32xf32> to vector<2x8xf32>
    %c0_7 = arith.constant 0 : index
    %c0_8 = arith.constant 0 : index
    %9 = vector.load %arg4[%c0_7, %c0_8] : memref<2x8xf32, #tpu.memory_space<vmem>>, vector<2x8xf32>
    %cst_9 = arith.constant 5.000000e-01 : f32
    %10 = vector.broadcast %cst_9 : f32 to vector<2x8xf32>
    %11 = arith.cmpf ogt, %9, %10 : vector<2x8xf32>
    %cst_10 = arith.constant -1.000000e+30 : f32
    %12 = vector.broadcast %cst_10 : f32 to vector<2x8xf32>
    %13 = arith.select %11, %8, %12 : vector<2x8xi1>, vector<2x8xf32>
    %cst_11 = arith.constant dense<0xFF800000> : vector<2xf32>
    %14 = vector.multi_reduction <maximumf>, %13, %cst_11 [1] : vector<2x8xf32> to vector<2xf32>
    %15 = vector.shape_cast %14 : vector<2xf32> to vector<2x1xf32>
    %16 = vector.broadcast %15 : vector<2x1xf32> to vector<2x8xf32>
    %17 = arith.subf %13, %16 : vector<2x8xf32>
    %18 = math.exp %17 : vector<2x8xf32>
    %19 = arith.mulf %18, %9 : vector<2x8xf32>
    %cst_12 = arith.constant dense<0.000000e+00> : vector<2xf32>
    %20 = vector.multi_reduction <add>, %19, %cst_12 [1] : vector<2x8xf32> to vector<2xf32>
    %21 = vector.shape_cast %20 : vector<2xf32> to vector<2x1xf32>
    %cst_13 = arith.constant 1.000000e-30 : f32
    %22 = vector.broadcast %cst_13 : f32 to vector<2x1xf32>
    %23 = arith.maximumf %21, %22 : vector<2x1xf32>
    %24 = vector.broadcast %23 : vector<2x1xf32> to vector<2x8xf32>
    %25 = arith.divf %19, %24 : vector<2x8xf32>
    %c0_14 = arith.constant 0 : index
    %c0_15 = arith.constant 0 : index
    %26 = vector.load %arg16[%c0_14, %c0_15] : memref<2x8xf32, #tpu.memory_space<vmem>>, vector<2x8xf32>
    tpu.vector_store %arg16[%c0_14, %c0_15], %25 {strides = array<i32>} : memref<2x8xf32, #tpu.memory_space<vmem>>, vector<2x8xf32>,
    %27 = vector.shape_cast %25 : vector<2x8xf32> to vector<2x8x1xf32>
    %28 = vector.broadcast %27 : vector<2x8x1xf32> to vector<2x8x32xf32>
    %29 = arith.mulf %28, %4 : vector<2x8x32xf32>
    %cst_16 = arith.constant dense<0.000000e+00> : vector<2x32xf32>
    %30 = vector.multi_reduction <add>, %29, %cst_16 [1] : vector<2x8x32xf32> to vector<2x32xf32>
    %31 = vector.shape_cast %25 : vector<2x8xf32> to vector<2x8x1xf32>
    %c0_17 = arith.constant 0 : index
    %c0_18 = arith.constant 0 : index
    %c0_19 = arith.constant 0 : index
    %32 = vector.load %arg3[%c0_17, %c0_18, %c0_19] : memref<2x8x32xf32, #tpu.memory_space<vmem>>, vector<2x8x32xf32>
    %33 = vector.broadcast %31 : vector<2x8x1xf32> to vector<2x8x32xf32>
    %34 = arith.mulf %33, %32 : vector<2x8x32xf32>
    %cst_20 = arith.constant dense<0.000000e+00> : vector<2x32xf32>
    %35 = vector.multi_reduction <add>, %34, %cst_20 [1] : vector<2x8x32xf32> to vector<2x32xf32>
    %36 = arith.truncf %30 : vector<2x32xf32> to vector<2x32xbf16>
    %c0_21 = arith.constant 0 : index
    %c0_22 = arith.constant 0 : index
    %37 = vector.load %arg5[%c0_21, %c0_22] : memref<32x32xbf16, #tpu.memory_space<vmem>>, vector<32x32xbf16>
    %cst_23 = arith.constant dense<0.000000e+00> : vector<2x32xf32>
    %38 = tpu.matmul %36, %37, %cst_23 {dimension_numbers = #tpu.dot_dimension_numbers<[1], [0], [0], [1], [0, 0, 1, 1], [], []>} : vector<2x32xbf16>, vector<32x32xbf16>, vector<2x32xf32> -> vector<2x32xf32>
    %39 = arith.truncf %35 : vector<2x32xf32> to vector<2x32xbf16>
    %c0_24 = arith.constant 0 : index
    %c0_25 = arith.constant 0 : index
    %40 = vector.load %arg6[%c0_24, %c0_25] : memref<32x32xbf16, #tpu.memory_space<vmem>>, vector<32x32xbf16>
    %cst_26 = arith.constant dense<0.000000e+00> : vector<2x32xf32>
    %41 = tpu.matmul %39, %40, %cst_26 {dimension_numbers = #tpu.dot_dimension_numbers<[1], [0], [0], [1], [0, 0, 1, 1], [], []>} : vector<2x32xbf16>, vector<32x32xbf16>, vector<2x32xf32> -> vector<2x32xf32>
    %42 = arith.addf %38, %41 : vector<2x32xf32>
    %c0_27 = arith.constant 0 : index
    %c0_28 = arith.constant 0 : index
    %43 = vector.load %arg7[%c0_27, %c0_28] : memref<1x32xf32, #tpu.memory_space<vmem>>, vector<1x32xf32>
    %44 = vector.broadcast %43 : vector<1x32xf32> to vector<2x32xf32>
    %45 = arith.addf %42, %44 : vector<2x32xf32>
    %cst_29 = arith.constant 0.000000e+00 : f32
    %46 = vector.broadcast %cst_29 : f32 to vector<2x32xf32>
    %47 = arith.maximumf %45, %46 : vector<2x32xf32>
    %48 = arith.truncf %47 : vector<2x32xf32> to vector<2x32xbf16>
    %c0_30 = arith.constant 0 : index
    %c0_31 = arith.constant 0 : index
    %49 = vector.load %arg8[%c0_30, %c0_31] : memref<32x8xbf16, #tpu.memory_space<vmem>>, vector<32x8xbf16>
    %cst_32 = arith.constant dense<0.000000e+00> : vector<2x8xf32>
    %50 = tpu.matmul %48, %49, %cst_32 {dimension_numbers = #tpu.dot_dimension_numbers<[1], [0], [0], [1], [0, 0, 1, 1], [], []>} : vector<2x32xbf16>, vector<32x8xbf16>, vector<2x8xf32> -> vector<2x8xf32>
    %c0_33 = arith.constant 0 : index
    %c0_34 = arith.constant 0 : index
    %51 = vector.load %arg9[%c0_33, %c0_34] : memref<1x8xf32, #tpu.memory_space<vmem>>, vector<1x8xf32>
    %52 = vector.broadcast %51 : vector<1x8xf32> to vector<2x8xf32>
    %53 = arith.addf %50, %52 : vector<2x8xf32>
    %c0_35 = arith.constant 0 : index
    %c0_36 = arith.constant 0 : index
    %54 = vector.load %arg17[%c0_35, %c0_36] : memref<2x8xf32, #tpu.memory_space<vmem>>, vector<2x8xf32>
    tpu.vector_store %arg17[%c0_35, %c0_36], %53 {strides = array<i32>} : memref<2x8xf32, #tpu.memory_space<vmem>>, vector<2x8xf32>,
    %cst_37 = arith.constant dense<0xFF800000> : vector<2xf32>
    %55 = vector.multi_reduction <maximumf>, %53, %cst_37 [1] : vector<2x8xf32> to vector<2xf32>
    %56 = vector.shape_cast %55 : vector<2xf32> to vector<2x1xf32>
    %57 = vector.broadcast %56 : vector<2x1xf32> to vector<2x8xf32>
    %58 = arith.subf %53, %57 : vector<2x8xf32>
    %59 = math.exp %58 : vector<2x8xf32>
    %cst_38 = arith.constant dense<0.000000e+00> : vector<2xf32>
    %60 = vector.multi_reduction <add>, %59, %cst_38 [1] : vector<2x8xf32> to vector<2xf32>
    %61 = vector.shape_cast %60 : vector<2xf32> to vector<2x1xf32>
    %62 = vector.broadcast %61 : vector<2x1xf32> to vector<2x8xf32>
    %63 = arith.divf %59, %62 : vector<2x8xf32>
    %64 = tpu.iota {dimensions = array<i32: 1>} : vector<2x8xi32>
    %65 = vector.broadcast %56 : vector<2x1xf32> to vector<2x8xf32>
    %66 = arith.cmpf oeq, %53, %65 : vector<2x8xf32>
    %c8_i32 = arith.constant 8 : i32
    %67 = vector.broadcast %c8_i32 : i32 to vector<2x8xi32>
    %68 = arith.select %66, %64, %67 : vector<2x8xi1>, vector<2x8xi32>
    %cst_39 = arith.constant dense<2147483647> : vector<2xi32>
    %69 = vector.multi_reduction <minsi>, %68, %cst_39 [1] : vector<2x8xi32> to vector<2xi32>
    %70 = vector.shape_cast %69 : vector<2xi32> to vector<2x1xi32>
    %c0_40 = arith.constant 0 : index
    %c0_41 = arith.constant 0 : index
    %71 = vector.load %arg18[%c0_40, %c0_41] : memref<2x1xi32, #tpu.memory_space<vmem>>, vector<2x1xi32>
    tpu.vector_store %arg18[%c0_40, %c0_41], %70 {strides = array<i32>} : memref<2x1xi32, #tpu.memory_space<vmem>>, vector<2x1xi32>,
    %72 = arith.truncf %63 : vector<2x8xf32> to vector<2x8xbf16>
    %c0_42 = arith.constant 0 : index
    %c0_43 = arith.constant 0 : index
    %73 = vector.load %arg10[%c0_42, %c0_43] : memref<8x32xbf16, #tpu.memory_space<vmem>>, vector<8x32xbf16>
    %cst_44 = arith.constant dense<0.000000e+00> : vector<2x32xf32>
    %74 = tpu.matmul %72, %73, %cst_44 {dimension_numbers = #tpu.dot_dimension_numbers<[1], [0], [0], [1], [0, 0, 1, 1], [], []>} : vector<2x8xbf16>, vector<8x32xbf16>, vector<2x32xf32> -> vector<2x32xf32>
    %75 = arith.truncf %30 : vector<2x32xf32> to vector<2x32xbf16>
    %c0_45 = arith.constant 0 : index
    %c0_46 = arith.constant 0 : index
    %76 = vector.load %arg11[%c0_45, %c0_46] : memref<32x1024xbf16, #tpu.memory_space<vmem>>, vector<32x1024xbf16>
    %cst_47 = arith.constant dense<0.000000e+00> : vector<2x1024xf32>
    %77 = tpu.matmul %75, %76, %cst_47 {dimension_numbers = #tpu.dot_dimension_numbers<[1], [0], [0], [1], [0, 0, 1, 1], [], []>} : vector<2x32xbf16>, vector<32x1024xbf16>, vector<2x1024xf32> -> vector<2x1024xf32>
    %c0_48 = arith.constant 0 : index
    %c0_49 = arith.constant 0 : index
    %78 = vector.load %arg12[%c0_48, %c0_49] : memref<1x32xf32, #tpu.memory_space<vmem>>, vector<1x32xf32>
    %79 = vector.extract_strided_slice %74 {offsets = [0, 0], sizes = [2, 1], strides = [1, 1]} : vector<2x32xf32> to vector<2x1xf32>
    %80 = vector.extract_strided_slice %77 {offsets = [0, 0], sizes = [2, 32], strides = [1, 1]} : vector<2x1024xf32> to vector<2x32xf32>
    %81 = vector.broadcast %79 : vector<2x1xf32> to vector<2x32xf32>
    %82 = arith.mulf %81, %80 : vector<2x32xf32>
    %83 = vector.broadcast %78 : vector<1x32xf32> to vector<2x32xf32>
    %84 = arith.addf %83, %82 : vector<2x32xf32>
    %85 = vector.extract_strided_slice %74 {offsets = [0, 1], sizes = [2, 1], strides = [1, 1]} : vector<2x32xf32> to vector<2x1xf32>
    %86 = vector.extract_strided_slice %77 {offsets = [0, 32], sizes = [2, 32], strides = [1, 1]} : vector<2x1024xf32> to vector<2x32xf32>
    %87 = vector.broadcast %85 : vector<2x1xf32> to vector<2x32xf32>
    %88 = arith.mulf %87, %86 : vector<2x32xf32>
    %89 = arith.addf %84, %88 : vector<2x32xf32>
    %90 = vector.extract_strided_slice %74 {offsets = [0, 2], sizes = [2, 1], strides = [1, 1]} : vector<2x32xf32> to vector<2x1xf32>
    %91 = vector.extract_strided_slice %77 {offsets = [0, 64], sizes = [2, 32], strides = [1, 1]} : vector<2x1024xf32> to vector<2x32xf32>
    %92 = vector.broadcast %90 : vector<2x1xf32> to vector<2x32xf32>
    %93 = arith.mulf %92, %91 : vector<2x32xf32>
    %94 = arith.addf %89, %93 : vector<2x32xf32>
    %95 = vector.extract_strided_slice %74 {offsets = [0, 3], sizes = [2, 1], strides = [1, 1]} : vector<2x32xf32> to vector<2x1xf32>
    %96 = vector.extract_strided_slice %77 {offsets = [0, 96], sizes = [2, 32], strides = [1, 1]} : vector<2x1024xf32> to vector<2x32xf32>
    %97 = vector.broadcast %95 : vector<2x1xf32> to vector<2x32xf32>
    %98 = arith.mulf %97, %96 : vector<2x32xf32>
    %99 = arith.addf %94, %98 : vector<2x32xf32>
    %100 = vector.extract_strided_slice %74 {offsets = [0, 4], sizes = [2, 1], strides = [1, 1]} : vector<2x32xf32> to vector<2x1xf32>
    %101 = vector.extract_strided_slice %77 {offsets = [0, 128], sizes = [2, 32], strides = [1, 1]} : vector<2x1024xf32> to vector<2x32xf32>
    %102 = vector.broadcast %100 : vector<2x1xf32> to vector<2x32xf32>
    %103 = arith.mulf %102, %101 : vector<2x32xf32>
    %104 = arith.addf %99, %103 : vector<2x32xf32>
    %105 = vector.extract_strided_slice %74 {offsets = [0, 5], sizes = [2, 1], strides = [1, 1]} : vector<2x32xf32> to vector<2x1xf32>
    %106 = vector.extract_strided_slice %77 {offsets = [0, 160], sizes = [2, 32], strides = [1, 1]} : vector<2x1024xf32> to vector<2x32xf32>
    %107 = vector.broadcast %105 : vector<2x1xf32> to vector<2x32xf32>
    %108 = arith.mulf %107, %106 : vector<2x32xf32>
    %109 = arith.addf %104, %108 : vector<2x32xf32>
    %110 = vector.extract_strided_slice %74 {offsets = [0, 6], sizes = [2, 1], strides = [1, 1]} : vector<2x32xf32> to vector<2x1xf32>
    %111 = vector.extract_strided_slice %77 {offsets = [0, 192], sizes = [2, 32], strides = [1, 1]} : vector<2x1024xf32> to vector<2x32xf32>
    %112 = vector.broadcast %110 : vector<2x1xf32> to vector<2x32xf32>
    %113 = arith.mulf %112, %111 : vector<2x32xf32>
    %114 = arith.addf %109, %113 : vector<2x32xf32>
    %115 = vector.extract_strided_slice %74 {offsets = [0, 7], sizes = [2, 1], strides = [1, 1]} : vector<2x32xf32> to vector<2x1xf32>
    %116 = vector.extract_strided_slice %77 {offsets = [0, 224], sizes = [2, 32], strides = [1, 1]} : vector<2x1024xf32> to vector<2x32xf32>
    %117 = vector.broadcast %115 : vector<2x1xf32> to vector<2x32xf32>
    %118 = arith.mulf %117, %116 : vector<2x32xf32>
    %119 = arith.addf %114, %118 : vector<2x32xf32>
    %120 = vector.extract_strided_slice %74 {offsets = [0, 8], sizes = [2, 1], strides = [1, 1]} : vector<2x32xf32> to vector<2x1xf32>
    %121 = vector.extract_strided_slice %77 {offsets = [0, 256], sizes = [2, 32], strides = [1, 1]} : vector<2x1024xf32> to vector<2x32xf32>
    %122 = vector.broadcast %120 : vector<2x1xf32> to vector<2x32xf32>
    %123 = arith.mulf %122, %121 : vector<2x32xf32>
    %124 = arith.addf %119, %123 : vector<2x32xf32>
    %125 = vector.extract_strided_slice %74 {offsets = [0, 9], sizes = [2, 1], strides = [1, 1]} : vector<2x32xf32> to vector<2x1xf32>
    %126 = vector.extract_strided_slice %77 {offsets = [0, 288], sizes = [2, 32], strides = [1, 1]} : vector<2x1024xf32> to vector<2x32xf32>
    %127 = vector.broadcast %125 : vector<2x1xf32> to vector<2x32xf32>
    %128 = arith.mulf %127, %126 : vector<2x32xf32>
    %129 = arith.addf %124, %128 : vector<2x32xf32>
    %130 = vector.extract_strided_slice %74 {offsets = [0, 10], sizes = [2, 1], strides = [1, 1]} : vector<2x32xf32> to vector<2x1xf32>
    %131 = vector.extract_strided_slice %77 {offsets = [0, 320], sizes = [2, 32], strides = [1, 1]} : vector<2x1024xf32> to vector<2x32xf32>
    %132 = vector.broadcast %130 : vector<2x1xf32> to vector<2x32xf32>
    %133 = arith.mulf %132, %131 : vector<2x32xf32>
    %134 = arith.addf %129, %133 : vector<2x32xf32>
    %135 = vector.extract_strided_slice %74 {offsets = [0, 11], sizes = [2, 1], strides = [1, 1]} : vector<2x32xf32> to vector<2x1xf32>
    %136 = vector.extract_strided_slice %77 {offsets = [0, 352], sizes = [2, 32], strides = [1, 1]} : vector<2x1024xf32> to vector<2x32xf32>
    %137 = vector.broadcast %135 : vector<2x1xf32> to vector<2x32xf32>
    %138 = arith.mulf %137, %136 : vector<2x32xf32>
    %139 = arith.addf %134, %138 : vector<2x32xf32>
    %140 = vector.extract_strided_slice %74 {offsets = [0, 12], sizes = [2, 1], strides = [1, 1]} : vector<2x32xf32> to vector<2x1xf32>
    %141 = vector.extract_strided_slice %77 {offsets = [0, 384], sizes = [2, 32], strides = [1, 1]} : vector<2x1024xf32> to vector<2x32xf32>
    %142 = vector.broadcast %140 : vector<2x1xf32> to vector<2x32xf32>
    %143 = arith.mulf %142, %141 : vector<2x32xf32>
    %144 = arith.addf %139, %143 : vector<2x32xf32>
    %145 = vector.extract_strided_slice %74 {offsets = [0, 13], sizes = [2, 1], strides = [1, 1]} : vector<2x32xf32> to vector<2x1xf32>
    %146 = vector.extract_strided_slice %77 {offsets = [0, 416], sizes = [2, 32], strides = [1, 1]} : vector<2x1024xf32> to vector<2x32xf32>
    %147 = vector.broadcast %145 : vector<2x1xf32> to vector<2x32xf32>
    %148 = arith.mulf %147, %146 : vector<2x32xf32>
    %149 = arith.addf %144, %148 : vector<2x32xf32>
    %150 = vector.extract_strided_slice %74 {offsets = [0, 14], sizes = [2, 1], strides = [1, 1]} : vector<2x32xf32> to vector<2x1xf32>
    %151 = vector.extract_strided_slice %77 {offsets = [0, 448], sizes = [2, 32], strides = [1, 1]} : vector<2x1024xf32> to vector<2x32xf32>
    %152 = vector.broadcast %150 : vector<2x1xf32> to vector<2x32xf32>
    %153 = arith.mulf %152, %151 : vector<2x32xf32>
    %154 = arith.addf %149, %153 : vector<2x32xf32>
    %155 = vector.extract_strided_slice %74 {offsets = [0, 15], sizes = [2, 1], strides = [1, 1]} : vector<2x32xf32> to vector<2x1xf32>
    %156 = vector.extract_strided_slice %77 {offsets = [0, 480], sizes = [2, 32], strides = [1, 1]} : vector<2x1024xf32> to vector<2x32xf32>
    %157 = vector.broadcast %155 : vector<2x1xf32> to vector<2x32xf32>
    %158 = arith.mulf %157, %156 : vector<2x32xf32>
    %159 = arith.addf %154, %158 : vector<2x32xf32>
    %160 = vector.extract_strided_slice %74 {offsets = [0, 16], sizes = [2, 1], strides = [1, 1]} : vector<2x32xf32> to vector<2x1xf32>
    %161 = vector.extract_strided_slice %77 {offsets = [0, 512], sizes = [2, 32], strides = [1, 1]} : vector<2x1024xf32> to vector<2x32xf32>
    %162 = vector.broadcast %160 : vector<2x1xf32> to vector<2x32xf32>
    %163 = arith.mulf %162, %161 : vector<2x32xf32>
    %164 = arith.addf %159, %163 : vector<2x32xf32>
    %165 = vector.extract_strided_slice %74 {offsets = [0, 17], sizes = [2, 1], strides = [1, 1]} : vector<2x32xf32> to vector<2x1xf32>
    %166 = vector.extract_strided_slice %77 {offsets = [0, 544], sizes = [2, 32], strides = [1, 1]} : vector<2x1024xf32> to vector<2x32xf32>
    %167 = vector.broadcast %165 : vector<2x1xf32> to vector<2x32xf32>
    %168 = arith.mulf %167, %166 : vector<2x32xf32>
    %169 = arith.addf %164, %168 : vector<2x32xf32>
    %170 = vector.extract_strided_slice %74 {offsets = [0, 18], sizes = [2, 1], strides = [1, 1]} : vector<2x32xf32> to vector<2x1xf32>
    %171 = vector.extract_strided_slice %77 {offsets = [0, 576], sizes = [2, 32], strides = [1, 1]} : vector<2x1024xf32> to vector<2x32xf32>
    %172 = vector.broadcast %170 : vector<2x1xf32> to vector<2x32xf32>
    %173 = arith.mulf %172, %171 : vector<2x32xf32>
    %174 = arith.addf %169, %173 : vector<2x32xf32>
    %175 = vector.extract_strided_slice %74 {offsets = [0, 19], sizes = [2, 1], strides = [1, 1]} : vector<2x32xf32> to vector<2x1xf32>
    %176 = vector.extract_strided_slice %77 {offsets = [0, 608], sizes = [2, 32], strides = [1, 1]} : vector<2x1024xf32> to vector<2x32xf32>
    %177 = vector.broadcast %175 : vector<2x1xf32> to vector<2x32xf32>
    %178 = arith.mulf %177, %176 : vector<2x32xf32>
    %179 = arith.addf %174, %178 : vector<2x32xf32>
    %180 = vector.extract_strided_slice %74 {offsets = [0, 20], sizes = [2, 1], strides = [1, 1]} : vector<2x32xf32> to vector<2x1xf32>
    %181 = vector.extract_strided_slice %77 {offsets = [0, 640], sizes = [2, 32], strides = [1, 1]} : vector<2x1024xf32> to vector<2x32xf32>
    %182 = vector.broadcast %180 : vector<2x1xf32> to vector<2x32xf32>
    %183 = arith.mulf %182, %181 : vector<2x32xf32>
    %184 = arith.addf %179, %183 : vector<2x32xf32>
    %185 = vector.extract_strided_slice %74 {offsets = [0, 21], sizes = [2, 1], strides = [1, 1]} : vector<2x32xf32> to vector<2x1xf32>
    %186 = vector.extract_strided_slice %77 {offsets = [0, 672], sizes = [2, 32], strides = [1, 1]} : vector<2x1024xf32> to vector<2x32xf32>
    %187 = vector.broadcast %185 : vector<2x1xf32> to vector<2x32xf32>
    %188 = arith.mulf %187, %186 : vector<2x32xf32>
    %189 = arith.addf %184, %188 : vector<2x32xf32>
    %190 = vector.extract_strided_slice %74 {offsets = [0, 22], sizes = [2, 1], strides = [1, 1]} : vector<2x32xf32> to vector<2x1xf32>
    %191 = vector.extract_strided_slice %77 {offsets = [0, 704], sizes = [2, 32], strides = [1, 1]} : vector<2x1024xf32> to vector<2x32xf32>
    %192 = vector.broadcast %190 : vector<2x1xf32> to vector<2x32xf32>
    %193 = arith.mulf %192, %191 : vector<2x32xf32>
    %194 = arith.addf %189, %193 : vector<2x32xf32>
    %195 = vector.extract_strided_slice %74 {offsets = [0, 23], sizes = [2, 1], strides = [1, 1]} : vector<2x32xf32> to vector<2x1xf32>
    %196 = vector.extract_strided_slice %77 {offsets = [0, 736], sizes = [2, 32], strides = [1, 1]} : vector<2x1024xf32> to vector<2x32xf32>
    %197 = vector.broadcast %195 : vector<2x1xf32> to vector<2x32xf32>
    %198 = arith.mulf %197, %196 : vector<2x32xf32>
    %199 = arith.addf %194, %198 : vector<2x32xf32>
    %200 = vector.extract_strided_slice %74 {offsets = [0, 24], sizes = [2, 1], strides = [1, 1]} : vector<2x32xf32> to vector<2x1xf32>
    %201 = vector.extract_strided_slice %77 {offsets = [0, 768], sizes = [2, 32], strides = [1, 1]} : vector<2x1024xf32> to vector<2x32xf32>
    %202 = vector.broadcast %200 : vector<2x1xf32> to vector<2x32xf32>
    %203 = arith.mulf %202, %201 : vector<2x32xf32>
    %204 = arith.addf %199, %203 : vector<2x32xf32>
    %205 = vector.extract_strided_slice %74 {offsets = [0, 25], sizes = [2, 1], strides = [1, 1]} : vector<2x32xf32> to vector<2x1xf32>
    %206 = vector.extract_strided_slice %77 {offsets = [0, 800], sizes = [2, 32], strides = [1, 1]} : vector<2x1024xf32> to vector<2x32xf32>
    %207 = vector.broadcast %205 : vector<2x1xf32> to vector<2x32xf32>
    %208 = arith.mulf %207, %206 : vector<2x32xf32>
    %209 = arith.addf %204, %208 : vector<2x32xf32>
    %210 = vector.extract_strided_slice %74 {offsets = [0, 26], sizes = [2, 1], strides = [1, 1]} : vector<2x32xf32> to vector<2x1xf32>
    %211 = vector.extract_strided_slice %77 {offsets = [0, 832], sizes = [2, 32], strides = [1, 1]} : vector<2x1024xf32> to vector<2x32xf32>
    %212 = vector.broadcast %210 : vector<2x1xf32> to vector<2x32xf32>
    %213 = arith.mulf %212, %211 : vector<2x32xf32>
    %214 = arith.addf %209, %213 : vector<2x32xf32>
    %215 = vector.extract_strided_slice %74 {offsets = [0, 27], sizes = [2, 1], strides = [1, 1]} : vector<2x32xf32> to vector<2x1xf32>
    %216 = vector.extract_strided_slice %77 {offsets = [0, 864], sizes = [2, 32], strides = [1, 1]} : vector<2x1024xf32> to vector<2x32xf32>
    %217 = vector.broadcast %215 : vector<2x1xf32> to vector<2x32xf32>
    %218 = arith.mulf %217, %216 : vector<2x32xf32>
    %219 = arith.addf %214, %218 : vector<2x32xf32>
    %220 = vector.extract_strided_slice %74 {offsets = [0, 28], sizes = [2, 1], strides = [1, 1]} : vector<2x32xf32> to vector<2x1xf32>
    %221 = vector.extract_strided_slice %77 {offsets = [0, 896], sizes = [2, 32], strides = [1, 1]} : vector<2x1024xf32> to vector<2x32xf32>
    %222 = vector.broadcast %220 : vector<2x1xf32> to vector<2x32xf32>
    %223 = arith.mulf %222, %221 : vector<2x32xf32>
    %224 = arith.addf %219, %223 : vector<2x32xf32>
    %225 = vector.extract_strided_slice %74 {offsets = [0, 29], sizes = [2, 1], strides = [1, 1]} : vector<2x32xf32> to vector<2x1xf32>
    %226 = vector.extract_strided_slice %77 {offsets = [0, 928], sizes = [2, 32], strides = [1, 1]} : vector<2x1024xf32> to vector<2x32xf32>
    %227 = vector.broadcast %225 : vector<2x1xf32> to vector<2x32xf32>
    %228 = arith.mulf %227, %226 : vector<2x32xf32>
    %229 = arith.addf %224, %228 : vector<2x32xf32>
    %230 = vector.extract_strided_slice %74 {offsets = [0, 30], sizes = [2, 1], strides = [1, 1]} : vector<2x32xf32> to vector<2x1xf32>
    %231 = vector.extract_strided_slice %77 {offsets = [0, 960], sizes = [2, 32], strides = [1, 1]} : vector<2x1024xf32> to vector<2x32xf32>
    %232 = vector.broadcast %230 : vector<2x1xf32> to vector<2x32xf32>
    %233 = arith.mulf %232, %231 : vector<2x32xf32>
    %234 = arith.addf %229, %233 : vector<2x32xf32>
    %235 = vector.extract_strided_slice %74 {offsets = [0, 31], sizes = [2, 1], strides = [1, 1]} : vector<2x32xf32> to vector<2x1xf32>
    %236 = vector.extract_strided_slice %77 {offsets = [0, 992], sizes = [2, 32], strides = [1, 1]} : vector<2x1024xf32> to vector<2x32xf32>
    %237 = vector.broadcast %235 : vector<2x1xf32> to vector<2x32xf32>
    %238 = arith.mulf %237, %236 : vector<2x32xf32>
    %239 = arith.addf %234, %238 : vector<2x32xf32>
    %240 = arith.truncf %239 : vector<2x32xf32> to vector<2x32xbf16>
    %c0_50 = arith.constant 0 : index
    %c0_51 = arith.constant 0 : index
    %241 = vector.load %arg13[%c0_50, %c0_51] : memref<32x64xbf16, #tpu.memory_space<vmem>>, vector<32x64xbf16>
    %cst_52 = arith.constant dense<0.000000e+00> : vector<2x64xf32>
    %242 = tpu.matmul %240, %241, %cst_52 {dimension_numbers = #tpu.dot_dimension_numbers<[1], [0], [0], [1], [0, 0, 1, 1], [], []>} : vector<2x32xbf16>, vector<32x64xbf16>, vector<2x64xf32> -> vector<2x64xf32>
    %c0_53 = arith.constant 0 : index
    %c0_54 = arith.constant 0 : index
    %243 = vector.load %arg19[%c0_53, %c0_54] : memref<2x64xf32, #tpu.memory_space<vmem>>, vector<2x64xf32>
    tpu.vector_store %arg19[%c0_53, %c0_54], %242 {strides = array<i32>} : memref<2x64xf32, #tpu.memory_space<vmem>>, vector<2x64xf32>,
    %cst_55 = arith.constant dense<0xFF800000> : vector<2xf32>
    %244 = vector.multi_reduction <maximumf>, %242, %cst_55 [1] : vector<2x64xf32> to vector<2xf32>
    %245 = vector.shape_cast %244 : vector<2xf32> to vector<2x1xf32>
    %246 = vector.broadcast %245 : vector<2x1xf32> to vector<2x64xf32>
    %247 = arith.subf %242, %246 : vector<2x64xf32>
    %248 = math.exp %247 : vector<2x64xf32>
    %cst_56 = arith.constant dense<0.000000e+00> : vector<2xf32>
    %249 = vector.multi_reduction <add>, %248, %cst_56 [1] : vector<2x64xf32> to vector<2xf32>
    %250 = vector.shape_cast %249 : vector<2xf32> to vector<2x1xf32>
    %251 = vector.broadcast %250 : vector<2x1xf32> to vector<2x64xf32>
    %252 = arith.divf %248, %251 : vector<2x64xf32>
    %253 = tpu.iota {dimensions = array<i32: 1>} : vector<2x64xi32>
    %cst_57 = arith.constant dense<0xFF800000> : vector<2xf32>
    %254 = vector.multi_reduction <maximumf>, %252, %cst_57 [1] : vector<2x64xf32> to vector<2xf32>
    %255 = vector.shape_cast %254 : vector<2xf32> to vector<2x1xf32>
    %256 = vector.broadcast %255 : vector<2x1xf32> to vector<2x64xf32>
    %257 = arith.cmpf oeq, %252, %256 : vector<2x64xf32>
    %c64_i32 = arith.constant 64 : i32
    %258 = vector.broadcast %c64_i32 : i32 to vector<2x64xi32>
    %259 = arith.select %257, %253, %258 : vector<2x64xi1>, vector<2x64xi32>
    %cst_58 = arith.constant dense<2147483647> : vector<2xi32>
    %260 = vector.multi_reduction <minsi>, %259, %cst_58 [1] : vector<2x64xi32> to vector<2xi32>
    %261 = vector.shape_cast %260 : vector<2xi32> to vector<2x1xi32>
    %c0_59 = arith.constant 0 : index
    %c0_60 = arith.constant 0 : index
    %262 = vector.load %arg20[%c0_59, %c0_60] : memref<2x5xi32, #tpu.memory_space<vmem>>, vector<2x1xi32>
    tpu.vector_store %arg20[%c0_59, %c0_60], %261 {strides = array<i32>} : memref<2x5xi32, #tpu.memory_space<vmem>>, vector<2x1xi32>,
    %263 = vector.broadcast %261 : vector<2x1xi32> to vector<2x64xi32>
    %264 = arith.cmpi eq, %253, %263 : vector<2x64xi32>
    %265 = arith.extui %264 : vector<2x64xi1> to vector<2x64xi32>
    %266 = arith.sitofp %265 : vector<2x64xi32> to vector<2x64xf32>
    %267 = arith.truncf %63 : vector<2x8xf32> to vector<2x8xbf16>
    %c0_61 = arith.constant 0 : index
    %c0_62 = arith.constant 0 : index
    %268 = vector.load %arg15[%c0_61, %c0_62] : memref<8x64xbf16, #tpu.memory_space<vmem>>, vector<8x64xbf16>
    %cst_63 = arith.constant dense<0.000000e+00> : vector<2x64xf32>
    %269 = tpu.matmul %267, %268, %cst_63 {dimension_numbers = #tpu.dot_dimension_numbers<[1], [0], [0], [1], [0, 0, 1, 1], [], []>} : vector<2x8xbf16>, vector<8x64xbf16>, vector<2x64xf32> -> vector<2x64xf32>
    %cst_64 = arith.constant dense<0.000000e+00> : vector<2xf32>
    %270 = vector.multi_reduction <add>, %269, %cst_64 [1] : vector<2x64xf32> to vector<2xf32>
    %271 = vector.shape_cast %270 : vector<2xf32> to vector<2x1xf32>
    %cst_65 = arith.constant 1.000000e-30 : f32
    %272 = vector.broadcast %cst_65 : f32 to vector<2x1xf32>
    %273 = arith.maximumf %271, %272 : vector<2x1xf32>
    %274 = vector.broadcast %273 : vector<2x1xf32> to vector<2x64xf32>
    %275 = arith.divf %269, %274 : vector<2x64xf32>
    %cst_66 = arith.constant 5.000000e-01 : f32
    %276 = vector.broadcast %cst_66 : f32 to vector<2x64xf32>
    %277 = arith.mulf %276, %252 : vector<2x64xf32>
    %cst_67 = arith.constant 5.000000e-01 : f32
    %278 = vector.broadcast %cst_67 : f32 to vector<2x64xf32>
    %279 = arith.mulf %278, %275 : vector<2x64xf32>
    %280 = arith.addf %277, %279 : vector<2x64xf32>
    %cst_68 = arith.constant 1.000000e+09 : f32
    %281 = vector.broadcast %cst_68 : f32 to vector<2x64xf32>
    %282 = arith.mulf %266, %281 : vector<2x64xf32>
    %283 = arith.subf %280, %282 : vector<2x64xf32>
    %cst_69 = arith.constant dense<0xFF800000> : vector<2xf32>
    %284 = vector.multi_reduction <maximumf>, %283, %cst_69 [1] : vector<2x64xf32> to vector<2xf32>
    %285 = vector.shape_cast %284 : vector<2xf32> to vector<2x1xf32>
    %286 = vector.broadcast %285 : vector<2x1xf32> to vector<2x64xf32>
    %287 = arith.cmpf oeq, %283, %286 : vector<2x64xf32>
    %c64_i32_70 = arith.constant 64 : i32
    %288 = vector.broadcast %c64_i32_70 : i32 to vector<2x64xi32>
    %289 = arith.select %287, %253, %288 : vector<2x64xi1>, vector<2x64xi32>
    %cst_71 = arith.constant dense<2147483647> : vector<2xi32>
    %290 = vector.multi_reduction <minsi>, %289, %cst_71 [1] : vector<2x64xi32> to vector<2xi32>
    %291 = vector.shape_cast %290 : vector<2xi32> to vector<2x1xi32>
    %c0_72 = arith.constant 0 : index
    %c1 = arith.constant 1 : index
    %292 = vector.load %arg20[%c0_72, %c1] : memref<2x5xi32, #tpu.memory_space<vmem>>, vector<2x1xi32>
    tpu.vector_store %arg20[%c0_72, %c1], %291 {strides = array<i32>} : memref<2x5xi32, #tpu.memory_space<vmem>>, vector<2x1xi32>,
    %293 = vector.broadcast %291 : vector<2x1xi32> to vector<2x64xi32>
    %294 = arith.cmpi eq, %253, %293 : vector<2x64xi32>
    %295 = arith.extui %294 : vector<2x64xi1> to vector<2x64xi32>
    %296 = arith.sitofp %295 : vector<2x64xi32> to vector<2x64xf32>
    %297 = arith.addf %266, %296 : vector<2x64xf32>
    %298 = arith.truncf %296 : vector<2x64xf32> to vector<2x64xbf16>
    %c0_73 = arith.constant 0 : index
    %c0_74 = arith.constant 0 : index
    %299 = vector.load %arg14[%c0_73, %c0_74] : memref<64x8xbf16, #tpu.memory_space<vmem>>, vector<64x8xbf16>
    %cst_75 = arith.constant dense<0.000000e+00> : vector<2x8xf32>
    %300 = tpu.matmul %298, %299, %cst_75 {dimension_numbers = #tpu.dot_dimension_numbers<[1], [0], [0], [1], [0, 0, 1, 1], [], []>} : vector<2x64xbf16>, vector<64x8xbf16>, vector<2x8xf32> -> vector<2x8xf32>
    %cst_76 = arith.constant 1.000000e+00 : f32
    %301 = vector.broadcast %cst_76 : f32 to vector<2x8xf32>
    %302 = arith.subf %301, %300 : vector<2x8xf32>
    %cst_77 = arith.constant 9.99999974E-6 : f32
    %303 = vector.broadcast %cst_77 : f32 to vector<2x8xf32>
    %304 = arith.addf %302, %303 : vector<2x8xf32>
    %305 = arith.mulf %63, %304 : vector<2x8xf32>
    %cst_78 = arith.constant dense<0.000000e+00> : vector<2xf32>
    %306 = vector.multi_reduction <add>, %305, %cst_78 [1] : vector<2x8xf32> to vector<2xf32>
    %307 = vector.shape_cast %306 : vector<2xf32> to vector<2x1xf32>
    %cst_79 = arith.constant 1.000000e-30 : f32
    %308 = vector.broadcast %cst_79 : f32 to vector<2x1xf32>
    %309 = arith.maximumf %307, %308 : vector<2x1xf32>
    %310 = vector.broadcast %309 : vector<2x1xf32> to vector<2x8xf32>
    %311 = arith.divf %305, %310 : vector<2x8xf32>
    %312 = arith.truncf %311 : vector<2x8xf32> to vector<2x8xbf16>
    %c0_80 = arith.constant 0 : index
    %c0_81 = arith.constant 0 : index
    %313 = vector.load %arg15[%c0_80, %c0_81] : memref<8x64xbf16, #tpu.memory_space<vmem>>, vector<8x64xbf16>
    %cst_82 = arith.constant dense<0.000000e+00> : vector<2x64xf32>
    %314 = tpu.matmul %312, %313, %cst_82 {dimension_numbers = #tpu.dot_dimension_numbers<[1], [0], [0], [1], [0, 0, 1, 1], [], []>} : vector<2x8xbf16>, vector<8x64xbf16>, vector<2x64xf32> -> vector<2x64xf32>
    %cst_83 = arith.constant dense<0.000000e+00> : vector<2xf32>
    %315 = vector.multi_reduction <add>, %314, %cst_83 [1] : vector<2x64xf32> to vector<2xf32>
    %316 = vector.shape_cast %315 : vector<2xf32> to vector<2x1xf32>
    %cst_84 = arith.constant 1.000000e-30 : f32
    %317 = vector.broadcast %cst_84 : f32 to vector<2x1xf32>
    %318 = arith.maximumf %316, %317 : vector<2x1xf32>
    %319 = vector.broadcast %318 : vector<2x1xf32> to vector<2x64xf32>
    %320 = arith.divf %314, %319 : vector<2x64xf32>
    %cst_85 = arith.constant 5.000000e-01 : f32
    %321 = vector.broadcast %cst_85 : f32 to vector<2x64xf32>
    %322 = arith.mulf %321, %252 : vector<2x64xf32>
    %cst_86 = arith.constant 5.000000e-01 : f32
    %323 = vector.broadcast %cst_86 : f32 to vector<2x64xf32>
    %324 = arith.mulf %323, %320 : vector<2x64xf32>
    %325 = arith.addf %322, %324 : vector<2x64xf32>
    %cst_87 = arith.constant 1.000000e+09 : f32
    %326 = vector.broadcast %cst_87 : f32 to vector<2x64xf32>
    %327 = arith.mulf %297, %326 : vector<2x64xf32>
    %328 = arith.subf %325, %327 : vector<2x64xf32>
    %cst_88 = arith.constant dense<0xFF800000> : vector<2xf32>
    %329 = vector.multi_reduction <maximumf>, %328, %cst_88 [1] : vector<2x64xf32> to vector<2xf32>
    %330 = vector.shape_cast %329 : vector<2xf32> to vector<2x1xf32>
    %331 = vector.broadcast %330 : vector<2x1xf32> to vector<2x64xf32>
    %332 = arith.cmpf oeq, %328, %331 : vector<2x64xf32>
    %c64_i32_89 = arith.constant 64 : i32
    %333 = vector.broadcast %c64_i32_89 : i32 to vector<2x64xi32>
    %334 = arith.select %332, %253, %333 : vector<2x64xi1>, vector<2x64xi32>
    %cst_90 = arith.constant dense<2147483647> : vector<2xi32>
    %335 = vector.multi_reduction <minsi>, %334, %cst_90 [1] : vector<2x64xi32> to vector<2xi32>
    %336 = vector.shape_cast %335 : vector<2xi32> to vector<2x1xi32>
    %c0_91 = arith.constant 0 : index
    %c2 = arith.constant 2 : index
    %337 = vector.load %arg20[%c0_91, %c2] : memref<2x5xi32, #tpu.memory_space<vmem>>, vector<2x1xi32>
    tpu.vector_store %arg20[%c0_91, %c2], %336 {strides = array<i32>} : memref<2x5xi32, #tpu.memory_space<vmem>>, vector<2x1xi32>,
    %338 = vector.broadcast %336 : vector<2x1xi32> to vector<2x64xi32>
    %339 = arith.cmpi eq, %253, %338 : vector<2x64xi32>
    %340 = arith.extui %339 : vector<2x64xi1> to vector<2x64xi32>
    %341 = arith.sitofp %340 : vector<2x64xi32> to vector<2x64xf32>
    %342 = arith.addf %297, %341 : vector<2x64xf32>
    %343 = arith.truncf %341 : vector<2x64xf32> to vector<2x64xbf16>
    %c0_92 = arith.constant 0 : index
    %c0_93 = arith.constant 0 : index
    %344 = vector.load %arg14[%c0_92, %c0_93] : memref<64x8xbf16, #tpu.memory_space<vmem>>, vector<64x8xbf16>
    %cst_94 = arith.constant dense<0.000000e+00> : vector<2x8xf32>
    %345 = tpu.matmul %343, %344, %cst_94 {dimension_numbers = #tpu.dot_dimension_numbers<[1], [0], [0], [1], [0, 0, 1, 1], [], []>} : vector<2x64xbf16>, vector<64x8xbf16>, vector<2x8xf32> -> vector<2x8xf32>
    %cst_95 = arith.constant 1.000000e+00 : f32
    %346 = vector.broadcast %cst_95 : f32 to vector<2x8xf32>
    %347 = arith.subf %346, %345 : vector<2x8xf32>
    %cst_96 = arith.constant 9.99999974E-6 : f32
    %348 = vector.broadcast %cst_96 : f32 to vector<2x8xf32>
    %349 = arith.addf %347, %348 : vector<2x8xf32>
    %350 = arith.mulf %311, %349 : vector<2x8xf32>
    %cst_97 = arith.constant dense<0.000000e+00> : vector<2xf32>
    %351 = vector.multi_reduction <add>, %350, %cst_97 [1] : vector<2x8xf32> to vector<2xf32>
    %352 = vector.shape_cast %351 : vector<2xf32> to vector<2x1xf32>
    %cst_98 = arith.constant 1.000000e-30 : f32
    %353 = vector.broadcast %cst_98 : f32 to vector<2x1xf32>
    %354 = arith.maximumf %352, %353 : vector<2x1xf32>
    %355 = vector.broadcast %354 : vector<2x1xf32> to vector<2x8xf32>
    %356 = arith.divf %350, %355 : vector<2x8xf32>
    %357 = arith.truncf %356 : vector<2x8xf32> to vector<2x8xbf16>
    %c0_99 = arith.constant 0 : index
    %c0_100 = arith.constant 0 : index
    %358 = vector.load %arg15[%c0_99, %c0_100] : memref<8x64xbf16, #tpu.memory_space<vmem>>, vector<8x64xbf16>
    %cst_101 = arith.constant dense<0.000000e+00> : vector<2x64xf32>
    %359 = tpu.matmul %357, %358, %cst_101 {dimension_numbers = #tpu.dot_dimension_numbers<[1], [0], [0], [1], [0, 0, 1, 1], [], []>} : vector<2x8xbf16>, vector<8x64xbf16>, vector<2x64xf32> -> vector<2x64xf32>
    %cst_102 = arith.constant dense<0.000000e+00> : vector<2xf32>
    %360 = vector.multi_reduction <add>, %359, %cst_102 [1] : vector<2x64xf32> to vector<2xf32>
    %361 = vector.shape_cast %360 : vector<2xf32> to vector<2x1xf32>
    %cst_103 = arith.constant 1.000000e-30 : f32
    %362 = vector.broadcast %cst_103 : f32 to vector<2x1xf32>
    %363 = arith.maximumf %361, %362 : vector<2x1xf32>
    %364 = vector.broadcast %363 : vector<2x1xf32> to vector<2x64xf32>
    %365 = arith.divf %359, %364 : vector<2x64xf32>
    %cst_104 = arith.constant 5.000000e-01 : f32
    %366 = vector.broadcast %cst_104 : f32 to vector<2x64xf32>
    %367 = arith.mulf %366, %252 : vector<2x64xf32>
    %cst_105 = arith.constant 5.000000e-01 : f32
    %368 = vector.broadcast %cst_105 : f32 to vector<2x64xf32>
    %369 = arith.mulf %368, %365 : vector<2x64xf32>
    %370 = arith.addf %367, %369 : vector<2x64xf32>
    %cst_106 = arith.constant 1.000000e+09 : f32
    %371 = vector.broadcast %cst_106 : f32 to vector<2x64xf32>
    %372 = arith.mulf %342, %371 : vector<2x64xf32>
    %373 = arith.subf %370, %372 : vector<2x64xf32>
    %cst_107 = arith.constant dense<0xFF800000> : vector<2xf32>
    %374 = vector.multi_reduction <maximumf>, %373, %cst_107 [1] : vector<2x64xf32> to vector<2xf32>
    %375 = vector.shape_cast %374 : vector<2xf32> to vector<2x1xf32>
    %376 = vector.broadcast %375 : vector<2x1xf32> to vector<2x64xf32>
    %377 = arith.cmpf oeq, %373, %376 : vector<2x64xf32>
    %c64_i32_108 = arith.constant 64 : i32
    %378 = vector.broadcast %c64_i32_108 : i32 to vector<2x64xi32>
    %379 = arith.select %377, %253, %378 : vector<2x64xi1>, vector<2x64xi32>
    %cst_109 = arith.constant dense<2147483647> : vector<2xi32>
    %380 = vector.multi_reduction <minsi>, %379, %cst_109 [1] : vector<2x64xi32> to vector<2xi32>
    %381 = vector.shape_cast %380 : vector<2xi32> to vector<2x1xi32>
    %c0_110 = arith.constant 0 : index
    %c3 = arith.constant 3 : index
    %382 = vector.load %arg20[%c0_110, %c3] : memref<2x5xi32, #tpu.memory_space<vmem>>, vector<2x1xi32>
    tpu.vector_store %arg20[%c0_110, %c3], %381 {strides = array<i32>} : memref<2x5xi32, #tpu.memory_space<vmem>>, vector<2x1xi32>,
    %383 = vector.broadcast %381 : vector<2x1xi32> to vector<2x64xi32>
    %384 = arith.cmpi eq, %253, %383 : vector<2x64xi32>
    %385 = arith.extui %384 : vector<2x64xi1> to vector<2x64xi32>
    %386 = arith.sitofp %385 : vector<2x64xi32> to vector<2x64xf32>
    %387 = arith.addf %342, %386 : vector<2x64xf32>
    %388 = arith.truncf %386 : vector<2x64xf32> to vector<2x64xbf16>
    %c0_111 = arith.constant 0 : index
    %c0_112 = arith.constant 0 : index
    %389 = vector.load %arg14[%c0_111, %c0_112] : memref<64x8xbf16, #tpu.memory_space<vmem>>, vector<64x8xbf16>
    %cst_113 = arith.constant dense<0.000000e+00> : vector<2x8xf32>
    %390 = tpu.matmul %388, %389, %cst_113 {dimension_numbers = #tpu.dot_dimension_numbers<[1], [0], [0], [1], [0, 0, 1, 1], [], []>} : vector<2x64xbf16>, vector<64x8xbf16>, vector<2x8xf32> -> vector<2x8xf32>
    %cst_114 = arith.constant 1.000000e+00 : f32
    %391 = vector.broadcast %cst_114 : f32 to vector<2x8xf32>
    %392 = arith.subf %391, %390 : vector<2x8xf32>
    %cst_115 = arith.constant 9.99999974E-6 : f32
    %393 = vector.broadcast %cst_115 : f32 to vector<2x8xf32>
    %394 = arith.addf %392, %393 : vector<2x8xf32>
    %395 = arith.mulf %356, %394 : vector<2x8xf32>
    %cst_116 = arith.constant dense<0.000000e+00> : vector<2xf32>
    %396 = vector.multi_reduction <add>, %395, %cst_116 [1] : vector<2x8xf32> to vector<2xf32>
    %397 = vector.shape_cast %396 : vector<2xf32> to vector<2x1xf32>
    %cst_117 = arith.constant 1.000000e-30 : f32
    %398 = vector.broadcast %cst_117 : f32 to vector<2x1xf32>
    %399 = arith.maximumf %397, %398 : vector<2x1xf32>
    %400 = vector.broadcast %399 : vector<2x1xf32> to vector<2x8xf32>
    %401 = arith.divf %395, %400 : vector<2x8xf32>
    %402 = arith.truncf %401 : vector<2x8xf32> to vector<2x8xbf16>
    %c0_118 = arith.constant 0 : index
    %c0_119 = arith.constant 0 : index
    %403 = vector.load %arg15[%c0_118, %c0_119] : memref<8x64xbf16, #tpu.memory_space<vmem>>, vector<8x64xbf16>
    %cst_120 = arith.constant dense<0.000000e+00> : vector<2x64xf32>
    %404 = tpu.matmul %402, %403, %cst_120 {dimension_numbers = #tpu.dot_dimension_numbers<[1], [0], [0], [1], [0, 0, 1, 1], [], []>} : vector<2x8xbf16>, vector<8x64xbf16>, vector<2x64xf32> -> vector<2x64xf32>
    %cst_121 = arith.constant dense<0.000000e+00> : vector<2xf32>
    %405 = vector.multi_reduction <add>, %404, %cst_121 [1] : vector<2x64xf32> to vector<2xf32>
    %406 = vector.shape_cast %405 : vector<2xf32> to vector<2x1xf32>
    %cst_122 = arith.constant 1.000000e-30 : f32
    %407 = vector.broadcast %cst_122 : f32 to vector<2x1xf32>
    %408 = arith.maximumf %406, %407 : vector<2x1xf32>
    %409 = vector.broadcast %408 : vector<2x1xf32> to vector<2x64xf32>
    %410 = arith.divf %404, %409 : vector<2x64xf32>
    %cst_123 = arith.constant 5.000000e-01 : f32
    %411 = vector.broadcast %cst_123 : f32 to vector<2x64xf32>
    %412 = arith.mulf %411, %252 : vector<2x64xf32>
    %cst_124 = arith.constant 5.000000e-01 : f32
    %413 = vector.broadcast %cst_124 : f32 to vector<2x64xf32>
    %414 = arith.mulf %413, %410 : vector<2x64xf32>
    %415 = arith.addf %412, %414 : vector<2x64xf32>
    %cst_125 = arith.constant 1.000000e+09 : f32
    %416 = vector.broadcast %cst_125 : f32 to vector<2x64xf32>
    %417 = arith.mulf %387, %416 : vector<2x64xf32>
    %418 = arith.subf %415, %417 : vector<2x64xf32>
    %cst_126 = arith.constant dense<0xFF800000> : vector<2xf32>
    %419 = vector.multi_reduction <maximumf>, %418, %cst_126 [1] : vector<2x64xf32> to vector<2xf32>
    %420 = vector.shape_cast %419 : vector<2xf32> to vector<2x1xf32>
    %421 = vector.broadcast %420 : vector<2x1xf32> to vector<2x64xf32>
    %422 = arith.cmpf oeq, %418, %421 : vector<2x64xf32>
    %c64_i32_127 = arith.constant 64 : i32
    %423 = vector.broadcast %c64_i32_127 : i32 to vector<2x64xi32>
    %424 = arith.select %422, %253, %423 : vector<2x64xi1>, vector<2x64xi32>
    %cst_128 = arith.constant dense<2147483647> : vector<2xi32>
    %425 = vector.multi_reduction <minsi>, %424, %cst_128 [1] : vector<2x64xi32> to vector<2xi32>
    %426 = vector.shape_cast %425 : vector<2xi32> to vector<2x1xi32>
    %c0_129 = arith.constant 0 : index
    %c4 = arith.constant 4 : index
    %427 = vector.load %arg20[%c0_129, %c4] : memref<2x5xi32, #tpu.memory_space<vmem>>, vector<2x1xi32>
    tpu.vector_store %arg20[%c0_129, %c4], %426 {strides = array<i32>} : memref<2x5xi32, #tpu.memory_space<vmem>>, vector<2x1xi32>,
    return
  }
}

</mosaic_0001>

<llo_original>
// kernel: _lambda_.4
$region0: #{_lambda_.4}
  #allocation0 [shape = 'u32[]', space=smem, size = 0x4, offset = 0x4, fixed_abs, tag = 'smem constant byte address 0x4 - core index']
  #allocation1 [shape = 'u32[144,128]{1,0:T(1,128)}', space=vmem, size = 0x12000, scoped, tag = 'internal scratch']
  %s0 = inlined_call_operand.vmem [shape: bf16[16,8], index: 0, kind: input, shape index: {}]
  %s1 = inlined_call_operand.vmem [shape: bf16[8,32], index: 1, kind: input, shape index: {}]
  %s2 = inlined_call_operand.vmem [shape: f32[16,32], index: 2, kind: output, shape index: {}]
  %s3 = sld [smem:[#allocation0]]
  $region18: #{_lambda_.4} parent=0
    _
  %s5 = ssub.s32 1, %s3
  %s6 = scalar_select 0, %s5, %s3
  // Predicated region
  $region2: #{_lambda_.4} parent=0 // pred_check
    _
  $region3: #{_lambda_.4} parent=0 // pred_check_branch
    %8 = sbr.rel (0) target = $region5
  $region4: #{_lambda_.4} parent=0 // pred_region
    _
  $region5: #{_lambda_.4} parent=0 // pred_fallthru
    _
  // Predicated region
  $region6: #{_lambda_.4} parent=0 // pred_check
    _
  $region7: #{_lambda_.4} parent=0 // pred_check_branch
    %10 = sbr.rel (0) target = $region9
  $region8: #{_lambda_.4} parent=0 // pred_region
    _
  $region9: #{_lambda_.4} parent=0 // pred_fallthru
    _
  %v12 = vld [vmem:[%s0] sm:$0xf]
  %v13 = vld [vmem:[%s0 + $0x4] sm:$0xf]
  %v14 = vld [vmem:[%s1] sm:$0xf]
  %v17 = vunpack.c.l.b16 %v12
  %v18 = vunpack.c.l.b16 %v13
  %v19 = vpack.c.b16 %v18, %v17
  %vm20 = vcmask 64512
  %v22 = vsel %vm20, %v19, 0
  %vm24 = vcmask 1043456
  %v26 = vsel %vm24, %v14, 0
  %28 = vmatprep.subr.bf16.mxu0 0
  %29 = vmatpush1.bf16.msra.mxu0 %v26
  %30 = vmatprep.subr.bf16.mxu0 0
  %31 = vmatpush1.bf16.msra.mxu0 0
  %32 = vmatprep.subr.bf16.mxu0 0
  %33 = vmatpush1.bf16.msra.mxu0 0
  %34 = vmatprep.subr.bf16.mxu0 0
  %35 = vmatpush1.bf16.msra.mxu0 0
  %36 = vmatprep.subr.bf16.mxu0 0
  %37 = vmatpush1.bf16.msra.mxu0 0
  %38 = vmatprep.subr.bf16.mxu0 0
  %39 = vmatpush1.bf16.msra.mxu0 0
  %40 = vmatprep.subr.bf16.mxu0 0
  %41 = vmatpush1.bf16.msra.mxu0 0
  %42 = vmatprep.subr.bf16.mxu0 0
  %43 = vmatpush1.bf16.msra.mxu0 0
  %44 = vmatprep.subr.bf16.mxu0 0
  %45 = vmatpush1.bf16.msra.mxu0 0
  %46 = vmatprep.subr.bf16.mxu0 0
  %47 = vmatpush1.bf16.msra.mxu0 0
  %48 = vmatprep.subr.bf16.mxu0 0
  %49 = vmatpush1.bf16.msra.mxu0 0
  %50 = vmatprep.subr.bf16.mxu0 0
  %51 = vmatpush1.bf16.msra.mxu0 0
  %52 = vmatprep.subr.bf16.mxu0 0
  %53 = vmatpush1.bf16.msra.mxu0 0
  %54 = vmatprep.subr.bf16.mxu0 0
  %55 = vmatpush1.bf16.msra.mxu0 0
  %56 = vmatprep.subr.bf16.mxu0 0
  %57 = vmatpush1.bf16.msra.mxu0 0
  %58 = vmatprep.subr.bf16.mxu0 0
  %59 = vmatpush1.bf16.msra.mxu0 0
  %60 = vmatprep.mubr.bf16.mxu0 0
  %61 = vmatmul.mubr.bf16.gmra.mrb[0].mxu0 %v22
  %v62 = vpop.f32.mrb[0].mxu0
  %v63 = vadd.f32 0.0, %v62
  %v64 = vpop.f32.mrb[0].mxu0
  %v65 = vpop.f32.mrb[0].mxu0
  %v66 = vadd.f32 0.0, %v65
  %v67 = vpop.f32.mrb[0].mxu0
  %68 = vdwg.mxu0
  %vm69 = vcmask 261120
  %70 = vst.msk [vmem:[%s2] sm:$0xff] %vm69, %v63
  %71 = vst.msk [vmem:[%s2 + $0x8] sm:$0xff] %vm69, %v66
  // Predicated region
  $region10: #{_lambda_.4} parent=0 // pred_check
    _
  $region11: #{_lambda_.4} parent=0 // pred_check_branch
    %73 = sbr.rel (0) target = $region13
  $region12: #{_lambda_.4} parent=0 // pred_region
    _
  $region13: #{_lambda_.4} parent=0 // pred_fallthru
    _
  // Predicated region
  $region14: #{_lambda_.4} parent=0 // pred_check
    _
  $region15: #{_lambda_.4} parent=0 // pred_check_branch
    %75 = sbr.rel (0) target = $region17
  $region16: #{_lambda_.4} parent=0 // pred_region
    _
  $region17: #{_lambda_.4} parent=0 // pred_fallthru
    _

// kernel: _lambda_.5
$region0: #{_lambda_.5}
  #allocation0 [shape = 'u32[]', space=smem, size = 0x4, offset = 0x4, fixed_abs, tag = 'smem constant byte address 0x4 - core index']
  #allocation1 [shape = 'u32[144,128]{1,0:T(1,128)}', space=vmem, size = 0x12000, scoped, tag = 'internal scratch']
  #allocation2 [shape = 'f32[16,96]{1,0:T(8,128)}', space=vmem, size = 0x2000, scoped, tag = 'scratch operand']
  %s0 = inlined_call_operand.vmem [shape: bf16[16,96], index: 0, kind: input, shape index: {}]
  %s1 = inlined_call_operand.vmem [shape: f32[8,2,1], index: 1, kind: input, shape index: {}]
  %s2 = inlined_call_operand.vmem [shape: bf16[96,96], index: 2, kind: input, shape index: {}]
  %s3 = inlined_call_operand.vmem [shape: f32[1,96], index: 3, kind: input, shape index: {}]
  %s4 = inlined_call_operand.vmem [shape: bf16[16,48], index: 4, kind: input, shape index: {}]
  %s5 = inlined_call_operand.vmem [shape: f32[1,48], index: 5, kind: input, shape index: {}]
  %s6 = inlined_call_operand.vmem [shape: bf16[16,48], index: 6, kind: input, shape index: {}]
  %s7 = inlined_call_operand.vmem [shape: f32[1,48], index: 7, kind: input, shape index: {}]
  %s8 = inlined_call_operand.vmem [shape: f32[8,2,16], index: 8, kind: output, shape index: {0}]
  %s9 = inlined_call_operand.vmem [shape: f32[8,2,16], index: 9, kind: output, shape index: {1}]
  %s10 = inlined_call_operand.hbm [shape: f32[2,16], index: 10, kind: output, shape index: {2}]
  %s11 = inlined_call_operand.hbm [shape: f32[2,16], index: 11, kind: output, shape index: {3}]
  %12 = xla_tuple %s8, %s9, %s10, %s11
  %s13 = sld [smem:[#allocation0]]
  $region66: #{_lambda_.5} parent=0
    _
  %s15 = ssub.s32 1, %s13
  %s16 = scalar_select 0, %s15, %s13
  $region1: #{_lambda_.5} parent=0
    #allocation3 [shape = 'u8[1024]{0}', space=vmem, size = 0x400, scoped, tag = 'output window, operand 2, single buffered']
    #allocation4 [shape = 's32[1]{0}', space=sflag, size = 0x4, scoped, tag = 'scoped memory for _lambda_.5']
    #allocation5 [shape = 'u8[1024]{0}', space=vmem, size = 0x400, scoped, tag = 'output window, operand 3, single buffered']
    #allocation6 [shape = 's32[1]{0}', space=sflag, size = 0x4, scoped, tag = 'scoped memory for _lambda_.5']
    %17 = vsyncpa [#allocation4], 0
    %18 = vsyncpa [#allocation6], 0
    // Predicated region
    $region2: #{_lambda_.5} parent=1 // pred_check
      _
    $region3: #{_lambda_.5} parent=1 // pred_check_branch
      %20 = sbr.rel (0) target = $region5
    $region4: #{_lambda_.5} parent=1 // pred_region
      _
    $region5: #{_lambda_.5} parent=1 // pred_fallthru
      _
    // Predicated region
    $region6: #{_lambda_.5} parent=1 // pred_check
      _
    $region7: #{_lambda_.5} parent=1 // pred_check_branch
      %22 = sbr.rel (0) target = $region9
    $region8: #{_lambda_.5} parent=1 // pred_region
      _
    $region9: #{_lambda_.5} parent=1 // pred_fallthru
      _
    // Predicated region
    $region10: #{_lambda_.5} parent=1 // pred_check
      _
    $region11: #{_lambda_.5} parent=1 // pred_check_branch
      %24 = sbr.rel (0) target = $region13
    $region12: #{_lambda_.5} parent=1 // pred_region
      _
    $region13: #{_lambda_.5} parent=1 // pred_fallthru
      _
    // Predicated region
    $region14: #{_lambda_.5} parent=1 // pred_check
      _
    $region15: #{_lambda_.5} parent=1 // pred_check_branch
      %26 = sbr.rel (0) target = $region17
    $region16: #{_lambda_.5} parent=1 // pred_region
      _
    $region17: #{_lambda_.5} parent=1 // pred_fallthru
      _
    // Predicated region
    $region18: #{_lambda_.5} parent=1 // pred_check
      _
    $region19: #{_lambda_.5} parent=1 // pred_check_branch
      %28 = sbr.rel (0) target = $region21
    $region20: #{_lambda_.5} parent=1 // pred_region
      _
    $region21: #{_lambda_.5} parent=1 // pred_fallthru
      _
    // Predicated region
    $region22: #{_lambda_.5} parent=1 // pred_check
      _
    $region23: #{_lambda_.5} parent=1 // pred_check_branch
      %30 = sbr.rel (0) target = $region25
    $region24: #{_lambda_.5} parent=1 // pred_region
      _
    $region25: #{_lambda_.5} parent=1 // pred_fallthru
      _
    // Predicated region
    $region26: #{_lambda_.5} parent=1 // pred_check
      _
    $region27: #{_lambda_.5} parent=1 // pred_check_branch
      %32 = sbr.rel (0) target = $region29
    $region28: #{_lambda_.5} parent=1 // pred_region
      _
    $region29: #{_lambda_.5} parent=1 // pred_fallthru
      _
    // Predicated region
    $region30: #{_lambda_.5} parent=1 // pred_check
      _
    $region31: #{_lambda_.5} parent=1 // pred_check_branch
      %34 = sbr.rel (0) target = $region33
    $region32: #{_lambda_.5} parent=1 // pred_region
      _
    $region33: #{_lambda_.5} parent=1 // pred_fallthru
      _
    %v36 = vld [vmem:[%s0] sm:$0xf]
    %v37 = vld [vmem:[%s0 + $0x4] sm:$0xf]
    %v38 = vld [vmem:[%s2] sm:$0xf]
    %v39 = vld [vmem:[%s2 + $0x4] sm:$0xf]
    %v40 = vld [vmem:[%s2 + $0x8] sm:$0xf]
    %v41 = vld [vmem:[%s2 + $0xc] sm:$0xf]
    %v42 = vld [vmem:[%s2 + $0x10] sm:$0xf]
    %v43 = vld [vmem:[%s2 + $0x14] sm:$0xf]
    %v44 = vld [vmem:[%s2 + $0x18] sm:$0xf]
    %v45 = vld [vmem:[%s2 + $0x1c] sm:$0xf]
    %v46 = vld [vmem:[%s2 + $0x20] sm:$0xf]
    %v47 = vld [vmem:[%s2 + $0x24] sm:$0xf]
    %v48 = vld [vmem:[%s2 + $0x28] sm:$0xf]
    %v49 = vld [vmem:[%s2 + $0x2c] sm:$0xf]
    %v50 = vld [vmem:[%s3] sm:$0x1]
    %v52 = vlaneseq
    %v53 = vshrl.u32 %v52, 7
    %v54 = vsub.s32 0, %v53
    %v55 = vrot.slane %v50, %v54
    %v59 = vunpack.c.l.b16 %v36
    %v60 = vunpack.c.l.b16 %v37
    %v61 = vpack.c.b16 %v60, %v59
    %v74 = vunpack.c.l.b16 %v38
    %v75 = vunpack.c.l.b16 %v39
    %v76 = vunpack.c.l.b16 %v40
    %v77 = vunpack.c.l.b16 %v41
    %v78 = vunpack.c.l.b16 %v42
    %v79 = vunpack.c.l.b16 %v43
    %v80 = vunpack.c.l.b16 %v44
    %v81 = vunpack.c.l.b16 %v45
    %v82 = vunpack.c.l.b16 %v46
    %v83 = vunpack.c.l.b16 %v47
    %v84 = vunpack.c.l.b16 %v48
    %v85 = vunpack.c.l.b16 %v49
    %v86 = vpack.c.b16 %v75, %v74
    %v87 = vpack.c.b16 %v77, %v76
    %v88 = vpack.c.b16 %v79, %v78
    %v89 = vpack.c.b16 %v81, %v80
    %v90 = vpack.c.b16 %v83, %v82
    %v91 = vpack.c.b16 %v85, %v84
    %vm98 = vcmask 785408
    %v100 = vsel %vm98, %v61, 0
    %102 = vmatprep.subr.bf16.mxu0 0
    %103 = vmatpush1.bf16.msra.mxu0 %v86
    %104 = vmatprep.subr.bf16.mxu0 0
    %105 = vmatpush1.bf16.msra.mxu0 %v87
    %106 = vmatprep.subr.bf16.mxu0 0
    %107 = vmatpush1.bf16.msra.mxu0 %v88
    %108 = vmatprep.subr.bf16.mxu0 0
    %109 = vmatpush1.bf16.msra.mxu0 %v89
    %110 = vmatprep.subr.bf16.mxu0 0
    %111 = vmatpush1.bf16.msra.mxu0 %v90
    %112 = vmatprep.subr.bf16.mxu0 0
    %113 = vmatpush1.bf16.msra.mxu0 %v91
    %114 = vmatprep.subr.bf16.mxu0 0
    %115 = vmatpush1.bf16.msra.mxu0 0
    %116 = vmatprep.subr.bf16.mxu0 0
    %117 = vmatpush1.bf16.msra.mxu0 0
    %118 = vmatprep.subr.bf16.mxu0 0
    %119 = vmatpush1.bf16.msra.mxu0 0
    %120 = vmatprep.subr.bf16.mxu0 0
    %121 = vmatpush1.bf16.msra.mxu0 0
    %122 = vmatprep.subr.bf16.mxu0 0
    %123 = vmatpush1.bf16.msra.mxu0 0
    %124 = vmatprep.subr.bf16.mxu0 0
    %125 = vmatpush1.bf16.msra.mxu0 0
    %126 = vmatprep.subr.bf16.mxu0 0
    %127 = vmatpush1.bf16.msra.mxu0 0
    %128 = vmatprep.subr.bf16.mxu0 0
    %129 = vmatpush1.bf16.msra.mxu0 0
    %130 = vmatprep.subr.bf16.mxu0 0
    %131 = vmatpush1.bf16.msra.mxu0 0
    %132 = vmatprep.subr.bf16.mxu0 0
    %133 = vmatpush1.bf16.msra.mxu0 0
    %134 = vmatprep.mubr.bf16.mxu0 0
    %135 = vmatmul.mubr.bf16.gmra.mrb[0].mxu0 %v100
    %v136 = vpop.f32.mrb[0].mxu0
    %v137 = vadd.f32 %v55, %v136
    %v138 = vpop.f32.mrb[0].mxu0
    %v139 = vpop.f32.mrb[0].mxu0
    %v140 = vadd.f32 %v55, %v139
    %v141 = vpop.f32.mrb[0].mxu0
    %142 = vdwg.mxu0
    %143 = vst.msk [vmem:[#allocation2] sm:$0xff] %vm98, %v137
    %144 = vst.msk [vmem:[#allocation2 + $0x8] sm:$0xff] %vm98, %v140
    %v145 = vld [vmem:[#allocation2] sm:$0x3]
    %v146 = vld [vmem:[#allocation2 + $0xe] sm:$0x3]
    %v147 = vld [vmem:[%s1] sm:$0x3]
    %s148 = scalar_lea.vmem %s1, 14
    %v149 = vld [vmem:[%s148] sm:$0x3]
    %v150 = vld [vmem:[%s4] sm:$0xf]
    %v151 = vld [vmem:[%s4 + $0x4] sm:$0xf]
    %v152 = vld [vmem:[%s5] sm:$0x1]
    %v154 = vlaneseq
    %v155 = vshrl.u32 %v154, 7
    %v156 = vsub.s32 0, %v155
    %v157 = vrot.slane %v152, %v156
    %v161 = vunpack.c.l.b16 %v150
    %v162 = vunpack.c.l.b16 %v151
    %v163 = vpack.c.b16 %v162, %v161
    %vm165 = vcmask 130048
    %v167 = vsel %vm165, 0, 0
    %169 = vmatprep.subr.bf16.mxu0 0
    %170 = vmatpush1.bf16.msra.mxu0 %v163
    %171 = vmatprep.subr.bf16.mxu0 0
    %172 = vmatpush1.bf16.msra.mxu0 0
    %173 = vmatprep.subr.bf16.mxu0 0
    %174 = vmatpush1.bf16.msra.mxu0 0
    %175 = vmatprep.subr.bf16.mxu0 0
    %176 = vmatpush1.bf16.msra.mxu0 0
    %177 = vmatprep.subr.bf16.mxu0 0
    %178 = vmatpush1.bf16.msra.mxu0 0
    %179 = vmatprep.subr.bf16.mxu0 0
    %180 = vmatpush1.bf16.msra.mxu0 0
    %181 = vmatprep.subr.bf16.mxu0 0
    %182 = vmatpush1.bf16.msra.mxu0 0
    %183 = vmatprep.subr.bf16.mxu0 0
    %184 = vmatpush1.bf16.msra.mxu0 0
    %185 = vmatprep.subr.bf16.mxu0 0
    %186 = vmatpush1.bf16.msra.mxu0 0
    %187 = vmatprep.subr.bf16.mxu0 0
    %188 = vmatpush1.bf16.msra.mxu0 0
    %189 = vmatprep.subr.bf16.mxu0 0
    %190 = vmatpush1.bf16.msra.mxu0 0
    %191 = vmatprep.subr.bf16.mxu0 0
    %192 = vmatpush1.bf16.msra.mxu0 0
    %193 = vmatprep.subr.bf16.mxu0 0
    %194 = vmatpush1.bf16.msra.mxu0 0
    %195 = vmatprep.subr.bf16.mxu0 0
    %196 = vmatpush1.bf16.msra.mxu0 0
    %197 = vmatprep.subr.bf16.mxu0 0
    %198 = vmatpush1.bf16.msra.mxu0 0
    %199 = vmatprep.subr.bf16.mxu0 0
    %200 = vmatpush1.bf16.msra.mxu0 0
    %201 = vmatprep.mubr.bf16.mxu0 0
    %202 = vmatmul.mubr.bf16.gmra.mrb[0].mxu0 %v167
    %v203 = vpop.f32.mrb[0].mxu0
    %v204 = vadd.f32 %v157, %v203
    %v205 = vpop.f32.mrb[0].mxu0
    %v206 = vpop.f32.mrb[0].mxu0
    %v207 = vpop.f32.mrb[0].mxu0
    %208 = vdwg.mxu0
    %v209 = vadd.f32 %v145, %v204
    %v210 = vxor.u32 %v209, 2147483648
    %v211 = vmul.f32 %v210, 1.442695
    %v212 = vpow.pop %v211
    %v213 = vadd.f32 %v212, 1.0
    %v214 = vrcp.pop %v213
    %v215 = vmul.f32 1.0, %v214
    %217 = vrot.lane.b32.xlu0 %v204, 96
    %v218 = vpop.permute.xlu0 %217
    %v220 = vmul.f32 %v215, %v218
    %222 = vrot.lane.b32.xlu0 %v220, 32
    %v223 = vpop.permute.xlu0 %222
    %v225 = vadd.f32 %v145, %v223
    %v226 = vtanh.pop %v225
    %v227 = vsub.f32 1.0, %v215
    %229 = vrot.lane.b32.xlu0 %v226, 112
    %v230 = vpop.permute.xlu0 %229
    %v232 = vmul.f32 %v227, %v230
    %v233 = vmul.f32 %v215, 0.0
    %v234 = vadd.f32 %v232, %v233
    %v235 = vld [vmem:[%s6] sm:$0xf]
    %v236 = vld [vmem:[%s6 + $0x4] sm:$0xf]
    %v237 = vld [vmem:[%s7] sm:$0x1]
    %v239 = vlaneseq
    %v240 = vshrl.u32 %v239, 7
    %v241 = vsub.s32 0, %v240
    %v242 = vrot.slane %v237, %v241
    %v246 = vunpack.c.l.b16 %v235
    %v247 = vunpack.c.l.b16 %v236
    %v248 = vpack.c.b16 %v247, %v246
    %250 = vmatprep.subr.bf16.mxu0 0
    %251 = vmatpush1.bf16.msra.mxu0 %v248
    %252 = vmatprep.subr.bf16.mxu0 0
    %253 = vmatpush1.bf16.msra.mxu0 0
    %254 = vmatprep.subr.bf16.mxu0 0
    %255 = vmatpush1.bf16.msra.mxu0 0
    %256 = vmatprep.subr.bf16.mxu0 0
    %257 = vmatpush1.bf16.msra.mxu0 0
    %258 = vmatprep.subr.bf16.mxu0 0
    %259 = vmatpush1.bf16.msra.mxu0 0
    %260 = vmatprep.subr.bf16.mxu0 0
    %261 = vmatpush1.bf16.msra.mxu0 0
    %262 = vmatprep.subr.bf16.mxu0 0
    %263 = vmatpush1.bf16.msra.mxu0 0
    %264 = vmatprep.subr.bf16.mxu0 0
    %265 = vmatpush1.bf16.msra.mxu0 0
    %266 = vmatprep.subr.bf16.mxu0 0
    %267 = vmatpush1.bf16.msra.mxu0 0
    %268 = vmatprep.subr.bf16.mxu0 0
    %269 = vmatpush1.bf16.msra.mxu0 0
    %270 = vmatprep.subr.bf16.mxu0 0
    %271 = vmatpush1.bf16.msra.mxu0 0
    %272 = vmatprep.subr.bf16.mxu0 0
    %273 = vmatpush1.bf16.msra.mxu0 0
    %274 = vmatprep.subr.bf16.mxu0 0
    %275 = vmatpush1.bf16.msra.mxu0 0
    %276 = vmatprep.subr.bf16.mxu0 0
    %277 = vmatpush1.bf16.msra.mxu0 0
    %278 = vmatprep.subr.bf16.mxu0 0
    %279 = vmatpush1.bf16.msra.mxu0 0
    %280 = vmatprep.subr.bf16.mxu0 0
    %281 = vmatpush1.bf16.msra.mxu0 0
    %282 = vmatprep.mubr.bf16.mxu0 0
    %283 = vmatmul.mubr.bf16.gmra.mrb[0].mxu0 %v167
    %v284 = vpop.f32.mrb[0].mxu0
    %v285 = vadd.f32 %v242, %v284
    %v286 = vpop.f32.mrb[0].mxu0
    %v287 = vpop.f32.mrb[0].mxu0
    %v288 = vpop.f32.mrb[0].mxu0
    %289 = vdwg.mxu0
    %291 = vrot.lane.b32.xlu0 %v285, 48
    %v292 = vpop.permute.xlu0 %291
    %v294 = vadd.f32 %v146, %v292
    %v295 = vxor.u32 %v294, 2147483648
    %v296 = vmul.f32 %v295, 1.442695
    %v297 = vpow.pop %v296
    %v298 = vadd.f32 %v297, 1.0
    %v299 = vrcp.pop %v298
    %v300 = vmul.f32 1.0, %v299
    %301 = vrot.lane.b32.xlu0 %v285, 16
    %v302 = vpop.permute.xlu0 %301
    %v304 = vmul.f32 %v300, %v302
    %306 = vrot.lane.b32.xlu0 %v304, 32
    %v307 = vpop.permute.xlu0 %306
    %v309 = vadd.f32 %v146, %v307
    %v310 = vtanh.pop %v309
    %v311 = vsub.f32 1.0, %v300
    %313 = vrot.lane.b32.xlu0 %v310, 112
    %v314 = vpop.permute.xlu0 %313
    %v316 = vmul.f32 %v311, %v314
    %v317 = vmul.f32 %v300, 0.0
    %v318 = vadd.f32 %v316, %v317
    %320 = vset.pattern.permute.xlu0 0
    %321 = vperm.xlu0 %320, %v147
    %v322 = vpop.permute.xlu0 %321
    %v324 = vmul.f32 %v322, %v234
    %326 = vrot.lane.b32.xlu0 %v324, 112
    %v327 = vpop.permute.xlu0 %326
    %vm329 = vcmask 123904
    %330 = vst.msk [vmem:[%s8] sm:$0x3] %vm329, %v327
    %332 = vset.pattern.permute.xlu0 0
    %333 = vperm.xlu0 %332, %v149
    %v334 = vpop.permute.xlu0 %333
    %v336 = vmul.f32 %v334, %v318
    %338 = vrot.lane.b32.xlu0 %v336, 64
    %v339 = vpop.permute.xlu0 %338
    %s341 = scalar_lea.vmem %s9, 14
    %342 = vst.msk [vmem:[%s341] sm:$0x3] %vm329, %v339
    %v343 = vsub.f32 1.0, %v147
    %345 = vset.pattern.permute.xlu0 0
    %346 = vperm.xlu0 %345, %v343
    %v347 = vpop.permute.xlu0 %346
    %v349 = vmul.f32 %v347, 0.0
    %v350 = vadd.f32 %v324, %v349
    %v351 = vsub.f32 1.0, %v149
    %353 = vset.pattern.permute.xlu0 0
    %354 = vperm.xlu0 %353, %v351
    %v355 = vpop.permute.xlu0 %354
    %v357 = vmul.f32 %v355, 0.0
    %v358 = vadd.f32 %v336, %v357
    %v359 = vld [vmem:[#allocation2 + $0x2] sm:$0x3]
    %v360 = vld [vmem:[#allocation2 + $0xc] sm:$0x3]
    %s361 = scalar_lea.vmem %s1, 2
    %v362 = vld [vmem:[%s361] sm:$0x3]
    %s363 = scalar_lea.vmem %s1, 12
    %v364 = vld [vmem:[%s363] sm:$0x3]
    %v365 = vpack.c.bf16 %v350, %v350
    %v366 = vld [vmem:[%s4] sm:$0xf]
    %v367 = vld [vmem:[%s4 + $0x4] sm:$0xf]
    %v368 = vld [vmem:[%s5] sm:$0x1]
    %v370 = vlaneseq
    %v371 = vshrl.u32 %v370, 7
    %v372 = vsub.s32 0, %v371
    %v373 = vrot.slane %v368, %v372
    %376 = vrot.lane.b32.xlu0 %v365, 112
    %v377 = vpop.permute.xlu0 %376
    %v380 = vunpack.c.l.b16 %v366
    %v381 = vunpack.c.l.b16 %v367
    %v382 = vpack.c.b16 %v381, %v380
    %v385 = vsel %vm165, %v377, 0
    %387 = vmatprep.subr.bf16.mxu0 0
    %388 = vmatpush1.bf16.msra.mxu0 %v382
    %389 = vmatprep.subr.bf16.mxu0 0
    %390 = vmatpush1.bf16.msra.mxu0 0
    %391 = vmatprep.subr.bf16.mxu0 0
    %392 = vmatpush1.bf16.msra.mxu0 0
    %393 = vmatprep.subr.bf16.mxu0 0
    %394 = vmatpush1.bf16.msra.mxu0 0
    %395 = vmatprep.subr.bf16.mxu0 0
    %396 = vmatpush1.bf16.msra.mxu0 0
    %397 = vmatprep.subr.bf16.mxu0 0
    %398 = vmatpush1.bf16.msra.mxu0 0
    %399 = vmatprep.subr.bf16.mxu0 0
    %400 = vmatpush1.bf16.msra.mxu0 0
    %401 = vmatprep.subr.bf16.mxu0 0
    %402 = vmatpush1.bf16.msra.mxu0 0
    %403 = vmatprep.subr.bf16.mxu0 0
    %404 = vmatpush1.bf16.msra.mxu0 0
    %405 = vmatprep.subr.bf16.mxu0 0
    %406 = vmatpush1.bf16.msra.mxu0 0
    %407 = vmatprep.subr.bf16.mxu0 0
    %408 = vmatpush1.bf16.msra.mxu0 0
    %409 = vmatprep.subr.bf16.mxu0 0
    %410 = vmatpush1.bf16.msra.mxu0 0
    %411 = vmatprep.subr.bf16.mxu0 0
    %412 = vmatpush1.bf16.msra.mxu0 0
    %413 = vmatprep.subr.bf16.mxu0 0
    %414 = vmatpush1.bf16.msra.mxu0 0
    %415 = vmatprep.subr.bf16.mxu0 0
    %416 = vmatpush1.bf16.msra.mxu0 0
    %417 = vmatprep.subr.bf16.mxu0 0
    %418 = vmatpush1.bf16.msra.mxu0 0
    %419 = vmatprep.mubr.bf16.mxu0 0
    %420 = vmatmul.mubr.bf16.gmra.mrb[0].mxu0 %v385
    %v421 = vpop.f32.mrb[0].mxu0
    %v422 = vadd.f32 %v373, %v421
    %v423 = vpop.f32.mrb[0].mxu0
    %v424 = vpop.f32.mrb[0].mxu0
    %v425 = vpop.f32.mrb[0].mxu0
    %426 = vdwg.mxu0
    %v427 = vadd.f32 %v359, %v422
    %v428 = vxor.u32 %v427, 2147483648
    %v429 = vmul.f32 %v428, 1.442695
    %v430 = vpow.pop %v429
    %v431 = vadd.f32 %v430, 1.0
    %v432 = vrcp.pop %v431
    %v433 = vmul.f32 1.0, %v432
    %435 = vrot.lane.b32.xlu0 %v422, 96
    %v436 = vpop.permute.xlu0 %435
    %v438 = vmul.f32 %v433, %v436
    %440 = vrot.lane.b32.xlu0 %v438, 32
    %v441 = vpop.permute.xlu0 %440
    %v443 = vadd.f32 %v359, %v441
    %v444 = vtanh.pop %v443
    %v445 = vsub.f32 1.0, %v433
    %447 = vrot.lane.b32.xlu0 %v444, 112
    %v448 = vpop.permute.xlu0 %447
    %v450 = vmul.f32 %v445, %v448
    %v451 = vmul.f32 %v433, %v350
    %v452 = vadd.f32 %v450, %v451
    %v453 = vpack.c.bf16 %v358, %v358
    %v454 = vld [vmem:[%s6] sm:$0xf]
    %v455 = vld [vmem:[%s6 + $0x4] sm:$0xf]
    %v456 = vld [vmem:[%s7] sm:$0x1]
    %v458 = vlaneseq
    %v459 = vshrl.u32 %v458, 7
    %v460 = vsub.s32 0, %v459
    %v461 = vrot.slane %v456, %v460
    %464 = vrot.lane.b32.xlu0 %v453, 64
    %v465 = vpop.permute.xlu0 %464
    %v468 = vunpack.c.l.b16 %v454
    %v469 = vunpack.c.l.b16 %v455
    %v470 = vpack.c.b16 %v469, %v468
    %v473 = vsel %vm165, %v465, 0
    %475 = vmatprep.subr.bf16.mxu0 0
    %476 = vmatpush1.bf16.msra.mxu0 %v470
    %477 = vmatprep.subr.bf16.mxu0 0
    %478 = vmatpush1.bf16.msra.mxu0 0
    %479 = vmatprep.subr.bf16.mxu0 0
    %480 = vmatpush1.bf16.msra.mxu0 0
    %481 = vmatprep.subr.bf16.mxu0 0
    %482 = vmatpush1.bf16.msra.mxu0 0
    %483 = vmatprep.subr.bf16.mxu0 0
    %484 = vmatpush1.bf16.msra.mxu0 0
    %485 = vmatprep.subr.bf16.mxu0 0
    %486 = vmatpush1.bf16.msra.mxu0 0
    %487 = vmatprep.subr.bf16.mxu0 0
    %488 = vmatpush1.bf16.msra.mxu0 0
    %489 = vmatprep.subr.bf16.mxu0 0
    %490 = vmatpush1.bf16.msra.mxu0 0
    %491 = vmatprep.subr.bf16.mxu0 0
    %492 = vmatpush1.bf16.msra.mxu0 0
    %493 = vmatprep.subr.bf16.mxu0 0
    %494 = vmatpush1.bf16.msra.mxu0 0
    %495 = vmatprep.subr.bf16.mxu0 0
    %496 = vmatpush1.bf16.msra.mxu0 0
    %497 = vmatprep.subr.bf16.mxu0 0
    %498 = vmatpush1.bf16.msra.mxu0 0
    %499 = vmatprep.subr.bf16.mxu0 0
    %500 = vmatpush1.bf16.msra.mxu0 0
    %501 = vmatprep.subr.bf16.mxu0 0
    %502 = vmatpush1.bf16.msra.mxu0 0
    %503 = vmatprep.subr.bf16.mxu0 0
    %504 = vmatpush1.bf16.msra.mxu0 0
    %505 = vmatprep.subr.bf16.mxu0 0
    %506 = vmatpush1.bf16.msra.mxu0 0
    %507 = vmatprep.mubr.bf16.mxu0 0
    %508 = vmatmul.mubr.bf16.gmra.mrb[0].mxu0 %v473
    %v509 = vpop.f32.mrb[0].mxu0
    %v510 = vadd.f32 %v461, %v509
    %v511 = vpop.f32.mrb[0].mxu0
    %v512 = vpop.f32.mrb[0].mxu0
    %v513 = vpop.f32.mrb[0].mxu0
    %514 = vdwg.mxu0
    %516 = vrot.lane.b32.xlu0 %v510, 48
    %v517 = vpop.permute.xlu0 %516
    %v519 = vadd.f32 %v360, %v517
    %v520 = vxor.u32 %v519, 2147483648
    %v521 = vmul.f32 %v520, 1.442695
    %v522 = vpow.pop %v521
    %v523 = vadd.f32 %v522, 1.0
    %v524 = vrcp.pop %v523
    %v525 = vmul.f32 1.0, %v524
    %526 = vrot.lane.b32.xlu0 %v510, 16
    %v527 = vpop.permute.xlu0 %526
    %v529 = vmul.f32 %v525, %v527
    %531 = vrot.lane.b32.xlu0 %v529, 32
    %v532 = vpop.permute.xlu0 %531
    %v534 = vadd.f32 %v360, %v532
    %v535 = vtanh.pop %v534
    %v536 = vsub.f32 1.0, %v525
    %538 = vrot.lane.b32.xlu0 %v535, 112
    %v539 = vpop.permute.xlu0 %538
    %v541 = vmul.f32 %v536, %v539
    %v542 = vmul.f32 %v525, %v358
    %v543 = vadd.f32 %v541, %v542
    %545 = vset.pattern.permute.xlu0 0
    %546 = vperm.xlu0 %545, %v362
    %v547 = vpop.permute.xlu0 %546
    %v549 = vmul.f32 %v547, %v452
    %551 = vrot.lane.b32.xlu0 %v549, 112
    %v552 = vpop.permute.xlu0 %551
    %s554 = scalar_lea.vmem %s8, 2
    %555 = vst.msk [vmem:[%s554] sm:$0x3] %vm329, %v552
    %557 = vset.pattern.permute.xlu0 0
    %558 = vperm.xlu0 %557, %v364
    %v559 = vpop.permute.xlu0 %558
    %v561 = vmul.f32 %v559, %v543
    %563 = vrot.lane.b32.xlu0 %v561, 64
    %v564 = vpop.permute.xlu0 %563
    %s566 = scalar_lea.vmem %s9, 12
    %567 = vst.msk [vmem:[%s566] sm:$0x3] %vm329, %v564
    %v568 = vsub.f32 1.0, %v362
    %570 = vset.pattern.permute.xlu0 0
    %571 = vperm.xlu0 %570, %v568
    %v572 = vpop.permute.xlu0 %571
    %v574 = vmul.f32 %v572, %v350
    %v575 = vadd.f32 %v549, %v574
    %v576 = vsub.f32 1.0, %v364
    %578 = vset.pattern.permute.xlu0 0
    %579 = vperm.xlu0 %578, %v576
    %v580 = vpop.permute.xlu0 %579
    %v582 = vmul.f32 %v580, %v358
    %v583 = vadd.f32 %v561, %v582
    %v584 = vld [vmem:[#allocation2 + $0x4] sm:$0x3]
    %v585 = vld [vmem:[#allocation2 + $0xa] sm:$0x3]
    %s586 = scalar_lea.vmem %s1, 4
    %v587 = vld [vmem:[%s586] sm:$0x3]
    %s588 = scalar_lea.vmem %s1, 10
    %v589 = vld [vmem:[%s588] sm:$0x3]
    %v590 = vpack.c.bf16 %v575, %v575
    %v591 = vld [vmem:[%s4] sm:$0xf]
    %v592 = vld [vmem:[%s4 + $0x4] sm:$0xf]
    %v593 = vld [vmem:[%s5] sm:$0x1]
    %v595 = vlaneseq
    %v596 = vshrl.u32 %v595, 7
    %v597 = vsub.s32 0, %v596
    %v598 = vrot.slane %v593, %v597
    %601 = vrot.lane.b32.xlu0 %v590, 112
    %v602 = vpop.permute.xlu0 %601
    %v605 = vunpack.c.l.b16 %v591
    %v606 = vunpack.c.l.b16 %v592
    %v607 = vpack.c.b16 %v606, %v605
    %v610 = vsel %vm165, %v602, 0
    %612 = vmatprep.subr.bf16.mxu0 0
    %613 = vmatpush1.bf16.msra.mxu0 %v607
    %614 = vmatprep.subr.bf16.mxu0 0
    %615 = vmatpush1.bf16.msra.mxu0 0
    %616 = vmatprep.subr.bf16.mxu0 0
    %617 = vmatpush1.bf16.msra.mxu0 0
    %618 = vmatprep.subr.bf16.mxu0 0
    %619 = vmatpush1.bf16.msra.mxu0 0
    %620 = vmatprep.subr.bf16.mxu0 0
    %621 = vmatpush1.bf16.msra.mxu0 0
    %622 = vmatprep.subr.bf16.mxu0 0
    %623 = vmatpush1.bf16.msra.mxu0 0
    %624 = vmatprep.subr.bf16.mxu0 0
    %625 = vmatpush1.bf16.msra.mxu0 0
    %626 = vmatprep.subr.bf16.mxu0 0
    %627 = vmatpush1.bf16.msra.mxu0 0
    %628 = vmatprep.subr.bf16.mxu0 0
    %629 = vmatpush1.bf16.msra.mxu0 0
    %630 = vmatprep.subr.bf16.mxu0 0
    %631 = vmatpush1.bf16.msra.mxu0 0
    %632 = vmatprep.subr.bf16.mxu0 0
    %633 = vmatpush1.bf16.msra.mxu0 0
    %634 = vmatprep.subr.bf16.mxu0 0
    %635 = vmatpush1.bf16.msra.mxu0 0
    %636 = vmatprep.subr.bf16.mxu0 0
    %637 = vmatpush1.bf16.msra.mxu0 0
    %638 = vmatprep.subr.bf16.mxu0 0
    %639 = vmatpush1.bf16.msra.mxu0 0
    %640 = vmatprep.subr.bf16.mxu0 0
    %641 = vmatpush1.bf16.msra.mxu0 0
    %642 = vmatprep.subr.bf16.mxu0 0
    %643 = vmatpush1.bf16.msra.mxu0 0
    %644 = vmatprep.mubr.bf16.mxu0 0
    %645 = vmatmul.mubr.bf16.gmra.mrb[0].mxu0 %v610
    %v646 = vpop.f32.mrb[0].mxu0
    %v647 = vadd.f32 %v598, %v646
    %v648 = vpop.f32.mrb[0].mxu0
    %v649 = vpop.f32.mrb[0].mxu0
    %v650 = vpop.f32.mrb[0].mxu0
    %651 = vdwg.mxu0
    %v652 = vadd.f32 %v584, %v647
    %v653 = vxor.u32 %v652, 2147483648
    %v654 = vmul.f32 %v653, 1.442695
    %v655 = vpow.pop %v654
    %v656 = vadd.f32 %v655, 1.0
    %v657 = vrcp.pop %v656
    %v658 = vmul.f32 1.0, %v657
    %660 = vrot.lane.b32.xlu0 %v647, 96
    %v661 = vpop.permute.xlu0 %660
    %v663 = vmul.f32 %v658, %v661
    %665 = vrot.lane.b32.xlu0 %v663, 32
    %v666 = vpop.permute.xlu0 %665
    %v668 = vadd.f32 %v584, %v666
    %v669 = vtanh.pop %v668
    %v670 = vsub.f32 1.0, %v658
    %672 = vrot.lane.b32.xlu0 %v669, 112
    %v673 = vpop.permute.xlu0 %672
    %v675 = vmul.f32 %v670, %v673
    %v676 = vmul.f32 %v658, %v575
    %v677 = vadd.f32 %v675, %v676
    %v678 = vpack.c.bf16 %v583, %v583
    %v679 = vld [vmem:[%s6] sm:$0xf]
    %v680 = vld [vmem:[%s6 + $0x4] sm:$0xf]
    %v681 = vld [vmem:[%s7] sm:$0x1]
    %v683 = vlaneseq
    %v684 = vshrl.u32 %v683, 7
    %v685 = vsub.s32 0, %v684
    %v686 = vrot.slane %v681, %v685
    %689 = vrot.lane.b32.xlu0 %v678, 64
    %v690 = vpop.permute.xlu0 %689
    %v693 = vunpack.c.l.b16 %v679
    %v694 = vunpack.c.l.b16 %v680
    %v695 = vpack.c.b16 %v694, %v693
    %v698 = vsel %vm165, %v690, 0
    %700 = vmatprep.subr.bf16.mxu0 0
    %701 = vmatpush1.bf16.msra.mxu0 %v695
    %702 = vmatprep.subr.bf16.mxu0 0
    %703 = vmatpush1.bf16.msra.mxu0 0
    %704 = vmatprep.subr.bf16.mxu0 0
    %705 = vmatpush1.bf16.msra.mxu0 0
    %706 = vmatprep.subr.bf16.mxu0 0
    %707 = vmatpush1.bf16.msra.mxu0 0
    %708 = vmatprep.subr.bf16.mxu0 0
    %709 = vmatpush1.bf16.msra.mxu0 0
    %710 = vmatprep.subr.bf16.mxu0 0
    %711 = vmatpush1.bf16.msra.mxu0 0
    %712 = vmatprep.subr.bf16.mxu0 0
    %713 = vmatpush1.bf16.msra.mxu0 0
    %714 = vmatprep.subr.bf16.mxu0 0
    %715 = vmatpush1.bf16.msra.mxu0 0
    %716 = vmatprep.subr.bf16.mxu0 0
    %717 = vmatpush1.bf16.msra.mxu0 0
    %718 = vmatprep.subr.bf16.mxu0 0
    %719 = vmatpush1.bf16.msra.mxu0 0
    %720 = vmatprep.subr.bf16.mxu0 0
    %721 = vmatpush1.bf16.msra.mxu0 0
    %722 = vmatprep.subr.bf16.mxu0 0
    %723 = vmatpush1.bf16.msra.mxu0 0
    %724 = vmatprep.subr.bf16.mxu0 0
    %725 = vmatpush1.bf16.msra.mxu0 0
    %726 = vmatprep.subr.bf16.mxu0 0
    %727 = vmatpush1.bf16.msra.mxu0 0
    %728 = vmatprep.subr.bf16.mxu0 0
    %729 = vmatpush1.bf16.msra.mxu0 0
    %730 = vmatprep.subr.bf16.mxu0 0
    %731 = vmatpush1.bf16.msra.mxu0 0
    %732 = vmatprep.mubr.bf16.mxu0 0
    %733 = vmatmul.mubr.bf16.gmra.mrb[0].mxu0 %v698
    %v734 = vpop.f32.mrb[0].mxu0
    %v735 = vadd.f32 %v686, %v734
    %v736 = vpop.f32.mrb[0].mxu0
    %v737 = vpop.f32.mrb[0].mxu0
    %v738 = vpop.f32.mrb[0].mxu0
    %739 = vdwg.mxu0
    %741 = vrot.lane.b32.xlu0 %v735, 48
    %v742 = vpop.permute.xlu0 %741
    %v744 = vadd.f32 %v585, %v742
    %v745 = vxor.u32 %v744, 2147483648
    %v746 = vmul.f32 %v745, 1.442695
    %v747 = vpow.pop %v746
    %v748 = vadd.f32 %v747, 1.0
    %v749 = vrcp.pop %v748
    %v750 = vmul.f32 1.0, %v749
    %751 = vrot.lane.b32.xlu0 %v735, 16
    %v752 = vpop.permute.xlu0 %751
    %v754 = vmul.f32 %v750, %v752
    %756 = vrot.lane.b32.xlu0 %v754, 32
    %v757 = vpop.permute.xlu0 %756
    %v759 = vadd.f32 %v585, %v757
    %v760 = vtanh.pop %v759
    %v761 = vsub.f32 1.0, %v750
    %763 = vrot.lane.b32.xlu0 %v760, 112
    %v764 = vpop.permute.xlu0 %763
    %v766 = vmul.f32 %v761, %v764
    %v767 = vmul.f32 %v750, %v583
    %v768 = vadd.f32 %v766, %v767
    %770 = vset.pattern.permute.xlu0 0
    %771 = vperm.xlu0 %770, %v587
    %v772 = vpop.permute.xlu0 %771
    %v774 = vmul.f32 %v772, %v677
    %776 = vrot.lane.b32.xlu0 %v774, 112
    %v777 = vpop.permute.xlu0 %776
    %s779 = scalar_lea.vmem %s8, 4
    %780 = vst.msk [vmem:[%s779] sm:$0x3] %vm329, %v777
    %782 = vset.pattern.permute.xlu0 0
    %783 = vperm.xlu0 %782, %v589
    %v784 = vpop.permute.xlu0 %783
    %v786 = vmul.f32 %v784, %v768
    %788 = vrot.lane.b32.xlu0 %v786, 64
    %v789 = vpop.permute.xlu0 %788
    %s791 = scalar_lea.vmem %s9, 10
    %792 = vst.msk [vmem:[%s791] sm:$0x3] %vm329, %v789
    %v793 = vsub.f32 1.0, %v587
    %795 = vset.pattern.permute.xlu0 0
    %796 = vperm.xlu0 %795, %v793
    %v797 = vpop.permute.xlu0 %796
    %v799 = vmul.f32 %v797, %v575
    %v800 = vadd.f32 %v774, %v799
    %v801 = vsub.f32 1.0, %v589
    %803 = vset.pattern.permute.xlu0 0
    %804 = vperm.xlu0 %803, %v801
    %v805 = vpop.permute.xlu0 %804
    %v807 = vmul.f32 %v805, %v583
    %v808 = vadd.f32 %v786, %v807
    %v809 = vld [vmem:[#allocation2 + $0x6] sm:$0x3]
    %v810 = vld [vmem:[#allocation2 + $0x8] sm:$0x3]
    %s811 = scalar_lea.vmem %s1, 6
    %v812 = vld [vmem:[%s811] sm:$0x3]
    %s813 = scalar_lea.vmem %s1, 8
    %v814 = vld [vmem:[%s813] sm:$0x3]
    %v815 = vpack.c.bf16 %v800, %v800
    %v816 = vld [vmem:[%s4] sm:$0xf]
    %v817 = vld [vmem:[%s4 + $0x4] sm:$0xf]
    %v818 = vld [vmem:[%s5] sm:$0x1]
    %v820 = vlaneseq
    %v821 = vshrl.u32 %v820, 7
    %v822 = vsub.s32 0, %v821
    %v823 = vrot.slane %v818, %v822
    %826 = vrot.lane.b32.xlu0 %v815, 112
    %v827 = vpop.permute.xlu0 %826
    %v830 = vunpack.c.l.b16 %v816
    %v831 = vunpack.c.l.b16 %v817
    %v832 = vpack.c.b16 %v831, %v830
    %v835 = vsel %vm165, %v827, 0
    %837 = vmatprep.subr.bf16.mxu0 0
    %838 = vmatpush1.bf16.msra.mxu0 %v832
    %839 = vmatprep.subr.bf16.mxu0 0
    %840 = vmatpush1.bf16.msra.mxu0 0
    %841 = vmatprep.subr.bf16.mxu0 0
    %842 = vmatpush1.bf16.msra.mxu0 0
    %843 = vmatprep.subr.bf16.mxu0 0
    %844 = vmatpush1.bf16.msra.mxu0 0
    %845 = vmatprep.subr.bf16.mxu0 0
    %846 = vmatpush1.bf16.msra.mxu0 0
    %847 = vmatprep.subr.bf16.mxu0 0
    %848 = vmatpush1.bf16.msra.mxu0 0
    %849 = vmatprep.subr.bf16.mxu0 0
    %850 = vmatpush1.bf16.msra.mxu0 0
    %851 = vmatprep.subr.bf16.mxu0 0
    %852 = vmatpush1.bf16.msra.mxu0 0
    %853 = vmatprep.subr.bf16.mxu0 0
    %854 = vmatpush1.bf16.msra.mxu0 0
    %855 = vmatprep.subr.bf16.mxu0 0
    %856 = vmatpush1.bf16.msra.mxu0 0
    %857 = vmatprep.subr.bf16.mxu0 0
    %858 = vmatpush1.bf16.msra.mxu0 0
    %859 = vmatprep.subr.bf16.mxu0 0
    %860 = vmatpush1.bf16.msra.mxu0 0
    %861 = vmatprep.subr.bf16.mxu0 0
    %862 = vmatpush1.bf16.msra.mxu0 0
    %863 = vmatprep.subr.bf16.mxu0 0
    %864 = vmatpush1.bf16.msra.mxu0 0
    %865 = vmatprep.subr.bf16.mxu0 0
    %866 = vmatpush1.bf16.msra.mxu0 0
    %867 = vmatprep.subr.bf16.mxu0 0
    %868 = vmatpush1.bf16.msra.mxu0 0
    %869 = vmatprep.mubr.bf16.mxu0 0
    %870 = vmatmul.mubr.bf16.gmra.mrb[0].mxu0 %v835
    %v871 = vpop.f32.mrb[0].mxu0
    %v872 = vadd.f32 %v823, %v871
    %v873 = vpop.f32.mrb[0].mxu0
    %v874 = vpop.f32.mrb[0].mxu0
    %v875 = vpop.f32.mrb[0].mxu0
    %876 = vdwg.mxu0
    %v877 = vadd.f32 %v809, %v872
    %v878 = vxor.u32 %v877, 2147483648
    %v879 = vmul.f32 %v878, 1.442695
    %v880 = vpow.pop %v879
    %v881 = vadd.f32 %v880, 1.0
    %v882 = vrcp.pop %v881
    %v883 = vmul.f32 1.0, %v882
    %885 = vrot.lane.b32.xlu0 %v872, 96
    %v886 = vpop.permute.xlu0 %885
    %v888 = vmul.f32 %v883, %v886
    %890 = vrot.lane.b32.xlu0 %v888, 32
    %v891 = vpop.permute.xlu0 %890
    %v893 = vadd.f32 %v809, %v891
    %v894 = vtanh.pop %v893
    %v895 = vsub.f32 1.0, %v883
    %897 = vrot.lane.b32.xlu0 %v894, 112
    %v898 = vpop.permute.xlu0 %897
    %v900 = vmul.f32 %v895, %v898
    %v901 = vmul.f32 %v883, %v800
    %v902 = vadd.f32 %v900, %v901
    %v903 = vpack.c.bf16 %v808, %v808
    %v904 = vld [vmem:[%s6] sm:$0xf]
    %v905 = vld [vmem:[%s6 + $0x4] sm:$0xf]
    %v906 = vld [vmem:[%s7] sm:$0x1]
    %v908 = vlaneseq
    %v909 = vshrl.u32 %v908, 7
    %v910 = vsub.s32 0, %v909
    %v911 = vrot.slane %v906, %v910
    %914 = vrot.lane.b32.xlu0 %v903, 64
    %v915 = vpop.permute.xlu0 %914
    %v918 = vunpack.c.l.b16 %v904
    %v919 = vunpack.c.l.b16 %v905
    %v920 = vpack.c.b16 %v919, %v918
    %v923 = vsel %vm165, %v915, 0
    %925 = vmatprep.subr.bf16.mxu0 0
    %926 = vmatpush1.bf16.msra.mxu0 %v920
    %927 = vmatprep.subr.bf16.mxu0 0
    %928 = vmatpush1.bf16.msra.mxu0 0
    %929 = vmatprep.subr.bf16.mxu0 0
    %930 = vmatpush1.bf16.msra.mxu0 0
    %931 = vmatprep.subr.bf16.mxu0 0
    %932 = vmatpush1.bf16.msra.mxu0 0
    %933 = vmatprep.subr.bf16.mxu0 0
    %934 = vmatpush1.bf16.msra.mxu0 0
    %935 = vmatprep.subr.bf16.mxu0 0
    %936 = vmatpush1.bf16.msra.mxu0 0
    %937 = vmatprep.subr.bf16.mxu0 0
    %938 = vmatpush1.bf16.msra.mxu0 0
    %939 = vmatprep.subr.bf16.mxu0 0
    %940 = vmatpush1.bf16.msra.mxu0 0
    %941 = vmatprep.subr.bf16.mxu0 0
    %942 = vmatpush1.bf16.msra.mxu0 0
    %943 = vmatprep.subr.bf16.mxu0 0
    %944 = vmatpush1.bf16.msra.mxu0 0
    %945 = vmatprep.subr.bf16.mxu0 0
    %946 = vmatpush1.bf16.msra.mxu0 0
    %947 = vmatprep.subr.bf16.mxu0 0
    %948 = vmatpush1.bf16.msra.mxu0 0
    %949 = vmatprep.subr.bf16.mxu0 0
    %950 = vmatpush1.bf16.msra.mxu0 0
    %951 = vmatprep.subr.bf16.mxu0 0
    %952 = vmatpush1.bf16.msra.mxu0 0
    %953 = vmatprep.subr.bf16.mxu0 0
    %954 = vmatpush1.bf16.msra.mxu0 0
    %955 = vmatprep.subr.bf16.mxu0 0
    %956 = vmatpush1.bf16.msra.mxu0 0
    %957 = vmatprep.mubr.bf16.mxu0 0
    %958 = vmatmul.mubr.bf16.gmra.mrb[0].mxu0 %v923
    %v959 = vpop.f32.mrb[0].mxu0
    %v960 = vadd.f32 %v911, %v959
    %v961 = vpop.f32.mrb[0].mxu0
    %v962 = vpop.f32.mrb[0].mxu0
    %v963 = vpop.f32.mrb[0].mxu0
    %964 = vdwg.mxu0
    %966 = vrot.lane.b32.xlu0 %v960, 48
    %v967 = vpop.permute.xlu0 %966
    %v969 = vadd.f32 %v810, %v967
    %v970 = vxor.u32 %v969, 2147483648
    %v971 = vmul.f32 %v970, 1.442695
    %v972 = vpow.pop %v971
    %v973 = vadd.f32 %v972, 1.0
    %v974 = vrcp.pop %v973
    %v975 = vmul.f32 1.0, %v974
    %976 = vrot.lane.b32.xlu0 %v960, 16
    %v977 = vpop.permute.xlu0 %976
    %v979 = vmul.f32 %v975, %v977
    %981 = vrot.lane.b32.xlu0 %v979, 32
    %v982 = vpop.permute.xlu0 %981
    %v984 = vadd.f32 %v810, %v982
    %v985 = vtanh.pop %v984
    %v986 = vsub.f32 1.0, %v975
    %988 = vrot.lane.b32.xlu0 %v985, 112
    %v989 = vpop.permute.xlu0 %988
    %v991 = vmul.f32 %v986, %v989
    %v992 = vmul.f32 %v975, %v808
    %v993 = vadd.f32 %v991, %v992
    %995 = vset.pattern.permute.xlu0 0
    %996 = vperm.xlu0 %995, %v812
    %v997 = vpop.permute.xlu0 %996
    %v999 = vmul.f32 %v997, %v902
    %1001 = vrot.lane.b32.xlu0 %v999, 112
    %v1002 = vpop.permute.xlu0 %1001
    %s1004 = scalar_lea.vmem %s8, 6
    %1005 = vst.msk [vmem:[%s1004] sm:$0x3] %vm329, %v1002
    %1007 = vset.pattern.permute.xlu0 0
    %1008 = vperm.xlu0 %1007, %v814
    %v1009 = vpop.permute.xlu0 %1008
    %v1011 = vmul.f32 %v1009, %v993
    %1013 = vrot.lane.b32.xlu0 %v1011, 64
    %v1014 = vpop.permute.xlu0 %1013
    %s1016 = scalar_lea.vmem %s9, 8
    %1017 = vst.msk [vmem:[%s1016] sm:$0x3] %vm329, %v1014
    %v1018 = vsub.f32 1.0, %v812
    %1020 = vset.pattern.permute.xlu0 0
    %1021 = vperm.xlu0 %1020, %v1018
    %v1022 = vpop.permute.xlu0 %1021
    %v1024 = vmul.f32 %v1022, %v800
    %v1025 = vadd.f32 %v999, %v1024
    %v1026 = vsub.f32 1.0, %v814
    %1028 = vset.pattern.permute.xlu0 0
    %1029 = vperm.xlu0 %1028, %v1026
    %v1030 = vpop.permute.xlu0 %1029
    %v1032 = vmul.f32 %v1030, %v808
    %v1033 = vadd.f32 %v1011, %v1032
    %v1034 = vld [vmem:[#allocation2 + $0x8] sm:$0x3]
    %v1035 = vld [vmem:[#allocation2 + $0x6] sm:$0x3]
    %v1036 = vld [vmem:[%s813] sm:$0x3]
    %v1037 = vld [vmem:[%s811] sm:$0x3]
    %v1038 = vpack.c.bf16 %v1025, %v1025
    %v1039 = vld [vmem:[%s4] sm:$0xf]
    %v1040 = vld [vmem:[%s4 + $0x4] sm:$0xf]
    %v1041 = vld [vmem:[%s5] sm:$0x1]
    %v1043 = vlaneseq
    %v1044 = vshrl.u32 %v1043, 7
    %v1045 = vsub.s32 0, %v1044
    %v1046 = vrot.slane %v1041, %v1045
    %1049 = vrot.lane.b32.xlu0 %v1038, 112
    %v1050 = vpop.permute.xlu0 %1049
    %v1053 = vunpack.c.l.b16 %v1039
    %v1054 = vunpack.c.l.b16 %v1040
    %v1055 = vpack.c.b16 %v1054, %v1053
    %v1058 = vsel %vm165, %v1050, 0
    %1060 = vmatprep.subr.bf16.mxu0 0
    %1061 = vmatpush1.bf16.msra.mxu0 %v1055
    %1062 = vmatprep.subr.bf16.mxu0 0
    %1063 = vmatpush1.bf16.msra.mxu0 0
    %1064 = vmatprep.subr.bf16.mxu0 0
    %1065 = vmatpush1.bf16.msra.mxu0 0
    %1066 = vmatprep.subr.bf16.mxu0 0
    %1067 = vmatpush1.bf16.msra.mxu0 0
    %1068 = vmatprep.subr.bf16.mxu0 0
    %1069 = vmatpush1.bf16.msra.mxu0 0
    %1070 = vmatprep.subr.bf16.mxu0 0
    %1071 = vmatpush1.bf16.msra.mxu0 0
    %1072 = vmatprep.subr.bf16.mxu0 0
    %1073 = vmatpush1.bf16.msra.mxu0 0
    %1074 = vmatprep.subr.bf16.mxu0 0
    %1075 = vmatpush1.bf16.msra.mxu0 0
    %1076 = vmatprep.subr.bf16.mxu0 0
    %1077 = vmatpush1.bf16.msra.mxu0 0
    %1078 = vmatprep.subr.bf16.mxu0 0
    %1079 = vmatpush1.bf16.msra.mxu0 0
    %1080 = vmatprep.subr.bf16.mxu0 0
    %1081 = vmatpush1.bf16.msra.mxu0 0
    %1082 = vmatprep.subr.bf16.mxu0 0
    %1083 = vmatpush1.bf16.msra.mxu0 0
    %1084 = vmatprep.subr.bf16.mxu0 0
    %1085 = vmatpush1.bf16.msra.mxu0 0
    %1086 = vmatprep.subr.bf16.mxu0 0
    %1087 = vmatpush1.bf16.msra.mxu0 0
    %1088 = vmatprep.subr.bf16.mxu0 0
    %1089 = vmatpush1.bf16.msra.mxu0 0
    %1090 = vmatprep.subr.bf16.mxu0 0
    %1091 = vmatpush1.bf16.msra.mxu0 0
    %1092 = vmatprep.mubr.bf16.mxu0 0
    %1093 = vmatmul.mubr.bf16.gmra.mrb[0].mxu0 %v1058
    %v1094 = vpop.f32.mrb[0].mxu0
    %v1095 = vadd.f32 %v1046, %v1094
    %v1096 = vpop.f32.mrb[0].mxu0
    %v1097 = vpop.f32.mrb[0].mxu0
    %v1098 = vpop.f32.mrb[0].mxu0
    %1099 = vdwg.mxu0
    %v1100 = vadd.f32 %v1034, %v1095
    %v1101 = vxor.u32 %v1100, 2147483648
    %v1102 = vmul.f32 %v1101, 1.442695
    %v1103 = vpow.pop %v1102
    %v1104 = vadd.f32 %v1103, 1.0
    %v1105 = vrcp.pop %v1104
    %v1106 = vmul.f32 1.0, %v1105
    %1108 = vrot.lane.b32.xlu0 %v1095, 96
    %v1109 = vpop.permute.xlu0 %1108
    %v1111 = vmul.f32 %v1106, %v1109
    %1113 = vrot.lane.b32.xlu0 %v1111, 32
    %v1114 = vpop.permute.xlu0 %1113
    %v1116 = vadd.f32 %v1034, %v1114
    %v1117 = vtanh.pop %v1116
    %v1118 = vsub.f32 1.0, %v1106
    %1120 = vrot.lane.b32.xlu0 %v1117, 112
    %v1121 = vpop.permute.xlu0 %1120
    %v1123 = vmul.f32 %v1118, %v1121
    %v1124 = vmul.f32 %v1106, %v1025
    %v1125 = vadd.f32 %v1123, %v1124
    %v1126 = vpack.c.bf16 %v1033, %v1033
    %v1127 = vld [vmem:[%s6] sm:$0xf]
    %v1128 = vld [vmem:[%s6 + $0x4] sm:$0xf]
    %v1129 = vld [vmem:[%s7] sm:$0x1]
    %v1131 = vlaneseq
    %v1132 = vshrl.u32 %v1131, 7
    %v1133 = vsub.s32 0, %v1132
    %v1134 = vrot.slane %v1129, %v1133
    %1137 = vrot.lane.b32.xlu0 %v1126, 64
    %v1138 = vpop.permute.xlu0 %1137
    %v1141 = vunpack.c.l.b16 %v1127
    %v1142 = vunpack.c.l.b16 %v1128
    %v1143 = vpack.c.b16 %v1142, %v1141
    %v1146 = vsel %vm165, %v1138, 0
    %1148 = vmatprep.subr.bf16.mxu0 0
    %1149 = vmatpush1.bf16.msra.mxu0 %v1143
    %1150 = vmatprep.subr.bf16.mxu0 0
    %1151 = vmatpush1.bf16.msra.mxu0 0
    %1152 = vmatprep.subr.bf16.mxu0 0
    %1153 = vmatpush1.bf16.msra.mxu0 0
    %1154 = vmatprep.subr.bf16.mxu0 0
    %1155 = vmatpush1.bf16.msra.mxu0 0
    %1156 = vmatprep.subr.bf16.mxu0 0
    %1157 = vmatpush1.bf16.msra.mxu0 0
    %1158 = vmatprep.subr.bf16.mxu0 0
    %1159 = vmatpush1.bf16.msra.mxu0 0
    %1160 = vmatprep.subr.bf16.mxu0 0
    %1161 = vmatpush1.bf16.msra.mxu0 0
    %1162 = vmatprep.subr.bf16.mxu0 0
    %1163 = vmatpush1.bf16.msra.mxu0 0
    %1164 = vmatprep.subr.bf16.mxu0 0
    %1165 = vmatpush1.bf16.msra.mxu0 0
    %1166 = vmatprep.subr.bf16.mxu0 0
    %1167 = vmatpush1.bf16.msra.mxu0 0
    %1168 = vmatprep.subr.bf16.mxu0 0
    %1169 = vmatpush1.bf16.msra.mxu0 0
    %1170 = vmatprep.subr.bf16.mxu0 0
    %1171 = vmatpush1.bf16.msra.mxu0 0
    %1172 = vmatprep.subr.bf16.mxu0 0
    %1173 = vmatpush1.bf16.msra.mxu0 0
    %1174 = vmatprep.subr.bf16.mxu0 0
    %1175 = vmatpush1.bf16.msra.mxu0 0
    %1176 = vmatprep.subr.bf16.mxu0 0
    %1177 = vmatpush1.bf16.msra.mxu0 0
    %1178 = vmatprep.subr.bf16.mxu0 0
    %1179 = vmatpush1.bf16.msra.mxu0 0
    %1180 = vmatprep.mubr.bf16.mxu0 0
    %1181 = vmatmul.mubr.bf16.gmra.mrb[0].mxu0 %v1146
    %v1182 = vpop.f32.mrb[0].mxu0
    %v1183 = vadd.f32 %v1134, %v1182
    %v1184 = vpop.f32.mrb[0].mxu0
    %v1185 = vpop.f32.mrb[0].mxu0
    %v1186 = vpop.f32.mrb[0].mxu0
    %1187 = vdwg.mxu0
    %1189 = vrot.lane.b32.xlu0 %v1183, 48
    %v1190 = vpop.permute.xlu0 %1189
    %v1192 = vadd.f32 %v1035, %v1190
    %v1193 = vxor.u32 %v1192, 2147483648
    %v1194 = vmul.f32 %v1193, 1.442695
    %v1195 = vpow.pop %v1194
    %v1196 = vadd.f32 %v1195, 1.0
    %v1197 = vrcp.pop %v1196
    %v1198 = vmul.f32 1.0, %v1197
    %1199 = vrot.lane.b32.xlu0 %v1183, 16
    %v1200 = vpop.permute.xlu0 %1199
    %v1202 = vmul.f32 %v1198, %v1200
    %1204 = vrot.lane.b32.xlu0 %v1202, 32
    %v1205 = vpop.permute.xlu0 %1204
    %v1207 = vadd.f32 %v1035, %v1205
    %v1208 = vtanh.pop %v1207
    %v1209 = vsub.f32 1.0, %v1198
    %1211 = vrot.lane.b32.xlu0 %v1208, 112
    %v1212 = vpop.permute.xlu0 %1211
    %v1214 = vmul.f32 %v1209, %v1212
    %v1215 = vmul.f32 %v1198, %v1033
    %v1216 = vadd.f32 %v1214, %v1215
    %1218 = vset.pattern.permute.xlu0 0
    %1219 = vperm.xlu0 %1218, %v1036
    %v1220 = vpop.permute.xlu0 %1219
    %v1222 = vmul.f32 %v1220, %v1125
    %1224 = vrot.lane.b32.xlu0 %v1222, 112
    %v1225 = vpop.permute.xlu0 %1224
    %s1227 = scalar_lea.vmem %s8, 8
    %1228 = vst.msk [vmem:[%s1227] sm:$0x3] %vm329, %v1225
    %1230 = vset.pattern.permute.xlu0 0
    %1231 = vperm.xlu0 %1230, %v1037
    %v1232 = vpop.permute.xlu0 %1231
    %v1234 = vmul.f32 %v1232, %v1216
    %1236 = vrot.lane.b32.xlu0 %v1234, 64
    %v1237 = vpop.permute.xlu0 %1236
    %s1239 = scalar_lea.vmem %s9, 6
    %1240 = vst.msk [vmem:[%s1239] sm:$0x3] %vm329, %v1237
    %v1241 = vsub.f32 1.0, %v1036
    %1243 = vset.pattern.permute.xlu0 0
    %1244 = vperm.xlu0 %1243, %v1241
    %v1245 = vpop.permute.xlu0 %1244
    %v1247 = vmul.f32 %v1245, %v1025
    %v1248 = vadd.f32 %v1222, %v1247
    %v1249 = vsub.f32 1.0, %v1037
    %1251 = vset.pattern.permute.xlu0 0
    %1252 = vperm.xlu0 %1251, %v1249
    %v1253 = vpop.permute.xlu0 %1252
    %v1255 = vmul.f32 %v1253, %v1033
    %v1256 = vadd.f32 %v1234, %v1255
    %v1257 = vld [vmem:[#allocation2 + $0xa] sm:$0x3]
    %v1258 = vld [vmem:[#allocation2 + $0x4] sm:$0x3]
    %v1259 = vld [vmem:[%s588] sm:$0x3]
    %v1260 = vld [vmem:[%s586] sm:$0x3]
    %v1261 = vpack.c.bf16 %v1248, %v1248
    %v1262 = vld [vmem:[%s4] sm:$0xf]
    %v1263 = vld [vmem:[%s4 + $0x4] sm:$0xf]
    %v1264 = vld [vmem:[%s5] sm:$0x1]
    %v1266 = vlaneseq
    %v1267 = vshrl.u32 %v1266, 7
    %v1268 = vsub.s32 0, %v1267
    %v1269 = vrot.slane %v1264, %v1268
    %1272 = vrot.lane.b32.xlu0 %v1261, 112
    %v1273 = vpop.permute.xlu0 %1272
    %v1276 = vunpack.c.l.b16 %v1262
    %v1277 = vunpack.c.l.b16 %v1263
    %v1278 = vpack.c.b16 %v1277, %v1276
    %v1281 = vsel %vm165, %v1273, 0
    %1283 = vmatprep.subr.bf16.mxu0 0
    %1284 = vmatpush1.bf16.msra.mxu0 %v1278
    %1285 = vmatprep.subr.bf16.mxu0 0
    %1286 = vmatpush1.bf16.msra.mxu0 0
    %1287 = vmatprep.subr.bf16.mxu0 0
    %1288 = vmatpush1.bf16.msra.mxu0 0
    %1289 = vmatprep.subr.bf16.mxu0 0
    %1290 = vmatpush1.bf16.msra.mxu0 0
    %1291 = vmatprep.subr.bf16.mxu0 0
    %1292 = vmatpush1.bf16.msra.mxu0 0
    %1293 = vmatprep.subr.bf16.mxu0 0
    %1294 = vmatpush1.bf16.msra.mxu0 0
    %1295 = vmatprep.subr.bf16.mxu0 0
    %1296 = vmatpush1.bf16.msra.mxu0 0
    %1297 = vmatprep.subr.bf16.mxu0 0
    %1298 = vmatpush1.bf16.msra.mxu0 0
    %1299 = vmatprep.subr.bf16.mxu0 0
    %1300 = vmatpush1.bf16.msra.mxu0 0
    %1301 = vmatprep.subr.bf16.mxu0 0
    %1302 = vmatpush1.bf16.msra.mxu0 0
    %1303 = vmatprep.subr.bf16.mxu0 0
    %1304 = vmatpush1.bf16.msra.mxu0 0
    %1305 = vmatprep.subr.bf16.mxu0 0
    %1306 = vmatpush1.bf16.msra.mxu0 0
    %1307 = vmatprep.subr.bf16.mxu0 0
    %1308 = vmatpush1.bf16.msra.mxu0 0
    %1309 = vmatprep.subr.bf16.mxu0 0
    %1310 = vmatpush1.bf16.msra.mxu0 0
    %1311 = vmatprep.subr.bf16.mxu0 0
    %1312 = vmatpush1.bf16.msra.mxu0 0
    %1313 = vmatprep.subr.bf16.mxu0 0
    %1314 = vmatpush1.bf16.msra.mxu0 0
    %1315 = vmatprep.mubr.bf16.mxu0 0
    %1316 = vmatmul.mubr.bf16.gmra.mrb[0].mxu0 %v1281
    %v1317 = vpop.f32.mrb[0].mxu0
    %v1318 = vadd.f32 %v1269, %v1317
    %v1319 = vpop.f32.mrb[0].mxu0
    %v1320 = vpop.f32.mrb[0].mxu0
    %v1321 = vpop.f32.mrb[0].mxu0
    %1322 = vdwg.mxu0
    %v1323 = vadd.f32 %v1257, %v1318
    %v1324 = vxor.u32 %v1323, 2147483648
    %v1325 = vmul.f32 %v1324, 1.442695
    %v1326 = vpow.pop %v1325
    %v1327 = vadd.f32 %v1326, 1.0
    %v1328 = vrcp.pop %v1327
    %v1329 = vmul.f32 1.0, %v1328
    %1331 = vrot.lane.b32.xlu0 %v1318, 96
    %v1332 = vpop.permute.xlu0 %1331
    %v1334 = vmul.f32 %v1329, %v1332
    %1336 = vrot.lane.b32.xlu0 %v1334, 32
    %v1337 = vpop.permute.xlu0 %1336
    %v1339 = vadd.f32 %v1257, %v1337
    %v1340 = vtanh.pop %v1339
    %v1341 = vsub.f32 1.0, %v1329
    %1343 = vrot.lane.b32.xlu0 %v1340, 112
    %v1344 = vpop.permute.xlu0 %1343
    %v1346 = vmul.f32 %v1341, %v1344
    %v1347 = vmul.f32 %v1329, %v1248
    %v1348 = vadd.f32 %v1346, %v1347
    %v1349 = vpack.c.bf16 %v1256, %v1256
    %v1350 = vld [vmem:[%s6] sm:$0xf]
    %v1351 = vld [vmem:[%s6 + $0x4] sm:$0xf]
    %v1352 = vld [vmem:[%s7] sm:$0x1]
    %v1354 = vlaneseq
    %v1355 = vshrl.u32 %v1354, 7
    %v1356 = vsub.s32 0, %v1355
    %v1357 = vrot.slane %v1352, %v1356
    %1360 = vrot.lane.b32.xlu0 %v1349, 64
    %v1361 = vpop.permute.xlu0 %1360
    %v1364 = vunpack.c.l.b16 %v1350
    %v1365 = vunpack.c.l.b16 %v1351
    %v1366 = vpack.c.b16 %v1365, %v1364
    %v1369 = vsel %vm165, %v1361, 0
    %1371 = vmatprep.subr.bf16.mxu0 0
    %1372 = vmatpush1.bf16.msra.mxu0 %v1366
    %1373 = vmatprep.subr.bf16.mxu0 0
    %1374 = vmatpush1.bf16.msra.mxu0 0
    %1375 = vmatprep.subr.bf16.mxu0 0
    %1376 = vmatpush1.bf16.msra.mxu0 0
    %1377 = vmatprep.subr.bf16.mxu0 0
    %1378 = vmatpush1.bf16.msra.mxu0 0
    %1379 = vmatprep.subr.bf16.mxu0 0
    %1380 = vmatpush1.bf16.msra.mxu0 0
    %1381 = vmatprep.subr.bf16.mxu0 0
    %1382 = vmatpush1.bf16.msra.mxu0 0
    %1383 = vmatprep.subr.bf16.mxu0 0
    %1384 = vmatpush1.bf16.msra.mxu0 0
    %1385 = vmatprep.subr.bf16.mxu0 0
    %1386 = vmatpush1.bf16.msra.mxu0 0
    %1387 = vmatprep.subr.bf16.mxu0 0
    %1388 = vmatpush1.bf16.msra.mxu0 0
    %1389 = vmatprep.subr.bf16.mxu0 0
    %1390 = vmatpush1.bf16.msra.mxu0 0
    %1391 = vmatprep.subr.bf16.mxu0 0
    %1392 = vmatpush1.bf16.msra.mxu0 0
    %1393 = vmatprep.subr.bf16.mxu0 0
    %1394 = vmatpush1.bf16.msra.mxu0 0
    %1395 = vmatprep.subr.bf16.mxu0 0
    %1396 = vmatpush1.bf16.msra.mxu0 0
    %1397 = vmatprep.subr.bf16.mxu0 0
    %1398 = vmatpush1.bf16.msra.mxu0 0
    %1399 = vmatprep.subr.bf16.mxu0 0
    %1400 = vmatpush1.bf16.msra.mxu0 0
    %1401 = vmatprep.subr.bf16.mxu0 0
    %1402 = vmatpush1.bf16.msra.mxu0 0
    %1403 = vmatprep.mubr.bf16.mxu0 0
    %1404 = vmatmul.mubr.bf16.gmra.mrb[0].mxu0 %v1369
    %v1405 = vpop.f32.mrb[0].mxu0
    %v1406 = vadd.f32 %v1357, %v1405
    %v1407 = vpop.f32.mrb[0].mxu0
    %v1408 = vpop.f32.mrb[0].mxu0
    %v1409 = vpop.f32.mrb[0].mxu0
    %1410 = vdwg.mxu0
    %1412 = vrot.lane.b32.xlu0 %v1406, 48
    %v1413 = vpop.permute.xlu0 %1412
    %v1415 = vadd.f32 %v1258, %v1413
    %v1416 = vxor.u32 %v1415, 2147483648
    %v1417 = vmul.f32 %v1416, 1.442695
    %v1418 = vpow.pop %v1417
    %v1419 = vadd.f32 %v1418, 1.0
    %v1420 = vrcp.pop %v1419
    %v1421 = vmul.f32 1.0, %v1420
    %1422 = vrot.lane.b32.xlu0 %v1406, 16
    %v1423 = vpop.permute.xlu0 %1422
    %v1425 = vmul.f32 %v1421, %v1423
    %1427 = vrot.lane.b32.xlu0 %v1425, 32
    %v1428 = vpop.permute.xlu0 %1427
    %v1430 = vadd.f32 %v1258, %v1428
    %v1431 = vtanh.pop %v1430
    %v1432 = vsub.f32 1.0, %v1421
    %1434 = vrot.lane.b32.xlu0 %v1431, 112
    %v1435 = vpop.permute.xlu0 %1434
    %v1437 = vmul.f32 %v1432, %v1435
    %v1438 = vmul.f32 %v1421, %v1256
    %v1439 = vadd.f32 %v1437, %v1438
    %1441 = vset.pattern.permute.xlu0 0
    %1442 = vperm.xlu0 %1441, %v1259
    %v1443 = vpop.permute.xlu0 %1442
    %v1445 = vmul.f32 %v1443, %v1348
    %1447 = vrot.lane.b32.xlu0 %v1445, 112
    %v1448 = vpop.permute.xlu0 %1447
    %s1450 = scalar_lea.vmem %s8, 10
    %1451 = vst.msk [vmem:[%s1450] sm:$0x3] %vm329, %v1448
    %1453 = vset.pattern.permute.xlu0 0
    %1454 = vperm.xlu0 %1453, %v1260
    %v1455 = vpop.permute.xlu0 %1454
    %v1457 = vmul.f32 %v1455, %v1439
    %1459 = vrot.lane.b32.xlu0 %v1457, 64
    %v1460 = vpop.permute.xlu0 %1459
    %s1462 = scalar_lea.vmem %s9, 4
    %1463 = vst.msk [vmem:[%s1462] sm:$0x3] %vm329, %v1460
    %v1464 = vsub.f32 1.0, %v1259
    %1466 = vset.pattern.permute.xlu0 0
    %1467 = vperm.xlu0 %1466, %v1464
    %v1468 = vpop.permute.xlu0 %1467
    %v1470 = vmul.f32 %v1468, %v1248
    %v1471 = vadd.f32 %v1445, %v1470
    %v1472 = vsub.f32 1.0, %v1260
    %1474 = vset.pattern.permute.xlu0 0
    %1475 = vperm.xlu0 %1474, %v1472
    %v1476 = vpop.permute.xlu0 %1475
    %v1478 = vmul.f32 %v1476, %v1256
    %v1479 = vadd.f32 %v1457, %v1478
    %v1480 = vld [vmem:[#allocation2 + $0xc] sm:$0x3]
    %v1481 = vld [vmem:[#allocation2 + $0x2] sm:$0x3]
    %v1482 = vld [vmem:[%s363] sm:$0x3]
    %v1483 = vld [vmem:[%s361] sm:$0x3]
    %v1484 = vpack.c.bf16 %v1471, %v1471
    %v1485 = vld [vmem:[%s4] sm:$0xf]
    %v1486 = vld [vmem:[%s4 + $0x4] sm:$0xf]
    %v1487 = vld [vmem:[%s5] sm:$0x1]
    %v1489 = vlaneseq
    %v1490 = vshrl.u32 %v1489, 7
    %v1491 = vsub.s32 0, %v1490
    %v1492 = vrot.slane %v1487, %v1491
    %1495 = vrot.lane.b32.xlu0 %v1484, 112
    %v1496 = vpop.permute.xlu0 %1495
    %v1499 = vunpack.c.l.b16 %v1485
    %v1500 = vunpack.c.l.b16 %v1486
    %v1501 = vpack.c.b16 %v1500, %v1499
    %v1504 = vsel %vm165, %v1496, 0
    %1506 = vmatprep.subr.bf16.mxu0 0
    %1507 = vmatpush1.bf16.msra.mxu0 %v1501
    %1508 = vmatprep.subr.bf16.mxu0 0
    %1509 = vmatpush1.bf16.msra.mxu0 0
    %1510 = vmatprep.subr.bf16.mxu0 0
    %1511 = vmatpush1.bf16.msra.mxu0 0
    %1512 = vmatprep.subr.bf16.mxu0 0
    %1513 = vmatpush1.bf16.msra.mxu0 0
    %1514 = vmatprep.subr.bf16.mxu0 0
    %1515 = vmatpush1.bf16.msra.mxu0 0
    %1516 = vmatprep.subr.bf16.mxu0 0
    %1517 = vmatpush1.bf16.msra.mxu0 0
    %1518 = vmatprep.subr.bf16.mxu0 0
    %1519 = vmatpush1.bf16.msra.mxu0 0
    %1520 = vmatprep.subr.bf16.mxu0 0
    %1521 = vmatpush1.bf16.msra.mxu0 0
    %1522 = vmatprep.subr.bf16.mxu0 0
    %1523 = vmatpush1.bf16.msra.mxu0 0
    %1524 = vmatprep.subr.bf16.mxu0 0
    %1525 = vmatpush1.bf16.msra.mxu0 0
    %1526 = vmatprep.subr.bf16.mxu0 0
    %1527 = vmatpush1.bf16.msra.mxu0 0
    %1528 = vmatprep.subr.bf16.mxu0 0
    %1529 = vmatpush1.bf16.msra.mxu0 0
    %1530 = vmatprep.subr.bf16.mxu0 0
    %1531 = vmatpush1.bf16.msra.mxu0 0
    %1532 = vmatprep.subr.bf16.mxu0 0
    %1533 = vmatpush1.bf16.msra.mxu0 0
    %1534 = vmatprep.subr.bf16.mxu0 0
    %1535 = vmatpush1.bf16.msra.mxu0 0
    %1536 = vmatprep.subr.bf16.mxu0 0
    %1537 = vmatpush1.bf16.msra.mxu0 0
    %1538 = vmatprep.mubr.bf16.mxu0 0
    %1539 = vmatmul.mubr.bf16.gmra.mrb[0].mxu0 %v1504
    %v1540 = vpop.f32.mrb[0].mxu0
    %v1541 = vadd.f32 %v1492, %v1540
    %v1542 = vpop.f32.mrb[0].mxu0
    %v1543 = vpop.f32.mrb[0].mxu0
    %v1544 = vpop.f32.mrb[0].mxu0
    %1545 = vdwg.mxu0
    %v1546 = vadd.f32 %v1480, %v1541
    %v1547 = vxor.u32 %v1546, 2147483648
    %v1548 = vmul.f32 %v1547, 1.442695
    %v1549 = vpow.pop %v1548
    %v1550 = vadd.f32 %v1549, 1.0
    %v1551 = vrcp.pop %v1550
    %v1552 = vmul.f32 1.0, %v1551
    %1554 = vrot.lane.b32.xlu0 %v1541, 96
    %v1555 = vpop.permute.xlu0 %1554
    %v1557 = vmul.f32 %v1552, %v1555
    %1559 = vrot.lane.b32.xlu0 %v1557, 32
    %v1560 = vpop.permute.xlu0 %1559
    %v1562 = vadd.f32 %v1480, %v1560
    %v1563 = vtanh.pop %v1562
    %v1564 = vsub.f32 1.0, %v1552
    %1566 = vrot.lane.b32.xlu0 %v1563, 112
    %v1567 = vpop.permute.xlu0 %1566
    %v1569 = vmul.f32 %v1564, %v1567
    %v1570 = vmul.f32 %v1552, %v1471
    %v1571 = vadd.f32 %v1569, %v1570
    %v1572 = vpack.c.bf16 %v1479, %v1479
    %v1573 = vld [vmem:[%s6] sm:$0xf]
    %v1574 = vld [vmem:[%s6 + $0x4] sm:$0xf]
    %v1575 = vld [vmem:[%s7] sm:$0x1]
    %v1577 = vlaneseq
    %v1578 = vshrl.u32 %v1577, 7
    %v1579 = vsub.s32 0, %v1578
    %v1580 = vrot.slane %v1575, %v1579
    %1583 = vrot.lane.b32.xlu0 %v1572, 64
    %v1584 = vpop.permute.xlu0 %1583
    %v1587 = vunpack.c.l.b16 %v1573
    %v1588 = vunpack.c.l.b16 %v1574
    %v1589 = vpack.c.b16 %v1588, %v1587
    %v1592 = vsel %vm165, %v1584, 0
    %1594 = vmatprep.subr.bf16.mxu0 0
    %1595 = vmatpush1.bf16.msra.mxu0 %v1589
    %1596 = vmatprep.subr.bf16.mxu0 0
    %1597 = vmatpush1.bf16.msra.mxu0 0
    %1598 = vmatprep.subr.bf16.mxu0 0
    %1599 = vmatpush1.bf16.msra.mxu0 0
    %1600 = vmatprep.subr.bf16.mxu0 0
    %1601 = vmatpush1.bf16.msra.mxu0 0
    %1602 = vmatprep.subr.bf16.mxu0 0
    %1603 = vmatpush1.bf16.msra.mxu0 0
    %1604 = vmatprep.subr.bf16.mxu0 0
    %1605 = vmatpush1.bf16.msra.mxu0 0
    %1606 = vmatprep.subr.bf16.mxu0 0
    %1607 = vmatpush1.bf16.msra.mxu0 0
    %1608 = vmatprep.subr.bf16.mxu0 0
    %1609 = vmatpush1.bf16.msra.mxu0 0
    %1610 = vmatprep.subr.bf16.mxu0 0
    %1611 = vmatpush1.bf16.msra.mxu0 0
    %1612 = vmatprep.subr.bf16.mxu0 0
    %1613 = vmatpush1.bf16.msra.mxu0 0
    %1614 = vmatprep.subr.bf16.mxu0 0
    %1615 = vmatpush1.bf16.msra.mxu0 0
    %1616 = vmatprep.subr.bf16.mxu0 0
    %1617 = vmatpush1.bf16.msra.mxu0 0
    %1618 = vmatprep.subr.bf16.mxu0 0
    %1619 = vmatpush1.bf16.msra.mxu0 0
    %1620 = vmatprep.subr.bf16.mxu0 0
    %1621 = vmatpush1.bf16.msra.mxu0 0
    %1622 = vmatprep.subr.bf16.mxu0 0
    %1623 = vmatpush1.bf16.msra.mxu0 0
    %1624 = vmatprep.subr.bf16.mxu0 0
    %1625 = vmatpush1.bf16.msra.mxu0 0
    %1626 = vmatprep.mubr.bf16.mxu0 0
    %1627 = vmatmul.mubr.bf16.gmra.mrb[0].mxu0 %v1592
    %v1628 = vpop.f32.mrb[0].mxu0
    %v1629 = vadd.f32 %v1580, %v1628
    %v1630 = vpop.f32.mrb[0].mxu0
    %v1631 = vpop.f32.mrb[0].mxu0
    %v1632 = vpop.f32.mrb[0].mxu0
    %1633 = vdwg.mxu0
    %1635 = vrot.lane.b32.xlu0 %v1629, 48
    %v1636 = vpop.permute.xlu0 %1635
    %v1638 = vadd.f32 %v1481, %v1636
    %v1639 = vxor.u32 %v1638, 2147483648
    %v1640 = vmul.f32 %v1639, 1.442695
    %v1641 = vpow.pop %v1640
    %v1642 = vadd.f32 %v1641, 1.0
    %v1643 = vrcp.pop %v1642
    %v1644 = vmul.f32 1.0, %v1643
    %1645 = vrot.lane.b32.xlu0 %v1629, 16
    %v1646 = vpop.permute.xlu0 %1645
    %v1648 = vmul.f32 %v1644, %v1646
    %1650 = vrot.lane.b32.xlu0 %v1648, 32
    %v1651 = vpop.permute.xlu0 %1650
    %v1653 = vadd.f32 %v1481, %v1651
    %v1654 = vtanh.pop %v1653
    %v1655 = vsub.f32 1.0, %v1644
    %1657 = vrot.lane.b32.xlu0 %v1654, 112
    %v1658 = vpop.permute.xlu0 %1657
    %v1660 = vmul.f32 %v1655, %v1658
    %v1661 = vmul.f32 %v1644, %v1479
    %v1662 = vadd.f32 %v1660, %v1661
    %1664 = vset.pattern.permute.xlu0 0
    %1665 = vperm.xlu0 %1664, %v1482
    %v1666 = vpop.permute.xlu0 %1665
    %v1668 = vmul.f32 %v1666, %v1571
    %1670 = vrot.lane.b32.xlu0 %v1668, 112
    %v1671 = vpop.permute.xlu0 %1670
    %s1673 = scalar_lea.vmem %s8, 12
    %1674 = vst.msk [vmem:[%s1673] sm:$0x3] %vm329, %v1671
    %1676 = vset.pattern.permute.xlu0 0
    %1677 = vperm.xlu0 %1676, %v1483
    %v1678 = vpop.permute.xlu0 %1677
    %v1680 = vmul.f32 %v1678, %v1662
    %1682 = vrot.lane.b32.xlu0 %v1680, 64
    %v1683 = vpop.permute.xlu0 %1682
    %s1685 = scalar_lea.vmem %s9, 2
    %1686 = vst.msk [vmem:[%s1685] sm:$0x3] %vm329, %v1683
    %v1687 = vsub.f32 1.0, %v1482
    %1689 = vset.pattern.permute.xlu0 0
    %1690 = vperm.xlu0 %1689, %v1687
    %v1691 = vpop.permute.xlu0 %1690
    %v1693 = vmul.f32 %v1691, %v1471
    %v1694 = vadd.f32 %v1668, %v1693
    %v1695 = vsub.f32 1.0, %v1483
    %1697 = vset.pattern.permute.xlu0 0
    %1698 = vperm.xlu0 %1697, %v1695
    %v1699 = vpop.permute.xlu0 %1698
    %v1701 = vmul.f32 %v1699, %v1479
    %v1702 = vadd.f32 %v1680, %v1701
    %v1703 = vld [vmem:[#allocation2 + $0xe] sm:$0x3]
    %v1704 = vld [vmem:[#allocation2] sm:$0x3]
    %v1705 = vld [vmem:[%s148] sm:$0x3]
    %v1706 = vld [vmem:[%s1] sm:$0x3]
    %v1707 = vpack.c.bf16 %v1694, %v1694
    %v1708 = vld [vmem:[%s4] sm:$0xf]
    %v1709 = vld [vmem:[%s4 + $0x4] sm:$0xf]
    %v1710 = vld [vmem:[%s5] sm:$0x1]
    %v1712 = vlaneseq
    %v1713 = vshrl.u32 %v1712, 7
    %v1714 = vsub.s32 0, %v1713
    %v1715 = vrot.slane %v1710, %v1714
    %1718 = vrot.lane.b32.xlu0 %v1707, 112
    %v1719 = vpop.permute.xlu0 %1718
    %v1722 = vunpack.c.l.b16 %v1708
    %v1723 = vunpack.c.l.b16 %v1709
    %v1724 = vpack.c.b16 %v1723, %v1722
    %v1727 = vsel %vm165, %v1719, 0
    %1729 = vmatprep.subr.bf16.mxu0 0
    %1730 = vmatpush1.bf16.msra.mxu0 %v1724
    %1731 = vmatprep.subr.bf16.mxu0 0
    %1732 = vmatpush1.bf16.msra.mxu0 0
    %1733 = vmatprep.subr.bf16.mxu0 0
    %1734 = vmatpush1.bf16.msra.mxu0 0
    %1735 = vmatprep.subr.bf16.mxu0 0
    %1736 = vmatpush1.bf16.msra.mxu0 0
    %1737 = vmatprep.subr.bf16.mxu0 0
    %1738 = vmatpush1.bf16.msra.mxu0 0
    %1739 = vmatprep.subr.bf16.mxu0 0
    %1740 = vmatpush1.bf16.msra.mxu0 0
    %1741 = vmatprep.subr.bf16.mxu0 0
    %1742 = vmatpush1.bf16.msra.mxu0 0
    %1743 = vmatprep.subr.bf16.mxu0 0
    %1744 = vmatpush1.bf16.msra.mxu0 0
    %1745 = vmatprep.subr.bf16.mxu0 0
    %1746 = vmatpush1.bf16.msra.mxu0 0
    %1747 = vmatprep.subr.bf16.mxu0 0
    %1748 = vmatpush1.bf16.msra.mxu0 0
    %1749 = vmatprep.subr.bf16.mxu0 0
    %1750 = vmatpush1.bf16.msra.mxu0 0
    %1751 = vmatprep.subr.bf16.mxu0 0
    %1752 = vmatpush1.bf16.msra.mxu0 0
    %1753 = vmatprep.subr.bf16.mxu0 0
    %1754 = vmatpush1.bf16.msra.mxu0 0
    %1755 = vmatprep.subr.bf16.mxu0 0
    %1756 = vmatpush1.bf16.msra.mxu0 0
    %1757 = vmatprep.subr.bf16.mxu0 0
    %1758 = vmatpush1.bf16.msra.mxu0 0
    %1759 = vmatprep.subr.bf16.mxu0 0
    %1760 = vmatpush1.bf16.msra.mxu0 0
    %1761 = vmatprep.mubr.bf16.mxu0 0
    %1762 = vmatmul.mubr.bf16.gmra.mrb[0].mxu0 %v1727
    %v1763 = vpop.f32.mrb[0].mxu0
    %v1764 = vadd.f32 %v1715, %v1763
    %v1765 = vpop.f32.mrb[0].mxu0
    %v1766 = vpop.f32.mrb[0].mxu0
    %v1767 = vpop.f32.mrb[0].mxu0
    %1768 = vdwg.mxu0
    %v1769 = vadd.f32 %v1703, %v1764
    %v1770 = vxor.u32 %v1769, 2147483648
    %v1771 = vmul.f32 %v1770, 1.442695
    %v1772 = vpow.pop %v1771
    %v1773 = vadd.f32 %v1772, 1.0
    %v1774 = vrcp.pop %v1773
    %v1775 = vmul.f32 1.0, %v1774
    %1777 = vrot.lane.b32.xlu0 %v1764, 96
    %v1778 = vpop.permute.xlu0 %1777
    %v1780 = vmul.f32 %v1775, %v1778
    %1782 = vrot.lane.b32.xlu0 %v1780, 32
    %v1783 = vpop.permute.xlu0 %1782
    %v1785 = vadd.f32 %v1703, %v1783
    %v1786 = vtanh.pop %v1785
    %v1787 = vsub.f32 1.0, %v1775
    %1789 = vrot.lane.b32.xlu0 %v1786, 112
    %v1790 = vpop.permute.xlu0 %1789
    %v1792 = vmul.f32 %v1787, %v1790
    %v1793 = vmul.f32 %v1775, %v1694
    %v1794 = vadd.f32 %v1792, %v1793
    %v1795 = vpack.c.bf16 %v1702, %v1702
    %v1796 = vld [vmem:[%s6] sm:$0xf]
    %v1797 = vld [vmem:[%s6 + $0x4] sm:$0xf]
    %v1798 = vld [vmem:[%s7] sm:$0x1]
    %v1800 = vlaneseq
    %v1801 = vshrl.u32 %v1800, 7
    %v1802 = vsub.s32 0, %v1801
    %v1803 = vrot.slane %v1798, %v1802
    %1806 = vrot.lane.b32.xlu0 %v1795, 64
    %v1807 = vpop.permute.xlu0 %1806
    %v1810 = vunpack.c.l.b16 %v1796
    %v1811 = vunpack.c.l.b16 %v1797
    %v1812 = vpack.c.b16 %v1811, %v1810
    %v1815 = vsel %vm165, %v1807, 0
    %1817 = vmatprep.subr.bf16.mxu0 0
    %1818 = vmatpush1.bf16.msra.mxu0 %v1812
    %1819 = vmatprep.subr.bf16.mxu0 0
    %1820 = vmatpush1.bf16.msra.mxu0 0
    %1821 = vmatprep.subr.bf16.mxu0 0
    %1822 = vmatpush1.bf16.msra.mxu0 0
    %1823 = vmatprep.subr.bf16.mxu0 0
    %1824 = vmatpush1.bf16.msra.mxu0 0
    %1825 = vmatprep.subr.bf16.mxu0 0
    %1826 = vmatpush1.bf16.msra.mxu0 0
    %1827 = vmatprep.subr.bf16.mxu0 0
    %1828 = vmatpush1.bf16.msra.mxu0 0
    %1829 = vmatprep.subr.bf16.mxu0 0
    %1830 = vmatpush1.bf16.msra.mxu0 0
    %1831 = vmatprep.subr.bf16.mxu0 0
    %1832 = vmatpush1.bf16.msra.mxu0 0
    %1833 = vmatprep.subr.bf16.mxu0 0
    %1834 = vmatpush1.bf16.msra.mxu0 0
    %1835 = vmatprep.subr.bf16.mxu0 0
    %1836 = vmatpush1.bf16.msra.mxu0 0
    %1837 = vmatprep.subr.bf16.mxu0 0
    %1838 = vmatpush1.bf16.msra.mxu0 0
    %1839 = vmatprep.subr.bf16.mxu0 0
    %1840 = vmatpush1.bf16.msra.mxu0 0
    %1841 = vmatprep.subr.bf16.mxu0 0
    %1842 = vmatpush1.bf16.msra.mxu0 0
    %1843 = vmatprep.subr.bf16.mxu0 0
    %1844 = vmatpush1.bf16.msra.mxu0 0
    %1845 = vmatprep.subr.bf16.mxu0 0
    %1846 = vmatpush1.bf16.msra.mxu0 0
    %1847 = vmatprep.subr.bf16.mxu0 0
    %1848 = vmatpush1.bf16.msra.mxu0 0
    %1849 = vmatprep.mubr.bf16.mxu0 0
    %1850 = vmatmul.mubr.bf16.gmra.mrb[0].mxu0 %v1815
    %v1851 = vpop.f32.mrb[0].mxu0
    %v1852 = vadd.f32 %v1803, %v1851
    %v1853 = vpop.f32.mrb[0].mxu0
    %v1854 = vpop.f32.mrb[0].mxu0
    %v1855 = vpop.f32.mrb[0].mxu0
    %1856 = vdwg.mxu0
    %1858 = vrot.lane.b32.xlu0 %v1852, 48
    %v1859 = vpop.permute.xlu0 %1858
    %v1861 = vadd.f32 %v1704, %v1859
    %v1862 = vxor.u32 %v1861, 2147483648
    %v1863 = vmul.f32 %v1862, 1.442695
    %v1864 = vpow.pop %v1863
    %v1865 = vadd.f32 %v1864, 1.0
    %v1866 = vrcp.pop %v1865
    %v1867 = vmul.f32 1.0, %v1866
    %1868 = vrot.lane.b32.xlu0 %v1852, 16
    %v1869 = vpop.permute.xlu0 %1868
    %v1871 = vmul.f32 %v1867, %v1869
    %1873 = vrot.lane.b32.xlu0 %v1871, 32
    %v1874 = vpop.permute.xlu0 %1873
    %v1876 = vadd.f32 %v1704, %v1874
    %v1877 = vtanh.pop %v1876
    %v1878 = vsub.f32 1.0, %v1867
    %1880 = vrot.lane.b32.xlu0 %v1877, 112
    %v1881 = vpop.permute.xlu0 %1880
    %v1883 = vmul.f32 %v1878, %v1881
    %v1884 = vmul.f32 %v1867, %v1702
    %v1885 = vadd.f32 %v1883, %v1884
    %1887 = vset.pattern.permute.xlu0 0
    %1888 = vperm.xlu0 %1887, %v1705
    %v1889 = vpop.permute.xlu0 %1888
    %v1891 = vmul.f32 %v1889, %v1794
    %1893 = vrot.lane.b32.xlu0 %v1891, 112
    %v1894 = vpop.permute.xlu0 %1893
    %s1896 = scalar_lea.vmem %s8, 14
    %1897 = vst.msk [vmem:[%s1896] sm:$0x3] %vm329, %v1894
    %1899 = vset.pattern.permute.xlu0 0
    %1900 = vperm.xlu0 %1899, %v1706
    %v1901 = vpop.permute.xlu0 %1900
    %v1903 = vmul.f32 %v1901, %v1885
    %1905 = vrot.lane.b32.xlu0 %v1903, 64
    %v1906 = vpop.permute.xlu0 %1905
    %1908 = vst.msk [vmem:[%s9] sm:$0x3] %vm329, %v1906
    %v1909 = vsub.f32 1.0, %v1705
    %1911 = vset.pattern.permute.xlu0 0
    %1912 = vperm.xlu0 %1911, %v1909
    %v1913 = vpop.permute.xlu0 %1912
    %v1915 = vmul.f32 %v1913, %v1694
    %v1916 = vadd.f32 %v1891, %v1915
    %v1917 = vsub.f32 1.0, %v1706
    %1919 = vset.pattern.permute.xlu0 0
    %1920 = vperm.xlu0 %1919, %v1917
    %v1921 = vpop.permute.xlu0 %1920
    %v1923 = vmul.f32 %v1921, %v1702
    %v1924 = vadd.f32 %v1903, %v1923
    %1926 = vrot.lane.b32.xlu0 %v1916, 112
    %v1927 = vpop.permute.xlu0 %1926
    %1929 = vst.msk [vmem:[#allocation3] sm:$0x3] %vm329, %v1927
    %1931 = vrot.lane.b32.xlu0 %v1924, 64
    %v1932 = vpop.permute.xlu0 %1931
    %1934 = vst.msk [vmem:[#allocation5] sm:$0x3] %vm329, %v1932
    // Predicated region
    $region34: #{_lambda_.5} parent=1 // pred_check
      _
    $region35: #{_lambda_.5} parent=1 // pred_check_branch
      %1936 = sbr.rel (0) target = $region37
    $region36: #{_lambda_.5} parent=1 // pred_region
      _
    $region37: #{_lambda_.5} parent=1 // pred_fallthru
      _
    // Predicated region
    $region38: #{_lambda_.5} parent=1 // pred_check
      _
    $region39: #{_lambda_.5} parent=1 // pred_check_branch
      %1938 = sbr.rel (0) target = $region41
    $region40: #{_lambda_.5} parent=1 // pred_region
      _
    $region41: #{_lambda_.5} parent=1 // pred_fallthru
      _
    // Predicated region
    $region42: #{_lambda_.5} parent=1 // pred_check
      _
    $region43: #{_lambda_.5} parent=1 // pred_check_branch
      %1940 = sbr.rel (0) target = $region45
    $region44: #{_lambda_.5} parent=1 // pred_region
      %s1942 = ssub.s32 32, 32
      %1943 = vsyncadd [#allocation4], %s1942
      %s1945 = sshll.u32 [#allocation3], 4
      %s1946 = int_to_ptr.vmem [resolvable:$true] %s1945
      %1948 = dma.vmem_to_hbm [thread:$0]  %s1946, 32, %s10, [#allocation4]
    $region45: #{_lambda_.5} parent=1 // pred_fallthru
      _
    // Predicated region
    $region46: #{_lambda_.5} parent=1 // pred_check
      _
    $region47: #{_lambda_.5} parent=1 // pred_check_branch
      %1950 = sbr.rel (0) target = $region49
    $region48: #{_lambda_.5} parent=1 // pred_region
      %s1952 = ssub.s32 32, 32
      %1953 = vsyncadd [#allocation6], %s1952
      %s1955 = sshll.u32 [#allocation5], 4
      %s1956 = int_to_ptr.vmem [resolvable:$true] %s1955
      %1958 = dma.vmem_to_hbm [thread:$0]  %s1956, 32, %s11, [#allocation6]
    $region49: #{_lambda_.5} parent=1 // pred_fallthru
      _
    // Predicated region
    $region50: #{_lambda_.5} parent=1 // pred_check
      _
    $region51: #{_lambda_.5} parent=1 // pred_check_branch
      %1960 = sbr.rel (0) target = $region53
    $region52: #{_lambda_.5} parent=1 // pred_region
      _
    $region53: #{_lambda_.5} parent=1 // pred_fallthru
      _
    // Predicated region
    $region54: #{_lambda_.5} parent=1 // pred_check
      _
    $region55: #{_lambda_.5} parent=1 // pred_check_branch
      %1962 = sbr.rel (0) target = $region57
    $region56: #{_lambda_.5} parent=1 // pred_region
      _
    $region57: #{_lambda_.5} parent=1 // pred_fallthru
      _
    // Predicated region
    $region58: #{_lambda_.5} parent=1 // pred_check
      _
    $region59: #{_lambda_.5} parent=1 // pred_check_branch
      %1964 = sbr.rel (0) target = $region61
    $region60: #{_lambda_.5} parent=1 // pred_region
      %1965 = dma.done [#allocation4], 32
    $region61: #{_lambda_.5} parent=1 // pred_fallthru
      _
    // Predicated region
    $region62: #{_lambda_.5} parent=1 // pred_check
      _
    $region63: #{_lambda_.5} parent=1 // pred_check_branch
      %1967 = sbr.rel (0) target = $region65
    $region64: #{_lambda_.5} parent=1 // pred_region
      %1968 = dma.done [#allocation6], 32
    $region65: #{_lambda_.5} parent=1 // pred_fallthru
      _
    %1969 = vsyncpa [#allocation4], 1
    %1970 = vsyncpa [#allocation6], 1

// kernel: _lambda_.6
$region0: #{_lambda_.6}
  #allocation0 [shape = 'u32[]', space=smem, size = 0x4, offset = 0x4, fixed_abs, tag = 'smem constant byte address 0x4 - core index']
  #allocation1 [shape = 'u32[144,128]{1,0:T(1,128)}', space=vmem, size = 0x12000, scoped, tag = 'internal scratch']
  #allocation2 [shape = 'f32[16,96]{1,0:T(8,128)}', space=vmem, size = 0x2000, scoped, tag = 'scratch operand']
  %s0 = inlined_call_operand.vmem [shape: bf16[16,64], index: 0, kind: input, shape index: {}]
  %s1 = inlined_call_operand.vmem [shape: f32[8,2,1], index: 1, kind: input, shape index: {}]
  %s2 = inlined_call_operand.vmem [shape: bf16[64,96], index: 2, kind: input, shape index: {}]
  %s3 = inlined_call_operand.vmem [shape: f32[1,96], index: 3, kind: input, shape index: {}]
  %s4 = inlined_call_operand.vmem [shape: bf16[16,48], index: 4, kind: input, shape index: {}]
  %s5 = inlined_call_operand.vmem [shape: f32[1,48], index: 5, kind: input, shape index: {}]
  %s6 = inlined_call_operand.vmem [shape: bf16[16,48], index: 6, kind: input, shape index: {}]
  %s7 = inlined_call_operand.vmem [shape: f32[1,48], index: 7, kind: input, shape index: {}]
  %s8 = inlined_call_operand.vmem [shape: f32[8,2,16], index: 8, kind: output, shape index: {0}]
  %s9 = inlined_call_operand.vmem [shape: f32[8,2,16], index: 9, kind: output, shape index: {1}]
  %s10 = inlined_call_operand.vmem [shape: f32[2,16], index: 10, kind: output, shape index: {2}]
  %s11 = inlined_call_operand.vmem [shape: f32[2,16], index: 11, kind: output, shape index: {3}]
  %12 = xla_tuple %s8, %s9, %s10, %s11
  %s13 = sld [smem:[#allocation0]]
  $region66: #{_lambda_.6} parent=0
    _
  %s15 = ssub.s32 1, %s13
  %s16 = scalar_select 0, %s15, %s13
  // Predicated region
  $region2: #{_lambda_.6} parent=0 // pred_check
    _
  $region3: #{_lambda_.6} parent=0 // pred_check_branch
    %18 = sbr.rel (0) target = $region5
  $region4: #{_lambda_.6} parent=0 // pred_region
    _
  $region5: #{_lambda_.6} parent=0 // pred_fallthru
    _
  // Predicated region
  $region6: #{_lambda_.6} parent=0 // pred_check
    _
  $region7: #{_lambda_.6} parent=0 // pred_check_branch
    %20 = sbr.rel (0) target = $region9
  $region8: #{_lambda_.6} parent=0 // pred_region
    _
  $region9: #{_lambda_.6} parent=0 // pred_fallthru
    _
  // Predicated region
  $region10: #{_lambda_.6} parent=0 // pred_check
    _
  $region11: #{_lambda_.6} parent=0 // pred_check_branch
    %22 = sbr.rel (0) target = $region13
  $region12: #{_lambda_.6} parent=0 // pred_region
    _
  $region13: #{_lambda_.6} parent=0 // pred_fallthru
    _
  // Predicated region
  $region14: #{_lambda_.6} parent=0 // pred_check
    _
  $region15: #{_lambda_.6} parent=0 // pred_check_branch
    %24 = sbr.rel (0) target = $region17
  $region16: #{_lambda_.6} parent=0 // pred_region
    _
  $region17: #{_lambda_.6} parent=0 // pred_fallthru
    _
  // Predicated region
  $region18: #{_lambda_.6} parent=0 // pred_check
    _
  $region19: #{_lambda_.6} parent=0 // pred_check_branch
    %26 = sbr.rel (0) target = $region21
  $region20: #{_lambda_.6} parent=0 // pred_region
    _
  $region21: #{_lambda_.6} parent=0 // pred_fallthru
    _
  // Predicated region
  $region22: #{_lambda_.6} parent=0 // pred_check
    _
  $region23: #{_lambda_.6} parent=0 // pred_check_branch
    %28 = sbr.rel (0) target = $region25
  $region24: #{_lambda_.6} parent=0 // pred_region
    _
  $region25: #{_lambda_.6} parent=0 // pred_fallthru
    _
  // Predicated region
  $region26: #{_lambda_.6} parent=0 // pred_check
    _
  $region27: #{_lambda_.6} parent=0 // pred_check_branch
    %30 = sbr.rel (0) target = $region29
  $region28: #{_lambda_.6} parent=0 // pred_region
    _
  $region29: #{_lambda_.6} parent=0 // pred_fallthru
    _
  // Predicated region
  $region30: #{_lambda_.6} parent=0 // pred_check
    _
  $region31: #{_lambda_.6} parent=0 // pred_check_branch
    %32 = sbr.rel (0) target = $region33
  $region32: #{_lambda_.6} parent=0 // pred_region
    _
  $region33: #{_lambda_.6} parent=0 // pred_fallthru
    _
  %v34 = vld [vmem:[%s0] sm:$0xf]
  %v35 = vld [vmem:[%s0 + $0x4] sm:$0xf]
  %v36 = vld [vmem:[%s2] sm:$0xf]
  %v37 = vld [vmem:[%s2 + $0x4] sm:$0xf]
  %v38 = vld [vmem:[%s2 + $0x8] sm:$0xf]
  %v39 = vld [vmem:[%s2 + $0xc] sm:$0xf]
  %v40 = vld [vmem:[%s2 + $0x10] sm:$0xf]
  %v41 = vld [vmem:[%s2 + $0x14] sm:$0xf]
  %v42 = vld [vmem:[%s2 + $0x18] sm:$0xf]
  %v43 = vld [vmem:[%s2 + $0x1c] sm:$0xf]
  %v44 = vld [vmem:[%s3] sm:$0x1]
  %v46 = vlaneseq
  %v47 = vshrl.u32 %v46, 7
  %v48 = vsub.s32 0, %v47
  %v49 = vrot.slane %v44, %v48
  %v53 = vunpack.c.l.b16 %v34
  %v54 = vunpack.c.l.b16 %v35
  %v55 = vpack.c.b16 %v54, %v53
  %v64 = vunpack.c.l.b16 %v36
  %v65 = vunpack.c.l.b16 %v37
  %v66 = vunpack.c.l.b16 %v38
  %v67 = vunpack.c.l.b16 %v39
  %v68 = vunpack.c.l.b16 %v40
  %v69 = vunpack.c.l.b16 %v41
  %v70 = vunpack.c.l.b16 %v42
  %v71 = vunpack.c.l.b16 %v43
  %v72 = vpack.c.b16 %v65, %v64
  %v73 = vpack.c.b16 %v67, %v66
  %v74 = vpack.c.b16 %v69, %v68
  %v75 = vpack.c.b16 %v71, %v70
  %vm80 = vcmask 523264
  %v82 = vsel %vm80, %v55, 0
  %84 = vmatprep.subr.bf16.mxu0 0
  %85 = vmatpush1.bf16.msra.mxu0 %v72
  %86 = vmatprep.subr.bf16.mxu0 0
  %87 = vmatpush1.bf16.msra.mxu0 %v73
  %88 = vmatprep.subr.bf16.mxu0 0
  %89 = vmatpush1.bf16.msra.mxu0 %v74
  %90 = vmatprep.subr.bf16.mxu0 0
  %91 = vmatpush1.bf16.msra.mxu0 %v75
  %92 = vmatprep.subr.bf16.mxu0 0
  %93 = vmatpush1.bf16.msra.mxu0 0
  %94 = vmatprep.subr.bf16.mxu0 0
  %95 = vmatpush1.bf16.msra.mxu0 0
  %96 = vmatprep.subr.bf16.mxu0 0
  %97 = vmatpush1.bf16.msra.mxu0 0
  %98 = vmatprep.subr.bf16.mxu0 0
  %99 = vmatpush1.bf16.msra.mxu0 0
  %100 = vmatprep.subr.bf16.mxu0 0
  %101 = vmatpush1.bf16.msra.mxu0 0
  %102 = vmatprep.subr.bf16.mxu0 0
  %103 = vmatpush1.bf16.msra.mxu0 0
  %104 = vmatprep.subr.bf16.mxu0 0
  %105 = vmatpush1.bf16.msra.mxu0 0
  %106 = vmatprep.subr.bf16.mxu0 0
  %107 = vmatpush1.bf16.msra.mxu0 0
  %108 = vmatprep.subr.bf16.mxu0 0
  %109 = vmatpush1.bf16.msra.mxu0 0
  %110 = vmatprep.subr.bf16.mxu0 0
  %111 = vmatpush1.bf16.msra.mxu0 0
  %112 = vmatprep.subr.bf16.mxu0 0
  %113 = vmatpush1.bf16.msra.mxu0 0
  %114 = vmatprep.subr.bf16.mxu0 0
  %115 = vmatpush1.bf16.msra.mxu0 0
  %116 = vmatprep.mubr.bf16.mxu0 0
  %117 = vmatmul.mubr.bf16.gmra.mrb[0].mxu0 %v82
  %v118 = vpop.f32.mrb[0].mxu0
  %v119 = vadd.f32 %v49, %v118
  %v120 = vpop.f32.mrb[0].mxu0
  %v121 = vpop.f32.mrb[0].mxu0
  %v122 = vadd.f32 %v49, %v121
  %v123 = vpop.f32.mrb[0].mxu0
  %124 = vdwg.mxu0
  %vm125 = vcmask 785408
  %126 = vst.msk [vmem:[#allocation2] sm:$0xff] %vm125, %v119
  %127 = vst.msk [vmem:[#allocation2 + $0x8] sm:$0xff] %vm125, %v122
  %v128 = vld [vmem:[#allocation2] sm:$0x3]
  %v129 = vld [vmem:[#allocation2 + $0xe] sm:$0x3]
  %v130 = vld [vmem:[%s1] sm:$0x3]
  %s131 = scalar_lea.vmem %s1, 14
  %v132 = vld [vmem:[%s131] sm:$0x3]
  %v133 = vld [vmem:[%s4] sm:$0xf]
  %v134 = vld [vmem:[%s4 + $0x4] sm:$0xf]
  %v135 = vld [vmem:[%s5] sm:$0x1]
  %v137 = vlaneseq
  %v138 = vshrl.u32 %v137, 7
  %v139 = vsub.s32 0, %v138
  %v140 = vrot.slane %v135, %v139
  %v144 = vunpack.c.l.b16 %v133
  %v145 = vunpack.c.l.b16 %v134
  %v146 = vpack.c.b16 %v145, %v144
  %vm148 = vcmask 130048
  %v150 = vsel %vm148, 0, 0
  %152 = vmatprep.subr.bf16.mxu0 0
  %153 = vmatpush1.bf16.msra.mxu0 %v146
  %154 = vmatprep.subr.bf16.mxu0 0
  %155 = vmatpush1.bf16.msra.mxu0 0
  %156 = vmatprep.subr.bf16.mxu0 0
  %157 = vmatpush1.bf16.msra.mxu0 0
  %158 = vmatprep.subr.bf16.mxu0 0
  %159 = vmatpush1.bf16.msra.mxu0 0
  %160 = vmatprep.subr.bf16.mxu0 0
  %161 = vmatpush1.bf16.msra.mxu0 0
  %162 = vmatprep.subr.bf16.mxu0 0
  %163 = vmatpush1.bf16.msra.mxu0 0
  %164 = vmatprep.subr.bf16.mxu0 0
  %165 = vmatpush1.bf16.msra.mxu0 0
  %166 = vmatprep.subr.bf16.mxu0 0
  %167 = vmatpush1.bf16.msra.mxu0 0
  %168 = vmatprep.subr.bf16.mxu0 0
  %169 = vmatpush1.bf16.msra.mxu0 0
  %170 = vmatprep.subr.bf16.mxu0 0
  %171 = vmatpush1.bf16.msra.mxu0 0
  %172 = vmatprep.subr.bf16.mxu0 0
  %173 = vmatpush1.bf16.msra.mxu0 0
  %174 = vmatprep.subr.bf16.mxu0 0
  %175 = vmatpush1.bf16.msra.mxu0 0
  %176 = vmatprep.subr.bf16.mxu0 0
  %177 = vmatpush1.bf16.msra.mxu0 0
  %178 = vmatprep.subr.bf16.mxu0 0
  %179 = vmatpush1.bf16.msra.mxu0 0
  %180 = vmatprep.subr.bf16.mxu0 0
  %181 = vmatpush1.bf16.msra.mxu0 0
  %182 = vmatprep.subr.bf16.mxu0 0
  %183 = vmatpush1.bf16.msra.mxu0 0
  %184 = vmatprep.mubr.bf16.mxu0 0
  %185 = vmatmul.mubr.bf16.gmra.mrb[0].mxu0 %v150
  %v186 = vpop.f32.mrb[0].mxu0
  %v187 = vadd.f32 %v140, %v186
  %v188 = vpop.f32.mrb[0].mxu0
  %v189 = vpop.f32.mrb[0].mxu0
  %v190 = vpop.f32.mrb[0].mxu0
  %191 = vdwg.mxu0
  %v192 = vadd.f32 %v128, %v187
  %v193 = vxor.u32 %v192, 2147483648
  %v194 = vmul.f32 %v193, 1.442695
  %v195 = vpow.pop %v194
  %v196 = vadd.f32 %v195, 1.0
  %v197 = vrcp.pop %v196
  %v198 = vmul.f32 1.0, %v197
  %200 = vrot.lane.b32.xlu0 %v187, 96
  %v201 = vpop.permute.xlu0 %200
  %v203 = vmul.f32 %v198, %v201
  %205 = vrot.lane.b32.xlu0 %v203, 32
  %v206 = vpop.permute.xlu0 %205
  %v208 = vadd.f32 %v128, %v206
  %v209 = vtanh.pop %v208
  %v210 = vsub.f32 1.0, %v198
  %212 = vrot.lane.b32.xlu0 %v209, 112
  %v213 = vpop.permute.xlu0 %212
  %v215 = vmul.f32 %v210, %v213
  %v216 = vmul.f32 %v198, 0.0
  %v217 = vadd.f32 %v215, %v216
  %v218 = vld [vmem:[%s6] sm:$0xf]
  %v219 = vld [vmem:[%s6 + $0x4] sm:$0xf]
  %v220 = vld [vmem:[%s7] sm:$0x1]
  %v222 = vlaneseq
  %v223 = vshrl.u32 %v222, 7
  %v224 = vsub.s32 0, %v223
  %v225 = vrot.slane %v220, %v224
  %v229 = vunpack.c.l.b16 %v218
  %v230 = vunpack.c.l.b16 %v219
  %v231 = vpack.c.b16 %v230, %v229
  %233 = vmatprep.subr.bf16.mxu0 0
  %234 = vmatpush1.bf16.msra.mxu0 %v231
  %235 = vmatprep.subr.bf16.mxu0 0
  %236 = vmatpush1.bf16.msra.mxu0 0
  %237 = vmatprep.subr.bf16.mxu0 0
  %238 = vmatpush1.bf16.msra.mxu0 0
  %239 = vmatprep.subr.bf16.mxu0 0
  %240 = vmatpush1.bf16.msra.mxu0 0
  %241 = vmatprep.subr.bf16.mxu0 0
  %242 = vmatpush1.bf16.msra.mxu0 0
  %243 = vmatprep.subr.bf16.mxu0 0
  %244 = vmatpush1.bf16.msra.mxu0 0
  %245 = vmatprep.subr.bf16.mxu0 0
  %246 = vmatpush1.bf16.msra.mxu0 0
  %247 = vmatprep.subr.bf16.mxu0 0
  %248 = vmatpush1.bf16.msra.mxu0 0
  %249 = vmatprep.subr.bf16.mxu0 0
  %250 = vmatpush1.bf16.msra.mxu0 0
  %251 = vmatprep.subr.bf16.mxu0 0
  %252 = vmatpush1.bf16.msra.mxu0 0
  %253 = vmatprep.subr.bf16.mxu0 0
  %254 = vmatpush1.bf16.msra.mxu0 0
  %255 = vmatprep.subr.bf16.mxu0 0
  %256 = vmatpush1.bf16.msra.mxu0 0
  %257 = vmatprep.subr.bf16.mxu0 0
  %258 = vmatpush1.bf16.msra.mxu0 0
  %259 = vmatprep.subr.bf16.mxu0 0
  %260 = vmatpush1.bf16.msra.mxu0 0
  %261 = vmatprep.subr.bf16.mxu0 0
  %262 = vmatpush1.bf16.msra.mxu0 0
  %263 = vmatprep.subr.bf16.mxu0 0
  %264 = vmatpush1.bf16.msra.mxu0 0
  %265 = vmatprep.mubr.bf16.mxu0 0
  %266 = vmatmul.mubr.bf16.gmra.mrb[0].mxu0 %v150
  %v267 = vpop.f32.mrb[0].mxu0
  %v268 = vadd.f32 %v225, %v267
  %v269 = vpop.f32.mrb[0].mxu0
  %v270 = vpop.f32.mrb[0].mxu0
  %v271 = vpop.f32.mrb[0].mxu0
  %272 = vdwg.mxu0
  %274 = vrot.lane.b32.xlu0 %v268, 48
  %v275 = vpop.permute.xlu0 %274
  %v277 = vadd.f32 %v129, %v275
  %v278 = vxor.u32 %v277, 2147483648
  %v279 = vmul.f32 %v278, 1.442695
  %v280 = vpow.pop %v279
  %v281 = vadd.f32 %v280, 1.0
  %v282 = vrcp.pop %v281
  %v283 = vmul.f32 1.0, %v282
  %284 = vrot.lane.b32.xlu0 %v268, 16
  %v285 = vpop.permute.xlu0 %284
  %v287 = vmul.f32 %v283, %v285
  %289 = vrot.lane.b32.xlu0 %v287, 32
  %v290 = vpop.permute.xlu0 %289
  %v292 = vadd.f32 %v129, %v290
  %v293 = vtanh.pop %v292
  %v294 = vsub.f32 1.0, %v283
  %296 = vrot.lane.b32.xlu0 %v293, 112
  %v297 = vpop.permute.xlu0 %296
  %v299 = vmul.f32 %v294, %v297
  %v300 = vmul.f32 %v283, 0.0
  %v301 = vadd.f32 %v299, %v300
  %303 = vset.pattern.permute.xlu0 0
  %304 = vperm.xlu0 %303, %v130
  %v305 = vpop.permute.xlu0 %304
  %v307 = vmul.f32 %v305, %v217
  %309 = vrot.lane.b32.xlu0 %v307, 112
  %v310 = vpop.permute.xlu0 %309
  %vm312 = vcmask 123904
  %313 = vst.msk [vmem:[%s8] sm:$0x3] %vm312, %v310
  %315 = vset.pattern.permute.xlu0 0
  %316 = vperm.xlu0 %315, %v132
  %v317 = vpop.permute.xlu0 %316
  %v319 = vmul.f32 %v317, %v301
  %321 = vrot.lane.b32.xlu0 %v319, 64
  %v322 = vpop.permute.xlu0 %321
  %s324 = scalar_lea.vmem %s9, 14
  %325 = vst.msk [vmem:[%s324] sm:$0x3] %vm312, %v322
  %v326 = vsub.f32 1.0, %v130
  %328 = vset.pattern.permute.xlu0 0
  %329 = vperm.xlu0 %328, %v326
  %v330 = vpop.permute.xlu0 %329
  %v332 = vmul.f32 %v330, 0.0
  %v333 = vadd.f32 %v307, %v332
  %v334 = vsub.f32 1.0, %v132
  %336 = vset.pattern.permute.xlu0 0
  %337 = vperm.xlu0 %336, %v334
  %v338 = vpop.permute.xlu0 %337
  %v340 = vmul.f32 %v338, 0.0
  %v341 = vadd.f32 %v319, %v340
  %v342 = vld [vmem:[#allocation2 + $0x2] sm:$0x3]
  %v343 = vld [vmem:[#allocation2 + $0xc] sm:$0x3]
  %s344 = scalar_lea.vmem %s1, 2
  %v345 = vld [vmem:[%s344] sm:$0x3]
  %s346 = scalar_lea.vmem %s1, 12
  %v347 = vld [vmem:[%s346] sm:$0x3]
  %v348 = vpack.c.bf16 %v333, %v333
  %v349 = vld [vmem:[%s4] sm:$0xf]
  %v350 = vld [vmem:[%s4 + $0x4] sm:$0xf]
  %v351 = vld [vmem:[%s5] sm:$0x1]
  %v353 = vlaneseq
  %v354 = vshrl.u32 %v353, 7
  %v355 = vsub.s32 0, %v354
  %v356 = vrot.slane %v351, %v355
  %359 = vrot.lane.b32.xlu0 %v348, 112
  %v360 = vpop.permute.xlu0 %359
  %v363 = vunpack.c.l.b16 %v349
  %v364 = vunpack.c.l.b16 %v350
  %v365 = vpack.c.b16 %v364, %v363
  %v368 = vsel %vm148, %v360, 0
  %370 = vmatprep.subr.bf16.mxu0 0
  %371 = vmatpush1.bf16.msra.mxu0 %v365
  %372 = vmatprep.subr.bf16.mxu0 0
  %373 = vmatpush1.bf16.msra.mxu0 0
  %374 = vmatprep.subr.bf16.mxu0 0
  %375 = vmatpush1.bf16.msra.mxu0 0
  %376 = vmatprep.subr.bf16.mxu0 0
  %377 = vmatpush1.bf16.msra.mxu0 0
  %378 = vmatprep.subr.bf16.mxu0 0
  %379 = vmatpush1.bf16.msra.mxu0 0
  %380 = vmatprep.subr.bf16.mxu0 0
  %381 = vmatpush1.bf16.msra.mxu0 0
  %382 = vmatprep.subr.bf16.mxu0 0
  %383 = vmatpush1.bf16.msra.mxu0 0
  %384 = vmatprep.subr.bf16.mxu0 0
  %385 = vmatpush1.bf16.msra.mxu0 0
  %386 = vmatprep.subr.bf16.mxu0 0
  %387 = vmatpush1.bf16.msra.mxu0 0
  %388 = vmatprep.subr.bf16.mxu0 0
  %389 = vmatpush1.bf16.msra.mxu0 0
  %390 = vmatprep.subr.bf16.mxu0 0
  %391 = vmatpush1.bf16.msra.mxu0 0
  %392 = vmatprep.subr.bf16.mxu0 0
  %393 = vmatpush1.bf16.msra.mxu0 0
  %394 = vmatprep.subr.bf16.mxu0 0
  %395 = vmatpush1.bf16.msra.mxu0 0
  %396 = vmatprep.subr.bf16.mxu0 0
  %397 = vmatpush1.bf16.msra.mxu0 0
  %398 = vmatprep.subr.bf16.mxu0 0
  %399 = vmatpush1.bf16.msra.mxu0 0
  %400 = vmatprep.subr.bf16.mxu0 0
  %401 = vmatpush1.bf16.msra.mxu0 0
  %402 = vmatprep.mubr.bf16.mxu0 0
  %403 = vmatmul.mubr.bf16.gmra.mrb[0].mxu0 %v368
  %v404 = vpop.f32.mrb[0].mxu0
  %v405 = vadd.f32 %v356, %v404
  %v406 = vpop.f32.mrb[0].mxu0
  %v407 = vpop.f32.mrb[0].mxu0
  %v408 = vpop.f32.mrb[0].mxu0
  %409 = vdwg.mxu0
  %v410 = vadd.f32 %v342, %v405
  %v411 = vxor.u32 %v410, 2147483648
  %v412 = vmul.f32 %v411, 1.442695
  %v413 = vpow.pop %v412
  %v414 = vadd.f32 %v413, 1.0
  %v415 = vrcp.pop %v414
  %v416 = vmul.f32 1.0, %v415
  %418 = vrot.lane.b32.xlu0 %v405, 96
  %v419 = vpop.permute.xlu0 %418
  %v421 = vmul.f32 %v416, %v419
  %423 = vrot.lane.b32.xlu0 %v421, 32
  %v424 = vpop.permute.xlu0 %423
  %v426 = vadd.f32 %v342, %v424
  %v427 = vtanh.pop %v426
  %v428 = vsub.f32 1.0, %v416
  %430 = vrot.lane.b32.xlu0 %v427, 112
  %v431 = vpop.permute.xlu0 %430
  %v433 = vmul.f32 %v428, %v431
  %v434 = vmul.f32 %v416, %v333
  %v435 = vadd.f32 %v433, %v434
  %v436 = vpack.c.bf16 %v341, %v341
  %v437 = vld [vmem:[%s6] sm:$0xf]
  %v438 = vld [vmem:[%s6 + $0x4] sm:$0xf]
  %v439 = vld [vmem:[%s7] sm:$0x1]
  %v441 = vlaneseq
  %v442 = vshrl.u32 %v441, 7
  %v443 = vsub.s32 0, %v442
  %v444 = vrot.slane %v439, %v443
  %447 = vrot.lane.b32.xlu0 %v436, 64
  %v448 = vpop.permute.xlu0 %447
  %v451 = vunpack.c.l.b16 %v437
  %v452 = vunpack.c.l.b16 %v438
  %v453 = vpack.c.b16 %v452, %v451
  %v456 = vsel %vm148, %v448, 0
  %458 = vmatprep.subr.bf16.mxu0 0
  %459 = vmatpush1.bf16.msra.mxu0 %v453
  %460 = vmatprep.subr.bf16.mxu0 0
  %461 = vmatpush1.bf16.msra.mxu0 0
  %462 = vmatprep.subr.bf16.mxu0 0
  %463 = vmatpush1.bf16.msra.mxu0 0
  %464 = vmatprep.subr.bf16.mxu0 0
  %465 = vmatpush1.bf16.msra.mxu0 0
  %466 = vmatprep.subr.bf16.mxu0 0
  %467 = vmatpush1.bf16.msra.mxu0 0
  %468 = vmatprep.subr.bf16.mxu0 0
  %469 = vmatpush1.bf16.msra.mxu0 0
  %470 = vmatprep.subr.bf16.mxu0 0
  %471 = vmatpush1.bf16.msra.mxu0 0
  %472 = vmatprep.subr.bf16.mxu0 0
  %473 = vmatpush1.bf16.msra.mxu0 0
  %474 = vmatprep.subr.bf16.mxu0 0
  %475 = vmatpush1.bf16.msra.mxu0 0
  %476 = vmatprep.subr.bf16.mxu0 0
  %477 = vmatpush1.bf16.msra.mxu0 0
  %478 = vmatprep.subr.bf16.mxu0 0
  %479 = vmatpush1.bf16.msra.mxu0 0
  %480 = vmatprep.subr.bf16.mxu0 0
  %481 = vmatpush1.bf16.msra.mxu0 0
  %482 = vmatprep.subr.bf16.mxu0 0
  %483 = vmatpush1.bf16.msra.mxu0 0
  %484 = vmatprep.subr.bf16.mxu0 0
  %485 = vmatpush1.bf16.msra.mxu0 0
  %486 = vmatprep.subr.bf16.mxu0 0
  %487 = vmatpush1.bf16.msra.mxu0 0
  %488 = vmatprep.subr.bf16.mxu0 0
  %489 = vmatpush1.bf16.msra.mxu0 0
  %490 = vmatprep.mubr.bf16.mxu0 0
  %491 = vmatmul.mubr.bf16.gmra.mrb[0].mxu0 %v456
  %v492 = vpop.f32.mrb[0].mxu0
  %v493 = vadd.f32 %v444, %v492
  %v494 = vpop.f32.mrb[0].mxu0
  %v495 = vpop.f32.mrb[0].mxu0
  %v496 = vpop.f32.mrb[0].mxu0
  %497 = vdwg.mxu0
  %499 = vrot.lane.b32.xlu0 %v493, 48
  %v500 = vpop.permute.xlu0 %499
  %v502 = vadd.f32 %v343, %v500
  %v503 = vxor.u32 %v502, 2147483648
  %v504 = vmul.f32 %v503, 1.442695
  %v505 = vpow.pop %v504
  %v506 = vadd.f32 %v505, 1.0
  %v507 = vrcp.pop %v506
  %v508 = vmul.f32 1.0, %v507
  %509 = vrot.lane.b32.xlu0 %v493, 16
  %v510 = vpop.permute.xlu0 %509
  %v512 = vmul.f32 %v508, %v510
  %514 = vrot.lane.b32.xlu0 %v512, 32
  %v515 = vpop.permute.xlu0 %514
  %v517 = vadd.f32 %v343, %v515
  %v518 = vtanh.pop %v517
  %v519 = vsub.f32 1.0, %v508
  %521 = vrot.lane.b32.xlu0 %v518, 112
  %v522 = vpop.permute.xlu0 %521
  %v524 = vmul.f32 %v519, %v522
  %v525 = vmul.f32 %v508, %v341
  %v526 = vadd.f32 %v524, %v525
  %528 = vset.pattern.permute.xlu0 0
  %529 = vperm.xlu0 %528, %v345
  %v530 = vpop.permute.xlu0 %529
  %v532 = vmul.f32 %v530, %v435
  %534 = vrot.lane.b32.xlu0 %v532, 112
  %v535 = vpop.permute.xlu0 %534
  %s537 = scalar_lea.vmem %s8, 2
  %538 = vst.msk [vmem:[%s537] sm:$0x3] %vm312, %v535
  %540 = vset.pattern.permute.xlu0 0
  %541 = vperm.xlu0 %540, %v347
  %v542 = vpop.permute.xlu0 %541
  %v544 = vmul.f32 %v542, %v526
  %546 = vrot.lane.b32.xlu0 %v544, 64
  %v547 = vpop.permute.xlu0 %546
  %s549 = scalar_lea.vmem %s9, 12
  %550 = vst.msk [vmem:[%s549] sm:$0x3] %vm312, %v547
  %v551 = vsub.f32 1.0, %v345
  %553 = vset.pattern.permute.xlu0 0
  %554 = vperm.xlu0 %553, %v551
  %v555 = vpop.permute.xlu0 %554
  %v557 = vmul.f32 %v555, %v333
  %v558 = vadd.f32 %v532, %v557
  %v559 = vsub.f32 1.0, %v347
  %561 = vset.pattern.permute.xlu0 0
  %562 = vperm.xlu0 %561, %v559
  %v563 = vpop.permute.xlu0 %562
  %v565 = vmul.f32 %v563, %v341
  %v566 = vadd.f32 %v544, %v565
  %v567 = vld [vmem:[#allocation2 + $0x4] sm:$0x3]
  %v568 = vld [vmem:[#allocation2 + $0xa] sm:$0x3]
  %s569 = scalar_lea.vmem %s1, 4
  %v570 = vld [vmem:[%s569] sm:$0x3]
  %s571 = scalar_lea.vmem %s1, 10
  %v572 = vld [vmem:[%s571] sm:$0x3]
  %v573 = vpack.c.bf16 %v558, %v558
  %v574 = vld [vmem:[%s4] sm:$0xf]
  %v575 = vld [vmem:[%s4 + $0x4] sm:$0xf]
  %v576 = vld [vmem:[%s5] sm:$0x1]
  %v578 = vlaneseq
  %v579 = vshrl.u32 %v578, 7
  %v580 = vsub.s32 0, %v579
  %v581 = vrot.slane %v576, %v580
  %584 = vrot.lane.b32.xlu0 %v573, 112
  %v585 = vpop.permute.xlu0 %584
  %v588 = vunpack.c.l.b16 %v574
  %v589 = vunpack.c.l.b16 %v575
  %v590 = vpack.c.b16 %v589, %v588
  %v593 = vsel %vm148, %v585, 0
  %595 = vmatprep.subr.bf16.mxu0 0
  %596 = vmatpush1.bf16.msra.mxu0 %v590
  %597 = vmatprep.subr.bf16.mxu0 0
  %598 = vmatpush1.bf16.msra.mxu0 0
  %599 = vmatprep.subr.bf16.mxu0 0
  %600 = vmatpush1.bf16.msra.mxu0 0
  %601 = vmatprep.subr.bf16.mxu0 0
  %602 = vmatpush1.bf16.msra.mxu0 0
  %603 = vmatprep.subr.bf16.mxu0 0
  %604 = vmatpush1.bf16.msra.mxu0 0
  %605 = vmatprep.subr.bf16.mxu0 0
  %606 = vmatpush1.bf16.msra.mxu0 0
  %607 = vmatprep.subr.bf16.mxu0 0
  %608 = vmatpush1.bf16.msra.mxu0 0
  %609 = vmatprep.subr.bf16.mxu0 0
  %610 = vmatpush1.bf16.msra.mxu0 0
  %611 = vmatprep.subr.bf16.mxu0 0
  %612 = vmatpush1.bf16.msra.mxu0 0
  %613 = vmatprep.subr.bf16.mxu0 0
  %614 = vmatpush1.bf16.msra.mxu0 0
  %615 = vmatprep.subr.bf16.mxu0 0
  %616 = vmatpush1.bf16.msra.mxu0 0
  %617 = vmatprep.subr.bf16.mxu0 0
  %618 = vmatpush1.bf16.msra.mxu0 0
  %619 = vmatprep.subr.bf16.mxu0 0
  %620 = vmatpush1.bf16.msra.mxu0 0
  %621 = vmatprep.subr.bf16.mxu0 0
  %622 = vmatpush1.bf16.msra.mxu0 0
  %623 = vmatprep.subr.bf16.mxu0 0
  %624 = vmatpush1.bf16.msra.mxu0 0
  %625 = vmatprep.subr.bf16.mxu0 0
  %626 = vmatpush1.bf16.msra.mxu0 0
  %627 = vmatprep.mubr.bf16.mxu0 0
  %628 = vmatmul.mubr.bf16.gmra.mrb[0].mxu0 %v593
  %v629 = vpop.f32.mrb[0].mxu0
  %v630 = vadd.f32 %v581, %v629
  %v631 = vpop.f32.mrb[0].mxu0
  %v632 = vpop.f32.mrb[0].mxu0
  %v633 = vpop.f32.mrb[0].mxu0
  %634 = vdwg.mxu0
  %v635 = vadd.f32 %v567, %v630
  %v636 = vxor.u32 %v635, 2147483648
  %v637 = vmul.f32 %v636, 1.442695
  %v638 = vpow.pop %v637
  %v639 = vadd.f32 %v638, 1.0
  %v640 = vrcp.pop %v639
  %v641 = vmul.f32 1.0, %v640
  %643 = vrot.lane.b32.xlu0 %v630, 96
  %v644 = vpop.permute.xlu0 %643
  %v646 = vmul.f32 %v641, %v644
  %648 = vrot.lane.b32.xlu0 %v646, 32
  %v649 = vpop.permute.xlu0 %648
  %v651 = vadd.f32 %v567, %v649
  %v652 = vtanh.pop %v651
  %v653 = vsub.f32 1.0, %v641
  %655 = vrot.lane.b32.xlu0 %v652, 112
  %v656 = vpop.permute.xlu0 %655
  %v658 = vmul.f32 %v653, %v656
  %v659 = vmul.f32 %v641, %v558
  %v660 = vadd.f32 %v658, %v659
  %v661 = vpack.c.bf16 %v566, %v566
  %v662 = vld [vmem:[%s6] sm:$0xf]
  %v663 = vld [vmem:[%s6 + $0x4] sm:$0xf]
  %v664 = vld [vmem:[%s7] sm:$0x1]
  %v666 = vlaneseq
  %v667 = vshrl.u32 %v666, 7
  %v668 = vsub.s32 0, %v667
  %v669 = vrot.slane %v664, %v668
  %672 = vrot.lane.b32.xlu0 %v661, 64
  %v673 = vpop.permute.xlu0 %672
  %v676 = vunpack.c.l.b16 %v662
  %v677 = vunpack.c.l.b16 %v663
  %v678 = vpack.c.b16 %v677, %v676
  %v681 = vsel %vm148, %v673, 0
  %683 = vmatprep.subr.bf16.mxu0 0
  %684 = vmatpush1.bf16.msra.mxu0 %v678
  %685 = vmatprep.subr.bf16.mxu0 0
  %686 = vmatpush1.bf16.msra.mxu0 0
  %687 = vmatprep.subr.bf16.mxu0 0
  %688 = vmatpush1.bf16.msra.mxu0 0
  %689 = vmatprep.subr.bf16.mxu0 0
  %690 = vmatpush1.bf16.msra.mxu0 0
  %691 = vmatprep.subr.bf16.mxu0 0
  %692 = vmatpush1.bf16.msra.mxu0 0
  %693 = vmatprep.subr.bf16.mxu0 0
  %694 = vmatpush1.bf16.msra.mxu0 0
  %695 = vmatprep.subr.bf16.mxu0 0
  %696 = vmatpush1.bf16.msra.mxu0 0
  %697 = vmatprep.subr.bf16.mxu0 0
  %698 = vmatpush1.bf16.msra.mxu0 0
  %699 = vmatprep.subr.bf16.mxu0 0
  %700 = vmatpush1.bf16.msra.mxu0 0
  %701 = vmatprep.subr.bf16.mxu0 0
  %702 = vmatpush1.bf16.msra.mxu0 0
  %703 = vmatprep.subr.bf16.mxu0 0
  %704 = vmatpush1.bf16.msra.mxu0 0
  %705 = vmatprep.subr.bf16.mxu0 0
  %706 = vmatpush1.bf16.msra.mxu0 0
  %707 = vmatprep.subr.bf16.mxu0 0
  %708 = vmatpush1.bf16.msra.mxu0 0
  %709 = vmatprep.subr.bf16.mxu0 0
  %710 = vmatpush1.bf16.msra.mxu0 0
  %711 = vmatprep.subr.bf16.mxu0 0
  %712 = vmatpush1.bf16.msra.mxu0 0
  %713 = vmatprep.subr.bf16.mxu0 0
  %714 = vmatpush1.bf16.msra.mxu0 0
  %715 = vmatprep.mubr.bf16.mxu0 0
  %716 = vmatmul.mubr.bf16.gmra.mrb[0].mxu0 %v681
  %v717 = vpop.f32.mrb[0].mxu0
  %v718 = vadd.f32 %v669, %v717
  %v719 = vpop.f32.mrb[0].mxu0
  %v720 = vpop.f32.mrb[0].mxu0
  %v721 = vpop.f32.mrb[0].mxu0
  %722 = vdwg.mxu0
  %724 = vrot.lane.b32.xlu0 %v718, 48
  %v725 = vpop.permute.xlu0 %724
  %v727 = vadd.f32 %v568, %v725
  %v728 = vxor.u32 %v727, 2147483648
  %v729 = vmul.f32 %v728, 1.442695
  %v730 = vpow.pop %v729
  %v731 = vadd.f32 %v730, 1.0
  %v732 = vrcp.pop %v731
  %v733 = vmul.f32 1.0, %v732
  %734 = vrot.lane.b32.xlu0 %v718, 16
  %v735 = vpop.permute.xlu0 %734
  %v737 = vmul.f32 %v733, %v735
  %739 = vrot.lane.b32.xlu0 %v737, 32
  %v740 = vpop.permute.xlu0 %739
  %v742 = vadd.f32 %v568, %v740
  %v743 = vtanh.pop %v742
  %v744 = vsub.f32 1.0, %v733
  %746 = vrot.lane.b32.xlu0 %v743, 112
  %v747 = vpop.permute.xlu0 %746
  %v749 = vmul.f32 %v744, %v747
  %v750 = vmul.f32 %v733, %v566
  %v751 = vadd.f32 %v749, %v750
  %753 = vset.pattern.permute.xlu0 0
  %754 = vperm.xlu0 %753, %v570
  %v755 = vpop.permute.xlu0 %754
  %v757 = vmul.f32 %v755, %v660
  %759 = vrot.lane.b32.xlu0 %v757, 112
  %v760 = vpop.permute.xlu0 %759
  %s762 = scalar_lea.vmem %s8, 4
  %763 = vst.msk [vmem:[%s762] sm:$0x3] %vm312, %v760
  %765 = vset.pattern.permute.xlu0 0
  %766 = vperm.xlu0 %765, %v572
  %v767 = vpop.permute.xlu0 %766
  %v769 = vmul.f32 %v767, %v751
  %771 = vrot.lane.b32.xlu0 %v769, 64
  %v772 = vpop.permute.xlu0 %771
  %s774 = scalar_lea.vmem %s9, 10
  %775 = vst.msk [vmem:[%s774] sm:$0x3] %vm312, %v772
  %v776 = vsub.f32 1.0, %v570
  %778 = vset.pattern.permute.xlu0 0
  %779 = vperm.xlu0 %778, %v776
  %v780 = vpop.permute.xlu0 %779
  %v782 = vmul.f32 %v780, %v558
  %v783 = vadd.f32 %v757, %v782
  %v784 = vsub.f32 1.0, %v572
  %786 = vset.pattern.permute.xlu0 0
  %787 = vperm.xlu0 %786, %v784
  %v788 = vpop.permute.xlu0 %787
  %v790 = vmul.f32 %v788, %v566
  %v791 = vadd.f32 %v769, %v790
  %v792 = vld [vmem:[#allocation2 + $0x6] sm:$0x3]
  %v793 = vld [vmem:[#allocation2 + $0x8] sm:$0x3]
  %s794 = scalar_lea.vmem %s1, 6
  %v795 = vld [vmem:[%s794] sm:$0x3]
  %s796 = scalar_lea.vmem %s1, 8
  %v797 = vld [vmem:[%s796] sm:$0x3]
  %v798 = vpack.c.bf16 %v783, %v783
  %v799 = vld [vmem:[%s4] sm:$0xf]
  %v800 = vld [vmem:[%s4 + $0x4] sm:$0xf]
  %v801 = vld [vmem:[%s5] sm:$0x1]
  %v803 = vlaneseq
  %v804 = vshrl.u32 %v803, 7
  %v805 = vsub.s32 0, %v804
  %v806 = vrot.slane %v801, %v805
  %809 = vrot.lane.b32.xlu0 %v798, 112
  %v810 = vpop.permute.xlu0 %809
  %v813 = vunpack.c.l.b16 %v799
  %v814 = vunpack.c.l.b16 %v800
  %v815 = vpack.c.b16 %v814, %v813
  %v818 = vsel %vm148, %v810, 0
  %820 = vmatprep.subr.bf16.mxu0 0
  %821 = vmatpush1.bf16.msra.mxu0 %v815
  %822 = vmatprep.subr.bf16.mxu0 0
  %823 = vmatpush1.bf16.msra.mxu0 0
  %824 = vmatprep.subr.bf16.mxu0 0
  %825 = vmatpush1.bf16.msra.mxu0 0
  %826 = vmatprep.subr.bf16.mxu0 0
  %827 = vmatpush1.bf16.msra.mxu0 0
  %828 = vmatprep.subr.bf16.mxu0 0
  %829 = vmatpush1.bf16.msra.mxu0 0
  %830 = vmatprep.subr.bf16.mxu0 0
  %831 = vmatpush1.bf16.msra.mxu0 0
  %832 = vmatprep.subr.bf16.mxu0 0
  %833 = vmatpush1.bf16.msra.mxu0 0
  %834 = vmatprep.subr.bf16.mxu0 0
  %835 = vmatpush1.bf16.msra.mxu0 0
  %836 = vmatprep.subr.bf16.mxu0 0
  %837 = vmatpush1.bf16.msra.mxu0 0
  %838 = vmatprep.subr.bf16.mxu0 0
  %839 = vmatpush1.bf16.msra.mxu0 0
  %840 = vmatprep.subr.bf16.mxu0 0
  %841 = vmatpush1.bf16.msra.mxu0 0
  %842 = vmatprep.subr.bf16.mxu0 0
  %843 = vmatpush1.bf16.msra.mxu0 0
  %844 = vmatprep.subr.bf16.mxu0 0
  %845 = vmatpush1.bf16.msra.mxu0 0
  %846 = vmatprep.subr.bf16.mxu0 0
  %847 = vmatpush1.bf16.msra.mxu0 0
  %848 = vmatprep.subr.bf16.mxu0 0
  %849 = vmatpush1.bf16.msra.mxu0 0
  %850 = vmatprep.subr.bf16.mxu0 0
  %851 = vmatpush1.bf16.msra.mxu0 0
  %852 = vmatprep.mubr.bf16.mxu0 0
  %853 = vmatmul.mubr.bf16.gmra.mrb[0].mxu0 %v818
  %v854 = vpop.f32.mrb[0].mxu0
  %v855 = vadd.f32 %v806, %v854
  %v856 = vpop.f32.mrb[0].mxu0
  %v857 = vpop.f32.mrb[0].mxu0
  %v858 = vpop.f32.mrb[0].mxu0
  %859 = vdwg.mxu0
  %v860 = vadd.f32 %v792, %v855
  %v861 = vxor.u32 %v860, 2147483648
  %v862 = vmul.f32 %v861, 1.442695
  %v863 = vpow.pop %v862
  %v864 = vadd.f32 %v863, 1.0
  %v865 = vrcp.pop %v864
  %v866 = vmul.f32 1.0, %v865
  %868 = vrot.lane.b32.xlu0 %v855, 96
  %v869 = vpop.permute.xlu0 %868
  %v871 = vmul.f32 %v866, %v869
  %873 = vrot.lane.b32.xlu0 %v871, 32
  %v874 = vpop.permute.xlu0 %873
  %v876 = vadd.f32 %v792, %v874
  %v877 = vtanh.pop %v876
  %v878 = vsub.f32 1.0, %v866
  %880 = vrot.lane.b32.xlu0 %v877, 112
  %v881 = vpop.permute.xlu0 %880
  %v883 = vmul.f32 %v878, %v881
  %v884 = vmul.f32 %v866, %v783
  %v885 = vadd.f32 %v883, %v884
  %v886 = vpack.c.bf16 %v791, %v791
  %v887 = vld [vmem:[%s6] sm:$0xf]
  %v888 = vld [vmem:[%s6 + $0x4] sm:$0xf]
  %v889 = vld [vmem:[%s7] sm:$0x1]
  %v891 = vlaneseq
  %v892 = vshrl.u32 %v891, 7
  %v893 = vsub.s32 0, %v892
  %v894 = vrot.slane %v889, %v893
  %897 = vrot.lane.b32.xlu0 %v886, 64
  %v898 = vpop.permute.xlu0 %897
  %v901 = vunpack.c.l.b16 %v887
  %v902 = vunpack.c.l.b16 %v888
  %v903 = vpack.c.b16 %v902, %v901
  %v906 = vsel %vm148, %v898, 0
  %908 = vmatprep.subr.bf16.mxu0 0
  %909 = vmatpush1.bf16.msra.mxu0 %v903
  %910 = vmatprep.subr.bf16.mxu0 0
  %911 = vmatpush1.bf16.msra.mxu0 0
  %912 = vmatprep.subr.bf16.mxu0 0
  %913 = vmatpush1.bf16.msra.mxu0 0
  %914 = vmatprep.subr.bf16.mxu0 0
  %915 = vmatpush1.bf16.msra.mxu0 0
  %916 = vmatprep.subr.bf16.mxu0 0
  %917 = vmatpush1.bf16.msra.mxu0 0
  %918 = vmatprep.subr.bf16.mxu0 0
  %919 = vmatpush1.bf16.msra.mxu0 0
  %920 = vmatprep.subr.bf16.mxu0 0
  %921 = vmatpush1.bf16.msra.mxu0 0
  %922 = vmatprep.subr.bf16.mxu0 0
  %923 = vmatpush1.bf16.msra.mxu0 0
  %924 = vmatprep.subr.bf16.mxu0 0
  %925 = vmatpush1.bf16.msra.mxu0 0
  %926 = vmatprep.subr.bf16.mxu0 0
  %927 = vmatpush1.bf16.msra.mxu0 0
  %928 = vmatprep.subr.bf16.mxu0 0
  %929 = vmatpush1.bf16.msra.mxu0 0
  %930 = vmatprep.subr.bf16.mxu0 0
  %931 = vmatpush1.bf16.msra.mxu0 0
  %932 = vmatprep.subr.bf16.mxu0 0
  %933 = vmatpush1.bf16.msra.mxu0 0
  %934 = vmatprep.subr.bf16.mxu0 0
  %935 = vmatpush1.bf16.msra.mxu0 0
  %936 = vmatprep.subr.bf16.mxu0 0
  %937 = vmatpush1.bf16.msra.mxu0 0
  %938 = vmatprep.subr.bf16.mxu0 0
  %939 = vmatpush1.bf16.msra.mxu0 0
  %940 = vmatprep.mubr.bf16.mxu0 0
  %941 = vmatmul.mubr.bf16.gmra.mrb[0].mxu0 %v906
  %v942 = vpop.f32.mrb[0].mxu0
  %v943 = vadd.f32 %v894, %v942
  %v944 = vpop.f32.mrb[0].mxu0
  %v945 = vpop.f32.mrb[0].mxu0
  %v946 = vpop.f32.mrb[0].mxu0
  %947 = vdwg.mxu0
  %949 = vrot.lane.b32.xlu0 %v943, 48
  %v950 = vpop.permute.xlu0 %949
  %v952 = vadd.f32 %v793, %v950
  %v953 = vxor.u32 %v952, 2147483648
  %v954 = vmul.f32 %v953, 1.442695
  %v955 = vpow.pop %v954
  %v956 = vadd.f32 %v955, 1.0
  %v957 = vrcp.pop %v956
  %v958 = vmul.f32 1.0, %v957
  %959 = vrot.lane.b32.xlu0 %v943, 16
  %v960 = vpop.permute.xlu0 %959
  %v962 = vmul.f32 %v958, %v960
  %964 = vrot.lane.b32.xlu0 %v962, 32
  %v965 = vpop.permute.xlu0 %964
  %v967 = vadd.f32 %v793, %v965
  %v968 = vtanh.pop %v967
  %v969 = vsub.f32 1.0, %v958
  %971 = vrot.lane.b32.xlu0 %v968, 112
  %v972 = vpop.permute.xlu0 %971
  %v974 = vmul.f32 %v969, %v972
  %v975 = vmul.f32 %v958, %v791
  %v976 = vadd.f32 %v974, %v975
  %978 = vset.pattern.permute.xlu0 0
  %979 = vperm.xlu0 %978, %v795
  %v980 = vpop.permute.xlu0 %979
  %v982 = vmul.f32 %v980, %v885
  %984 = vrot.lane.b32.xlu0 %v982, 112
  %v985 = vpop.permute.xlu0 %984
  %s987 = scalar_lea.vmem %s8, 6
  %988 = vst.msk [vmem:[%s987] sm:$0x3] %vm312, %v985
  %990 = vset.pattern.permute.xlu0 0
  %991 = vperm.xlu0 %990, %v797
  %v992 = vpop.permute.xlu0 %991
  %v994 = vmul.f32 %v992, %v976
  %996 = vrot.lane.b32.xlu0 %v994, 64
  %v997 = vpop.permute.xlu0 %996
  %s999 = scalar_lea.vmem %s9, 8
  %1000 = vst.msk [vmem:[%s999] sm:$0x3] %vm312, %v997
  %v1001 = vsub.f32 1.0, %v795
  %1003 = vset.pattern.permute.xlu0 0
  %1004 = vperm.xlu0 %1003, %v1001
  %v1005 = vpop.permute.xlu0 %1004
  %v1007 = vmul.f32 %v1005, %v783
  %v1008 = vadd.f32 %v982, %v1007
  %v1009 = vsub.f32 1.0, %v797
  %1011 = vset.pattern.permute.xlu0 0
  %1012 = vperm.xlu0 %1011, %v1009
  %v1013 = vpop.permute.xlu0 %1012
  %v1015 = vmul.f32 %v1013, %v791
  %v1016 = vadd.f32 %v994, %v1015
  %v1017 = vld [vmem:[#allocation2 + $0x8] sm:$0x3]
  %v1018 = vld [vmem:[#allocation2 + $0x6] sm:$0x3]
  %v1019 = vld [vmem:[%s796] sm:$0x3]
  %v1020 = vld [vmem:[%s794] sm:$0x3]
  %v1021 = vpack.c.bf16 %v1008, %v1008
  %v1022 = vld [vmem:[%s4] sm:$0xf]
  %v1023 = vld [vmem:[%s4 + $0x4] sm:$0xf]
  %v1024 = vld [vmem:[%s5] sm:$0x1]
  %v1026 = vlaneseq
  %v1027 = vshrl.u32 %v1026, 7
  %v1028 = vsub.s32 0, %v1027
  %v1029 = vrot.slane %v1024, %v1028
  %1032 = vrot.lane.b32.xlu0 %v1021, 112
  %v1033 = vpop.permute.xlu0 %1032
  %v1036 = vunpack.c.l.b16 %v1022
  %v1037 = vunpack.c.l.b16 %v1023
  %v1038 = vpack.c.b16 %v1037, %v1036
  %v1041 = vsel %vm148, %v1033, 0
  %1043 = vmatprep.subr.bf16.mxu0 0
  %1044 = vmatpush1.bf16.msra.mxu0 %v1038
  %1045 = vmatprep.subr.bf16.mxu0 0
  %1046 = vmatpush1.bf16.msra.mxu0 0
  %1047 = vmatprep.subr.bf16.mxu0 0
  %1048 = vmatpush1.bf16.msra.mxu0 0
  %1049 = vmatprep.subr.bf16.mxu0 0
  %1050 = vmatpush1.bf16.msra.mxu0 0
  %1051 = vmatprep.subr.bf16.mxu0 0
  %1052 = vmatpush1.bf16.msra.mxu0 0
  %1053 = vmatprep.subr.bf16.mxu0 0
  %1054 = vmatpush1.bf16.msra.mxu0 0
  %1055 = vmatprep.subr.bf16.mxu0 0
  %1056 = vmatpush1.bf16.msra.mxu0 0
  %1057 = vmatprep.subr.bf16.mxu0 0
  %1058 = vmatpush1.bf16.msra.mxu0 0
  %1059 = vmatprep.subr.bf16.mxu0 0
  %1060 = vmatpush1.bf16.msra.mxu0 0
  %1061 = vmatprep.subr.bf16.mxu0 0
  %1062 = vmatpush1.bf16.msra.mxu0 0
  %1063 = vmatprep.subr.bf16.mxu0 0
  %1064 = vmatpush1.bf16.msra.mxu0 0
  %1065 = vmatprep.subr.bf16.mxu0 0
  %1066 = vmatpush1.bf16.msra.mxu0 0
  %1067 = vmatprep.subr.bf16.mxu0 0
  %1068 = vmatpush1.bf16.msra.mxu0 0
  %1069 = vmatprep.subr.bf16.mxu0 0
  %1070 = vmatpush1.bf16.msra.mxu0 0
  %1071 = vmatprep.subr.bf16.mxu0 0
  %1072 = vmatpush1.bf16.msra.mxu0 0
  %1073 = vmatprep.subr.bf16.mxu0 0
  %1074 = vmatpush1.bf16.msra.mxu0 0
  %1075 = vmatprep.mubr.bf16.mxu0 0
  %1076 = vmatmul.mubr.bf16.gmra.mrb[0].mxu0 %v1041
  %v1077 = vpop.f32.mrb[0].mxu0
  %v1078 = vadd.f32 %v1029, %v1077
  %v1079 = vpop.f32.mrb[0].mxu0
  %v1080 = vpop.f32.mrb[0].mxu0
  %v1081 = vpop.f32.mrb[0].mxu0
  %1082 = vdwg.mxu0
  %v1083 = vadd.f32 %v1017, %v1078
  %v1084 = vxor.u32 %v1083, 2147483648
  %v1085 = vmul.f32 %v1084, 1.442695
  %v1086 = vpow.pop %v1085
  %v1087 = vadd.f32 %v1086, 1.0
  %v1088 = vrcp.pop %v1087
  %v1089 = vmul.f32 1.0, %v1088
  %1091 = vrot.lane.b32.xlu0 %v1078, 96
  %v1092 = vpop.permute.xlu0 %1091
  %v1094 = vmul.f32 %v1089, %v1092
  %1096 = vrot.lane.b32.xlu0 %v1094, 32
  %v1097 = vpop.permute.xlu0 %1096
  %v1099 = vadd.f32 %v1017, %v1097
  %v1100 = vtanh.pop %v1099
  %v1101 = vsub.f32 1.0, %v1089
  %1103 = vrot.lane.b32.xlu0 %v1100, 112
  %v1104 = vpop.permute.xlu0 %1103
  %v1106 = vmul.f32 %v1101, %v1104
  %v1107 = vmul.f32 %v1089, %v1008
  %v1108 = vadd.f32 %v1106, %v1107
  %v1109 = vpack.c.bf16 %v1016, %v1016
  %v1110 = vld [vmem:[%s6] sm:$0xf]
  %v1111 = vld [vmem:[%s6 + $0x4] sm:$0xf]
  %v1112 = vld [vmem:[%s7] sm:$0x1]
  %v1114 = vlaneseq
  %v1115 = vshrl.u32 %v1114, 7
  %v1116 = vsub.s32 0, %v1115
  %v1117 = vrot.slane %v1112, %v1116
  %1120 = vrot.lane.b32.xlu0 %v1109, 64
  %v1121 = vpop.permute.xlu0 %1120
  %v1124 = vunpack.c.l.b16 %v1110
  %v1125 = vunpack.c.l.b16 %v1111
  %v1126 = vpack.c.b16 %v1125, %v1124
  %v1129 = vsel %vm148, %v1121, 0
  %1131 = vmatprep.subr.bf16.mxu0 0
  %1132 = vmatpush1.bf16.msra.mxu0 %v1126
  %1133 = vmatprep.subr.bf16.mxu0 0
  %1134 = vmatpush1.bf16.msra.mxu0 0
  %1135 = vmatprep.subr.bf16.mxu0 0
  %1136 = vmatpush1.bf16.msra.mxu0 0
  %1137 = vmatprep.subr.bf16.mxu0 0
  %1138 = vmatpush1.bf16.msra.mxu0 0
  %1139 = vmatprep.subr.bf16.mxu0 0
  %1140 = vmatpush1.bf16.msra.mxu0 0
  %1141 = vmatprep.subr.bf16.mxu0 0
  %1142 = vmatpush1.bf16.msra.mxu0 0
  %1143 = vmatprep.subr.bf16.mxu0 0
  %1144 = vmatpush1.bf16.msra.mxu0 0
  %1145 = vmatprep.subr.bf16.mxu0 0
  %1146 = vmatpush1.bf16.msra.mxu0 0
  %1147 = vmatprep.subr.bf16.mxu0 0
  %1148 = vmatpush1.bf16.msra.mxu0 0
  %1149 = vmatprep.subr.bf16.mxu0 0
  %1150 = vmatpush1.bf16.msra.mxu0 0
  %1151 = vmatprep.subr.bf16.mxu0 0
  %1152 = vmatpush1.bf16.msra.mxu0 0
  %1153 = vmatprep.subr.bf16.mxu0 0
  %1154 = vmatpush1.bf16.msra.mxu0 0
  %1155 = vmatprep.subr.bf16.mxu0 0
  %1156 = vmatpush1.bf16.msra.mxu0 0
  %1157 = vmatprep.subr.bf16.mxu0 0
  %1158 = vmatpush1.bf16.msra.mxu0 0
  %1159 = vmatprep.subr.bf16.mxu0 0
  %1160 = vmatpush1.bf16.msra.mxu0 0
  %1161 = vmatprep.subr.bf16.mxu0 0
  %1162 = vmatpush1.bf16.msra.mxu0 0
  %1163 = vmatprep.mubr.bf16.mxu0 0
  %1164 = vmatmul.mubr.bf16.gmra.mrb[0].mxu0 %v1129
  %v1165 = vpop.f32.mrb[0].mxu0
  %v1166 = vadd.f32 %v1117, %v1165
  %v1167 = vpop.f32.mrb[0].mxu0
  %v1168 = vpop.f32.mrb[0].mxu0
  %v1169 = vpop.f32.mrb[0].mxu0
  %1170 = vdwg.mxu0
  %1172 = vrot.lane.b32.xlu0 %v1166, 48
  %v1173 = vpop.permute.xlu0 %1172
  %v1175 = vadd.f32 %v1018, %v1173
  %v1176 = vxor.u32 %v1175, 2147483648
  %v1177 = vmul.f32 %v1176, 1.442695
  %v1178 = vpow.pop %v1177
  %v1179 = vadd.f32 %v1178, 1.0
  %v1180 = vrcp.pop %v1179
  %v1181 = vmul.f32 1.0, %v1180
  %1182 = vrot.lane.b32.xlu0 %v1166, 16
  %v1183 = vpop.permute.xlu0 %1182
  %v1185 = vmul.f32 %v1181, %v1183
  %1187 = vrot.lane.b32.xlu0 %v1185, 32
  %v1188 = vpop.permute.xlu0 %1187
  %v1190 = vadd.f32 %v1018, %v1188
  %v1191 = vtanh.pop %v1190
  %v1192 = vsub.f32 1.0, %v1181
  %1194 = vrot.lane.b32.xlu0 %v1191, 112
  %v1195 = vpop.permute.xlu0 %1194
  %v1197 = vmul.f32 %v1192, %v1195
  %v1198 = vmul.f32 %v1181, %v1016
  %v1199 = vadd.f32 %v1197, %v1198
  %1201 = vset.pattern.permute.xlu0 0
  %1202 = vperm.xlu0 %1201, %v1019
  %v1203 = vpop.permute.xlu0 %1202
  %v1205 = vmul.f32 %v1203, %v1108
  %1207 = vrot.lane.b32.xlu0 %v1205, 112
  %v1208 = vpop.permute.xlu0 %1207
  %s1210 = scalar_lea.vmem %s8, 8
  %1211 = vst.msk [vmem:[%s1210] sm:$0x3] %vm312, %v1208
  %1213 = vset.pattern.permute.xlu0 0
  %1214 = vperm.xlu0 %1213, %v1020
  %v1215 = vpop.permute.xlu0 %1214
  %v1217 = vmul.f32 %v1215, %v1199
  %1219 = vrot.lane.b32.xlu0 %v1217, 64
  %v1220 = vpop.permute.xlu0 %1219
  %s1222 = scalar_lea.vmem %s9, 6
  %1223 = vst.msk [vmem:[%s1222] sm:$0x3] %vm312, %v1220
  %v1224 = vsub.f32 1.0, %v1019
  %1226 = vset.pattern.permute.xlu0 0
  %1227 = vperm.xlu0 %1226, %v1224
  %v1228 = vpop.permute.xlu0 %1227
  %v1230 = vmul.f32 %v1228, %v1008
  %v1231 = vadd.f32 %v1205, %v1230
  %v1232 = vsub.f32 1.0, %v1020
  %1234 = vset.pattern.permute.xlu0 0
  %1235 = vperm.xlu0 %1234, %v1232
  %v1236 = vpop.permute.xlu0 %1235
  %v1238 = vmul.f32 %v1236, %v1016
  %v1239 = vadd.f32 %v1217, %v1238
  %v1240 = vld [vmem:[#allocation2 + $0xa] sm:$0x3]
  %v1241 = vld [vmem:[#allocation2 + $0x4] sm:$0x3]
  %v1242 = vld [vmem:[%s571] sm:$0x3]
  %v1243 = vld [vmem:[%s569] sm:$0x3]
  %v1244 = vpack.c.bf16 %v1231, %v1231
  %v1245 = vld [vmem:[%s4] sm:$0xf]
  %v1246 = vld [vmem:[%s4 + $0x4] sm:$0xf]
  %v1247 = vld [vmem:[%s5] sm:$0x1]
  %v1249 = vlaneseq
  %v1250 = vshrl.u32 %v1249, 7
  %v1251 = vsub.s32 0, %v1250
  %v1252 = vrot.slane %v1247, %v1251
  %1255 = vrot.lane.b32.xlu0 %v1244, 112
  %v1256 = vpop.permute.xlu0 %1255
  %v1259 = vunpack.c.l.b16 %v1245
  %v1260 = vunpack.c.l.b16 %v1246
  %v1261 = vpack.c.b16 %v1260, %v1259
  %v1264 = vsel %vm148, %v1256, 0
  %1266 = vmatprep.subr.bf16.mxu0 0
  %1267 = vmatpush1.bf16.msra.mxu0 %v1261
  %1268 = vmatprep.subr.bf16.mxu0 0
  %1269 = vmatpush1.bf16.msra.mxu0 0
  %1270 = vmatprep.subr.bf16.mxu0 0
  %1271 = vmatpush1.bf16.msra.mxu0 0
  %1272 = vmatprep.subr.bf16.mxu0 0
  %1273 = vmatpush1.bf16.msra.mxu0 0
  %1274 = vmatprep.subr.bf16.mxu0 0
  %1275 = vmatpush1.bf16.msra.mxu0 0
  %1276 = vmatprep.subr.bf16.mxu0 0
  %1277 = vmatpush1.bf16.msra.mxu0 0
  %1278 = vmatprep.subr.bf16.mxu0 0
  %1279 = vmatpush1.bf16.msra.mxu0 0
  %1280 = vmatprep.subr.bf16.mxu0 0
  %1281 = vmatpush1.bf16.msra.mxu0 0
  %1282 = vmatprep.subr.bf16.mxu0 0
  %1283 = vmatpush1.bf16.msra.mxu0 0
  %1284 = vmatprep.subr.bf16.mxu0 0
  %1285 = vmatpush1.bf16.msra.mxu0 0
  %1286 = vmatprep.subr.bf16.mxu0 0
  %1287 = vmatpush1.bf16.msra.mxu0 0
  %1288 = vmatprep.subr.bf16.mxu0 0
  %1289 = vmatpush1.bf16.msra.mxu0 0
  %1290 = vmatprep.subr.bf16.mxu0 0
  %1291 = vmatpush1.bf16.msra.mxu0 0
  %1292 = vmatprep.subr.bf16.mxu0 0
  %1293 = vmatpush1.bf16.msra.mxu0 0
  %1294 = vmatprep.subr.bf16.mxu0 0
  %1295 = vmatpush1.bf16.msra.mxu0 0
  %1296 = vmatprep.subr.bf16.mxu0 0
  %1297 = vmatpush1.bf16.msra.mxu0 0
  %1298 = vmatprep.mubr.bf16.mxu0 0
  %1299 = vmatmul.mubr.bf16.gmra.mrb[0].mxu0 %v1264
  %v1300 = vpop.f32.mrb[0].mxu0
  %v1301 = vadd.f32 %v1252, %v1300
  %v1302 = vpop.f32.mrb[0].mxu0
  %v1303 = vpop.f32.mrb[0].mxu0
  %v1304 = vpop.f32.mrb[0].mxu0
  %1305 = vdwg.mxu0
  %v1306 = vadd.f32 %v1240, %v1301
  %v1307 = vxor.u32 %v1306, 2147483648
  %v1308 = vmul.f32 %v1307, 1.442695
  %v1309 = vpow.pop %v1308
  %v1310 = vadd.f32 %v1309, 1.0
  %v1311 = vrcp.pop %v1310
  %v1312 = vmul.f32 1.0, %v1311
  %1314 = vrot.lane.b32.xlu0 %v1301, 96
  %v1315 = vpop.permute.xlu0 %1314
  %v1317 = vmul.f32 %v1312, %v1315
  %1319 = vrot.lane.b32.xlu0 %v1317, 32
  %v1320 = vpop.permute.xlu0 %1319
  %v1322 = vadd.f32 %v1240, %v1320
  %v1323 = vtanh.pop %v1322
  %v1324 = vsub.f32 1.0, %v1312
  %1326 = vrot.lane.b32.xlu0 %v1323, 112
  %v1327 = vpop.permute.xlu0 %1326
  %v1329 = vmul.f32 %v1324, %v1327
  %v1330 = vmul.f32 %v1312, %v1231
  %v1331 = vadd.f32 %v1329, %v1330
  %v1332 = vpack.c.bf16 %v1239, %v1239
  %v1333 = vld [vmem:[%s6] sm:$0xf]
  %v1334 = vld [vmem:[%s6 + $0x4] sm:$0xf]
  %v1335 = vld [vmem:[%s7] sm:$0x1]
  %v1337 = vlaneseq
  %v1338 = vshrl.u32 %v1337, 7
  %v1339 = vsub.s32 0, %v1338
  %v1340 = vrot.slane %v1335, %v1339
  %1343 = vrot.lane.b32.xlu0 %v1332, 64
  %v1344 = vpop.permute.xlu0 %1343
  %v1347 = vunpack.c.l.b16 %v1333
  %v1348 = vunpack.c.l.b16 %v1334
  %v1349 = vpack.c.b16 %v1348, %v1347
  %v1352 = vsel %vm148, %v1344, 0
  %1354 = vmatprep.subr.bf16.mxu0 0
  %1355 = vmatpush1.bf16.msra.mxu0 %v1349
  %1356 = vmatprep.subr.bf16.mxu0 0
  %1357 = vmatpush1.bf16.msra.mxu0 0
  %1358 = vmatprep.subr.bf16.mxu0 0
  %1359 = vmatpush1.bf16.msra.mxu0 0
  %1360 = vmatprep.subr.bf16.mxu0 0
  %1361 = vmatpush1.bf16.msra.mxu0 0
  %1362 = vmatprep.subr.bf16.mxu0 0
  %1363 = vmatpush1.bf16.msra.mxu0 0
  %1364 = vmatprep.subr.bf16.mxu0 0
  %1365 = vmatpush1.bf16.msra.mxu0 0
  %1366 = vmatprep.subr.bf16.mxu0 0
  %1367 = vmatpush1.bf16.msra.mxu0 0
  %1368 = vmatprep.subr.bf16.mxu0 0
  %1369 = vmatpush1.bf16.msra.mxu0 0
  %1370 = vmatprep.subr.bf16.mxu0 0
  %1371 = vmatpush1.bf16.msra.mxu0 0
  %1372 = vmatprep.subr.bf16.mxu0 0
  %1373 = vmatpush1.bf16.msra.mxu0 0
  %1374 = vmatprep.subr.bf16.mxu0 0
  %1375 = vmatpush1.bf16.msra.mxu0 0
  %1376 = vmatprep.subr.bf16.mxu0 0
  %1377 = vmatpush1.bf16.msra.mxu0 0
  %1378 = vmatprep.subr.bf16.mxu0 0
  %1379 = vmatpush1.bf16.msra.mxu0 0
  %1380 = vmatprep.subr.bf16.mxu0 0
  %1381 = vmatpush1.bf16.msra.mxu0 0
  %1382 = vmatprep.subr.bf16.mxu0 0
  %1383 = vmatpush1.bf16.msra.mxu0 0
  %1384 = vmatprep.subr.bf16.mxu0 0
  %1385 = vmatpush1.bf16.msra.mxu0 0
  %1386 = vmatprep.mubr.bf16.mxu0 0
  %1387 = vmatmul.mubr.bf16.gmra.mrb[0].mxu0 %v1352
  %v1388 = vpop.f32.mrb[0].mxu0
  %v1389 = vadd.f32 %v1340, %v1388
  %v1390 = vpop.f32.mrb[0].mxu0
  %v1391 = vpop.f32.mrb[0].mxu0
  %v1392 = vpop.f32.mrb[0].mxu0
  %1393 = vdwg.mxu0
  %1395 = vrot.lane.b32.xlu0 %v1389, 48
  %v1396 = vpop.permute.xlu0 %1395
  %v1398 = vadd.f32 %v1241, %v1396
  %v1399 = vxor.u32 %v1398, 2147483648
  %v1400 = vmul.f32 %v1399, 1.442695
  %v1401 = vpow.pop %v1400
  %v1402 = vadd.f32 %v1401, 1.0
  %v1403 = vrcp.pop %v1402
  %v1404 = vmul.f32 1.0, %v1403
  %1405 = vrot.lane.b32.xlu0 %v1389, 16
  %v1406 = vpop.permute.xlu0 %1405
  %v1408 = vmul.f32 %v1404, %v1406
  %1410 = vrot.lane.b32.xlu0 %v1408, 32
  %v1411 = vpop.permute.xlu0 %1410
  %v1413 = vadd.f32 %v1241, %v1411
  %v1414 = vtanh.pop %v1413
  %v1415 = vsub.f32 1.0, %v1404
  %1417 = vrot.lane.b32.xlu0 %v1414, 112
  %v1418 = vpop.permute.xlu0 %1417
  %v1420 = vmul.f32 %v1415, %v1418
  %v1421 = vmul.f32 %v1404, %v1239
  %v1422 = vadd.f32 %v1420, %v1421
  %1424 = vset.pattern.permute.xlu0 0
  %1425 = vperm.xlu0 %1424, %v1242
  %v1426 = vpop.permute.xlu0 %1425
  %v1428 = vmul.f32 %v1426, %v1331
  %1430 = vrot.lane.b32.xlu0 %v1428, 112
  %v1431 = vpop.permute.xlu0 %1430
  %s1433 = scalar_lea.vmem %s8, 10
  %1434 = vst.msk [vmem:[%s1433] sm:$0x3] %vm312, %v1431
  %1436 = vset.pattern.permute.xlu0 0
  %1437 = vperm.xlu0 %1436, %v1243
  %v1438 = vpop.permute.xlu0 %1437
  %v1440 = vmul.f32 %v1438, %v1422
  %1442 = vrot.lane.b32.xlu0 %v1440, 64
  %v1443 = vpop.permute.xlu0 %1442
  %s1445 = scalar_lea.vmem %s9, 4
  %1446 = vst.msk [vmem:[%s1445] sm:$0x3] %vm312, %v1443
  %v1447 = vsub.f32 1.0, %v1242
  %1449 = vset.pattern.permute.xlu0 0
  %1450 = vperm.xlu0 %1449, %v1447
  %v1451 = vpop.permute.xlu0 %1450
  %v1453 = vmul.f32 %v1451, %v1231
  %v1454 = vadd.f32 %v1428, %v1453
  %v1455 = vsub.f32 1.0, %v1243
  %1457 = vset.pattern.permute.xlu0 0
  %1458 = vperm.xlu0 %1457, %v1455
  %v1459 = vpop.permute.xlu0 %1458
  %v1461 = vmul.f32 %v1459, %v1239
  %v1462 = vadd.f32 %v1440, %v1461
  %v1463 = vld [vmem:[#allocation2 + $0xc] sm:$0x3]
  %v1464 = vld [vmem:[#allocation2 + $0x2] sm:$0x3]
  %v1465 = vld [vmem:[%s346] sm:$0x3]
  %v1466 = vld [vmem:[%s344] sm:$0x3]
  %v1467 = vpack.c.bf16 %v1454, %v1454
  %v1468 = vld [vmem:[%s4] sm:$0xf]
  %v1469 = vld [vmem:[%s4 + $0x4] sm:$0xf]
  %v1470 = vld [vmem:[%s5] sm:$0x1]
  %v1472 = vlaneseq
  %v1473 = vshrl.u32 %v1472, 7
  %v1474 = vsub.s32 0, %v1473
  %v1475 = vrot.slane %v1470, %v1474
  %1478 = vrot.lane.b32.xlu0 %v1467, 112
  %v1479 = vpop.permute.xlu0 %1478
  %v1482 = vunpack.c.l.b16 %v1468
  %v1483 = vunpack.c.l.b16 %v1469
  %v1484 = vpack.c.b16 %v1483, %v1482
  %v1487 = vsel %vm148, %v1479, 0
  %1489 = vmatprep.subr.bf16.mxu0 0
  %1490 = vmatpush1.bf16.msra.mxu0 %v1484
  %1491 = vmatprep.subr.bf16.mxu0 0
  %1492 = vmatpush1.bf16.msra.mxu0 0
  %1493 = vmatprep.subr.bf16.mxu0 0
  %1494 = vmatpush1.bf16.msra.mxu0 0
  %1495 = vmatprep.subr.bf16.mxu0 0
  %1496 = vmatpush1.bf16.msra.mxu0 0
  %1497 = vmatprep.subr.bf16.mxu0 0
  %1498 = vmatpush1.bf16.msra.mxu0 0
  %1499 = vmatprep.subr.bf16.mxu0 0
  %1500 = vmatpush1.bf16.msra.mxu0 0
  %1501 = vmatprep.subr.bf16.mxu0 0
  %1502 = vmatpush1.bf16.msra.mxu0 0
  %1503 = vmatprep.subr.bf16.mxu0 0
  %1504 = vmatpush1.bf16.msra.mxu0 0
  %1505 = vmatprep.subr.bf16.mxu0 0
  %1506 = vmatpush1.bf16.msra.mxu0 0
  %1507 = vmatprep.subr.bf16.mxu0 0
  %1508 = vmatpush1.bf16.msra.mxu0 0
  %1509 = vmatprep.subr.bf16.mxu0 0
  %1510 = vmatpush1.bf16.msra.mxu0 0
  %1511 = vmatprep.subr.bf16.mxu0 0
  %1512 = vmatpush1.bf16.msra.mxu0 0
  %1513 = vmatprep.subr.bf16.mxu0 0
  %1514 = vmatpush1.bf16.msra.mxu0 0
  %1515 = vmatprep.subr.bf16.mxu0 0
  %1516 = vmatpush1.bf16.msra.mxu0 0
  %1517 = vmatprep.subr.bf16.mxu0 0
  %1518 = vmatpush1.bf16.msra.mxu0 0
  %1519 = vmatprep.subr.bf16.mxu0 0
  %1520 = vmatpush1.bf16.msra.mxu0 0
  %1521 = vmatprep.mubr.bf16.mxu0 0
  %1522 = vmatmul.mubr.bf16.gmra.mrb[0].mxu0 %v1487
  %v1523 = vpop.f32.mrb[0].mxu0
  %v1524 = vadd.f32 %v1475, %v1523
  %v1525 = vpop.f32.mrb[0].mxu0
  %v1526 = vpop.f32.mrb[0].mxu0
  %v1527 = vpop.f32.mrb[0].mxu0
  %1528 = vdwg.mxu0
  %v1529 = vadd.f32 %v1463, %v1524
  %v1530 = vxor.u32 %v1529, 2147483648
  %v1531 = vmul.f32 %v1530, 1.442695
  %v1532 = vpow.pop %v1531
  %v1533 = vadd.f32 %v1532, 1.0
  %v1534 = vrcp.pop %v1533
  %v1535 = vmul.f32 1.0, %v1534
  %1537 = vrot.lane.b32.xlu0 %v1524, 96
  %v1538 = vpop.permute.xlu0 %1537
  %v1540 = vmul.f32 %v1535, %v1538
  %1542 = vrot.lane.b32.xlu0 %v1540, 32
  %v1543 = vpop.permute.xlu0 %1542
  %v1545 = vadd.f32 %v1463, %v1543
  %v1546 = vtanh.pop %v1545
  %v1547 = vsub.f32 1.0, %v1535
  %1549 = vrot.lane.b32.xlu0 %v1546, 112
  %v1550 = vpop.permute.xlu0 %1549
  %v1552 = vmul.f32 %v1547, %v1550
  %v1553 = vmul.f32 %v1535, %v1454
  %v1554 = vadd.f32 %v1552, %v1553
  %v1555 = vpack.c.bf16 %v1462, %v1462
  %v1556 = vld [vmem:[%s6] sm:$0xf]
  %v1557 = vld [vmem:[%s6 + $0x4] sm:$0xf]
  %v1558 = vld [vmem:[%s7] sm:$0x1]
  %v1560 = vlaneseq
  %v1561 = vshrl.u32 %v1560, 7
  %v1562 = vsub.s32 0, %v1561
  %v1563 = vrot.slane %v1558, %v1562
  %1566 = vrot.lane.b32.xlu0 %v1555, 64
  %v1567 = vpop.permute.xlu0 %1566
  %v1570 = vunpack.c.l.b16 %v1556
  %v1571 = vunpack.c.l.b16 %v1557
  %v1572 = vpack.c.b16 %v1571, %v1570
  %v1575 = vsel %vm148, %v1567, 0
  %1577 = vmatprep.subr.bf16.mxu0 0
  %1578 = vmatpush1.bf16.msra.mxu0 %v1572
  %1579 = vmatprep.subr.bf16.mxu0 0
  %1580 = vmatpush1.bf16.msra.mxu0 0
  %1581 = vmatprep.subr.bf16.mxu0 0
  %1582 = vmatpush1.bf16.msra.mxu0 0
  %1583 = vmatprep.subr.bf16.mxu0 0
  %1584 = vmatpush1.bf16.msra.mxu0 0
  %1585 = vmatprep.subr.bf16.mxu0 0
  %1586 = vmatpush1.bf16.msra.mxu0 0
  %1587 = vmatprep.subr.bf16.mxu0 0
  %1588 = vmatpush1.bf16.msra.mxu0 0
  %1589 = vmatprep.subr.bf16.mxu0 0
  %1590 = vmatpush1.bf16.msra.mxu0 0
  %1591 = vmatprep.subr.bf16.mxu0 0
  %1592 = vmatpush1.bf16.msra.mxu0 0
  %1593 = vmatprep.subr.bf16.mxu0 0
  %1594 = vmatpush1.bf16.msra.mxu0 0
  %1595 = vmatprep.subr.bf16.mxu0 0
  %1596 = vmatpush1.bf16.msra.mxu0 0
  %1597 = vmatprep.subr.bf16.mxu0 0
  %1598 = vmatpush1.bf16.msra.mxu0 0
  %1599 = vmatprep.subr.bf16.mxu0 0
  %1600 = vmatpush1.bf16.msra.mxu0 0
  %1601 = vmatprep.subr.bf16.mxu0 0
  %1602 = vmatpush1.bf16.msra.mxu0 0
  %1603 = vmatprep.subr.bf16.mxu0 0
  %1604 = vmatpush1.bf16.msra.mxu0 0
  %1605 = vmatprep.subr.bf16.mxu0 0
  %1606 = vmatpush1.bf16.msra.mxu0 0
  %1607 = vmatprep.subr.bf16.mxu0 0
  %1608 = vmatpush1.bf16.msra.mxu0 0
  %1609 = vmatprep.mubr.bf16.mxu0 0
  %1610 = vmatmul.mubr.bf16.gmra.mrb[0].mxu0 %v1575
  %v1611 = vpop.f32.mrb[0].mxu0
  %v1612 = vadd.f32 %v1563, %v1611
  %v1613 = vpop.f32.mrb[0].mxu0
  %v1614 = vpop.f32.mrb[0].mxu0
  %v1615 = vpop.f32.mrb[0].mxu0
  %1616 = vdwg.mxu0
  %1618 = vrot.lane.b32.xlu0 %v1612, 48
  %v1619 = vpop.permute.xlu0 %1618
  %v1621 = vadd.f32 %v1464, %v1619
  %v1622 = vxor.u32 %v1621, 2147483648
  %v1623 = vmul.f32 %v1622, 1.442695
  %v1624 = vpow.pop %v1623
  %v1625 = vadd.f32 %v1624, 1.0
  %v1626 = vrcp.pop %v1625
  %v1627 = vmul.f32 1.0, %v1626
  %1628 = vrot.lane.b32.xlu0 %v1612, 16
  %v1629 = vpop.permute.xlu0 %1628
  %v1631 = vmul.f32 %v1627, %v1629
  %1633 = vrot.lane.b32.xlu0 %v1631, 32
  %v1634 = vpop.permute.xlu0 %1633
  %v1636 = vadd.f32 %v1464, %v1634
  %v1637 = vtanh.pop %v1636
  %v1638 = vsub.f32 1.0, %v1627
  %1640 = vrot.lane.b32.xlu0 %v1637, 112
  %v1641 = vpop.permute.xlu0 %1640
  %v1643 = vmul.f32 %v1638, %v1641
  %v1644 = vmul.f32 %v1627, %v1462
  %v1645 = vadd.f32 %v1643, %v1644
  %1647 = vset.pattern.permute.xlu0 0
  %1648 = vperm.xlu0 %1647, %v1465
  %v1649 = vpop.permute.xlu0 %1648
  %v1651 = vmul.f32 %v1649, %v1554
  %1653 = vrot.lane.b32.xlu0 %v1651, 112
  %v1654 = vpop.permute.xlu0 %1653
  %s1656 = scalar_lea.vmem %s8, 12
  %1657 = vst.msk [vmem:[%s1656] sm:$0x3] %vm312, %v1654
  %1659 = vset.pattern.permute.xlu0 0
  %1660 = vperm.xlu0 %1659, %v1466
  %v1661 = vpop.permute.xlu0 %1660
  %v1663 = vmul.f32 %v1661, %v1645
  %1665 = vrot.lane.b32.xlu0 %v1663, 64
  %v1666 = vpop.permute.xlu0 %1665
  %s1668 = scalar_lea.vmem %s9, 2
  %1669 = vst.msk [vmem:[%s1668] sm:$0x3] %vm312, %v1666
  %v1670 = vsub.f32 1.0, %v1465
  %1672 = vset.pattern.permute.xlu0 0
  %1673 = vperm.xlu0 %1672, %v1670
  %v1674 = vpop.permute.xlu0 %1673
  %v1676 = vmul.f32 %v1674, %v1454
  %v1677 = vadd.f32 %v1651, %v1676
  %v1678 = vsub.f32 1.0, %v1466
  %1680 = vset.pattern.permute.xlu0 0
  %1681 = vperm.xlu0 %1680, %v1678
  %v1682 = vpop.permute.xlu0 %1681
  %v1684 = vmul.f32 %v1682, %v1462
  %v1685 = vadd.f32 %v1663, %v1684
  %v1686 = vld [vmem:[#allocation2 + $0xe] sm:$0x3]
  %v1687 = vld [vmem:[#allocation2] sm:$0x3]
  %v1688 = vld [vmem:[%s131] sm:$0x3]
  %v1689 = vld [vmem:[%s1] sm:$0x3]
  %v1690 = vpack.c.bf16 %v1677, %v1677
  %v1691 = vld [vmem:[%s4] sm:$0xf]
  %v1692 = vld [vmem:[%s4 + $0x4] sm:$0xf]
  %v1693 = vld [vmem:[%s5] sm:$0x1]
  %v1695 = vlaneseq
  %v1696 = vshrl.u32 %v1695, 7
  %v1697 = vsub.s32 0, %v1696
  %v1698 = vrot.slane %v1693, %v1697
  %1701 = vrot.lane.b32.xlu0 %v1690, 112
  %v1702 = vpop.permute.xlu0 %1701
  %v1705 = vunpack.c.l.b16 %v1691
  %v1706 = vunpack.c.l.b16 %v1692
  %v1707 = vpack.c.b16 %v1706, %v1705
  %v1710 = vsel %vm148, %v1702, 0
  %1712 = vmatprep.subr.bf16.mxu0 0
  %1713 = vmatpush1.bf16.msra.mxu0 %v1707
  %1714 = vmatprep.subr.bf16.mxu0 0
  %1715 = vmatpush1.bf16.msra.mxu0 0
  %1716 = vmatprep.subr.bf16.mxu0 0
  %1717 = vmatpush1.bf16.msra.mxu0 0
  %1718 = vmatprep.subr.bf16.mxu0 0
  %1719 = vmatpush1.bf16.msra.mxu0 0
  %1720 = vmatprep.subr.bf16.mxu0 0
  %1721 = vmatpush1.bf16.msra.mxu0 0
  %1722 = vmatprep.subr.bf16.mxu0 0
  %1723 = vmatpush1.bf16.msra.mxu0 0
  %1724 = vmatprep.subr.bf16.mxu0 0
  %1725 = vmatpush1.bf16.msra.mxu0 0
  %1726 = vmatprep.subr.bf16.mxu0 0
  %1727 = vmatpush1.bf16.msra.mxu0 0
  %1728 = vmatprep.subr.bf16.mxu0 0
  %1729 = vmatpush1.bf16.msra.mxu0 0
  %1730 = vmatprep.subr.bf16.mxu0 0
  %1731 = vmatpush1.bf16.msra.mxu0 0
  %1732 = vmatprep.subr.bf16.mxu0 0
  %1733 = vmatpush1.bf16.msra.mxu0 0
  %1734 = vmatprep.subr.bf16.mxu0 0
  %1735 = vmatpush1.bf16.msra.mxu0 0
  %1736 = vmatprep.subr.bf16.mxu0 0
  %1737 = vmatpush1.bf16.msra.mxu0 0
  %1738 = vmatprep.subr.bf16.mxu0 0
  %1739 = vmatpush1.bf16.msra.mxu0 0
  %1740 = vmatprep.subr.bf16.mxu0 0
  %1741 = vmatpush1.bf16.msra.mxu0 0
  %1742 = vmatprep.subr.bf16.mxu0 0
  %1743 = vmatpush1.bf16.msra.mxu0 0
  %1744 = vmatprep.mubr.bf16.mxu0 0
  %1745 = vmatmul.mubr.bf16.gmra.mrb[0].mxu0 %v1710
  %v1746 = vpop.f32.mrb[0].mxu0
  %v1747 = vadd.f32 %v1698, %v1746
  %v1748 = vpop.f32.mrb[0].mxu0
  %v1749 = vpop.f32.mrb[0].mxu0
  %v1750 = vpop.f32.mrb[0].mxu0
  %1751 = vdwg.mxu0
  %v1752 = vadd.f32 %v1686, %v1747
  %v1753 = vxor.u32 %v1752, 2147483648
  %v1754 = vmul.f32 %v1753, 1.442695
  %v1755 = vpow.pop %v1754
  %v1756 = vadd.f32 %v1755, 1.0
  %v1757 = vrcp.pop %v1756
  %v1758 = vmul.f32 1.0, %v1757
  %1760 = vrot.lane.b32.xlu0 %v1747, 96
  %v1761 = vpop.permute.xlu0 %1760
  %v1763 = vmul.f32 %v1758, %v1761
  %1765 = vrot.lane.b32.xlu0 %v1763, 32
  %v1766 = vpop.permute.xlu0 %1765
  %v1768 = vadd.f32 %v1686, %v1766
  %v1769 = vtanh.pop %v1768
  %v1770 = vsub.f32 1.0, %v1758
  %1772 = vrot.lane.b32.xlu0 %v1769, 112
  %v1773 = vpop.permute.xlu0 %1772
  %v1775 = vmul.f32 %v1770, %v1773
  %v1776 = vmul.f32 %v1758, %v1677
  %v1777 = vadd.f32 %v1775, %v1776
  %v1778 = vpack.c.bf16 %v1685, %v1685
  %v1779 = vld [vmem:[%s6] sm:$0xf]
  %v1780 = vld [vmem:[%s6 + $0x4] sm:$0xf]
  %v1781 = vld [vmem:[%s7] sm:$0x1]
  %v1783 = vlaneseq
  %v1784 = vshrl.u32 %v1783, 7
  %v1785 = vsub.s32 0, %v1784
  %v1786 = vrot.slane %v1781, %v1785
  %1789 = vrot.lane.b32.xlu0 %v1778, 64
  %v1790 = vpop.permute.xlu0 %1789
  %v1793 = vunpack.c.l.b16 %v1779
  %v1794 = vunpack.c.l.b16 %v1780
  %v1795 = vpack.c.b16 %v1794, %v1793
  %v1798 = vsel %vm148, %v1790, 0
  %1800 = vmatprep.subr.bf16.mxu0 0
  %1801 = vmatpush1.bf16.msra.mxu0 %v1795
  %1802 = vmatprep.subr.bf16.mxu0 0
  %1803 = vmatpush1.bf16.msra.mxu0 0
  %1804 = vmatprep.subr.bf16.mxu0 0
  %1805 = vmatpush1.bf16.msra.mxu0 0
  %1806 = vmatprep.subr.bf16.mxu0 0
  %1807 = vmatpush1.bf16.msra.mxu0 0
  %1808 = vmatprep.subr.bf16.mxu0 0
  %1809 = vmatpush1.bf16.msra.mxu0 0
  %1810 = vmatprep.subr.bf16.mxu0 0
  %1811 = vmatpush1.bf16.msra.mxu0 0
  %1812 = vmatprep.subr.bf16.mxu0 0
  %1813 = vmatpush1.bf16.msra.mxu0 0
  %1814 = vmatprep.subr.bf16.mxu0 0
  %1815 = vmatpush1.bf16.msra.mxu0 0
  %1816 = vmatprep.subr.bf16.mxu0 0
  %1817 = vmatpush1.bf16.msra.mxu0 0
  %1818 = vmatprep.subr.bf16.mxu0 0
  %1819 = vmatpush1.bf16.msra.mxu0 0
  %1820 = vmatprep.subr.bf16.mxu0 0
  %1821 = vmatpush1.bf16.msra.mxu0 0
  %1822 = vmatprep.subr.bf16.mxu0 0
  %1823 = vmatpush1.bf16.msra.mxu0 0
  %1824 = vmatprep.subr.bf16.mxu0 0
  %1825 = vmatpush1.bf16.msra.mxu0 0
  %1826 = vmatprep.subr.bf16.mxu0 0
  %1827 = vmatpush1.bf16.msra.mxu0 0
  %1828 = vmatprep.subr.bf16.mxu0 0
  %1829 = vmatpush1.bf16.msra.mxu0 0
  %1830 = vmatprep.subr.bf16.mxu0 0
  %1831 = vmatpush1.bf16.msra.mxu0 0
  %1832 = vmatprep.mubr.bf16.mxu0 0
  %1833 = vmatmul.mubr.bf16.gmra.mrb[0].mxu0 %v1798
  %v1834 = vpop.f32.mrb[0].mxu0
  %v1835 = vadd.f32 %v1786, %v1834
  %v1836 = vpop.f32.mrb[0].mxu0
  %v1837 = vpop.f32.mrb[0].mxu0
  %v1838 = vpop.f32.mrb[0].mxu0
  %1839 = vdwg.mxu0
  %1841 = vrot.lane.b32.xlu0 %v1835, 48
  %v1842 = vpop.permute.xlu0 %1841
  %v1844 = vadd.f32 %v1687, %v1842
  %v1845 = vxor.u32 %v1844, 2147483648
  %v1846 = vmul.f32 %v1845, 1.442695
  %v1847 = vpow.pop %v1846
  %v1848 = vadd.f32 %v1847, 1.0
  %v1849 = vrcp.pop %v1848
  %v1850 = vmul.f32 1.0, %v1849
  %1851 = vrot.lane.b32.xlu0 %v1835, 16
  %v1852 = vpop.permute.xlu0 %1851
  %v1854 = vmul.f32 %v1850, %v1852
  %1856 = vrot.lane.b32.xlu0 %v1854, 32
  %v1857 = vpop.permute.xlu0 %1856
  %v1859 = vadd.f32 %v1687, %v1857
  %v1860 = vtanh.pop %v1859
  %v1861 = vsub.f32 1.0, %v1850
  %1863 = vrot.lane.b32.xlu0 %v1860, 112
  %v1864 = vpop.permute.xlu0 %1863
  %v1866 = vmul.f32 %v1861, %v1864
  %v1867 = vmul.f32 %v1850, %v1685
  %v1868 = vadd.f32 %v1866, %v1867
  %1870 = vset.pattern.permute.xlu0 0
  %1871 = vperm.xlu0 %1870, %v1688
  %v1872 = vpop.permute.xlu0 %1871
  %v1874 = vmul.f32 %v1872, %v1777
  %1876 = vrot.lane.b32.xlu0 %v1874, 112
  %v1877 = vpop.permute.xlu0 %1876
  %s1879 = scalar_lea.vmem %s8, 14
  %1880 = vst.msk [vmem:[%s1879] sm:$0x3] %vm312, %v1877
  %1882 = vset.pattern.permute.xlu0 0
  %1883 = vperm.xlu0 %1882, %v1689
  %v1884 = vpop.permute.xlu0 %1883
  %v1886 = vmul.f32 %v1884, %v1868
  %1888 = vrot.lane.b32.xlu0 %v1886, 64
  %v1889 = vpop.permute.xlu0 %1888
  %1891 = vst.msk [vmem:[%s9] sm:$0x3] %vm312, %v1889
  %v1892 = vsub.f32 1.0, %v1688
  %1894 = vset.pattern.permute.xlu0 0
  %1895 = vperm.xlu0 %1894, %v1892
  %v1896 = vpop.permute.xlu0 %1895
  %v1898 = vmul.f32 %v1896, %v1677
  %v1899 = vadd.f32 %v1874, %v1898
  %v1900 = vsub.f32 1.0, %v1689
  %1902 = vset.pattern.permute.xlu0 0
  %1903 = vperm.xlu0 %1902, %v1900
  %v1904 = vpop.permute.xlu0 %1903
  %v1906 = vmul.f32 %v1904, %v1685
  %v1907 = vadd.f32 %v1886, %v1906
  %1909 = vrot.lane.b32.xlu0 %v1899, 112
  %v1910 = vpop.permute.xlu0 %1909
  %1912 = vst.msk [vmem:[%s10] sm:$0x3] %vm312, %v1910
  %1914 = vrot.lane.b32.xlu0 %v1907, 64
  %v1915 = vpop.permute.xlu0 %1914
  %1917 = vst.msk [vmem:[%s11] sm:$0x3] %vm312, %v1915
  // Predicated region
  $region34: #{_lambda_.6} parent=0 // pred_check
    _
  $region35: #{_lambda_.6} parent=0 // pred_check_branch
    %1919 = sbr.rel (0) target = $region37
  $region36: #{_lambda_.6} parent=0 // pred_region
    _
  $region37: #{_lambda_.6} parent=0 // pred_fallthru
    _
  // Predicated region
  $region38: #{_lambda_.6} parent=0 // pred_check
    _
  $region39: #{_lambda_.6} parent=0 // pred_check_branch
    %1921 = sbr.rel (0) target = $region41
  $region40: #{_lambda_.6} parent=0 // pred_region
    _
  $region41: #{_lambda_.6} parent=0 // pred_fallthru
    _
  // Predicated region
  $region42: #{_lambda_.6} parent=0 // pred_check
    _
  $region43: #{_lambda_.6} parent=0 // pred_check_branch
    %1923 = sbr.rel (0) target = $region45
  $region44: #{_lambda_.6} parent=0 // pred_region
    _
  $region45: #{_lambda_.6} parent=0 // pred_fallthru
    _
  // Predicated region
  $region46: #{_lambda_.6} parent=0 // pred_check
    _
  $region47: #{_lambda_.6} parent=0 // pred_check_branch
    %1925 = sbr.rel (0) target = $region49
  $region48: #{_lambda_.6} parent=0 // pred_region
    _
  $region49: #{_lambda_.6} parent=0 // pred_fallthru
    _
  // Predicated region
  $region50: #{_lambda_.6} parent=0 // pred_check
    _
  $region51: #{_lambda_.6} parent=0 // pred_check_branch
    %1927 = sbr.rel (0) target = $region53
  $region52: #{_lambda_.6} parent=0 // pred_region
    _
  $region53: #{_lambda_.6} parent=0 // pred_fallthru
    _
  // Predicated region
  $region54: #{_lambda_.6} parent=0 // pred_check
    _
  $region55: #{_lambda_.6} parent=0 // pred_check_branch
    %1929 = sbr.rel (0) target = $region57
  $region56: #{_lambda_.6} parent=0 // pred_region
    _
  $region57: #{_lambda_.6} parent=0 // pred_fallthru
    _
  // Predicated region
  $region58: #{_lambda_.6} parent=0 // pred_check
    _
  $region59: #{_lambda_.6} parent=0 // pred_check_branch
    %1931 = sbr.rel (0) target = $region61
  $region60: #{_lambda_.6} parent=0 // pred_region
    _
  $region61: #{_lambda_.6} parent=0 // pred_fallthru
    _
  // Predicated region
  $region62: #{_lambda_.6} parent=0 // pred_check
    _
  $region63: #{_lambda_.6} parent=0 // pred_check_branch
    %1933 = sbr.rel (0) target = $region65
  $region64: #{_lambda_.6} parent=0 // pred_region
    _
  $region65: #{_lambda_.6} parent=0 // pred_fallthru
    _

// kernel: _lambda_.7
$region0: #{_lambda_.7}
  #allocation0 [shape = 'u32[]', space=smem, size = 0x4, offset = 0x4, fixed_abs, tag = 'smem constant byte address 0x4 - core index']
  #allocation1 [shape = 'u32[144,128]{1,0:T(1,128)}', space=vmem, size = 0x12000, scoped, tag = 'internal scratch']
  %s0 = inlined_call_operand.vmem [shape: f32[2,32], index: 0, kind: input, shape index: {}]
  %s1 = inlined_call_operand.vmem [shape: bf16[32,32], index: 1, kind: input, shape index: {}]
  %s2 = inlined_call_operand.vmem [shape: f32[2,8,32], index: 2, kind: input, shape index: {}]
  %s3 = inlined_call_operand.vmem [shape: f32[2,8,32], index: 3, kind: input, shape index: {}]
  %s4 = inlined_call_operand.vmem [shape: f32[2,8], index: 4, kind: input, shape index: {}]
  %s5 = inlined_call_operand.vmem [shape: bf16[32,32], index: 5, kind: input, shape index: {}]
  %s6 = inlined_call_operand.vmem [shape: bf16[32,32], index: 6, kind: input, shape index: {}]
  %s7 = inlined_call_operand.vmem [shape: f32[1,32], index: 7, kind: input, shape index: {}]
  %s8 = inlined_call_operand.vmem [shape: bf16[32,8], index: 8, kind: input, shape index: {}]
  %s9 = inlined_call_operand.vmem [shape: f32[1,8], index: 9, kind: input, shape index: {}]
  %s10 = inlined_call_operand.vmem [shape: bf16[8,32], index: 10, kind: input, shape index: {}]
  %s11 = inlined_call_operand.vmem [shape: bf16[32,1024], index: 11, kind: input, shape index: {}]
  %s12 = inlined_call_operand.vmem [shape: f32[1,32], index: 12, kind: input, shape index: {}]
  %s13 = inlined_call_operand.vmem [shape: bf16[32,64], index: 13, kind: input, shape index: {}]
  %s14 = inlined_call_operand.vmem [shape: bf16[64,8], index: 14, kind: input, shape index: {}]
  %s15 = inlined_call_operand.vmem [shape: bf16[8,64], index: 15, kind: input, shape index: {}]
  %s16 = inlined_call_operand.hbm [shape: f32[2,8], index: 16, kind: output, shape index: {0}]
  %s17 = inlined_call_operand.hbm [shape: f32[2,8], index: 17, kind: output, shape index: {1}]
  %s18 = inlined_call_operand.vmem [shape: s32[2,1], index: 18, kind: output, shape index: {2}]
  %s19 = inlined_call_operand.hbm [shape: f32[2,64], index: 19, kind: output, shape index: {3}]
  %s20 = inlined_call_operand.hbm [shape: s32[2,5], index: 20, kind: output, shape index: {4}]
  %21 = xla_tuple %s16, %s17, %s18, %s19, %s20
  %s22 = sld [smem:[#allocation0]]
  $region106: #{_lambda_.7} parent=0
    _
  %s24 = ssub.s32 1, %s22
  %s25 = scalar_select 0, %s24, %s22
  $region1: #{_lambda_.7} parent=0
    #allocation2 [shape = 'u8[1024]{0}', space=vmem, size = 0x400, scoped, tag = 'output window, operand 0, single buffered']
    #allocation3 [shape = 's32[1]{0}', space=sflag, size = 0x4, scoped, tag = 'scoped memory for _lambda_.7']
    #allocation4 [shape = 'u8[1024]{0}', space=vmem, size = 0x400, scoped, tag = 'output window, operand 1, single buffered']
    #allocation5 [shape = 's32[1]{0}', space=sflag, size = 0x4, scoped, tag = 'scoped memory for _lambda_.7']
    #allocation6 [shape = 'u8[1024]{0}', space=vmem, size = 0x400, scoped, tag = 'output window, operand 3, single buffered']
    #allocation7 [shape = 'u8[1024]{0}', space=vmem, size = 0x400, scoped, tag = 'output window, operand 4, single buffered']
    #allocation8 [shape = 's32[1]{0}', space=sflag, size = 0x4, scoped, tag = 'scoped memory for _lambda_.7']
    %26 = vsyncpa [#allocation3], 0
    %27 = vsyncpa [#allocation5], 0
    %28 = vsyncpa [#allocation8], 0
    // Predicated region
    $region2: #{_lambda_.7} parent=1 // pred_check
      _
    $region3: #{_lambda_.7} parent=1 // pred_check_branch
      %30 = sbr.rel (0) target = $region5
    $region4: #{_lambda_.7} parent=1 // pred_region
      _
    $region5: #{_lambda_.7} parent=1 // pred_fallthru
      _
    // Predicated region
    $region6: #{_lambda_.7} parent=1 // pred_check
      _
    $region7: #{_lambda_.7} parent=1 // pred_check_branch
      %32 = sbr.rel (0) target = $region9
    $region8: #{_lambda_.7} parent=1 // pred_region
      _
    $region9: #{_lambda_.7} parent=1 // pred_fallthru
      _
    // Predicated region
    $region10: #{_lambda_.7} parent=1 // pred_check
      _
    $region11: #{_lambda_.7} parent=1 // pred_check_branch
      %34 = sbr.rel (0) target = $region13
    $region12: #{_lambda_.7} parent=1 // pred_region
      _
    $region13: #{_lambda_.7} parent=1 // pred_fallthru
      _
    // Predicated region
    $region14: #{_lambda_.7} parent=1 // pred_check
      _
    $region15: #{_lambda_.7} parent=1 // pred_check_branch
      %36 = sbr.rel (0) target = $region17
    $region16: #{_lambda_.7} parent=1 // pred_region
      _
    $region17: #{_lambda_.7} parent=1 // pred_fallthru
      _
    // Predicated region
    $region18: #{_lambda_.7} parent=1 // pred_check
      _
    $region19: #{_lambda_.7} parent=1 // pred_check_branch
      %38 = sbr.rel (0) target = $region21
    $region20: #{_lambda_.7} parent=1 // pred_region
      _
    $region21: #{_lambda_.7} parent=1 // pred_fallthru
      _
    // Predicated region
    $region22: #{_lambda_.7} parent=1 // pred_check
      _
    $region23: #{_lambda_.7} parent=1 // pred_check_branch
      %40 = sbr.rel (0) target = $region25
    $region24: #{_lambda_.7} parent=1 // pred_region
      _
    $region25: #{_lambda_.7} parent=1 // pred_fallthru
      _
    // Predicated region
    $region26: #{_lambda_.7} parent=1 // pred_check
      _
    $region27: #{_lambda_.7} parent=1 // pred_check_branch
      %42 = sbr.rel (0) target = $region29
    $region28: #{_lambda_.7} parent=1 // pred_region
      _
    $region29: #{_lambda_.7} parent=1 // pred_fallthru
      _
    // Predicated region
    $region30: #{_lambda_.7} parent=1 // pred_check
      _
    $region31: #{_lambda_.7} parent=1 // pred_check_branch
      %44 = sbr.rel (0) target = $region33
    $region32: #{_lambda_.7} parent=1 // pred_region
      _
    $region33: #{_lambda_.7} parent=1 // pred_fallthru
      _
    // Predicated region
    $region34: #{_lambda_.7} parent=1 // pred_check
      _
    $region35: #{_lambda_.7} parent=1 // pred_check_branch
      %46 = sbr.rel (0) target = $region37
    $region36: #{_lambda_.7} parent=1 // pred_region
      _
    $region37: #{_lambda_.7} parent=1 // pred_fallthru
      _
    // Predicated region
    $region38: #{_lambda_.7} parent=1 // pred_check
      _
    $region39: #{_lambda_.7} parent=1 // pred_check_branch
      %48 = sbr.rel (0) target = $region41
    $region40: #{_lambda_.7} parent=1 // pred_region
      _
    $region41: #{_lambda_.7} parent=1 // pred_fallthru
      _
    // Predicated region
    $region42: #{_lambda_.7} parent=1 // pred_check
      _
    $region43: #{_lambda_.7} parent=1 // pred_check_branch
      %50 = sbr.rel (0) target = $region45
    $region44: #{_lambda_.7} parent=1 // pred_region
      _
    $region45: #{_lambda_.7} parent=1 // pred_fallthru
      _
    // Predicated region
    $region46: #{_lambda_.7} parent=1 // pred_check
      _
    $region47: #{_lambda_.7} parent=1 // pred_check_branch
      %52 = sbr.rel (0) target = $region49
    $region48: #{_lambda_.7} parent=1 // pred_region
      _
    $region49: #{_lambda_.7} parent=1 // pred_fallthru
      _
    // Predicated region
    $region50: #{_lambda_.7} parent=1 // pred_check
      _
    $region51: #{_lambda_.7} parent=1 // pred_check_branch
      %54 = sbr.rel (0) target = $region53
    $region52: #{_lambda_.7} parent=1 // pred_region
      _
    $region53: #{_lambda_.7} parent=1 // pred_fallthru
      _
    // Predicated region
    $region54: #{_lambda_.7} parent=1 // pred_check
      _
    $region55: #{_lambda_.7} parent=1 // pred_check_branch
      %56 = sbr.rel (0) target = $region57
    $region56: #{_lambda_.7} parent=1 // pred_region
      _
    $region57: #{_lambda_.7} parent=1 // pred_fallthru
      _
    // Predicated region
    $region58: #{_lambda_.7} parent=1 // pred_check
      _
    $region59: #{_lambda_.7} parent=1 // pred_check_branch
      %58 = sbr.rel (0) target = $region61
    $region60: #{_lambda_.7} parent=1 // pred_region
      _
    $region61: #{_lambda_.7} parent=1 // pred_fallthru
      _
    // Predicated region
    $region62: #{_lambda_.7} parent=1 // pred_check
      _
    $region63: #{_lambda_.7} parent=1 // pred_check_branch
      %60 = sbr.rel (0) target = $region65
    $region64: #{_lambda_.7} parent=1 // pred_region
      _
    $region65: #{_lambda_.7} parent=1 // pred_fallthru
      _
    %v62 = vld [vmem:[%s0] sm:$0x3]
    %v63 = vpack.c.bf16 %v62, %v62
    %v64 = vld [vmem:[%s1] sm:$0xf]
    %v65 = vld [vmem:[%s1 + $0x4] sm:$0xf]
    %v66 = vld [vmem:[%s1 + $0x8] sm:$0xf]
    %v67 = vld [vmem:[%s1 + $0xc] sm:$0xf]
    %v72 = vunpack.c.l.b16 %v64
    %v73 = vunpack.c.l.b16 %v65
    %v74 = vunpack.c.l.b16 %v66
    %v75 = vunpack.c.l.b16 %v67
    %v76 = vpack.c.b16 %v73, %v72
    %v77 = vpack.c.b16 %v75, %v74
    %vm80 = vcmask 261120
    %v82 = vsel %vm80, %v63, 0
    %84 = vmatprep.subr.bf16.mxu0 0
    %85 = vmatpush1.bf16.msra.mxu0 %v76
    %86 = vmatprep.subr.bf16.mxu0 0
    %87 = vmatpush1.bf16.msra.mxu0 %v77
    %88 = vmatprep.subr.bf16.mxu0 0
    %89 = vmatpush1.bf16.msra.mxu0 0
    %90 = vmatprep.subr.bf16.mxu0 0
    %91 = vmatpush1.bf16.msra.mxu0 0
    %92 = vmatprep.subr.bf16.mxu0 0
    %93 = vmatpush1.bf16.msra.mxu0 0
    %94 = vmatprep.subr.bf16.mxu0 0
    %95 = vmatpush1.bf16.msra.mxu0 0
    %96 = vmatprep.subr.bf16.mxu0 0
    %97 = vmatpush1.bf16.msra.mxu0 0
    %98 = vmatprep.subr.bf16.mxu0 0
    %99 = vmatpush1.bf16.msra.mxu0 0
    %100 = vmatprep.subr.bf16.mxu0 0
    %101 = vmatpush1.bf16.msra.mxu0 0
    %102 = vmatprep.subr.bf16.mxu0 0
    %103 = vmatpush1.bf16.msra.mxu0 0
    %104 = vmatprep.subr.bf16.mxu0 0
    %105 = vmatpush1.bf16.msra.mxu0 0
    %106 = vmatprep.subr.bf16.mxu0 0
    %107 = vmatpush1.bf16.msra.mxu0 0
    %108 = vmatprep.subr.bf16.mxu0 0
    %109 = vmatpush1.bf16.msra.mxu0 0
    %110 = vmatprep.subr.bf16.mxu0 0
    %111 = vmatpush1.bf16.msra.mxu0 0
    %112 = vmatprep.subr.bf16.mxu0 0
    %113 = vmatpush1.bf16.msra.mxu0 0
    %114 = vmatprep.subr.bf16.mxu0 0
    %115 = vmatpush1.bf16.msra.mxu0 0
    %116 = vmatprep.mubr.bf16.mxu0 0
    %117 = vmatmul.mubr.bf16.gmra.mrb[0].mxu0 %v82
    %v118 = vpop.f32.mrb[0].mxu0
    %v119 = vadd.f32 0.0, %v118
    %v120 = vpop.f32.mrb[0].mxu0
    %v121 = vpop.f32.mrb[0].mxu0
    %v122 = vpop.f32.mrb[0].mxu0
    %123 = vdwg.mxu0
    %v124 = vld [vmem:[%s2] sm:$0xff]
    %v125 = vld [vmem:[%s2 + $0x8] sm:$0xff]
    %v128 = vunpack.c.l.s4 1966171168
    %v129 = vunpack.c.0.s8 %v128
    %v130 = vlaneseq
    %v131 = vshrl.u32 %v130, 7
    %v132 = vsub.s32 %v129, %v131
    %v133 = vrot.slane %v119, %v132
    %v134 = vcombine.high %v133, %v133
    %v136 = vunpack.c.l.s4 1966171168
    %v137 = vunpack.c.0.s8 %v136
    %v138 = vlaneseq
    %v139 = vshrl.u32 %v138, 7
    %v140 = vsub.s32 %v137, %v139
    %v141 = vrot.slane %v133, %v140
    %v143 = vunpack.c.l.s4 1966171168
    %v144 = vunpack.c.0.s8 %v143
    %v145 = vlaneseq
    %v146 = vshrl.u32 %v145, 7
    %v147 = vsub.s32 %v144, %v146
    %v148 = vrot.slane %v134, %v147
    %v149 = vlaneseq
    %v150 = vshrl.u32 %v149, 7
    %v151 = vsub.s32 0, %v150
    %v152 = vrot.slane %v141, %v151
    %v153 = vlaneseq
    %v154 = vshrl.u32 %v153, 7
    %v155 = vsub.s32 0, %v154
    %v156 = vrot.slane %v148, %v155
    %v159 = vmul.f32 %v152, %v124
    %v160 = vmul.f32 %v156, %v125
    %v161 = vsel %vm80, %v159, 0.0
    %162 = vadd.xlane.f32.xlu0 %v161
    %v163 = vpop.xlane.xlu0 %162
    %v164 = vsel %vm80, %v160, 0.0
    %165 = vadd.xlane.f32.xlu0 %v164
    %v166 = vpop.xlane.xlu0 %165
    %v167 = vld [vmem:[%s4] sm:$0x3]
    %vm168 = vcmp.gt.f32.partialorder %v167, 0.5
    %v171 = vlaneseq
    %v172 = vand.u32 %v171, 127
    %v173 = vlaneseq
    %v174 = vshrl.u32 %v173, 7
    %v175 = vsub.s32 %v172, %v174
    %v176 = vrot.slane %v163, %v175
    %v177 = vlaneseq
    %v178 = vshrl.u32 %v177, 7
    %v179 = vsub.s32 %v172, %v178
    %v180 = vrot.slane %v166, %v179
    %vm181 = vcmask 1041409
    %v182 = vsel %vm181, %v180, %v176
    %v184 = vsel %vm168, %v182, -1e+30
    %vm185 = vcmask 58368
    %v186 = vsel %vm185, %v184, -inf
    %187 = vmax.xlane.f32.xlu0 %v186
    %v188 = vpop.xlane.xlu0 %187
    %v189 = vsub.f32 %v184, %v188
    %v190 = vmul.f32 %v189, 1.442695
    %v191 = vpow.pop %v190
    %v192 = vmul.f32 %v191, %v167
    %v193 = vsel %vm185, %v192, 0.0
    %194 = vadd.xlane.f32.xlu0 %v193
    %v195 = vpop.xlane.xlu0 %194
    %v196 = vmax.f32 %v195, 1e-30
    %v197 = vrcp.pop %v196
    %v198 = vmul.f32 %v192, %v197
    %199 = vst.msk [vmem:[#allocation2] sm:$0x3] %vm185, %v198
    %v200 = vlaneseq
    %v201 = vshrl.u32 %v200, 7
    %v202 = vsub.s32 0, %v201
    %v203 = vrot.slane %v198, %v202
    %205 = vbcast.lane.b32.xlu0 %v203, 256
    %v206 = vpop.permute.xlu0 %205
    %v207 = vlaneseq
    %v208 = vshrl.u32 %v207, 7
    %v209 = vsub.s32 1, %v208
    %v210 = vrot.slane %v198, %v209
    %212 = vbcast.lane.b32.xlu0 %v210, 256
    %v213 = vpop.permute.xlu0 %212
    %v214 = vmul.f32 %v206, %v124
    %v215 = vmul.f32 %v213, %v125
    %v216 = vsel %vm80, %v214, 0.0
    %v217 = vrot.slane %v216, 4
    %v218 = vadd.f32 %v216, %v217
    %v219 = vrot.slane %v218, 2
    %v220 = vadd.f32 %v218, %v219
    %v221 = vrot.slane %v220, 1
    %v222 = vadd.f32 %v220, %v221
    %v223 = vsel %vm80, %v215, 0.0
    %v224 = vrot.slane %v223, 4
    %v225 = vadd.f32 %v223, %v224
    %v226 = vrot.slane %v225, 2
    %v227 = vadd.f32 %v225, %v226
    %v228 = vrot.slane %v227, 1
    %v229 = vadd.f32 %v227, %v228
    %v230 = vld [vmem:[%s3] sm:$0xff]
    %v231 = vld [vmem:[%s3 + $0x8] sm:$0xff]
    %v232 = vmul.f32 %v206, %v230
    %v233 = vmul.f32 %v213, %v231
    %v234 = vsel %vm80, %v232, 0.0
    %v235 = vrot.slane %v234, 4
    %v236 = vadd.f32 %v234, %v235
    %v237 = vrot.slane %v236, 2
    %v238 = vadd.f32 %v236, %v237
    %v239 = vrot.slane %v238, 1
    %v240 = vadd.f32 %v238, %v239
    %v241 = vsel %vm80, %v233, 0.0
    %v242 = vrot.slane %v241, 4
    %v243 = vadd.f32 %v241, %v242
    %v244 = vrot.slane %v243, 2
    %v245 = vadd.f32 %v243, %v244
    %v246 = vrot.slane %v245, 1
    %v247 = vadd.f32 %v245, %v246
    %v248 = vpack.c.bf16 %v222, %v222
    %v249 = vpack.c.bf16 %v229, %v229
    %v250 = vld [vmem:[%s5] sm:$0xf]
    %v251 = vld [vmem:[%s5 + $0x4] sm:$0xf]
    %v252 = vld [vmem:[%s5 + $0x8] sm:$0xf]
    %v253 = vld [vmem:[%s5 + $0xc] sm:$0xf]
    %v254 = vpack.c.bf16 %v240, %v240
    %v255 = vpack.c.bf16 %v247, %v247
    %v256 = vld [vmem:[%s6] sm:$0xf]
    %v257 = vld [vmem:[%s6 + $0x4] sm:$0xf]
    %v258 = vld [vmem:[%s6 + $0x8] sm:$0xf]
    %v259 = vld [vmem:[%s6 + $0xc] sm:$0xf]
    %v262 = vunpack.c.l.b16 %v254
    %v263 = vunpack.c.l.b16 %v255
    %v264 = vsel %vm181, %v263, %v262
    %v265 = vpack.c.b16 %v264, %v264
    %v270 = vunpack.c.l.b16 %v256
    %v271 = vunpack.c.l.b16 %v257
    %v272 = vunpack.c.l.b16 %v258
    %v273 = vunpack.c.l.b16 %v259
    %v274 = vpack.c.b16 %v271, %v270
    %v275 = vpack.c.b16 %v273, %v272
    %v279 = vsel %vm80, %v265, 0
    %281 = vmatprep.subr.bf16.mxu0 0
    %282 = vmatpush1.bf16.msra.mxu0 %v274
    %283 = vmatprep.subr.bf16.mxu0 0
    %284 = vmatpush1.bf16.msra.mxu0 %v275
    %285 = vmatprep.subr.bf16.mxu0 0
    %286 = vmatpush1.bf16.msra.mxu0 0
    %287 = vmatprep.subr.bf16.mxu0 0
    %288 = vmatpush1.bf16.msra.mxu0 0
    %289 = vmatprep.subr.bf16.mxu0 0
    %290 = vmatpush1.bf16.msra.mxu0 0
    %291 = vmatprep.subr.bf16.mxu0 0
    %292 = vmatpush1.bf16.msra.mxu0 0
    %293 = vmatprep.subr.bf16.mxu0 0
    %294 = vmatpush1.bf16.msra.mxu0 0
    %295 = vmatprep.subr.bf16.mxu0 0
    %296 = vmatpush1.bf16.msra.mxu0 0
    %297 = vmatprep.subr.bf16.mxu0 0
    %298 = vmatpush1.bf16.msra.mxu0 0
    %299 = vmatprep.subr.bf16.mxu0 0
    %300 = vmatpush1.bf16.msra.mxu0 0
    %301 = vmatprep.subr.bf16.mxu0 0
    %302 = vmatpush1.bf16.msra.mxu0 0
    %303 = vmatprep.subr.bf16.mxu0 0
    %304 = vmatpush1.bf16.msra.mxu0 0
    %305 = vmatprep.subr.bf16.mxu0 0
    %306 = vmatpush1.bf16.msra.mxu0 0
    %307 = vmatprep.subr.bf16.mxu0 0
    %308 = vmatpush1.bf16.msra.mxu0 0
    %309 = vmatprep.subr.bf16.mxu0 0
    %310 = vmatpush1.bf16.msra.mxu0 0
    %311 = vmatprep.subr.bf16.mxu0 0
    %312 = vmatpush1.bf16.msra.mxu0 0
    %313 = vmatprep.mubr.bf16.mxu0 0
    %314 = vmatmul.mubr.bf16.gmra.mrb[0].mxu0 %v279
    %v315 = vpop.f32.mrb[0].mxu0
    %v316 = vadd.f32 0.0, %v315
    %v317 = vpop.f32.mrb[0].mxu0
    %v318 = vpop.f32.mrb[0].mxu0
    %v319 = vpop.f32.mrb[0].mxu0
    %320 = vdwg.mxu0
    %v323 = vunpack.c.l.b16 %v248
    %v324 = vunpack.c.l.b16 %v249
    %v325 = vsel %vm181, %v324, %v323
    %v326 = vpack.c.b16 %v325, %v325
    %v331 = vunpack.c.l.b16 %v250
    %v332 = vunpack.c.l.b16 %v251
    %v333 = vunpack.c.l.b16 %v252
    %v334 = vunpack.c.l.b16 %v253
    %v335 = vpack.c.b16 %v332, %v331
    %v336 = vpack.c.b16 %v334, %v333
    %v340 = vsel %vm80, %v326, 0
    %342 = vmatprep.subr.bf16.mxu0 0
    %343 = vmatpush1.bf16.msra.mxu0 %v335
    %344 = vmatprep.subr.bf16.mxu0 0
    %345 = vmatpush1.bf16.msra.mxu0 %v336
    %346 = vmatprep.subr.bf16.mxu0 0
    %347 = vmatpush1.bf16.msra.mxu0 0
    %348 = vmatprep.subr.bf16.mxu0 0
    %349 = vmatpush1.bf16.msra.mxu0 0
    %350 = vmatprep.subr.bf16.mxu0 0
    %351 = vmatpush1.bf16.msra.mxu0 0
    %352 = vmatprep.subr.bf16.mxu0 0
    %353 = vmatpush1.bf16.msra.mxu0 0
    %354 = vmatprep.subr.bf16.mxu0 0
    %355 = vmatpush1.bf16.msra.mxu0 0
    %356 = vmatprep.subr.bf16.mxu0 0
    %357 = vmatpush1.bf16.msra.mxu0 0
    %358 = vmatprep.subr.bf16.mxu0 0
    %359 = vmatpush1.bf16.msra.mxu0 0
    %360 = vmatprep.subr.bf16.mxu0 0
    %361 = vmatpush1.bf16.msra.mxu0 0
    %362 = vmatprep.subr.bf16.mxu0 0
    %363 = vmatpush1.bf16.msra.mxu0 0
    %364 = vmatprep.subr.bf16.mxu0 0
    %365 = vmatpush1.bf16.msra.mxu0 0
    %366 = vmatprep.subr.bf16.mxu0 0
    %367 = vmatpush1.bf16.msra.mxu0 0
    %368 = vmatprep.subr.bf16.mxu0 0
    %369 = vmatpush1.bf16.msra.mxu0 0
    %370 = vmatprep.subr.bf16.mxu0 0
    %371 = vmatpush1.bf16.msra.mxu0 0
    %372 = vmatprep.subr.bf16.mxu0 0
    %373 = vmatpush1.bf16.msra.mxu0 0
    %374 = vmatprep.mubr.bf16.mxu0 0
    %375 = vmatmul.mubr.bf16.gmra.mrb[0].mxu0 %v340
    %v376 = vpop.f32.mrb[0].mxu0
    %v377 = vadd.f32 %v316, %v376
    %v378 = vpop.f32.mrb[0].mxu0
    %v379 = vpop.f32.mrb[0].mxu0
    %v380 = vpop.f32.mrb[0].mxu0
    %381 = vdwg.mxu0
    %v382 = vld [vmem:[%s7] sm:$0x1]
    %v384 = vlaneseq
    %v385 = vshrl.u32 %v384, 7
    %v386 = vsub.s32 0, %v385
    %v387 = vrot.slane %v382, %v386
    %v389 = vadd.f32 %v377, %v387
    %v390 = vmax.f32 %v389, 0.0
    %v391 = vpack.c.bf16 %v390, %v390
    %v392 = vld [vmem:[%s8] sm:$0xf]
    %v393 = vld [vmem:[%s8 + $0x4] sm:$0xf]
    %v394 = vld [vmem:[%s8 + $0x8] sm:$0xf]
    %v395 = vld [vmem:[%s8 + $0xc] sm:$0xf]
    %v396 = vld [vmem:[%s9] sm:$0x1]
    %v398 = vlaneseq
    %v399 = vshrl.u32 %v398, 7
    %v400 = vsub.s32 0, %v399
    %v401 = vrot.slane %v396, %v400
    %v407 = vunpack.c.l.b16 %v392
    %v408 = vunpack.c.l.b16 %v393
    %v409 = vunpack.c.l.b16 %v394
    %v410 = vunpack.c.l.b16 %v395
    %v411 = vpack.c.b16 %v408, %v407
    %v412 = vpack.c.b16 %v410, %v409
    %v416 = vsel %vm80, %v391, 0
    %418 = vmatprep.subr.bf16.mxu0 0
    %419 = vmatpush1.bf16.msra.mxu0 %v411
    %420 = vmatprep.subr.bf16.mxu0 0
    %421 = vmatpush1.bf16.msra.mxu0 %v412
    %422 = vmatprep.subr.bf16.mxu0 0
    %423 = vmatpush1.bf16.msra.mxu0 0
    %424 = vmatprep.subr.bf16.mxu0 0
    %425 = vmatpush1.bf16.msra.mxu0 0
    %426 = vmatprep.subr.bf16.mxu0 0
    %427 = vmatpush1.bf16.msra.mxu0 0
    %428 = vmatprep.subr.bf16.mxu0 0
    %429 = vmatpush1.bf16.msra.mxu0 0
    %430 = vmatprep.subr.bf16.mxu0 0
    %431 = vmatpush1.bf16.msra.mxu0 0
    %432 = vmatprep.subr.bf16.mxu0 0
    %433 = vmatpush1.bf16.msra.mxu0 0
    %434 = vmatprep.subr.bf16.mxu0 0
    %435 = vmatpush1.bf16.msra.mxu0 0
    %436 = vmatprep.subr.bf16.mxu0 0
    %437 = vmatpush1.bf16.msra.mxu0 0
    %438 = vmatprep.subr.bf16.mxu0 0
    %439 = vmatpush1.bf16.msra.mxu0 0
    %440 = vmatprep.subr.bf16.mxu0 0
    %441 = vmatpush1.bf16.msra.mxu0 0
    %442 = vmatprep.subr.bf16.mxu0 0
    %443 = vmatpush1.bf16.msra.mxu0 0
    %444 = vmatprep.subr.bf16.mxu0 0
    %445 = vmatpush1.bf16.msra.mxu0 0
    %446 = vmatprep.subr.bf16.mxu0 0
    %447 = vmatpush1.bf16.msra.mxu0 0
    %448 = vmatprep.subr.bf16.mxu0 0
    %449 = vmatpush1.bf16.msra.mxu0 0
    %450 = vmatprep.mubr.bf16.mxu0 0
    %451 = vmatmul.mubr.bf16.gmra.mrb[0].mxu0 %v416
    %v452 = vpop.f32.mrb[0].mxu0
    %v453 = vadd.f32 %v401, %v452
    %v454 = vpop.f32.mrb[0].mxu0
    %v455 = vpop.f32.mrb[0].mxu0
    %v456 = vpop.f32.mrb[0].mxu0
    %457 = vdwg.mxu0
    %458 = vst.msk [vmem:[#allocation4] sm:$0x3] %vm185, %v453
    %v459 = vsel %vm185, %v453, -inf
    %460 = vmax.xlane.f32.xlu0 %v459
    %v461 = vpop.xlane.xlu0 %460
    %v462 = vsub.f32 %v453, %v461
    %v463 = vmul.f32 %v462, 1.442695
    %v464 = vpow.pop %v463
    %v465 = vsel %vm185, %v464, 0.0
    %466 = vadd.xlane.f32.xlu0 %v465
    %v467 = vpop.xlane.xlu0 %466
    %v468 = vrcp.pop %v467
    %v469 = vmul.f32 %v464, %v468
    %vm470 = vcmp.eq.f32.partialorder %v453, %v461
    %v471 = vsel %vm470, %v172, 8
    %v472 = vsel %vm185, %v471, 2147483647
    %v473 = vand.u32 %v472, 65535
    %v474 = vshra.s32 %v472, 16
    %v475 = vcvt.s32.f32 %v473
    %v476 = vcvt.s32.f32 %v474
    %477 = vmin.xlane.f32.xlu0 %v476
    %v478 = vpop.xlane.xlu0 %477
    %vm479 = vcmp.eq.f32.partialorder %v476, %v478
    %v480 = vsel %vm479, %v475, inf
    %481 = vmin.xlane.f32.xlu0 %v480
    %v482 = vpop.xlane.xlu0 %481
    %v483 = vcvt.f32.s32 %v482
    %v484 = vcvt.f32.s32 %v478
    %v485 = vshll.u32 %v484, 16
    %v486 = vadd.s32 %v485, %v483
    %vm487 = vcmask 1024
    %488 = vst.msk [vmem:[%s18] sm:$0x3] %vm487, %v486
    %v489 = vpack.c.bf16 %v469, %v469
    %v490 = vld [vmem:[%s10] sm:$0xf]
    %vm491 = vcmask 64512
    %v493 = vsel %vm491, %v489, 0
    %vm495 = vcmask 1043456
    %v497 = vsel %vm495, %v490, 0
    %499 = vmatprep.subr.bf16.mxu0 0
    %500 = vmatpush1.bf16.msra.mxu0 %v497
    %501 = vmatprep.subr.bf16.mxu0 0
    %502 = vmatpush1.bf16.msra.mxu0 0
    %503 = vmatprep.subr.bf16.mxu0 0
    %504 = vmatpush1.bf16.msra.mxu0 0
    %505 = vmatprep.subr.bf16.mxu0 0
    %506 = vmatpush1.bf16.msra.mxu0 0
    %507 = vmatprep.subr.bf16.mxu0 0
    %508 = vmatpush1.bf16.msra.mxu0 0
    %509 = vmatprep.subr.bf16.mxu0 0
    %510 = vmatpush1.bf16.msra.mxu0 0
    %511 = vmatprep.subr.bf16.mxu0 0
    %512 = vmatpush1.bf16.msra.mxu0 0
    %513 = vmatprep.subr.bf16.mxu0 0
    %514 = vmatpush1.bf16.msra.mxu0 0
    %515 = vmatprep.subr.bf16.mxu0 0
    %516 = vmatpush1.bf16.msra.mxu0 0
    %517 = vmatprep.subr.bf16.mxu0 0
    %518 = vmatpush1.bf16.msra.mxu0 0
    %519 = vmatprep.subr.bf16.mxu0 0
    %520 = vmatpush1.bf16.msra.mxu0 0
    %521 = vmatprep.subr.bf16.mxu0 0
    %522 = vmatpush1.bf16.msra.mxu0 0
    %523 = vmatprep.subr.bf16.mxu0 0
    %524 = vmatpush1.bf16.msra.mxu0 0
    %525 = vmatprep.subr.bf16.mxu0 0
    %526 = vmatpush1.bf16.msra.mxu0 0
    %527 = vmatprep.subr.bf16.mxu0 0
    %528 = vmatpush1.bf16.msra.mxu0 0
    %529 = vmatprep.subr.bf16.mxu0 0
    %530 = vmatpush1.bf16.msra.mxu0 0
    %531 = vmatprep.mubr.bf16.mxu0 0
    %532 = vmatmul.mubr.bf16.gmra.mrb[0].mxu0 %v493
    %v533 = vpop.f32.mrb[0].mxu0
    %v534 = vadd.f32 0.0, %v533
    %v535 = vpop.f32.mrb[0].mxu0
    %v536 = vpop.f32.mrb[0].mxu0
    %v537 = vpop.f32.mrb[0].mxu0
    %538 = vdwg.mxu0
    %v539 = vld [vmem:[%s11] sm:$0xff]
    %v540 = vld [vmem:[%s11 + $0x8] sm:$0xff]
    %v541 = vld [vmem:[%s11 + $0x10] sm:$0xff]
    %v542 = vld [vmem:[%s11 + $0x18] sm:$0xff]
    %v543 = vld [vmem:[%s11 + $0x20] sm:$0xff]
    %v544 = vld [vmem:[%s11 + $0x28] sm:$0xff]
    %v545 = vld [vmem:[%s11 + $0x30] sm:$0xff]
    %v546 = vld [vmem:[%s11 + $0x38] sm:$0xff]
    %v547 = vld [vmem:[%s11 + $0x40] sm:$0xff]
    %v548 = vld [vmem:[%s11 + $0x48] sm:$0xff]
    %v549 = vld [vmem:[%s11 + $0x50] sm:$0xff]
    %v550 = vld [vmem:[%s11 + $0x58] sm:$0xff]
    %v551 = vld [vmem:[%s11 + $0x60] sm:$0xff]
    %v552 = vld [vmem:[%s11 + $0x68] sm:$0xff]
    %v553 = vld [vmem:[%s11 + $0x70] sm:$0xff]
    %v554 = vld [vmem:[%s11 + $0x78] sm:$0xff]
    %v571 = vunpack.c.l.b16 %v539
    %v572 = vunpack.c.h.b16 %v539
    %v573 = vunpack.c.l.b16 %v540
    %v574 = vunpack.c.h.b16 %v540
    %v575 = vunpack.c.l.b16 %v541
    %v576 = vunpack.c.h.b16 %v541
    %v577 = vunpack.c.l.b16 %v542
    %v578 = vunpack.c.h.b16 %v542
    %v579 = vunpack.c.l.b16 %v543
    %v580 = vunpack.c.h.b16 %v543
    %v581 = vunpack.c.l.b16 %v544
    %v582 = vunpack.c.h.b16 %v544
    %v583 = vunpack.c.l.b16 %v545
    %v584 = vunpack.c.h.b16 %v545
    %v585 = vunpack.c.l.b16 %v546
    %v586 = vunpack.c.h.b16 %v546
    %v587 = vunpack.c.l.b16 %v547
    %v588 = vunpack.c.h.b16 %v547
    %v589 = vunpack.c.l.b16 %v548
    %v590 = vunpack.c.h.b16 %v548
    %v591 = vunpack.c.l.b16 %v549
    %v592 = vunpack.c.h.b16 %v549
    %v593 = vunpack.c.l.b16 %v550
    %v594 = vunpack.c.h.b16 %v550
    %v595 = vunpack.c.l.b16 %v551
    %v596 = vunpack.c.h.b16 %v551
    %v597 = vunpack.c.l.b16 %v552
    %v598 = vunpack.c.h.b16 %v552
    %v599 = vunpack.c.l.b16 %v553
    %v600 = vunpack.c.h.b16 %v553
    %v601 = vunpack.c.l.b16 %v554
    %v602 = vunpack.c.h.b16 %v554
    %v603 = vpack.c.b16 %v579, %v571
    %v604 = vpack.c.b16 %v580, %v572
    %v605 = vpack.c.b16 %v581, %v573
    %v606 = vpack.c.b16 %v582, %v574
    %v607 = vpack.c.b16 %v583, %v575
    %v608 = vpack.c.b16 %v584, %v576
    %v609 = vpack.c.b16 %v585, %v577
    %v610 = vpack.c.b16 %v586, %v578
    %v611 = vpack.c.b16 %v595, %v587
    %v612 = vpack.c.b16 %v596, %v588
    %v613 = vpack.c.b16 %v597, %v589
    %v614 = vpack.c.b16 %v598, %v590
    %v615 = vpack.c.b16 %v599, %v591
    %v616 = vpack.c.b16 %v600, %v592
    %v617 = vpack.c.b16 %v601, %v593
    %v618 = vpack.c.b16 %v602, %v594
    %635 = vmatprep.subr.bf16.mxu0 %v604
    %636 = vmatpush1.bf16.msra.mxu0 %v603
    %637 = vmatprep.subr.bf16.mxu0 %v612
    %638 = vmatpush1.bf16.msra.mxu0 %v611
    %639 = vmatprep.subr.bf16.mxu0 0
    %640 = vmatpush1.bf16.msra.mxu0 0
    %641 = vmatprep.subr.bf16.mxu0 0
    %642 = vmatpush1.bf16.msra.mxu0 0
    %643 = vmatprep.subr.bf16.mxu0 0
    %644 = vmatpush1.bf16.msra.mxu0 0
    %645 = vmatprep.subr.bf16.mxu0 0
    %646 = vmatpush1.bf16.msra.mxu0 0
    %647 = vmatprep.subr.bf16.mxu0 0
    %648 = vmatpush1.bf16.msra.mxu0 0
    %649 = vmatprep.subr.bf16.mxu0 0
    %650 = vmatpush1.bf16.msra.mxu0 0
    %651 = vmatprep.subr.bf16.mxu0 0
    %652 = vmatpush1.bf16.msra.mxu0 0
    %653 = vmatprep.subr.bf16.mxu0 0
    %654 = vmatpush1.bf16.msra.mxu0 0
    %655 = vmatprep.subr.bf16.mxu0 0
    %656 = vmatpush1.bf16.msra.mxu0 0
    %657 = vmatprep.subr.bf16.mxu0 0
    %658 = vmatpush1.bf16.msra.mxu0 0
    %659 = vmatprep.subr.bf16.mxu0 0
    %660 = vmatpush1.bf16.msra.mxu0 0
    %661 = vmatprep.subr.bf16.mxu0 0
    %662 = vmatpush1.bf16.msra.mxu0 0
    %663 = vmatprep.subr.bf16.mxu0 0
    %664 = vmatpush1.bf16.msra.mxu0 0
    %665 = vmatprep.subr.bf16.mxu0 0
    %666 = vmatpush1.bf16.msra.mxu0 0
    %667 = vmatprep.mubr.bf16.mxu0 0
    %668 = vmatmul.mubr.bf16.gmra.mrb[0].mxu0 %v340
    %v669 = vpop.f32.mrb[0].mxu0
    %v670 = vadd.f32 0.0, %v669
    %v671 = vpop.f32.mrb[0].mxu0
    %v672 = vadd.f32 0.0, %v671
    %v673 = vpop.f32.mrb[0].mxu0
    %v674 = vpop.f32.mrb[0].mxu0
    %675 = vdwg.mxu0
    %676 = vmatprep.subr.bf16.mxu0 %v606
    %677 = vmatpush1.bf16.msra.mxu0 %v605
    %678 = vmatprep.subr.bf16.mxu0 %v614
    %679 = vmatpush1.bf16.msra.mxu0 %v613
    %680 = vmatprep.subr.bf16.mxu0 0
    %681 = vmatpush1.bf16.msra.mxu0 0
    %682 = vmatprep.subr.bf16.mxu0 0
    %683 = vmatpush1.bf16.msra.mxu0 0
    %684 = vmatprep.subr.bf16.mxu0 0
    %685 = vmatpush1.bf16.msra.mxu0 0
    %686 = vmatprep.subr.bf16.mxu0 0
    %687 = vmatpush1.bf16.msra.mxu0 0
    %688 = vmatprep.subr.bf16.mxu0 0
    %689 = vmatpush1.bf16.msra.mxu0 0
    %690 = vmatprep.subr.bf16.mxu0 0
    %691 = vmatpush1.bf16.msra.mxu0 0
    %692 = vmatprep.subr.bf16.mxu0 0
    %693 = vmatpush1.bf16.msra.mxu0 0
    %694 = vmatprep.subr.bf16.mxu0 0
    %695 = vmatpush1.bf16.msra.mxu0 0
    %696 = vmatprep.subr.bf16.mxu0 0
    %697 = vmatpush1.bf16.msra.mxu0 0
    %698 = vmatprep.subr.bf16.mxu0 0
    %699 = vmatpush1.bf16.msra.mxu0 0
    %700 = vmatprep.subr.bf16.mxu0 0
    %701 = vmatpush1.bf16.msra.mxu0 0
    %702 = vmatprep.subr.bf16.mxu0 0
    %703 = vmatpush1.bf16.msra.mxu0 0
    %704 = vmatprep.subr.bf16.mxu0 0
    %705 = vmatpush1.bf16.msra.mxu0 0
    %706 = vmatprep.subr.bf16.mxu0 0
    %707 = vmatpush1.bf16.msra.mxu0 0
    %708 = vmatprep.mubr.bf16.mxu0 0
    %709 = vmatmul.mubr.bf16.gmra.mrb[0].mxu0 %v340
    %v710 = vpop.f32.mrb[0].mxu0
    %v711 = vadd.f32 0.0, %v710
    %v712 = vpop.f32.mrb[0].mxu0
    %v713 = vadd.f32 0.0, %v712
    %v714 = vpop.f32.mrb[0].mxu0
    %v715 = vpop.f32.mrb[0].mxu0
    %716 = vdwg.mxu0
    %717 = vmatprep.subr.bf16.mxu0 %v608
    %718 = vmatpush1.bf16.msra.mxu0 %v607
    %719 = vmatprep.subr.bf16.mxu0 %v616
    %720 = vmatpush1.bf16.msra.mxu0 %v615
    %721 = vmatprep.subr.bf16.mxu0 0
    %722 = vmatpush1.bf16.msra.mxu0 0
    %723 = vmatprep.subr.bf16.mxu0 0
    %724 = vmatpush1.bf16.msra.mxu0 0
    %725 = vmatprep.subr.bf16.mxu0 0
    %726 = vmatpush1.bf16.msra.mxu0 0
    %727 = vmatprep.subr.bf16.mxu0 0
    %728 = vmatpush1.bf16.msra.mxu0 0
    %729 = vmatprep.subr.bf16.mxu0 0
    %730 = vmatpush1.bf16.msra.mxu0 0
    %731 = vmatprep.subr.bf16.mxu0 0
    %732 = vmatpush1.bf16.msra.mxu0 0
    %733 = vmatprep.subr.bf16.mxu0 0
    %734 = vmatpush1.bf16.msra.mxu0 0
    %735 = vmatprep.subr.bf16.mxu0 0
    %736 = vmatpush1.bf16.msra.mxu0 0
    %737 = vmatprep.subr.bf16.mxu0 0
    %738 = vmatpush1.bf16.msra.mxu0 0
    %739 = vmatprep.subr.bf16.mxu0 0
    %740 = vmatpush1.bf16.msra.mxu0 0
    %741 = vmatprep.subr.bf16.mxu0 0
    %742 = vmatpush1.bf16.msra.mxu0 0
    %743 = vmatprep.subr.bf16.mxu0 0
    %744 = vmatpush1.bf16.msra.mxu0 0
    %745 = vmatprep.subr.bf16.mxu0 0
    %746 = vmatpush1.bf16.msra.mxu0 0
    %747 = vmatprep.subr.bf16.mxu0 0
    %748 = vmatpush1.bf16.msra.mxu0 0
    %749 = vmatprep.mubr.bf16.mxu0 0
    %750 = vmatmul.mubr.bf16.gmra.mrb[0].mxu0 %v340
    %v751 = vpop.f32.mrb[0].mxu0
    %v752 = vadd.f32 0.0, %v751
    %v753 = vpop.f32.mrb[0].mxu0
    %v754 = vadd.f32 0.0, %v753
    %v755 = vpop.f32.mrb[0].mxu0
    %v756 = vpop.f32.mrb[0].mxu0
    %757 = vdwg.mxu0
    %758 = vmatprep.subr.bf16.mxu0 %v610
    %759 = vmatpush1.bf16.msra.mxu0 %v609
    %760 = vmatprep.subr.bf16.mxu0 %v618
    %761 = vmatpush1.bf16.msra.mxu0 %v617
    %762 = vmatprep.subr.bf16.mxu0 0
    %763 = vmatpush1.bf16.msra.mxu0 0
    %764 = vmatprep.subr.bf16.mxu0 0
    %765 = vmatpush1.bf16.msra.mxu0 0
    %766 = vmatprep.subr.bf16.mxu0 0
    %767 = vmatpush1.bf16.msra.mxu0 0
    %768 = vmatprep.subr.bf16.mxu0 0
    %769 = vmatpush1.bf16.msra.mxu0 0
    %770 = vmatprep.subr.bf16.mxu0 0
    %771 = vmatpush1.bf16.msra.mxu0 0
    %772 = vmatprep.subr.bf16.mxu0 0
    %773 = vmatpush1.bf16.msra.mxu0 0
    %774 = vmatprep.subr.bf16.mxu0 0
    %775 = vmatpush1.bf16.msra.mxu0 0
    %776 = vmatprep.subr.bf16.mxu0 0
    %777 = vmatpush1.bf16.msra.mxu0 0
    %778 = vmatprep.subr.bf16.mxu0 0
    %779 = vmatpush1.bf16.msra.mxu0 0
    %780 = vmatprep.subr.bf16.mxu0 0
    %781 = vmatpush1.bf16.msra.mxu0 0
    %782 = vmatprep.subr.bf16.mxu0 0
    %783 = vmatpush1.bf16.msra.mxu0 0
    %784 = vmatprep.subr.bf16.mxu0 0
    %785 = vmatpush1.bf16.msra.mxu0 0
    %786 = vmatprep.subr.bf16.mxu0 0
    %787 = vmatpush1.bf16.msra.mxu0 0
    %788 = vmatprep.subr.bf16.mxu0 0
    %789 = vmatpush1.bf16.msra.mxu0 0
    %790 = vmatprep.mubr.bf16.mxu0 0
    %791 = vmatmul.mubr.bf16.gmra.mrb[0].mxu0 %v340
    %v792 = vpop.f32.mrb[0].mxu0
    %v793 = vadd.f32 0.0, %v792
    %v794 = vpop.f32.mrb[0].mxu0
    %v795 = vadd.f32 0.0, %v794
    %v796 = vpop.f32.mrb[0].mxu0
    %v797 = vpop.f32.mrb[0].mxu0
    %798 = vdwg.mxu0
    %v799 = vld [vmem:[%s12] sm:$0x1]
    %801 = vset.pattern.permute.xlu0 0
    %802 = vperm.xlu0 %801, %v534
    %v803 = vpop.permute.xlu0 %802
    %v805 = vmul.f32 %v803, %v670
    %v807 = vlaneseq
    %v808 = vshrl.u32 %v807, 7
    %v809 = vsub.s32 0, %v808
    %v810 = vrot.slane %v799, %v809
    %v812 = vadd.f32 %v810, %v805
    %813 = vset.pattern.permute.xlu0 1
    %814 = vperm.xlu0 %813, %v534
    %v815 = vpop.permute.xlu0 %814
    %v817 = vmul.f32 %v815, %v670
    %819 = vrot.lane.b32.xlu0 %v817, 96
    %v820 = vpop.permute.xlu0 %819
    %v822 = vadd.f32 %v812, %v820
    %823 = vset.pattern.permute.xlu0 2
    %824 = vperm.xlu0 %823, %v534
    %v825 = vpop.permute.xlu0 %824
    %v827 = vmul.f32 %v825, %v670
    %829 = vrot.lane.b32.xlu0 %v827, 64
    %v830 = vpop.permute.xlu0 %829
    %v832 = vadd.f32 %v822, %v830
    %833 = vset.pattern.permute.xlu0 3
    %834 = vperm.xlu0 %833, %v534
    %v835 = vpop.permute.xlu0 %834
    %v837 = vmul.f32 %v835, %v670
    %839 = vrot.lane.b32.xlu0 %v837, 32
    %v840 = vpop.permute.xlu0 %839
    %v842 = vadd.f32 %v832, %v840
    %843 = vset.pattern.permute.xlu0 4
    %844 = vperm.xlu0 %843, %v534
    %v845 = vpop.permute.xlu0 %844
    %v847 = vmul.f32 %v845, %v672
    %v848 = vadd.f32 %v842, %v847
    %849 = vset.pattern.permute.xlu0 5
    %850 = vperm.xlu0 %849, %v534
    %v851 = vpop.permute.xlu0 %850
    %v853 = vmul.f32 %v851, %v672
    %855 = vrot.lane.b32.xlu0 %v853, 96
    %v856 = vpop.permute.xlu0 %855
    %v858 = vadd.f32 %v848, %v856
    %859 = vset.pattern.permute.xlu0 6
    %860 = vperm.xlu0 %859, %v534
    %v861 = vpop.permute.xlu0 %860
    %v863 = vmul.f32 %v861, %v672
    %865 = vrot.lane.b32.xlu0 %v863, 64
    %v866 = vpop.permute.xlu0 %865
    %v868 = vadd.f32 %v858, %v866
    %869 = vset.pattern.permute.xlu0 7
    %870 = vperm.xlu0 %869, %v534
    %v871 = vpop.permute.xlu0 %870
    %v873 = vmul.f32 %v871, %v672
    %875 = vrot.lane.b32.xlu0 %v873, 32
    %v876 = vpop.permute.xlu0 %875
    %v878 = vadd.f32 %v868, %v876
    %879 = vset.pattern.permute.xlu0 8
    %880 = vperm.xlu0 %879, %v534
    %v881 = vpop.permute.xlu0 %880
    %v883 = vmul.f32 %v881, %v711
    %v884 = vadd.f32 %v878, %v883
    %885 = vset.pattern.permute.xlu0 9
    %886 = vperm.xlu0 %885, %v534
    %v887 = vpop.permute.xlu0 %886
    %v889 = vmul.f32 %v887, %v711
    %891 = vrot.lane.b32.xlu0 %v889, 96
    %v892 = vpop.permute.xlu0 %891
    %v894 = vadd.f32 %v884, %v892
    %895 = vset.pattern.permute.xlu0 10
    %896 = vperm.xlu0 %895, %v534
    %v897 = vpop.permute.xlu0 %896
    %v899 = vmul.f32 %v897, %v711
    %901 = vrot.lane.b32.xlu0 %v899, 64
    %v902 = vpop.permute.xlu0 %901
    %v904 = vadd.f32 %v894, %v902
    %905 = vset.pattern.permute.xlu0 11
    %906 = vperm.xlu0 %905, %v534
    %v907 = vpop.permute.xlu0 %906
    %v909 = vmul.f32 %v907, %v711
    %911 = vrot.lane.b32.xlu0 %v909, 32
    %v912 = vpop.permute.xlu0 %911
    %v914 = vadd.f32 %v904, %v912
    %915 = vset.pattern.permute.xlu0 12
    %916 = vperm.xlu0 %915, %v534
    %v917 = vpop.permute.xlu0 %916
    %v919 = vmul.f32 %v917, %v713
    %v920 = vadd.f32 %v914, %v919
    %921 = vset.pattern.permute.xlu0 13
    %922 = vperm.xlu0 %921, %v534
    %v923 = vpop.permute.xlu0 %922
    %v925 = vmul.f32 %v923, %v713
    %927 = vrot.lane.b32.xlu0 %v925, 96
    %v928 = vpop.permute.xlu0 %927
    %v930 = vadd.f32 %v920, %v928
    %931 = vset.pattern.permute.xlu0 14
    %932 = vperm.xlu0 %931, %v534
    %v933 = vpop.permute.xlu0 %932
    %v935 = vmul.f32 %v933, %v713
    %937 = vrot.lane.b32.xlu0 %v935, 64
    %v938 = vpop.permute.xlu0 %937
    %v940 = vadd.f32 %v930, %v938
    %941 = vset.pattern.permute.xlu0 15
    %942 = vperm.xlu0 %941, %v534
    %v943 = vpop.permute.xlu0 %942
    %v945 = vmul.f32 %v943, %v713
    %947 = vrot.lane.b32.xlu0 %v945, 32
    %v948 = vpop.permute.xlu0 %947
    %v950 = vadd.f32 %v940, %v948
    %951 = vset.pattern.permute.xlu0 16
    %952 = vperm.xlu0 %951, %v534
    %v953 = vpop.permute.xlu0 %952
    %v955 = vmul.f32 %v953, %v752
    %v956 = vadd.f32 %v950, %v955
    %957 = vset.pattern.permute.xlu0 17
    %958 = vperm.xlu0 %957, %v534
    %v959 = vpop.permute.xlu0 %958
    %v961 = vmul.f32 %v959, %v752
    %963 = vrot.lane.b32.xlu0 %v961, 96
    %v964 = vpop.permute.xlu0 %963
    %v966 = vadd.f32 %v956, %v964
    %967 = vset.pattern.permute.xlu0 18
    %968 = vperm.xlu0 %967, %v534
    %v969 = vpop.permute.xlu0 %968
    %v971 = vmul.f32 %v969, %v752
    %973 = vrot.lane.b32.xlu0 %v971, 64
    %v974 = vpop.permute.xlu0 %973
    %v976 = vadd.f32 %v966, %v974
    %977 = vset.pattern.permute.xlu0 19
    %978 = vperm.xlu0 %977, %v534
    %v979 = vpop.permute.xlu0 %978
    %v981 = vmul.f32 %v979, %v752
    %983 = vrot.lane.b32.xlu0 %v981, 32
    %v984 = vpop.permute.xlu0 %983
    %v986 = vadd.f32 %v976, %v984
    %987 = vset.pattern.permute.xlu0 20
    %988 = vperm.xlu0 %987, %v534
    %v989 = vpop.permute.xlu0 %988
    %v991 = vmul.f32 %v989, %v754
    %v992 = vadd.f32 %v986, %v991
    %993 = vset.pattern.permute.xlu0 21
    %994 = vperm.xlu0 %993, %v534
    %v995 = vpop.permute.xlu0 %994
    %v997 = vmul.f32 %v995, %v754
    %999 = vrot.lane.b32.xlu0 %v997, 96
    %v1000 = vpop.permute.xlu0 %999
    %v1002 = vadd.f32 %v992, %v1000
    %1003 = vset.pattern.permute.xlu0 22
    %1004 = vperm.xlu0 %1003, %v534
    %v1005 = vpop.permute.xlu0 %1004
    %v1007 = vmul.f32 %v1005, %v754
    %1009 = vrot.lane.b32.xlu0 %v1007, 64
    %v1010 = vpop.permute.xlu0 %1009
    %v1012 = vadd.f32 %v1002, %v1010
    %1013 = vset.pattern.permute.xlu0 23
    %1014 = vperm.xlu0 %1013, %v534
    %v1015 = vpop.permute.xlu0 %1014
    %v1017 = vmul.f32 %v1015, %v754
    %1019 = vrot.lane.b32.xlu0 %v1017, 32
    %v1020 = vpop.permute.xlu0 %1019
    %v1022 = vadd.f32 %v1012, %v1020
    %1023 = vset.pattern.permute.xlu0 24
    %1024 = vperm.xlu0 %1023, %v534
    %v1025 = vpop.permute.xlu0 %1024
    %v1027 = vmul.f32 %v1025, %v793
    %v1028 = vadd.f32 %v1022, %v1027
    %1029 = vset.pattern.permute.xlu0 25
    %1030 = vperm.xlu0 %1029, %v534
    %v1031 = vpop.permute.xlu0 %1030
    %v1033 = vmul.f32 %v1031, %v793
    %1035 = vrot.lane.b32.xlu0 %v1033, 96
    %v1036 = vpop.permute.xlu0 %1035
    %v1038 = vadd.f32 %v1028, %v1036
    %1039 = vset.pattern.permute.xlu0 26
    %1040 = vperm.xlu0 %1039, %v534
    %v1041 = vpop.permute.xlu0 %1040
    %v1043 = vmul.f32 %v1041, %v793
    %1045 = vrot.lane.b32.xlu0 %v1043, 64
    %v1046 = vpop.permute.xlu0 %1045
    %v1048 = vadd.f32 %v1038, %v1046
    %1049 = vset.pattern.permute.xlu0 27
    %1050 = vperm.xlu0 %1049, %v534
    %v1051 = vpop.permute.xlu0 %1050
    %v1053 = vmul.f32 %v1051, %v793
    %1055 = vrot.lane.b32.xlu0 %v1053, 32
    %v1056 = vpop.permute.xlu0 %1055
    %v1058 = vadd.f32 %v1048, %v1056
    %1059 = vset.pattern.permute.xlu0 28
    %1060 = vperm.xlu0 %1059, %v534
    %v1061 = vpop.permute.xlu0 %1060
    %v1063 = vmul.f32 %v1061, %v795
    %v1064 = vadd.f32 %v1058, %v1063
    %1065 = vset.pattern.permute.xlu0 29
    %1066 = vperm.xlu0 %1065, %v534
    %v1067 = vpop.permute.xlu0 %1066
    %v1069 = vmul.f32 %v1067, %v795
    %1071 = vrot.lane.b32.xlu0 %v1069, 96
    %v1072 = vpop.permute.xlu0 %1071
    %v1074 = vadd.f32 %v1064, %v1072
    %1075 = vset.pattern.permute.xlu0 30
    %1076 = vperm.xlu0 %1075, %v534
    %v1077 = vpop.permute.xlu0 %1076
    %v1079 = vmul.f32 %v1077, %v795
    %1081 = vrot.lane.b32.xlu0 %v1079, 64
    %v1082 = vpop.permute.xlu0 %1081
    %v1084 = vadd.f32 %v1074, %v1082
    %1085 = vset.pattern.permute.xlu0 31
    %1086 = vperm.xlu0 %1085, %v534
    %v1087 = vpop.permute.xlu0 %1086
    %v1089 = vmul.f32 %v1087, %v795
    %1091 = vrot.lane.b32.xlu0 %v1089, 32
    %v1092 = vpop.permute.xlu0 %1091
    %v1094 = vadd.f32 %v1084, %v1092
    %v1095 = vpack.c.bf16 %v1094, %v1094
    %v1096 = vld [vmem:[%s13] sm:$0xf]
    %v1097 = vld [vmem:[%s13 + $0x4] sm:$0xf]
    %v1098 = vld [vmem:[%s13 + $0x8] sm:$0xf]
    %v1099 = vld [vmem:[%s13 + $0xc] sm:$0xf]
    %v1104 = vunpack.c.l.b16 %v1096
    %v1105 = vunpack.c.l.b16 %v1097
    %v1106 = vunpack.c.l.b16 %v1098
    %v1107 = vunpack.c.l.b16 %v1099
    %v1108 = vpack.c.b16 %v1105, %v1104
    %v1109 = vpack.c.b16 %v1107, %v1106
    %v1113 = vsel %vm80, %v1095, 0
    %1115 = vmatprep.subr.bf16.mxu0 0
    %1116 = vmatpush1.bf16.msra.mxu0 %v1108
    %1117 = vmatprep.subr.bf16.mxu0 0
    %1118 = vmatpush1.bf16.msra.mxu0 %v1109
    %1119 = vmatprep.subr.bf16.mxu0 0
    %1120 = vmatpush1.bf16.msra.mxu0 0
    %1121 = vmatprep.subr.bf16.mxu0 0
    %1122 = vmatpush1.bf16.msra.mxu0 0
    %1123 = vmatprep.subr.bf16.mxu0 0
    %1124 = vmatpush1.bf16.msra.mxu0 0
    %1125 = vmatprep.subr.bf16.mxu0 0
    %1126 = vmatpush1.bf16.msra.mxu0 0
    %1127 = vmatprep.subr.bf16.mxu0 0
    %1128 = vmatpush1.bf16.msra.mxu0 0
    %1129 = vmatprep.subr.bf16.mxu0 0
    %1130 = vmatpush1.bf16.msra.mxu0 0
    %1131 = vmatprep.subr.bf16.mxu0 0
    %1132 = vmatpush1.bf16.msra.mxu0 0
    %1133 = vmatprep.subr.bf16.mxu0 0
    %1134 = vmatpush1.bf16.msra.mxu0 0
    %1135 = vmatprep.subr.bf16.mxu0 0
    %1136 = vmatpush1.bf16.msra.mxu0 0
    %1137 = vmatprep.subr.bf16.mxu0 0
    %1138 = vmatpush1.bf16.msra.mxu0 0
    %1139 = vmatprep.subr.bf16.mxu0 0
    %1140 = vmatpush1.bf16.msra.mxu0 0
    %1141 = vmatprep.subr.bf16.mxu0 0
    %1142 = vmatpush1.bf16.msra.mxu0 0
    %1143 = vmatprep.subr.bf16.mxu0 0
    %1144 = vmatpush1.bf16.msra.mxu0 0
    %1145 = vmatprep.subr.bf16.mxu0 0
    %1146 = vmatpush1.bf16.msra.mxu0 0
    %1147 = vmatprep.mubr.bf16.mxu0 0
    %1148 = vmatmul.mubr.bf16.gmra.mrb[0].mxu0 %v1113
    %v1149 = vpop.f32.mrb[0].mxu0
    %v1150 = vadd.f32 0.0, %v1149
    %v1151 = vpop.f32.mrb[0].mxu0
    %v1152 = vpop.f32.mrb[0].mxu0
    %v1153 = vpop.f32.mrb[0].mxu0
    %1154 = vdwg.mxu0
    %vm1155 = vcmask 517120
    %1156 = vst.msk [vmem:[#allocation6] sm:$0x3] %vm1155, %v1150
    %v1157 = vsel %vm1155, %v1150, -inf
    %1158 = vmax.xlane.f32.xlu0 %v1157
    %v1159 = vpop.xlane.xlu0 %1158
    %v1160 = vsub.f32 %v1150, %v1159
    %v1161 = vmul.f32 %v1160, 1.442695
    %v1162 = vpow.pop %v1161
    %v1163 = vsel %vm1155, %v1162, 0.0
    %1164 = vadd.xlane.f32.xlu0 %v1163
    %v1165 = vpop.xlane.xlu0 %1164
    %v1166 = vrcp.pop %v1165
    %v1167 = vmul.f32 %v1162, %v1166
    %v1168 = vsel %vm1155, %v1167, -inf
    %1169 = vmax.xlane.f32.xlu0 %v1168
    %v1170 = vpop.xlane.xlu0 %1169
    %vm1171 = vcmp.eq.f32.partialorder %v1167, %v1170
    %v1172 = vsel %vm1171, %v172, 64
    %v1173 = vsel %vm1155, %v1172, 2147483647
    %v1174 = vand.u32 %v1173, 65535
    %v1175 = vshra.s32 %v1173, 16
    %v1176 = vcvt.s32.f32 %v1174
    %v1177 = vcvt.s32.f32 %v1175
    %1178 = vmin.xlane.f32.xlu0 %v1177
    %v1179 = vpop.xlane.xlu0 %1178
    %vm1180 = vcmp.eq.f32.partialorder %v1177, %v1179
    %v1181 = vsel %vm1180, %v1176, inf
    %1182 = vmin.xlane.f32.xlu0 %v1181
    %v1183 = vpop.xlane.xlu0 %1182
    %v1184 = vcvt.f32.s32 %v1183
    %v1185 = vcvt.f32.s32 %v1179
    %v1186 = vshll.u32 %v1185, 16
    %v1187 = vadd.s32 %v1186, %v1184
    %1188 = vst.msk [vmem:[#allocation7] sm:$0x3] %vm487, %v1187
    %vm1189 = vcmp.eq.s32.totalorder %v172, %v1187
    %v1190 = vsel %vm1189, 1, 0
    %v1191 = vcvt.s32.f32 %v1190
    %v1192 = vld [vmem:[%s15] sm:$0xf]
    %v1194 = vsel %vm495, %v1192, 0
    %1196 = vmatprep.subr.bf16.mxu0 0
    %1197 = vmatpush1.bf16.msra.mxu0 %v1194
    %1198 = vmatprep.subr.bf16.mxu0 0
    %1199 = vmatpush1.bf16.msra.mxu0 0
    %1200 = vmatprep.subr.bf16.mxu0 0
    %1201 = vmatpush1.bf16.msra.mxu0 0
    %1202 = vmatprep.subr.bf16.mxu0 0
    %1203 = vmatpush1.bf16.msra.mxu0 0
    %1204 = vmatprep.subr.bf16.mxu0 0
    %1205 = vmatpush1.bf16.msra.mxu0 0
    %1206 = vmatprep.subr.bf16.mxu0 0
    %1207 = vmatpush1.bf16.msra.mxu0 0
    %1208 = vmatprep.subr.bf16.mxu0 0
    %1209 = vmatpush1.bf16.msra.mxu0 0
    %1210 = vmatprep.subr.bf16.mxu0 0
    %1211 = vmatpush1.bf16.msra.mxu0 0
    %1212 = vmatprep.subr.bf16.mxu0 0
    %1213 = vmatpush1.bf16.msra.mxu0 0
    %1214 = vmatprep.subr.bf16.mxu0 0
    %1215 = vmatpush1.bf16.msra.mxu0 0
    %1216 = vmatprep.subr.bf16.mxu0 0
    %1217 = vmatpush1.bf16.msra.mxu0 0
    %1218 = vmatprep.subr.bf16.mxu0 0
    %1219 = vmatpush1.bf16.msra.mxu0 0
    %1220 = vmatprep.subr.bf16.mxu0 0
    %1221 = vmatpush1.bf16.msra.mxu0 0
    %1222 = vmatprep.subr.bf16.mxu0 0
    %1223 = vmatpush1.bf16.msra.mxu0 0
    %1224 = vmatprep.subr.bf16.mxu0 0
    %1225 = vmatpush1.bf16.msra.mxu0 0
    %1226 = vmatprep.subr.bf16.mxu0 0
    %1227 = vmatpush1.bf16.msra.mxu0 0
    %1228 = vmatprep.mubr.bf16.mxu0 0
    %1229 = vmatmul.mubr.bf16.gmra.mrb[0].mxu0 %v493
    %v1230 = vpop.f32.mrb[0].mxu0
    %v1231 = vadd.f32 0.0, %v1230
    %v1232 = vpop.f32.mrb[0].mxu0
    %v1233 = vpop.f32.mrb[0].mxu0
    %v1234 = vpop.f32.mrb[0].mxu0
    %1235 = vdwg.mxu0
    %v1236 = vsel %vm1155, %v1231, 0.0
    %1237 = vadd.xlane.f32.xlu0 %v1236
    %v1238 = vpop.xlane.xlu0 %1237
    %v1239 = vmax.f32 %v1238, 1e-30
    %v1240 = vrcp.pop %v1239
    %v1241 = vmul.f32 %v1231, %v1240
    %v1242 = vmul.f32 %v1167, 0.5
    %v1243 = vmul.f32 %v1241, 0.5
    %v1244 = vadd.f32 %v1242, %v1243
    %v1245 = vmul.f32 %v1191, 1e+09
    %v1246 = vsub.f32 %v1244, %v1245
    %v1247 = vsel %vm1155, %v1246, -inf
    %1248 = vmax.xlane.f32.xlu0 %v1247
    %v1249 = vpop.xlane.xlu0 %1248
    %vm1250 = vcmp.eq.f32.partialorder %v1246, %v1249
    %v1251 = vsel %vm1250, %v172, 64
    %v1252 = vsel %vm1155, %v1251, 2147483647
    %v1253 = vand.u32 %v1252, 65535
    %v1254 = vshra.s32 %v1252, 16
    %v1255 = vcvt.s32.f32 %v1253
    %v1256 = vcvt.s32.f32 %v1254
    %1257 = vmin.xlane.f32.xlu0 %v1256
    %v1258 = vpop.xlane.xlu0 %1257
    %vm1259 = vcmp.eq.f32.partialorder %v1256, %v1258
    %v1260 = vsel %vm1259, %v1255, inf
    %1261 = vmin.xlane.f32.xlu0 %v1260
    %v1262 = vpop.xlane.xlu0 %1261
    %v1263 = vcvt.f32.s32 %v1262
    %v1264 = vcvt.f32.s32 %v1258
    %v1265 = vshll.u32 %v1264, 16
    %v1266 = vadd.s32 %v1265, %v1263
    %vm1267 = vcmask 9224
    %1268 = vst.msk [vmem:[#allocation7] sm:$0x3] %vm1267, %v1266
    %vm1269 = vcmp.eq.s32.totalorder %v172, %v1266
    %v1270 = vsel %vm1269, 1, 0
    %v1271 = vcvt.s32.f32 %v1270
    %v1272 = vadd.f32 %v1191, %v1271
    %v1273 = vpack.c.bf16 %v1271, %v1271
    %v1274 = vld [vmem:[%s14] sm:$0xf]
    %v1275 = vld [vmem:[%s14 + $0x4] sm:$0xf]
    %v1276 = vld [vmem:[%s14 + $0x8] sm:$0xf]
    %v1277 = vld [vmem:[%s14 + $0xc] sm:$0xf]
    %v1278 = vld [vmem:[%s14 + $0x10] sm:$0xf]
    %v1279 = vld [vmem:[%s14 + $0x14] sm:$0xf]
    %v1280 = vld [vmem:[%s14 + $0x18] sm:$0xf]
    %v1281 = vld [vmem:[%s14 + $0x1c] sm:$0xf]
    %v1290 = vunpack.c.l.b16 %v1274
    %v1291 = vunpack.c.l.b16 %v1275
    %v1292 = vunpack.c.l.b16 %v1276
    %v1293 = vunpack.c.l.b16 %v1277
    %v1294 = vunpack.c.l.b16 %v1278
    %v1295 = vunpack.c.l.b16 %v1279
    %v1296 = vunpack.c.l.b16 %v1280
    %v1297 = vunpack.c.l.b16 %v1281
    %v1298 = vpack.c.b16 %v1291, %v1290
    %v1299 = vpack.c.b16 %v1293, %v1292
    %v1300 = vpack.c.b16 %v1295, %v1294
    %v1301 = vpack.c.b16 %v1297, %v1296
    %vm1306 = vcmask 523264
    %v1308 = vsel %vm1306, %v1273, 0
    %1310 = vmatprep.subr.bf16.mxu0 0
    %1311 = vmatpush1.bf16.msra.mxu0 %v1298
    %1312 = vmatprep.subr.bf16.mxu0 0
    %1313 = vmatpush1.bf16.msra.mxu0 %v1299
    %1314 = vmatprep.subr.bf16.mxu0 0
    %1315 = vmatpush1.bf16.msra.mxu0 %v1300
    %1316 = vmatprep.subr.bf16.mxu0 0
    %1317 = vmatpush1.bf16.msra.mxu0 %v1301
    %1318 = vmatprep.subr.bf16.mxu0 0
    %1319 = vmatpush1.bf16.msra.mxu0 0
    %1320 = vmatprep.subr.bf16.mxu0 0
    %1321 = vmatpush1.bf16.msra.mxu0 0
    %1322 = vmatprep.subr.bf16.mxu0 0
    %1323 = vmatpush1.bf16.msra.mxu0 0
    %1324 = vmatprep.subr.bf16.mxu0 0
    %1325 = vmatpush1.bf16.msra.mxu0 0
    %1326 = vmatprep.subr.bf16.mxu0 0
    %1327 = vmatpush1.bf16.msra.mxu0 0
    %1328 = vmatprep.subr.bf16.mxu0 0
    %1329 = vmatpush1.bf16.msra.mxu0 0
    %1330 = vmatprep.subr.bf16.mxu0 0
    %1331 = vmatpush1.bf16.msra.mxu0 0
    %1332 = vmatprep.subr.bf16.mxu0 0
    %1333 = vmatpush1.bf16.msra.mxu0 0
    %1334 = vmatprep.subr.bf16.mxu0 0
    %1335 = vmatpush1.bf16.msra.mxu0 0
    %1336 = vmatprep.subr.bf16.mxu0 0
    %1337 = vmatpush1.bf16.msra.mxu0 0
    %1338 = vmatprep.subr.bf16.mxu0 0
    %1339 = vmatpush1.bf16.msra.mxu0 0
    %1340 = vmatprep.subr.bf16.mxu0 0
    %1341 = vmatpush1.bf16.msra.mxu0 0
    %1342 = vmatprep.mubr.bf16.mxu0 0
    %1343 = vmatmul.mubr.bf16.gmra.mrb[0].mxu0 %v1308
    %v1344 = vpop.f32.mrb[0].mxu0
    %v1345 = vadd.f32 0.0, %v1344
    %v1346 = vpop.f32.mrb[0].mxu0
    %v1347 = vpop.f32.mrb[0].mxu0
    %v1348 = vpop.f32.mrb[0].mxu0
    %1349 = vdwg.mxu0
    %v1350 = vsub.f32 1.0, %v1345
    %v1351 = vadd.f32 %v1350, 1e-05
    %v1352 = vmul.f32 %v469, %v1351
    %v1353 = vsel %vm185, %v1352, 0.0
    %1354 = vadd.xlane.f32.xlu0 %v1353
    %v1355 = vpop.xlane.xlu0 %1354
    %v1356 = vmax.f32 %v1355, 1e-30
    %v1357 = vrcp.pop %v1356
    %v1358 = vmul.f32 %v1352, %v1357
    %v1359 = vpack.c.bf16 %v1358, %v1358
    %v1360 = vld [vmem:[%s15] sm:$0xf]
    %v1362 = vsel %vm491, %v1359, 0
    %v1365 = vsel %vm495, %v1360, 0
    %1367 = vmatprep.subr.bf16.mxu0 0
    %1368 = vmatpush1.bf16.msra.mxu0 %v1365
    %1369 = vmatprep.subr.bf16.mxu0 0
    %1370 = vmatpush1.bf16.msra.mxu0 0
    %1371 = vmatprep.subr.bf16.mxu0 0
    %1372 = vmatpush1.bf16.msra.mxu0 0
    %1373 = vmatprep.subr.bf16.mxu0 0
    %1374 = vmatpush1.bf16.msra.mxu0 0
    %1375 = vmatprep.subr.bf16.mxu0 0
    %1376 = vmatpush1.bf16.msra.mxu0 0
    %1377 = vmatprep.subr.bf16.mxu0 0
    %1378 = vmatpush1.bf16.msra.mxu0 0
    %1379 = vmatprep.subr.bf16.mxu0 0
    %1380 = vmatpush1.bf16.msra.mxu0 0
    %1381 = vmatprep.subr.bf16.mxu0 0
    %1382 = vmatpush1.bf16.msra.mxu0 0
    %1383 = vmatprep.subr.bf16.mxu0 0
    %1384 = vmatpush1.bf16.msra.mxu0 0
    %1385 = vmatprep.subr.bf16.mxu0 0
    %1386 = vmatpush1.bf16.msra.mxu0 0
    %1387 = vmatprep.subr.bf16.mxu0 0
    %1388 = vmatpush1.bf16.msra.mxu0 0
    %1389 = vmatprep.subr.bf16.mxu0 0
    %1390 = vmatpush1.bf16.msra.mxu0 0
    %1391 = vmatprep.subr.bf16.mxu0 0
    %1392 = vmatpush1.bf16.msra.mxu0 0
    %1393 = vmatprep.subr.bf16.mxu0 0
    %1394 = vmatpush1.bf16.msra.mxu0 0
    %1395 = vmatprep.subr.bf16.mxu0 0
    %1396 = vmatpush1.bf16.msra.mxu0 0
    %1397 = vmatprep.subr.bf16.mxu0 0
    %1398 = vmatpush1.bf16.msra.mxu0 0
    %1399 = vmatprep.mubr.bf16.mxu0 0
    %1400 = vmatmul.mubr.bf16.gmra.mrb[0].mxu0 %v1362
    %v1401 = vpop.f32.mrb[0].mxu0
    %v1402 = vadd.f32 0.0, %v1401
    %v1403 = vpop.f32.mrb[0].mxu0
    %v1404 = vpop.f32.mrb[0].mxu0
    %v1405 = vpop.f32.mrb[0].mxu0
    %1406 = vdwg.mxu0
    %v1407 = vsel %vm1155, %v1402, 0.0
    %1408 = vadd.xlane.f32.xlu0 %v1407
    %v1409 = vpop.xlane.xlu0 %1408
    %v1410 = vmax.f32 %v1409, 1e-30
    %v1411 = vrcp.pop %v1410
    %v1412 = vmul.f32 %v1402, %v1411
    %v1413 = vmul.f32 %v1412, 0.5
    %v1414 = vadd.f32 %v1242, %v1413
    %v1415 = vmul.f32 %v1272, 1e+09
    %v1416 = vsub.f32 %v1414, %v1415
    %v1417 = vsel %vm1155, %v1416, -inf
    %1418 = vmax.xlane.f32.xlu0 %v1417
    %v1419 = vpop.xlane.xlu0 %1418
    %vm1420 = vcmp.eq.f32.partialorder %v1416, %v1419
    %v1421 = vsel %vm1420, %v172, 64
    %v1422 = vsel %vm1155, %v1421, 2147483647
    %v1423 = vand.u32 %v1422, 65535
    %v1424 = vshra.s32 %v1422, 16
    %v1425 = vcvt.s32.f32 %v1423
    %v1426 = vcvt.s32.f32 %v1424
    %1427 = vmin.xlane.f32.xlu0 %v1426
    %v1428 = vpop.xlane.xlu0 %1427
    %vm1429 = vcmp.eq.f32.partialorder %v1426, %v1428
    %v1430 = vsel %vm1429, %v1425, inf
    %1431 = vmin.xlane.f32.xlu0 %v1430
    %v1432 = vpop.xlane.xlu0 %1431
    %v1433 = vcvt.f32.s32 %v1432
    %v1434 = vcvt.f32.s32 %v1428
    %v1435 = vshll.u32 %v1434, 16
    %v1436 = vadd.s32 %v1435, %v1433
    %vm1437 = vcmask 17424
    %1438 = vst.msk [vmem:[#allocation7] sm:$0x3] %vm1437, %v1436
    %vm1439 = vcmp.eq.s32.totalorder %v172, %v1436
    %v1440 = vsel %vm1439, 1, 0
    %v1441 = vcvt.s32.f32 %v1440
    %v1442 = vadd.f32 %v1272, %v1441
    %v1443 = vpack.c.bf16 %v1441, %v1441
    %v1444 = vld [vmem:[%s14] sm:$0xf]
    %v1445 = vld [vmem:[%s14 + $0x4] sm:$0xf]
    %v1446 = vld [vmem:[%s14 + $0x8] sm:$0xf]
    %v1447 = vld [vmem:[%s14 + $0xc] sm:$0xf]
    %v1448 = vld [vmem:[%s14 + $0x10] sm:$0xf]
    %v1449 = vld [vmem:[%s14 + $0x14] sm:$0xf]
    %v1450 = vld [vmem:[%s14 + $0x18] sm:$0xf]
    %v1451 = vld [vmem:[%s14 + $0x1c] sm:$0xf]
    %v1460 = vunpack.c.l.b16 %v1444
    %v1461 = vunpack.c.l.b16 %v1445
    %v1462 = vunpack.c.l.b16 %v1446
    %v1463 = vunpack.c.l.b16 %v1447
    %v1464 = vunpack.c.l.b16 %v1448
    %v1465 = vunpack.c.l.b16 %v1449
    %v1466 = vunpack.c.l.b16 %v1450
    %v1467 = vunpack.c.l.b16 %v1451
    %v1468 = vpack.c.b16 %v1461, %v1460
    %v1469 = vpack.c.b16 %v1463, %v1462
    %v1470 = vpack.c.b16 %v1465, %v1464
    %v1471 = vpack.c.b16 %v1467, %v1466
    %v1477 = vsel %vm1306, %v1443, 0
    %1479 = vmatprep.subr.bf16.mxu0 0
    %1480 = vmatpush1.bf16.msra.mxu0 %v1468
    %1481 = vmatprep.subr.bf16.mxu0 0
    %1482 = vmatpush1.bf16.msra.mxu0 %v1469
    %1483 = vmatprep.subr.bf16.mxu0 0
    %1484 = vmatpush1.bf16.msra.mxu0 %v1470
    %1485 = vmatprep.subr.bf16.mxu0 0
    %1486 = vmatpush1.bf16.msra.mxu0 %v1471
    %1487 = vmatprep.subr.bf16.mxu0 0
    %1488 = vmatpush1.bf16.msra.mxu0 0
    %1489 = vmatprep.subr.bf16.mxu0 0
    %1490 = vmatpush1.bf16.msra.mxu0 0
    %1491 = vmatprep.subr.bf16.mxu0 0
    %1492 = vmatpush1.bf16.msra.mxu0 0
    %1493 = vmatprep.subr.bf16.mxu0 0
    %1494 = vmatpush1.bf16.msra.mxu0 0
    %1495 = vmatprep.subr.bf16.mxu0 0
    %1496 = vmatpush1.bf16.msra.mxu0 0
    %1497 = vmatprep.subr.bf16.mxu0 0
    %1498 = vmatpush1.bf16.msra.mxu0 0
    %1499 = vmatprep.subr.bf16.mxu0 0
    %1500 = vmatpush1.bf16.msra.mxu0 0
    %1501 = vmatprep.subr.bf16.mxu0 0
    %1502 = vmatpush1.bf16.msra.mxu0 0
    %1503 = vmatprep.subr.bf16.mxu0 0
    %1504 = vmatpush1.bf16.msra.mxu0 0
    %1505 = vmatprep.subr.bf16.mxu0 0
    %1506 = vmatpush1.bf16.msra.mxu0 0
    %1507 = vmatprep.subr.bf16.mxu0 0
    %1508 = vmatpush1.bf16.msra.mxu0 0
    %1509 = vmatprep.subr.bf16.mxu0 0
    %1510 = vmatpush1.bf16.msra.mxu0 0
    %1511 = vmatprep.mubr.bf16.mxu0 0
    %1512 = vmatmul.mubr.bf16.gmra.mrb[0].mxu0 %v1477
    %v1513 = vpop.f32.mrb[0].mxu0
    %v1514 = vadd.f32 0.0, %v1513
    %v1515 = vpop.f32.mrb[0].mxu0
    %v1516 = vpop.f32.mrb[0].mxu0
    %v1517 = vpop.f32.mrb[0].mxu0
    %1518 = vdwg.mxu0
    %v1519 = vsub.f32 1.0, %v1514
    %v1520 = vadd.f32 %v1519, 1e-05
    %v1521 = vmul.f32 %v1358, %v1520
    %v1522 = vsel %vm185, %v1521, 0.0
    %1523 = vadd.xlane.f32.xlu0 %v1522
    %v1524 = vpop.xlane.xlu0 %1523
    %v1525 = vmax.f32 %v1524, 1e-30
    %v1526 = vrcp.pop %v1525
    %v1527 = vmul.f32 %v1521, %v1526
    %v1528 = vpack.c.bf16 %v1527, %v1527
    %v1529 = vld [vmem:[%s15] sm:$0xf]
    %v1531 = vsel %vm491, %v1528, 0
    %v1534 = vsel %vm495, %v1529, 0
    %1536 = vmatprep.subr.bf16.mxu0 0
    %1537 = vmatpush1.bf16.msra.mxu0 %v1534
    %1538 = vmatprep.subr.bf16.mxu0 0
    %1539 = vmatpush1.bf16.msra.mxu0 0
    %1540 = vmatprep.subr.bf16.mxu0 0
    %1541 = vmatpush1.bf16.msra.mxu0 0
    %1542 = vmatprep.subr.bf16.mxu0 0
    %1543 = vmatpush1.bf16.msra.mxu0 0
    %1544 = vmatprep.subr.bf16.mxu0 0
    %1545 = vmatpush1.bf16.msra.mxu0 0
    %1546 = vmatprep.subr.bf16.mxu0 0
    %1547 = vmatpush1.bf16.msra.mxu0 0
    %1548 = vmatprep.subr.bf16.mxu0 0
    %1549 = vmatpush1.bf16.msra.mxu0 0
    %1550 = vmatprep.subr.bf16.mxu0 0
    %1551 = vmatpush1.bf16.msra.mxu0 0
    %1552 = vmatprep.subr.bf16.mxu0 0
    %1553 = vmatpush1.bf16.msra.mxu0 0
    %1554 = vmatprep.subr.bf16.mxu0 0
    %1555 = vmatpush1.bf16.msra.mxu0 0
    %1556 = vmatprep.subr.bf16.mxu0 0
    %1557 = vmatpush1.bf16.msra.mxu0 0
    %1558 = vmatprep.subr.bf16.mxu0 0
    %1559 = vmatpush1.bf16.msra.mxu0 0
    %1560 = vmatprep.subr.bf16.mxu0 0
    %1561 = vmatpush1.bf16.msra.mxu0 0
    %1562 = vmatprep.subr.bf16.mxu0 0
    %1563 = vmatpush1.bf16.msra.mxu0 0
    %1564 = vmatprep.subr.bf16.mxu0 0
    %1565 = vmatpush1.bf16.msra.mxu0 0
    %1566 = vmatprep.subr.bf16.mxu0 0
    %1567 = vmatpush1.bf16.msra.mxu0 0
    %1568 = vmatprep.mubr.bf16.mxu0 0
    %1569 = vmatmul.mubr.bf16.gmra.mrb[0].mxu0 %v1531
    %v1570 = vpop.f32.mrb[0].mxu0
    %v1571 = vadd.f32 0.0, %v1570
    %v1572 = vpop.f32.mrb[0].mxu0
    %v1573 = vpop.f32.mrb[0].mxu0
    %v1574 = vpop.f32.mrb[0].mxu0
    %1575 = vdwg.mxu0
    %v1576 = vsel %vm1155, %v1571, 0.0
    %1577 = vadd.xlane.f32.xlu0 %v1576
    %v1578 = vpop.xlane.xlu0 %1577
    %v1579 = vmax.f32 %v1578, 1e-30
    %v1580 = vrcp.pop %v1579
    %v1581 = vmul.f32 %v1571, %v1580
    %v1582 = vmul.f32 %v1581, 0.5
    %v1583 = vadd.f32 %v1242, %v1582
    %v1584 = vmul.f32 %v1442, 1e+09
    %v1585 = vsub.f32 %v1583, %v1584
    %v1586 = vsel %vm1155, %v1585, -inf
    %1587 = vmax.xlane.f32.xlu0 %v1586
    %v1588 = vpop.xlane.xlu0 %1587
    %vm1589 = vcmp.eq.f32.partialorder %v1585, %v1588
    %v1590 = vsel %vm1589, %v172, 64
    %v1591 = vsel %vm1155, %v1590, 2147483647
    %v1592 = vand.u32 %v1591, 65535
    %v1593 = vshra.s32 %v1591, 16
    %v1594 = vcvt.s32.f32 %v1592
    %v1595 = vcvt.s32.f32 %v1593
    %1596 = vmin.xlane.f32.xlu0 %v1595
    %v1597 = vpop.xlane.xlu0 %1596
    %vm1598 = vcmp.eq.f32.partialorder %v1595, %v1597
    %v1599 = vsel %vm1598, %v1594, inf
    %1600 = vmin.xlane.f32.xlu0 %v1599
    %v1601 = vpop.xlane.xlu0 %1600
    %v1602 = vcvt.f32.s32 %v1601
    %v1603 = vcvt.f32.s32 %v1597
    %v1604 = vshll.u32 %v1603, 16
    %v1605 = vadd.s32 %v1604, %v1602
    %vm1606 = vcmask 25624
    %1607 = vst.msk [vmem:[#allocation7] sm:$0x3] %vm1606, %v1605
    %vm1608 = vcmp.eq.s32.totalorder %v172, %v1605
    %v1609 = vsel %vm1608, 1, 0
    %v1610 = vcvt.s32.f32 %v1609
    %v1611 = vadd.f32 %v1442, %v1610
    %v1612 = vpack.c.bf16 %v1610, %v1610
    %v1613 = vld [vmem:[%s14] sm:$0xf]
    %v1614 = vld [vmem:[%s14 + $0x4] sm:$0xf]
    %v1615 = vld [vmem:[%s14 + $0x8] sm:$0xf]
    %v1616 = vld [vmem:[%s14 + $0xc] sm:$0xf]
    %v1617 = vld [vmem:[%s14 + $0x10] sm:$0xf]
    %v1618 = vld [vmem:[%s14 + $0x14] sm:$0xf]
    %v1619 = vld [vmem:[%s14 + $0x18] sm:$0xf]
    %v1620 = vld [vmem:[%s14 + $0x1c] sm:$0xf]
    %v1629 = vunpack.c.l.b16 %v1613
    %v1630 = vunpack.c.l.b16 %v1614
    %v1631 = vunpack.c.l.b16 %v1615
    %v1632 = vunpack.c.l.b16 %v1616
    %v1633 = vunpack.c.l.b16 %v1617
    %v1634 = vunpack.c.l.b16 %v1618
    %v1635 = vunpack.c.l.b16 %v1619
    %v1636 = vunpack.c.l.b16 %v1620
    %v1637 = vpack.c.b16 %v1630, %v1629
    %v1638 = vpack.c.b16 %v1632, %v1631
    %v1639 = vpack.c.b16 %v1634, %v1633
    %v1640 = vpack.c.b16 %v1636, %v1635
    %v1646 = vsel %vm1306, %v1612, 0
    %1648 = vmatprep.subr.bf16.mxu0 0
    %1649 = vmatpush1.bf16.msra.mxu0 %v1637
    %1650 = vmatprep.subr.bf16.mxu0 0
    %1651 = vmatpush1.bf16.msra.mxu0 %v1638
    %1652 = vmatprep.subr.bf16.mxu0 0
    %1653 = vmatpush1.bf16.msra.mxu0 %v1639
    %1654 = vmatprep.subr.bf16.mxu0 0
    %1655 = vmatpush1.bf16.msra.mxu0 %v1640
    %1656 = vmatprep.subr.bf16.mxu0 0
    %1657 = vmatpush1.bf16.msra.mxu0 0
    %1658 = vmatprep.subr.bf16.mxu0 0
    %1659 = vmatpush1.bf16.msra.mxu0 0
    %1660 = vmatprep.subr.bf16.mxu0 0
    %1661 = vmatpush1.bf16.msra.mxu0 0
    %1662 = vmatprep.subr.bf16.mxu0 0
    %1663 = vmatpush1.bf16.msra.mxu0 0
    %1664 = vmatprep.subr.bf16.mxu0 0
    %1665 = vmatpush1.bf16.msra.mxu0 0
    %1666 = vmatprep.subr.bf16.mxu0 0
    %1667 = vmatpush1.bf16.msra.mxu0 0
    %1668 = vmatprep.subr.bf16.mxu0 0
    %1669 = vmatpush1.bf16.msra.mxu0 0
    %1670 = vmatprep.subr.bf16.mxu0 0
    %1671 = vmatpush1.bf16.msra.mxu0 0
    %1672 = vmatprep.subr.bf16.mxu0 0
    %1673 = vmatpush1.bf16.msra.mxu0 0
    %1674 = vmatprep.subr.bf16.mxu0 0
    %1675 = vmatpush1.bf16.msra.mxu0 0
    %1676 = vmatprep.subr.bf16.mxu0 0
    %1677 = vmatpush1.bf16.msra.mxu0 0
    %1678 = vmatprep.subr.bf16.mxu0 0
    %1679 = vmatpush1.bf16.msra.mxu0 0
    %1680 = vmatprep.mubr.bf16.mxu0 0
    %1681 = vmatmul.mubr.bf16.gmra.mrb[0].mxu0 %v1646
    %v1682 = vpop.f32.mrb[0].mxu0
    %v1683 = vadd.f32 0.0, %v1682
    %v1684 = vpop.f32.mrb[0].mxu0
    %v1685 = vpop.f32.mrb[0].mxu0
    %v1686 = vpop.f32.mrb[0].mxu0
    %1687 = vdwg.mxu0
    %v1688 = vsub.f32 1.0, %v1683
    %v1689 = vadd.f32 %v1688, 1e-05
    %v1690 = vmul.f32 %v1527, %v1689
    %v1691 = vsel %vm185, %v1690, 0.0
    %1692 = vadd.xlane.f32.xlu0 %v1691
    %v1693 = vpop.xlane.xlu0 %1692
    %v1694 = vmax.f32 %v1693, 1e-30
    %v1695 = vrcp.pop %v1694
    %v1696 = vmul.f32 %v1690, %v1695
    %v1697 = vpack.c.bf16 %v1696, %v1696
    %v1698 = vld [vmem:[%s15] sm:$0xf]
    %v1700 = vsel %vm491, %v1697, 0
    %v1703 = vsel %vm495, %v1698, 0
    %1705 = vmatprep.subr.bf16.mxu0 0
    %1706 = vmatpush1.bf16.msra.mxu0 %v1703
    %1707 = vmatprep.subr.bf16.mxu0 0
    %1708 = vmatpush1.bf16.msra.mxu0 0
    %1709 = vmatprep.subr.bf16.mxu0 0
    %1710 = vmatpush1.bf16.msra.mxu0 0
    %1711 = vmatprep.subr.bf16.mxu0 0
    %1712 = vmatpush1.bf16.msra.mxu0 0
    %1713 = vmatprep.subr.bf16.mxu0 0
    %1714 = vmatpush1.bf16.msra.mxu0 0
    %1715 = vmatprep.subr.bf16.mxu0 0
    %1716 = vmatpush1.bf16.msra.mxu0 0
    %1717 = vmatprep.subr.bf16.mxu0 0
    %1718 = vmatpush1.bf16.msra.mxu0 0
    %1719 = vmatprep.subr.bf16.mxu0 0
    %1720 = vmatpush1.bf16.msra.mxu0 0
    %1721 = vmatprep.subr.bf16.mxu0 0
    %1722 = vmatpush1.bf16.msra.mxu0 0
    %1723 = vmatprep.subr.bf16.mxu0 0
    %1724 = vmatpush1.bf16.msra.mxu0 0
    %1725 = vmatprep.subr.bf16.mxu0 0
    %1726 = vmatpush1.bf16.msra.mxu0 0
    %1727 = vmatprep.subr.bf16.mxu0 0
    %1728 = vmatpush1.bf16.msra.mxu0 0
    %1729 = vmatprep.subr.bf16.mxu0 0
    %1730 = vmatpush1.bf16.msra.mxu0 0
    %1731 = vmatprep.subr.bf16.mxu0 0
    %1732 = vmatpush1.bf16.msra.mxu0 0
    %1733 = vmatprep.subr.bf16.mxu0 0
    %1734 = vmatpush1.bf16.msra.mxu0 0
    %1735 = vmatprep.subr.bf16.mxu0 0
    %1736 = vmatpush1.bf16.msra.mxu0 0
    %1737 = vmatprep.mubr.bf16.mxu0 0
    %1738 = vmatmul.mubr.bf16.gmra.mrb[0].mxu0 %v1700
    %v1739 = vpop.f32.mrb[0].mxu0
    %v1740 = vadd.f32 0.0, %v1739
    %v1741 = vpop.f32.mrb[0].mxu0
    %v1742 = vpop.f32.mrb[0].mxu0
    %v1743 = vpop.f32.mrb[0].mxu0
    %1744 = vdwg.mxu0
    %v1745 = vsel %vm1155, %v1740, 0.0
    %1746 = vadd.xlane.f32.xlu0 %v1745
    %v1747 = vpop.xlane.xlu0 %1746
    %v1748 = vmax.f32 %v1747, 1e-30
    %v1749 = vrcp.pop %v1748
    %v1750 = vmul.f32 %v1740, %v1749
    %v1751 = vmul.f32 %v1750, 0.5
    %v1752 = vadd.f32 %v1242, %v1751
    %v1753 = vmul.f32 %v1611, 1e+09
    %v1754 = vsub.f32 %v1752, %v1753
    %v1755 = vsel %vm1155, %v1754, -inf
    %1756 = vmax.xlane.f32.xlu0 %v1755
    %v1757 = vpop.xlane.xlu0 %1756
    %vm1758 = vcmp.eq.f32.partialorder %v1754, %v1757
    %v1759 = vsel %vm1758, %v172, 64
    %v1760 = vsel %vm1155, %v1759, 2147483647
    %v1761 = vand.u32 %v1760, 65535
    %v1762 = vshra.s32 %v1760, 16
    %v1763 = vcvt.s32.f32 %v1761
    %v1764 = vcvt.s32.f32 %v1762
    %1765 = vmin.xlane.f32.xlu0 %v1764
    %v1766 = vpop.xlane.xlu0 %1765
    %vm1767 = vcmp.eq.f32.partialorder %v1764, %v1766
    %v1768 = vsel %vm1767, %v1763, inf
    %1769 = vmin.xlane.f32.xlu0 %v1768
    %v1770 = vpop.xlane.xlu0 %1769
    %v1771 = vcvt.f32.s32 %v1770
    %v1772 = vcvt.f32.s32 %v1766
    %v1773 = vshll.u32 %v1772, 16
    %v1774 = vadd.s32 %v1773, %v1771
    %vm1775 = vcmask 33824
    %1776 = vst.msk [vmem:[#allocation7] sm:$0x3] %vm1775, %v1774
    // Predicated region
    $region66: #{_lambda_.7} parent=1 // pred_check
      _
    $region67: #{_lambda_.7} parent=1 // pred_check_branch
      %1778 = sbr.rel (0) target = $region69
    $region68: #{_lambda_.7} parent=1 // pred_region
      %s1780 = ssub.s32 32, 32
      %1781 = vsyncadd [#allocation3], %s1780
      %s1783 = sshll.u32 [#allocation2], 4
      %s1784 = int_to_ptr.vmem [resolvable:$true] %s1783
      %1786 = dma.vmem_to_hbm [thread:$0]  %s1784, 32, %s16, [#allocation3]
    $region69: #{_lambda_.7} parent=1 // pred_fallthru
      _
    // Predicated region
    $region70: #{_lambda_.7} parent=1 // pred_check
      _
    $region71: #{_lambda_.7} parent=1 // pred_check_branch
      %1788 = sbr.rel (0) target = $region73
    $region72: #{_lambda_.7} parent=1 // pred_region
      %s1790 = ssub.s32 32, 32
      %1791 = vsyncadd [#allocation5], %s1790
      %s1793 = sshll.u32 [#allocation4], 4
      %s1794 = int_to_ptr.vmem [resolvable:$true] %s1793
      %1796 = dma.vmem_to_hbm [thread:$0]  %s1794, 32, %s17, [#allocation5]
    $region73: #{_lambda_.7} parent=1 // pred_fallthru
      _
    // Predicated region
    $region74: #{_lambda_.7} parent=1 // pred_check
      _
    $region75: #{_lambda_.7} parent=1 // pred_check_branch
      %1798 = sbr.rel (0) target = $region77
    $region76: #{_lambda_.7} parent=1 // pred_region
      _
    $region77: #{_lambda_.7} parent=1 // pred_fallthru
      _
    // Predicated region
    $region78: #{_lambda_.7} parent=1 // pred_check
      _
    $region79: #{_lambda_.7} parent=1 // pred_check_branch
      %1800 = sbr.rel (0) target = $region81
    $region80: #{_lambda_.7} parent=1 // pred_region
      %s1802 = ssub.s32 32, 32
      %1803 = vsyncadd [#allocation5], %s1802
      %s1805 = sshll.u32 [#allocation6], 4
      %s1806 = int_to_ptr.vmem [resolvable:$true] %s1805
      %1808 = dma.vmem_to_hbm [thread:$0]  %s1806, 32, %s19, [#allocation5]
    $region81: #{_lambda_.7} parent=1 // pred_fallthru
      _
    // Predicated region
    $region82: #{_lambda_.7} parent=1 // pred_check
      _
    $region83: #{_lambda_.7} parent=1 // pred_check_branch
      %1810 = sbr.rel (0) target = $region85
    $region84: #{_lambda_.7} parent=1 // pred_region
      %s1812 = ssub.s32 32, 32
      %1813 = vsyncadd [#allocation8], %s1812
      %s1815 = sshll.u32 [#allocation7], 4
      %s1816 = int_to_ptr.vmem [resolvable:$true] %s1815
      %1818 = dma.vmem_to_hbm [thread:$0]  %s1816, 32, %s20, [#allocation8]
    $region85: #{_lambda_.7} parent=1 // pred_fallthru
      _
    // Predicated region
    $region86: #{_lambda_.7} parent=1 // pred_check
      _
    $region87: #{_lambda_.7} parent=1 // pred_check_branch
      %1820 = sbr.rel (0) target = $region89
    $region88: #{_lambda_.7} parent=1 // pred_region
      %1821 = dma.done [#allocation3], 32
    $region89: #{_lambda_.7} parent=1 // pred_fallthru
      _
    // Predicated region
    $region90: #{_lambda_.7} parent=1 // pred_check
      _
    $region91: #{_lambda_.7} parent=1 // pred_check_branch
      %1823 = sbr.rel (0) target = $region93
    $region92: #{_lambda_.7} parent=1 // pred_region
      %1824 = dma.done [#allocation5], 32
    $region93: #{_lambda_.7} parent=1 // pred_fallthru
      _
    // Predicated region
    $region94: #{_lambda_.7} parent=1 // pred_check
      _
    $region95: #{_lambda_.7} parent=1 // pred_check_branch
      %1826 = sbr.rel (0) target = $region97
    $region96: #{_lambda_.7} parent=1 // pred_region
      _
    $region97: #{_lambda_.7} parent=1 // pred_fallthru
      _
    // Predicated region
    $region98: #{_lambda_.7} parent=1 // pred_check
      _
    $region99: #{_lambda_.7} parent=1 // pred_check_branch
      %1828 = sbr.rel (0) target = $region101
    $region100: #{_lambda_.7} parent=1 // pred_region
      %1829 = dma.done [#allocation5], 32
    $region101: #{_lambda_.7} parent=1 // pred_fallthru
      _
    // Predicated region
    $region102: #{_lambda_.7} parent=1 // pred_check
      _
    $region103: #{_lambda_.7} parent=1 // pred_check_branch
      %1831 = sbr.rel (0) target = $region105
    $region104: #{_lambda_.7} parent=1 // pred_region
      %1832 = dma.done [#allocation8], 32
    $region105: #{_lambda_.7} parent=1 // pred_fallthru
      _
    %1833 = vsyncpa [#allocation3], 1
    %1834 = vsyncpa [#allocation5], 1
    %1835 = vsyncpa [#allocation8], 1

</llo_original>
